<compile_context>
chip_gen: v7x
topology: tpu7x:2x2x1
jax: 0.10.0
libtpu: 0.0.40
codegen_flags: <defaults>
</compile_context>

<pallas_src>
import jax
import jax.numpy as jnp
from jax.experimental import pallas as pl
from jax.experimental.pallas import tpu as pltpu


# ------------------------------ Pallas kernels ------------------------------

def _matmul_bias_kernel(x_ref, w_ref, b_ref, o_ref):
    # (tm, K) @ (K, N) + (1, N), f32 accumulation on the MXU.
    acc = jnp.dot(x_ref[...], w_ref[...], preferred_element_type=jnp.float32)
    o_ref[...] = (acc + b_ref[...]).astype(o_ref.dtype)


def _conv_pool_relu_kernel(p_ref, w_ref, b_ref, o_ref):
    # p_ref: (4, tm, K) im2col patches grouped by 2x2 max-pool parity.
    # out = relu(maxpool2(conv(x))) = relu(max_a(p[a] @ w) + bias).
    w = w_ref[...]
    m = jnp.dot(p_ref[0], w, preferred_element_type=jnp.float32)
    for a in range(1, 4):
        m = jnp.maximum(m, jnp.dot(p_ref[a], w,
                                   preferred_element_type=jnp.float32))
    o_ref[...] = jnp.maximum(m + b_ref[...], 0.0).astype(o_ref.dtype)


# ------------------------------ Pallas wrappers ------------------------------

_PARALLEL = pltpu.CompilerParams(dimension_semantics=("parallel",))


def _m_grid(m):
    # 2-way row split when it tiles cleanly (keeps v7x's 2nd TensorCore busy).
    return 2 if m % 32 == 0 else 1


def pallas_matmul_bias(x, w, b, out_dtype=jnp.bfloat16):
    """(M, K) @ (K, N) + b with the bias epilogue fused; bf16 MXU inputs."""
    M, K = x.shape
    N = w.shape[1]
    g = _m_grid(M)
    tm = M // g
    return pl.pallas_call(
        _matmul_bias_kernel,
        grid=(g,),
        in_specs=[pl.BlockSpec((tm, K), lambda i: (i, 0)),
                  pl.BlockSpec((K, N), lambda i: (0, 0)),
                  pl.BlockSpec((1, N), lambda i: (0, 0))],
        out_specs=pl.BlockSpec((tm, N), lambda i: (i, 0)),
        out_shape=jax.ShapeDtypeStruct((M, N), out_dtype),
        compiler_params=_PARALLEL,
    )(x.astype(jnp.bfloat16), w.astype(jnp.bfloat16),
      b.reshape(1, N).astype(jnp.float32))


def pallas_conv_pool_relu(pg, w, b, out_dtype=jnp.bfloat16):
    """Fused conv (im2col matmul) + MaxPool2d(2) + ReLU.

    pg: (4, M, K) patches; the leading axis holds the 4 members of each 2x2
    pool window, rows within each group ordered (b, i, j) over the pooled
    grid. Returns (M, N).
    """
    _, M, K = pg.shape
    N = w.shape[1]
    g = _m_grid(M)
    tm = M // g
    return pl.pallas_call(
        _conv_pool_relu_kernel,
        grid=(g,),
        in_specs=[pl.BlockSpec((4, tm, K), lambda i: (0, i, 0)),
                  pl.BlockSpec((K, N), lambda i: (0, 0)),
                  pl.BlockSpec((1, N), lambda i: (0, 0))],
        out_specs=pl.BlockSpec((tm, N), lambda i: (i, 0)),
        out_shape=jax.ShapeDtypeStruct((M, N), out_dtype),
        compiler_params=_PARALLEL,
    )(pg.astype(jnp.bfloat16), w.astype(jnp.bfloat16),
      b.reshape(1, N).astype(jnp.float32))


# --------------------- layout glue (XLA: pad/slice/reshape) ------------------

def _im2col(x4, k, pad):
    """NHWC -> (B*Ho*Wo, k*k*C) patch matrix, stride 1."""
    if pad:
        x4 = jnp.pad(x4, ((0, 0), (pad, pad), (pad, pad), (0, 0)))
    B, Hp, Wp, C = x4.shape
    Ho, Wo = Hp - k + 1, Wp - k + 1
    cols = [x4[:, i:i + Ho, j:j + Wo, :] for i in range(k) for j in range(k)]
    return jnp.concatenate(cols, axis=-1).reshape(B * Ho * Wo, k * k * C)


def _im2col_pool_groups(x4, k):
    """Valid (pad=0) conv patches grouped by 2x2 max-pool parity.

    Returns ((4, B*(Ho//2)*(Wo//2), k*k*C), (Ho//2, Wo//2)); group (a, b)
    holds the patches of conv output pixels (2i+a, 2j+b).
    """
    B, H, W, C = x4.shape
    Ho, Wo = H - k + 1, W - k + 1
    cols = [x4[:, i:i + Ho, j:j + Wo, :] for i in range(k) for j in range(k)]
    p = jnp.concatenate(cols, axis=-1)                    # (B, Ho, Wo, k*k*C)
    Ho2, Wo2 = Ho // 2, Wo // 2
    groups = [p[:, a::2, b::2, :].reshape(B * Ho2 * Wo2, k * k * C)
              for a in range(2) for b in range(2)]
    return jnp.stack(groups, axis=0), (Ho2, Wo2)


# ------------------------------ model definition -----------------------------

def inception_forward(x_flat, x4, ip):
    """InceptionA. x_flat: (M, Cin) rows ordered (b, h, w); x4: (B, H, W, Cin).

    Returns (M, 88) with channels in PyTorch order [b1 | b5 | b3 | bp].
    """
    B, H, W, _ = x4.shape
    # (1) the three input-sharing 1x1 convs: [b1 | b5_1 | b3_1]
    y1 = pallas_matmul_bias(x_flat, ip['w1'], ip['b1'])              # (M, 48)
    b5_1 = y1[:, 16:32].reshape(B, H, W, 16)
    b3_1 = y1[:, 32:48].reshape(B, H, W, 16)
    # (2) block-diag fused: [avgpool+1x1 (as a 3x3 conv) | 5x5 | first 3x3]
    p2 = jnp.concatenate([_im2col(x4, 3, 1),
                          _im2col(b5_1, 5, 2),
                          _im2col(b3_1, 3, 1)], axis=1)
    y2 = pallas_matmul_bias(p2, ip['w2'], ip['b2'])                  # (M, 72)
    # (3) trailing 3x3 conv of the 3x3 branch
    b3t = y2[:, 48:72].reshape(B, H, W, 24)
    y3 = pallas_matmul_bias(_im2col(b3t, 3, 1), ip['w3'], ip['b3'])  # (M, 24)
    # concat in PyTorch branch order [b1, b5, b3, bp]
    return jnp.concatenate([y1[:, 0:16], y2[:, 24:48], y3, y2[:, 0:24]], axis=1)


def net_forward(p, x_nchw):
    B = x_nchw.shape[0]
    x = jnp.transpose(x_nchw, (0, 2, 3, 1)).astype(jnp.bfloat16)  # NCHW->NHWC
    # conv1(5x5) + MaxPool2d(2) + ReLU, fused            -> (B*12*12, 10)
    pg1, (H1, W1) = _im2col_pool_groups(x, 5)
    a = pallas_conv_pool_relu(pg1, p['conv1_w'], p['conv1_b'])
    # InceptionA #1                                       -> (B*12*12, 88)
    i1 = inception_forward(a, a.reshape(B, H1, W1, 10), p['incep1'])
    # conv2(5x5) + MaxPool2d(2) + ReLU, fused             -> (B*4*4, 20)
    pg2, (H2, W2) = _im2col_pool_groups(i1.reshape(B, H1, W1, 88), 5)
    c = pallas_conv_pool_relu(pg2, p['conv2_w'], p['conv2_b'])
    # InceptionA #2                                       -> (B*4*4, 88)
    i2 = inception_forward(c, c.reshape(B, H2, W2, 20), p['incep2'])
    # FC: fc_w rows were pre-permuted at init to NHWC flatten order,
    # so no activation transpose is needed here.
    feat = i2.reshape(B, H2 * W2 * 88)                    # (B, 1408)
    return pallas_matmul_bias(feat, p['fc_w'], p['fc_b'],
                              out_dtype=jnp.float32)      # (B, 10)


# ------------------------- parameter init & preparation ----------------------

def _wmat(w_oihw):
    """OIHW conv weight -> im2col matmul matrix (k*k*Cin, O)."""
    O, C, kh, kw = w_oihw.shape
    return jnp.transpose(w_oihw, (2, 3, 1, 0)).reshape(kh * kw * C, O)


def _conv_params(key, o, c, k):
    kw_, kb = jax.random.split(key)
    w = jax.random.normal(kw_, (o, c, k, k), jnp.float32) * 0.05
    b = jax.random.normal(kb, (o,), jnp.float32) * 0.05
    return (w, b)


def _init_inception_raw(key, cin):
    ks = jax.random.split(key, 7)
    return {
        'b1':   _conv_params(ks[0], 16, cin, 1),
        'b5_1': _conv_params(ks[1], 16, cin, 1),
        'b5_2': _conv_params(ks[2], 24, 16, 5),
        'b3_1': _conv_params(ks[3], 16, cin, 1),
        'b3_2': _conv_params(ks[4], 24, 16, 3),
        'b3_3': _conv_params(ks[5], 24, 24, 3),
        'bp':   _conv_params(ks[6], 24, cin, 1),
    }


def _prep_inception(q, cin):
    """Fold the InceptionA convs into the three fused matmul weights."""
    # (1) three input-sharing 1x1 convs -> (Cin, 48)
    w1 = jnp.concatenate([_wmat(q['b1'][0]), _wmat(q['b5_1'][0]),
                          _wmat(q['b3_1'][0])], axis=1)
    b1 = jnp.concatenate([q['b1'][1], q['b5_1'][1], q['b3_1'][1]])
    # (2) avg_pool2d(3,1,1,count_include_pad) + 1x1 conv == 3x3 conv with the
    #     1x1 weights tiled over the 9 taps and divided by 9 (exact).
    w_bp = jnp.tile(_wmat(q['bp'][0]) / 9.0, (9, 1))          # (9*cin, 24)
    w_52 = _wmat(q['b5_2'][0])                                # (400, 24)
    w_32 = _wmat(q['b3_2'][0])                                # (144, 24)
    kbp, k5, k3 = 9 * cin, 25 * 16, 9 * 16
    w2 = jnp.zeros((kbp + k5 + k3, 72), jnp.float32)
    w2 = w2.at[:kbp, 0:24].set(w_bp)            # bp branch  -> cols  0:24
    w2 = w2.at[kbp:kbp + k5, 24:48].set(w_52)   # 5x5 branch -> cols 24:48
    w2 = w2.at[kbp + k5:, 48:72].set(w_32)      # 3x3 branch -> cols 48:72
    b2 = jnp.concatenate([q['bp'][1], q['b5_2'][1], q['b3_2'][1]])
    return {
        'w1': w1.astype(jnp.bfloat16), 'b1': b1,
        'w2': w2.astype(jnp.bfloat16), 'b2': b2,
        'w3': _wmat(q['b3_3'][0]).astype(jnp.bfloat16), 'b3': q['b3_3'][1],
    }


def _permute_fc_rows(fc_w, C, H, W):
    """Reorder fc rows from PyTorch NCHW-flatten order to NHWC-flatten order."""
    idx = jnp.arange(C * H * W)
    hw, c = idx // C, idx % C
    return fc_w[c * (H * W) + hw, :]


def init_params(key):
    k = jax.random.split(key, 6)
    conv1 = _conv_params(k[0], 10, 1, 5)
    conv2 = _conv_params(k[1], 20, 88, 5)
    fc_w = jax.random.normal(k[2], (1408, 10), jnp.float32) * 0.05
    fc_b = jax.random.normal(k[3], (10,), jnp.float32) * 0.05
    return {
        'conv1_w': _wmat(conv1[0]).astype(jnp.bfloat16), 'conv1_b': conv1[1],
        'conv2_w': _wmat(conv2[0]).astype(jnp.bfloat16), 'conv2_b': conv2[1],
        'incep1': _prep_inception(_init_inception_raw(k[4], 10), 10),
        'incep2': _prep_inception(_init_inception_raw(k[5], 20), 20),
        'fc_w': _permute_fc_rows(fc_w, 88, 4, 4).astype(jnp.bfloat16),
        'fc_b': fc_b,
    }


# ---------------------------------- main -------------------------------------

if __name__ == "__main__":
    root = jax.random.PRNGKey(0)
    kx, kp = jax.random.split(root)
    # fc(1408, 10) implies 28x28 single-channel inputs (MNIST-like)
    x = jax.random.normal(kx, (2, 1, 28, 28), jnp.float32)
    params = init_params(kp)

    fwd = jax.jit(net_forward)
    y = jax.block_until_ready(fwd(params, x))
    assert y.shape == (2, 10) and y.dtype == jnp.float32
    print("KERNEL_OK")
</pallas_src>

<mosaic_0001>
module attributes {stable_mosaic.version = 11 : i64} {
  func.func @_conv_pool_relu_kernel(%arg0: i32, %arg1: memref<4x144x25xbf16, #tpu.memory_space<vmem>>, %arg2: memref<25x10xbf16, #tpu.memory_space<vmem>>, %arg3: memref<1x10xf32, #tpu.memory_space<vmem>>, %arg4: memref<144x10xbf16, #tpu.memory_space<vmem>>) attributes {dimension_semantics = [#tpu.dimension_semantics<parallel>], iteration_bounds = array<i64: 2>, scalar_prefetch = 0 : i64, scratch_operands = 0 : i64, tpu.core_type = #tpu.core_type<tc>, window_params = [{transform_indices = @transform_0, window_bounds = array<i64: 4, 144, 25>}, {pipeline_mode = #tpu.pipeline_mode<synchronous>, transform_indices = @transform_1, window_bounds = array<i64: 25, 10>}, {pipeline_mode = #tpu.pipeline_mode<synchronous>, transform_indices = @transform_2, window_bounds = array<i64: 1, 10>}, {transform_indices = @transform_3, window_bounds = array<i64: 144, 10>}]} {
    %c0 = arith.constant 0 : index
    %c0_0 = arith.constant 0 : index
    %0 = vector.load %arg2[%c0, %c0_0] : memref<25x10xbf16, #tpu.memory_space<vmem>>, vector<25x10xbf16>
    %c0_1 = arith.constant 0 : index
    %c0_2 = arith.constant 0 : index
    %c0_3 = arith.constant 0 : index
    %1 = vector.load %arg1[%c0_1, %c0_2, %c0_3] : memref<4x144x25xbf16, #tpu.memory_space<vmem>>, vector<1x144x25xbf16>
    %2 = vector.shape_cast %1 : vector<1x144x25xbf16> to vector<144x25xbf16>
    %cst = arith.constant dense<0.000000e+00> : vector<144x10xf32>
    %3 = tpu.matmul %2, %0, %cst {dimension_numbers = #tpu.dot_dimension_numbers<[1], [0], [0], [1], [0, 0, 1, 1], [], []>} : vector<144x25xbf16>, vector<25x10xbf16>, vector<144x10xf32> -> vector<144x10xf32>
    %c1 = arith.constant 1 : index
    %c0_4 = arith.constant 0 : index
    %c0_5 = arith.constant 0 : index
    %4 = vector.load %arg1[%c1, %c0_4, %c0_5] : memref<4x144x25xbf16, #tpu.memory_space<vmem>>, vector<1x144x25xbf16>
    %5 = vector.shape_cast %4 : vector<1x144x25xbf16> to vector<144x25xbf16>
    %cst_6 = arith.constant dense<0.000000e+00> : vector<144x10xf32>
    %6 = tpu.matmul %5, %0, %cst_6 {dimension_numbers = #tpu.dot_dimension_numbers<[1], [0], [0], [1], [0, 0, 1, 1], [], []>} : vector<144x25xbf16>, vector<25x10xbf16>, vector<144x10xf32> -> vector<144x10xf32>
    %7 = arith.maximumf %3, %6 : vector<144x10xf32>
    %c2 = arith.constant 2 : index
    %c0_7 = arith.constant 0 : index
    %c0_8 = arith.constant 0 : index
    %8 = vector.load %arg1[%c2, %c0_7, %c0_8] : memref<4x144x25xbf16, #tpu.memory_space<vmem>>, vector<1x144x25xbf16>
    %9 = vector.shape_cast %8 : vector<1x144x25xbf16> to vector<144x25xbf16>
    %cst_9 = arith.constant dense<0.000000e+00> : vector<144x10xf32>
    %10 = tpu.matmul %9, %0, %cst_9 {dimension_numbers = #tpu.dot_dimension_numbers<[1], [0], [0], [1], [0, 0, 1, 1], [], []>} : vector<144x25xbf16>, vector<25x10xbf16>, vector<144x10xf32> -> vector<144x10xf32>
    %11 = arith.maximumf %7, %10 : vector<144x10xf32>
    %c3 = arith.constant 3 : index
    %c0_10 = arith.constant 0 : index
    %c0_11 = arith.constant 0 : index
    %12 = vector.load %arg1[%c3, %c0_10, %c0_11] : memref<4x144x25xbf16, #tpu.memory_space<vmem>>, vector<1x144x25xbf16>
    %13 = vector.shape_cast %12 : vector<1x144x25xbf16> to vector<144x25xbf16>
    %cst_12 = arith.constant dense<0.000000e+00> : vector<144x10xf32>
    %14 = tpu.matmul %13, %0, %cst_12 {dimension_numbers = #tpu.dot_dimension_numbers<[1], [0], [0], [1], [0, 0, 1, 1], [], []>} : vector<144x25xbf16>, vector<25x10xbf16>, vector<144x10xf32> -> vector<144x10xf32>
    %15 = arith.maximumf %11, %14 : vector<144x10xf32>
    %c0_13 = arith.constant 0 : index
    %c0_14 = arith.constant 0 : index
    %16 = vector.load %arg3[%c0_13, %c0_14] : memref<1x10xf32, #tpu.memory_space<vmem>>, vector<1x10xf32>
    %17 = vector.broadcast %16 : vector<1x10xf32> to vector<144x10xf32>
    %18 = arith.addf %15, %17 : vector<144x10xf32>
    %cst_15 = arith.constant 0.000000e+00 : f32
    %19 = vector.broadcast %cst_15 : f32 to vector<144x10xf32>
    %20 = arith.maximumf %18, %19 : vector<144x10xf32>
    %21 = arith.truncf %20 : vector<144x10xf32> to vector<144x10xbf16>
    %c0_16 = arith.constant 0 : index
    %c0_17 = arith.constant 0 : index
    %22 = vector.load %arg4[%c0_16, %c0_17] : memref<144x10xbf16, #tpu.memory_space<vmem>>, vector<144x10xbf16>
    tpu.vector_store %arg4[%c0_16, %c0_17], %21 {strides = array<i32>} : memref<144x10xbf16, #tpu.memory_space<vmem>>, vector<144x10xbf16>,
    return
  }
  func.func @transform_0(%arg0: i32) -> (i32, i32, i32) {
    %c0_i32 = arith.constant 0 : i32
    %c0_i32_0 = arith.constant 0 : i32
    %c0_i32_1 = arith.constant 0 : i32
    return %c0_i32, %arg0, %c0_i32_0 : i32, i32, i32
  }
  func.func @transform_1(%arg0: i32) -> (i32, i32) {
    %c0_i32 = arith.constant 0 : i32
    %c0_i32_0 = arith.constant 0 : i32
    %c0_i32_1 = arith.constant 0 : i32
    return %c0_i32, %c0_i32_0 : i32, i32
  }
  func.func @transform_2(%arg0: i32) -> (i32, i32) {
    %c0_i32 = arith.constant 0 : i32
    %c0_i32_0 = arith.constant 0 : i32
    %c0_i32_1 = arith.constant 0 : i32
    return %c0_i32, %c0_i32_0 : i32, i32
  }
  func.func @transform_3(%arg0: i32) -> (i32, i32) {
    %c0_i32 = arith.constant 0 : i32
    %c0_i32_0 = arith.constant 0 : i32
    return %arg0, %c0_i32 : i32, i32
  }
}

module attributes {stable_mosaic.version = 11 : i64} {
  func.func @_matmul_bias_kernel(%arg0: i32, %arg1: memref<144x10xbf16, #tpu.memory_space<vmem>>, %arg2: memref<10x48xbf16, #tpu.memory_space<vmem>>, %arg3: memref<1x48xf32, #tpu.memory_space<vmem>>, %arg4: memref<144x48xbf16, #tpu.memory_space<vmem>>) attributes {dimension_semantics = [#tpu.dimension_semantics<parallel>], iteration_bounds = array<i64: 2>, scalar_prefetch = 0 : i64, scratch_operands = 0 : i64, tpu.core_type = #tpu.core_type<tc>, window_params = [{transform_indices = @transform_0, window_bounds = array<i64: 144, 10>}, {pipeline_mode = #tpu.pipeline_mode<synchronous>, transform_indices = @transform_1, window_bounds = array<i64: 10, 48>}, {pipeline_mode = #tpu.pipeline_mode<synchronous>, transform_indices = @transform_2, window_bounds = array<i64: 1, 48>}, {transform_indices = @transform_3, window_bounds = array<i64: 144, 48>}]} {
    %c0 = arith.constant 0 : index
    %c0_0 = arith.constant 0 : index
    %0 = vector.load %arg1[%c0, %c0_0] : memref<144x10xbf16, #tpu.memory_space<vmem>>, vector<144x10xbf16>
    %c0_1 = arith.constant 0 : index
    %c0_2 = arith.constant 0 : index
    %1 = vector.load %arg2[%c0_1, %c0_2] : memref<10x48xbf16, #tpu.memory_space<vmem>>, vector<10x48xbf16>
    %cst = arith.constant dense<0.000000e+00> : vector<144x48xf32>
    %2 = tpu.matmul %0, %1, %cst {dimension_numbers = #tpu.dot_dimension_numbers<[1], [0], [0], [1], [0, 0, 1, 1], [], []>} : vector<144x10xbf16>, vector<10x48xbf16>, vector<144x48xf32> -> vector<144x48xf32>
    %c0_3 = arith.constant 0 : index
    %c0_4 = arith.constant 0 : index
    %3 = vector.load %arg3[%c0_3, %c0_4] : memref<1x48xf32, #tpu.memory_space<vmem>>, vector<1x48xf32>
    %4 = vector.broadcast %3 : vector<1x48xf32> to vector<144x48xf32>
    %5 = arith.addf %2, %4 : vector<144x48xf32>
    %6 = arith.truncf %5 : vector<144x48xf32> to vector<144x48xbf16>
    %c0_5 = arith.constant 0 : index
    %c0_6 = arith.constant 0 : index
    %7 = vector.load %arg4[%c0_5, %c0_6] : memref<144x48xbf16, #tpu.memory_space<vmem>>, vector<144x48xbf16>
    tpu.vector_store %arg4[%c0_5, %c0_6], %6 {strides = array<i32>} : memref<144x48xbf16, #tpu.memory_space<vmem>>, vector<144x48xbf16>,
    return
  }
  func.func @transform_0(%arg0: i32) -> (i32, i32) {
    %c0_i32 = arith.constant 0 : i32
    %c0_i32_0 = arith.constant 0 : i32
    return %arg0, %c0_i32 : i32, i32
  }
  func.func @transform_1(%arg0: i32) -> (i32, i32) {
    %c0_i32 = arith.constant 0 : i32
    %c0_i32_0 = arith.constant 0 : i32
    %c0_i32_1 = arith.constant 0 : i32
    return %c0_i32, %c0_i32_0 : i32, i32
  }
  func.func @transform_2(%arg0: i32) -> (i32, i32) {
    %c0_i32 = arith.constant 0 : i32
    %c0_i32_0 = arith.constant 0 : i32
    %c0_i32_1 = arith.constant 0 : i32
    return %c0_i32, %c0_i32_0 : i32, i32
  }
  func.func @transform_3(%arg0: i32) -> (i32, i32) {
    %c0_i32 = arith.constant 0 : i32
    %c0_i32_0 = arith.constant 0 : i32
    return %arg0, %c0_i32 : i32, i32
  }
}

module attributes {stable_mosaic.version = 11 : i64} {
  func.func @_matmul_bias_kernel(%arg0: i32, %arg1: memref<144x634xbf16, #tpu.memory_space<vmem>>, %arg2: memref<634x72xbf16, #tpu.memory_space<vmem>>, %arg3: memref<1x72xf32, #tpu.memory_space<vmem>>, %arg4: memref<144x72xbf16, #tpu.memory_space<vmem>>) attributes {dimension_semantics = [#tpu.dimension_semantics<parallel>], iteration_bounds = array<i64: 2>, scalar_prefetch = 0 : i64, scratch_operands = 0 : i64, tpu.core_type = #tpu.core_type<tc>, window_params = [{transform_indices = @transform_0, window_bounds = array<i64: 144, 634>}, {pipeline_mode = #tpu.pipeline_mode<synchronous>, transform_indices = @transform_1, window_bounds = array<i64: 634, 72>}, {pipeline_mode = #tpu.pipeline_mode<synchronous>, transform_indices = @transform_2, window_bounds = array<i64: 1, 72>}, {transform_indices = @transform_3, window_bounds = array<i64: 144, 72>}]} {
    %c0 = arith.constant 0 : index
    %c0_0 = arith.constant 0 : index
    %0 = vector.load %arg1[%c0, %c0_0] : memref<144x634xbf16, #tpu.memory_space<vmem>>, vector<144x634xbf16>
    %c0_1 = arith.constant 0 : index
    %c0_2 = arith.constant 0 : index
    %1 = vector.load %arg2[%c0_1, %c0_2] : memref<634x72xbf16, #tpu.memory_space<vmem>>, vector<634x72xbf16>
    %cst = arith.constant dense<0.000000e+00> : vector<144x72xf32>
    %2 = tpu.matmul %0, %1, %cst {dimension_numbers = #tpu.dot_dimension_numbers<[1], [0], [0], [1], [0, 0, 1, 1], [], []>} : vector<144x634xbf16>, vector<634x72xbf16>, vector<144x72xf32> -> vector<144x72xf32>
    %c0_3 = arith.constant 0 : index
    %c0_4 = arith.constant 0 : index
    %3 = vector.load %arg3[%c0_3, %c0_4] : memref<1x72xf32, #tpu.memory_space<vmem>>, vector<1x72xf32>
    %4 = vector.broadcast %3 : vector<1x72xf32> to vector<144x72xf32>
    %5 = arith.addf %2, %4 : vector<144x72xf32>
    %6 = arith.truncf %5 : vector<144x72xf32> to vector<144x72xbf16>
    %c0_5 = arith.constant 0 : index
    %c0_6 = arith.constant 0 : index
    %7 = vector.load %arg4[%c0_5, %c0_6] : memref<144x72xbf16, #tpu.memory_space<vmem>>, vector<144x72xbf16>
    tpu.vector_store %arg4[%c0_5, %c0_6], %6 {strides = array<i32>} : memref<144x72xbf16, #tpu.memory_space<vmem>>, vector<144x72xbf16>,
    return
  }
  func.func @transform_0(%arg0: i32) -> (i32, i32) {
    %c0_i32 = arith.constant 0 : i32
    %c0_i32_0 = arith.constant 0 : i32
    return %arg0, %c0_i32 : i32, i32
  }
  func.func @transform_1(%arg0: i32) -> (i32, i32) {
    %c0_i32 = arith.constant 0 : i32
    %c0_i32_0 = arith.constant 0 : i32
    %c0_i32_1 = arith.constant 0 : i32
    return %c0_i32, %c0_i32_0 : i32, i32
  }
  func.func @transform_2(%arg0: i32) -> (i32, i32) {
    %c0_i32 = arith.constant 0 : i32
    %c0_i32_0 = arith.constant 0 : i32
    %c0_i32_1 = arith.constant 0 : i32
    return %c0_i32, %c0_i32_0 : i32, i32
  }
  func.func @transform_3(%arg0: i32) -> (i32, i32) {
    %c0_i32 = arith.constant 0 : i32
    %c0_i32_0 = arith.constant 0 : i32
    return %arg0, %c0_i32 : i32, i32
  }
}

module attributes {stable_mosaic.version = 11 : i64} {
  func.func @_matmul_bias_kernel(%arg0: i32, %arg1: memref<144x216xbf16, #tpu.memory_space<vmem>>, %arg2: memref<216x24xbf16, #tpu.memory_space<vmem>>, %arg3: memref<1x24xf32, #tpu.memory_space<vmem>>, %arg4: memref<144x24xbf16, #tpu.memory_space<vmem>>) attributes {dimension_semantics = [#tpu.dimension_semantics<parallel>], iteration_bounds = array<i64: 2>, scalar_prefetch = 0 : i64, scratch_operands = 0 : i64, tpu.core_type = #tpu.core_type<tc>, window_params = [{transform_indices = @transform_0, window_bounds = array<i64: 144, 216>}, {pipeline_mode = #tpu.pipeline_mode<synchronous>, transform_indices = @transform_1, window_bounds = array<i64: 216, 24>}, {pipeline_mode = #tpu.pipeline_mode<synchronous>, transform_indices = @transform_2, window_bounds = array<i64: 1, 24>}, {transform_indices = @transform_3, window_bounds = array<i64: 144, 24>}]} {
    %c0 = arith.constant 0 : index
    %c0_0 = arith.constant 0 : index
    %0 = vector.load %arg1[%c0, %c0_0] : memref<144x216xbf16, #tpu.memory_space<vmem>>, vector<144x216xbf16>
    %c0_1 = arith.constant 0 : index
    %c0_2 = arith.constant 0 : index
    %1 = vector.load %arg2[%c0_1, %c0_2] : memref<216x24xbf16, #tpu.memory_space<vmem>>, vector<216x24xbf16>
    %cst = arith.constant dense<0.000000e+00> : vector<144x24xf32>
    %2 = tpu.matmul %0, %1, %cst {dimension_numbers = #tpu.dot_dimension_numbers<[1], [0], [0], [1], [0, 0, 1, 1], [], []>} : vector<144x216xbf16>, vector<216x24xbf16>, vector<144x24xf32> -> vector<144x24xf32>
    %c0_3 = arith.constant 0 : index
    %c0_4 = arith.constant 0 : index
    %3 = vector.load %arg3[%c0_3, %c0_4] : memref<1x24xf32, #tpu.memory_space<vmem>>, vector<1x24xf32>
    %4 = vector.broadcast %3 : vector<1x24xf32> to vector<144x24xf32>
    %5 = arith.addf %2, %4 : vector<144x24xf32>
    %6 = arith.truncf %5 : vector<144x24xf32> to vector<144x24xbf16>
    %c0_5 = arith.constant 0 : index
    %c0_6 = arith.constant 0 : index
    %7 = vector.load %arg4[%c0_5, %c0_6] : memref<144x24xbf16, #tpu.memory_space<vmem>>, vector<144x24xbf16>
    tpu.vector_store %arg4[%c0_5, %c0_6], %6 {strides = array<i32>} : memref<144x24xbf16, #tpu.memory_space<vmem>>, vector<144x24xbf16>,
    return
  }
  func.func @transform_0(%arg0: i32) -> (i32, i32) {
    %c0_i32 = arith.constant 0 : i32
    %c0_i32_0 = arith.constant 0 : i32
    return %arg0, %c0_i32 : i32, i32
  }
  func.func @transform_1(%arg0: i32) -> (i32, i32) {
    %c0_i32 = arith.constant 0 : i32
    %c0_i32_0 = arith.constant 0 : i32
    %c0_i32_1 = arith.constant 0 : i32
    return %c0_i32, %c0_i32_0 : i32, i32
  }
  func.func @transform_2(%arg0: i32) -> (i32, i32) {
    %c0_i32 = arith.constant 0 : i32
    %c0_i32_0 = arith.constant 0 : i32
    %c0_i32_1 = arith.constant 0 : i32
    return %c0_i32, %c0_i32_0 : i32, i32
  }
  func.func @transform_3(%arg0: i32) -> (i32, i32) {
    %c0_i32 = arith.constant 0 : i32
    %c0_i32_0 = arith.constant 0 : i32
    return %arg0, %c0_i32 : i32, i32
  }
}

module attributes {stable_mosaic.version = 11 : i64} {
  func.func @_conv_pool_relu_kernel(%arg0: i32, %arg1: memref<4x16x2200xbf16, #tpu.memory_space<vmem>>, %arg2: memref<2200x20xbf16, #tpu.memory_space<vmem>>, %arg3: memref<1x20xf32, #tpu.memory_space<vmem>>, %arg4: memref<16x20xbf16, #tpu.memory_space<vmem>>) attributes {dimension_semantics = [#tpu.dimension_semantics<parallel>], iteration_bounds = array<i64: 2>, scalar_prefetch = 0 : i64, scratch_operands = 0 : i64, tpu.core_type = #tpu.core_type<tc>, window_params = [{transform_indices = @transform_0, window_bounds = array<i64: 4, 16, 2200>}, {pipeline_mode = #tpu.pipeline_mode<synchronous>, transform_indices = @transform_1, window_bounds = array<i64: 2200, 20>}, {pipeline_mode = #tpu.pipeline_mode<synchronous>, transform_indices = @transform_2, window_bounds = array<i64: 1, 20>}, {transform_indices = @transform_3, window_bounds = array<i64: 16, 20>}]} {
    %c0 = arith.constant 0 : index
    %c0_0 = arith.constant 0 : index
    %0 = vector.load %arg2[%c0, %c0_0] : memref<2200x20xbf16, #tpu.memory_space<vmem>>, vector<2200x20xbf16>
    %c0_1 = arith.constant 0 : index
    %c0_2 = arith.constant 0 : index
    %c0_3 = arith.constant 0 : index
    %1 = vector.load %arg1[%c0_1, %c0_2, %c0_3] : memref<4x16x2200xbf16, #tpu.memory_space<vmem>>, vector<1x16x2200xbf16>
    %2 = vector.shape_cast %1 : vector<1x16x2200xbf16> to vector<16x2200xbf16>
    %cst = arith.constant dense<0.000000e+00> : vector<16x20xf32>
    %3 = tpu.matmul %2, %0, %cst {dimension_numbers = #tpu.dot_dimension_numbers<[1], [0], [0], [1], [0, 0, 1, 1], [], []>} : vector<16x2200xbf16>, vector<2200x20xbf16>, vector<16x20xf32> -> vector<16x20xf32>
    %c1 = arith.constant 1 : index
    %c0_4 = arith.constant 0 : index
    %c0_5 = arith.constant 0 : index
    %4 = vector.load %arg1[%c1, %c0_4, %c0_5] : memref<4x16x2200xbf16, #tpu.memory_space<vmem>>, vector<1x16x2200xbf16>
    %5 = vector.shape_cast %4 : vector<1x16x2200xbf16> to vector<16x2200xbf16>
    %cst_6 = arith.constant dense<0.000000e+00> : vector<16x20xf32>
    %6 = tpu.matmul %5, %0, %cst_6 {dimension_numbers = #tpu.dot_dimension_numbers<[1], [0], [0], [1], [0, 0, 1, 1], [], []>} : vector<16x2200xbf16>, vector<2200x20xbf16>, vector<16x20xf32> -> vector<16x20xf32>
    %7 = arith.maximumf %3, %6 : vector<16x20xf32>
    %c2 = arith.constant 2 : index
    %c0_7 = arith.constant 0 : index
    %c0_8 = arith.constant 0 : index
    %8 = vector.load %arg1[%c2, %c0_7, %c0_8] : memref<4x16x2200xbf16, #tpu.memory_space<vmem>>, vector<1x16x2200xbf16>
    %9 = vector.shape_cast %8 : vector<1x16x2200xbf16> to vector<16x2200xbf16>
    %cst_9 = arith.constant dense<0.000000e+00> : vector<16x20xf32>
    %10 = tpu.matmul %9, %0, %cst_9 {dimension_numbers = #tpu.dot_dimension_numbers<[1], [0], [0], [1], [0, 0, 1, 1], [], []>} : vector<16x2200xbf16>, vector<2200x20xbf16>, vector<16x20xf32> -> vector<16x20xf32>
    %11 = arith.maximumf %7, %10 : vector<16x20xf32>
    %c3 = arith.constant 3 : index
    %c0_10 = arith.constant 0 : index
    %c0_11 = arith.constant 0 : index
    %12 = vector.load %arg1[%c3, %c0_10, %c0_11] : memref<4x16x2200xbf16, #tpu.memory_space<vmem>>, vector<1x16x2200xbf16>
    %13 = vector.shape_cast %12 : vector<1x16x2200xbf16> to vector<16x2200xbf16>
    %cst_12 = arith.constant dense<0.000000e+00> : vector<16x20xf32>
    %14 = tpu.matmul %13, %0, %cst_12 {dimension_numbers = #tpu.dot_dimension_numbers<[1], [0], [0], [1], [0, 0, 1, 1], [], []>} : vector<16x2200xbf16>, vector<2200x20xbf16>, vector<16x20xf32> -> vector<16x20xf32>
    %15 = arith.maximumf %11, %14 : vector<16x20xf32>
    %c0_13 = arith.constant 0 : index
    %c0_14 = arith.constant 0 : index
    %16 = vector.load %arg3[%c0_13, %c0_14] : memref<1x20xf32, #tpu.memory_space<vmem>>, vector<1x20xf32>
    %17 = vector.broadcast %16 : vector<1x20xf32> to vector<16x20xf32>
    %18 = arith.addf %15, %17 : vector<16x20xf32>
    %cst_15 = arith.constant 0.000000e+00 : f32
    %19 = vector.broadcast %cst_15 : f32 to vector<16x20xf32>
    %20 = arith.maximumf %18, %19 : vector<16x20xf32>
    %21 = arith.truncf %20 : vector<16x20xf32> to vector<16x20xbf16>
    %c0_16 = arith.constant 0 : index
    %c0_17 = arith.constant 0 : index
    %22 = vector.load %arg4[%c0_16, %c0_17] : memref<16x20xbf16, #tpu.memory_space<vmem>>, vector<16x20xbf16>
    tpu.vector_store %arg4[%c0_16, %c0_17], %21 {strides = array<i32>} : memref<16x20xbf16, #tpu.memory_space<vmem>>, vector<16x20xbf16>,
    return
  }
  func.func @transform_0(%arg0: i32) -> (i32, i32, i32) {
    %c0_i32 = arith.constant 0 : i32
    %c0_i32_0 = arith.constant 0 : i32
    %c0_i32_1 = arith.constant 0 : i32
    return %c0_i32, %arg0, %c0_i32_0 : i32, i32, i32
  }
  func.func @transform_1(%arg0: i32) -> (i32, i32) {
    %c0_i32 = arith.constant 0 : i32
    %c0_i32_0 = arith.constant 0 : i32
    %c0_i32_1 = arith.constant 0 : i32
    return %c0_i32, %c0_i32_0 : i32, i32
  }
  func.func @transform_2(%arg0: i32) -> (i32, i32) {
    %c0_i32 = arith.constant 0 : i32
    %c0_i32_0 = arith.constant 0 : i32
    %c0_i32_1 = arith.constant 0 : i32
    return %c0_i32, %c0_i32_0 : i32, i32
  }
  func.func @transform_3(%arg0: i32) -> (i32, i32) {
    %c0_i32 = arith.constant 0 : i32
    %c0_i32_0 = arith.constant 0 : i32
    return %arg0, %c0_i32 : i32, i32
  }
}

module attributes {stable_mosaic.version = 11 : i64} {
  func.func @_matmul_bias_kernel(%arg0: i32, %arg1: memref<16x20xbf16, #tpu.memory_space<vmem>>, %arg2: memref<20x48xbf16, #tpu.memory_space<vmem>>, %arg3: memref<1x48xf32, #tpu.memory_space<vmem>>, %arg4: memref<16x48xbf16, #tpu.memory_space<vmem>>) attributes {dimension_semantics = [#tpu.dimension_semantics<parallel>], iteration_bounds = array<i64: 2>, scalar_prefetch = 0 : i64, scratch_operands = 0 : i64, tpu.core_type = #tpu.core_type<tc>, window_params = [{transform_indices = @transform_0, window_bounds = array<i64: 16, 20>}, {pipeline_mode = #tpu.pipeline_mode<synchronous>, transform_indices = @transform_1, window_bounds = array<i64: 20, 48>}, {pipeline_mode = #tpu.pipeline_mode<synchronous>, transform_indices = @transform_2, window_bounds = array<i64: 1, 48>}, {transform_indices = @transform_3, window_bounds = array<i64: 16, 48>}]} {
    %c0 = arith.constant 0 : index
    %c0_0 = arith.constant 0 : index
    %0 = vector.load %arg1[%c0, %c0_0] : memref<16x20xbf16, #tpu.memory_space<vmem>>, vector<16x20xbf16>
    %c0_1 = arith.constant 0 : index
    %c0_2 = arith.constant 0 : index
    %1 = vector.load %arg2[%c0_1, %c0_2] : memref<20x48xbf16, #tpu.memory_space<vmem>>, vector<20x48xbf16>
    %cst = arith.constant dense<0.000000e+00> : vector<16x48xf32>
    %2 = tpu.matmul %0, %1, %cst {dimension_numbers = #tpu.dot_dimension_numbers<[1], [0], [0], [1], [0, 0, 1, 1], [], []>} : vector<16x20xbf16>, vector<20x48xbf16>, vector<16x48xf32> -> vector<16x48xf32>
    %c0_3 = arith.constant 0 : index
    %c0_4 = arith.constant 0 : index
    %3 = vector.load %arg3[%c0_3, %c0_4] : memref<1x48xf32, #tpu.memory_space<vmem>>, vector<1x48xf32>
    %4 = vector.broadcast %3 : vector<1x48xf32> to vector<16x48xf32>
    %5 = arith.addf %2, %4 : vector<16x48xf32>
    %6 = arith.truncf %5 : vector<16x48xf32> to vector<16x48xbf16>
    %c0_5 = arith.constant 0 : index
    %c0_6 = arith.constant 0 : index
    %7 = vector.load %arg4[%c0_5, %c0_6] : memref<16x48xbf16, #tpu.memory_space<vmem>>, vector<16x48xbf16>
    tpu.vector_store %arg4[%c0_5, %c0_6], %6 {strides = array<i32>} : memref<16x48xbf16, #tpu.memory_space<vmem>>, vector<16x48xbf16>,
    return
  }
  func.func @transform_0(%arg0: i32) -> (i32, i32) {
    %c0_i32 = arith.constant 0 : i32
    %c0_i32_0 = arith.constant 0 : i32
    return %arg0, %c0_i32 : i32, i32
  }
  func.func @transform_1(%arg0: i32) -> (i32, i32) {
    %c0_i32 = arith.constant 0 : i32
    %c0_i32_0 = arith.constant 0 : i32
    %c0_i32_1 = arith.constant 0 : i32
    return %c0_i32, %c0_i32_0 : i32, i32
  }
  func.func @transform_2(%arg0: i32) -> (i32, i32) {
    %c0_i32 = arith.constant 0 : i32
    %c0_i32_0 = arith.constant 0 : i32
    %c0_i32_1 = arith.constant 0 : i32
    return %c0_i32, %c0_i32_0 : i32, i32
  }
  func.func @transform_3(%arg0: i32) -> (i32, i32) {
    %c0_i32 = arith.constant 0 : i32
    %c0_i32_0 = arith.constant 0 : i32
    return %arg0, %c0_i32 : i32, i32
  }
}

module attributes {stable_mosaic.version = 11 : i64} {
  func.func @_matmul_bias_kernel(%arg0: i32, %arg1: memref<16x724xbf16, #tpu.memory_space<vmem>>, %arg2: memref<724x72xbf16, #tpu.memory_space<vmem>>, %arg3: memref<1x72xf32, #tpu.memory_space<vmem>>, %arg4: memref<16x72xbf16, #tpu.memory_space<vmem>>) attributes {dimension_semantics = [#tpu.dimension_semantics<parallel>], iteration_bounds = array<i64: 2>, scalar_prefetch = 0 : i64, scratch_operands = 0 : i64, tpu.core_type = #tpu.core_type<tc>, window_params = [{transform_indices = @transform_0, window_bounds = array<i64: 16, 724>}, {pipeline_mode = #tpu.pipeline_mode<synchronous>, transform_indices = @transform_1, window_bounds = array<i64: 724, 72>}, {pipeline_mode = #tpu.pipeline_mode<synchronous>, transform_indices = @transform_2, window_bounds = array<i64: 1, 72>}, {transform_indices = @transform_3, window_bounds = array<i64: 16, 72>}]} {
    %c0 = arith.constant 0 : index
    %c0_0 = arith.constant 0 : index
    %0 = vector.load %arg1[%c0, %c0_0] : memref<16x724xbf16, #tpu.memory_space<vmem>>, vector<16x724xbf16>
    %c0_1 = arith.constant 0 : index
    %c0_2 = arith.constant 0 : index
    %1 = vector.load %arg2[%c0_1, %c0_2] : memref<724x72xbf16, #tpu.memory_space<vmem>>, vector<724x72xbf16>
    %cst = arith.constant dense<0.000000e+00> : vector<16x72xf32>
    %2 = tpu.matmul %0, %1, %cst {dimension_numbers = #tpu.dot_dimension_numbers<[1], [0], [0], [1], [0, 0, 1, 1], [], []>} : vector<16x724xbf16>, vector<724x72xbf16>, vector<16x72xf32> -> vector<16x72xf32>
    %c0_3 = arith.constant 0 : index
    %c0_4 = arith.constant 0 : index
    %3 = vector.load %arg3[%c0_3, %c0_4] : memref<1x72xf32, #tpu.memory_space<vmem>>, vector<1x72xf32>
    %4 = vector.broadcast %3 : vector<1x72xf32> to vector<16x72xf32>
    %5 = arith.addf %2, %4 : vector<16x72xf32>
    %6 = arith.truncf %5 : vector<16x72xf32> to vector<16x72xbf16>
    %c0_5 = arith.constant 0 : index
    %c0_6 = arith.constant 0 : index
    %7 = vector.load %arg4[%c0_5, %c0_6] : memref<16x72xbf16, #tpu.memory_space<vmem>>, vector<16x72xbf16>
    tpu.vector_store %arg4[%c0_5, %c0_6], %6 {strides = array<i32>} : memref<16x72xbf16, #tpu.memory_space<vmem>>, vector<16x72xbf16>,
    return
  }
  func.func @transform_0(%arg0: i32) -> (i32, i32) {
    %c0_i32 = arith.constant 0 : i32
    %c0_i32_0 = arith.constant 0 : i32
    return %arg0, %c0_i32 : i32, i32
  }
  func.func @transform_1(%arg0: i32) -> (i32, i32) {
    %c0_i32 = arith.constant 0 : i32
    %c0_i32_0 = arith.constant 0 : i32
    %c0_i32_1 = arith.constant 0 : i32
    return %c0_i32, %c0_i32_0 : i32, i32
  }
  func.func @transform_2(%arg0: i32) -> (i32, i32) {
    %c0_i32 = arith.constant 0 : i32
    %c0_i32_0 = arith.constant 0 : i32
    %c0_i32_1 = arith.constant 0 : i32
    return %c0_i32, %c0_i32_0 : i32, i32
  }
  func.func @transform_3(%arg0: i32) -> (i32, i32) {
    %c0_i32 = arith.constant 0 : i32
    %c0_i32_0 = arith.constant 0 : i32
    return %arg0, %c0_i32 : i32, i32
  }
}

module attributes {stable_mosaic.version = 11 : i64} {
  func.func @_matmul_bias_kernel(%arg0: i32, %arg1: memref<16x216xbf16, #tpu.memory_space<vmem>>, %arg2: memref<216x24xbf16, #tpu.memory_space<vmem>>, %arg3: memref<1x24xf32, #tpu.memory_space<vmem>>, %arg4: memref<16x24xbf16, #tpu.memory_space<vmem>>) attributes {dimension_semantics = [#tpu.dimension_semantics<parallel>], iteration_bounds = array<i64: 2>, scalar_prefetch = 0 : i64, scratch_operands = 0 : i64, tpu.core_type = #tpu.core_type<tc>, window_params = [{transform_indices = @transform_0, window_bounds = array<i64: 16, 216>}, {pipeline_mode = #tpu.pipeline_mode<synchronous>, transform_indices = @transform_1, window_bounds = array<i64: 216, 24>}, {pipeline_mode = #tpu.pipeline_mode<synchronous>, transform_indices = @transform_2, window_bounds = array<i64: 1, 24>}, {transform_indices = @transform_3, window_bounds = array<i64: 16, 24>}]} {
    %c0 = arith.constant 0 : index
    %c0_0 = arith.constant 0 : index
    %0 = vector.load %arg1[%c0, %c0_0] : memref<16x216xbf16, #tpu.memory_space<vmem>>, vector<16x216xbf16>
    %c0_1 = arith.constant 0 : index
    %c0_2 = arith.constant 0 : index
    %1 = vector.load %arg2[%c0_1, %c0_2] : memref<216x24xbf16, #tpu.memory_space<vmem>>, vector<216x24xbf16>
    %cst = arith.constant dense<0.000000e+00> : vector<16x24xf32>
    %2 = tpu.matmul %0, %1, %cst {dimension_numbers = #tpu.dot_dimension_numbers<[1], [0], [0], [1], [0, 0, 1, 1], [], []>} : vector<16x216xbf16>, vector<216x24xbf16>, vector<16x24xf32> -> vector<16x24xf32>
    %c0_3 = arith.constant 0 : index
    %c0_4 = arith.constant 0 : index
    %3 = vector.load %arg3[%c0_3, %c0_4] : memref<1x24xf32, #tpu.memory_space<vmem>>, vector<1x24xf32>
    %4 = vector.broadcast %3 : vector<1x24xf32> to vector<16x24xf32>
    %5 = arith.addf %2, %4 : vector<16x24xf32>
    %6 = arith.truncf %5 : vector<16x24xf32> to vector<16x24xbf16>
    %c0_5 = arith.constant 0 : index
    %c0_6 = arith.constant 0 : index
    %7 = vector.load %arg4[%c0_5, %c0_6] : memref<16x24xbf16, #tpu.memory_space<vmem>>, vector<16x24xbf16>
    tpu.vector_store %arg4[%c0_5, %c0_6], %6 {strides = array<i32>} : memref<16x24xbf16, #tpu.memory_space<vmem>>, vector<16x24xbf16>,
    return
  }
  func.func @transform_0(%arg0: i32) -> (i32, i32) {
    %c0_i32 = arith.constant 0 : i32
    %c0_i32_0 = arith.constant 0 : i32
    return %arg0, %c0_i32 : i32, i32
  }
  func.func @transform_1(%arg0: i32) -> (i32, i32) {
    %c0_i32 = arith.constant 0 : i32
    %c0_i32_0 = arith.constant 0 : i32
    %c0_i32_1 = arith.constant 0 : i32
    return %c0_i32, %c0_i32_0 : i32, i32
  }
  func.func @transform_2(%arg0: i32) -> (i32, i32) {
    %c0_i32 = arith.constant 0 : i32
    %c0_i32_0 = arith.constant 0 : i32
    %c0_i32_1 = arith.constant 0 : i32
    return %c0_i32, %c0_i32_0 : i32, i32
  }
  func.func @transform_3(%arg0: i32) -> (i32, i32) {
    %c0_i32 = arith.constant 0 : i32
    %c0_i32_0 = arith.constant 0 : i32
    return %arg0, %c0_i32 : i32, i32
  }
}

module attributes {stable_mosaic.version = 11 : i64} {
  func.func @_matmul_bias_kernel(%arg0: i32, %arg1: memref<2x1408xbf16, #tpu.memory_space<vmem>>, %arg2: memref<1408x10xbf16, #tpu.memory_space<vmem>>, %arg3: memref<1x10xf32, #tpu.memory_space<vmem>>, %arg4: memref<2x10xf32, #tpu.memory_space<vmem>>) attributes {dimension_semantics = [#tpu.dimension_semantics<parallel>], iteration_bounds = array<i64: 1>, scalar_prefetch = 0 : i64, scratch_operands = 0 : i64, tpu.core_type = #tpu.core_type<tc>, window_params = [{transform_indices = @transform_0, window_bounds = array<i64: 2, 1408>}, {pipeline_mode = #tpu.pipeline_mode<synchronous>, transform_indices = @transform_1, window_bounds = array<i64: 1408, 10>}, {pipeline_mode = #tpu.pipeline_mode<synchronous>, transform_indices = @transform_2, window_bounds = array<i64: 1, 10>}, {transform_indices = @transform_3, window_bounds = array<i64: 2, 10>}]} {
    %c0 = arith.constant 0 : index
    %c0_0 = arith.constant 0 : index
    %0 = vector.load %arg1[%c0, %c0_0] : memref<2x1408xbf16, #tpu.memory_space<vmem>>, vector<2x1408xbf16>
    %c0_1 = arith.constant 0 : index
    %c0_2 = arith.constant 0 : index
    %1 = vector.load %arg2[%c0_1, %c0_2] : memref<1408x10xbf16, #tpu.memory_space<vmem>>, vector<1408x10xbf16>
    %cst = arith.constant dense<0.000000e+00> : vector<2x10xf32>
    %2 = tpu.matmul %0, %1, %cst {dimension_numbers = #tpu.dot_dimension_numbers<[1], [0], [0], [1], [0, 0, 1, 1], [], []>} : vector<2x1408xbf16>, vector<1408x10xbf16>, vector<2x10xf32> -> vector<2x10xf32>
    %c0_3 = arith.constant 0 : index
    %c0_4 = arith.constant 0 : index
    %3 = vector.load %arg3[%c0_3, %c0_4] : memref<1x10xf32, #tpu.memory_space<vmem>>, vector<1x10xf32>
    %4 = vector.broadcast %3 : vector<1x10xf32> to vector<2x10xf32>
    %5 = arith.addf %2, %4 : vector<2x10xf32>
    %c0_5 = arith.constant 0 : index
    %c0_6 = arith.constant 0 : index
    %6 = vector.load %arg4[%c0_5, %c0_6] : memref<2x10xf32, #tpu.memory_space<vmem>>, vector<2x10xf32>
    tpu.vector_store %arg4[%c0_5, %c0_6], %5 {strides = array<i32>} : memref<2x10xf32, #tpu.memory_space<vmem>>, vector<2x10xf32>,
    return
  }
  func.func @transform_0(%arg0: i32) -> (i32, i32) {
    %c0_i32 = arith.constant 0 : i32
    %c0_i32_0 = arith.constant 0 : i32
    return %arg0, %c0_i32 : i32, i32
  }
  func.func @transform_1(%arg0: i32) -> (i32, i32) {
    %c0_i32 = arith.constant 0 : i32
    %c0_i32_0 = arith.constant 0 : i32
    %c0_i32_1 = arith.constant 0 : i32
    return %c0_i32, %c0_i32_0 : i32, i32
  }
  func.func @transform_2(%arg0: i32) -> (i32, i32) {
    %c0_i32 = arith.constant 0 : i32
    %c0_i32_0 = arith.constant 0 : i32
    %c0_i32_1 = arith.constant 0 : i32
    return %c0_i32, %c0_i32_0 : i32, i32
  }
  func.func @transform_3(%arg0: i32) -> (i32, i32) {
    %c0_i32 = arith.constant 0 : i32
    %c0_i32_0 = arith.constant 0 : i32
    return %arg0, %c0_i32 : i32, i32
  }
}

</mosaic_0001>

<llo_original>
// kernel: net_forward.10
$region0: #{net_forward.10}
  #allocation0 [shape = 'u32[]', space=smem, size = 0x4, offset = 0x4, fixed_abs, tag = 'smem constant byte address 0x4 - core index']
  #allocation1 [shape = 'u32[144,128]{1,0:T(1,128)}', space=vmem, size = 0x12000, scoped, tag = 'internal scratch']
  %s0 = inlined_call_operand.vmem [shape: bf16[288,10], index: 0, kind: input, shape index: {}]
  %s1 = inlined_call_operand.vmem [shape: bf16[10,48], index: 1, kind: input, shape index: {}]
  %s2 = inlined_call_operand.vmem [shape: f32[1,48], index: 2, kind: input, shape index: {}]
  %s3 = inlined_call_operand.vmem [shape: bf16[288,48], index: 3, kind: output, shape index: {}]
  %s4 = sld [smem:[#allocation0]]
  $region45: #{net_forward.10} parent=0
    _
  %s6 = ssub.s32 1, %s4
  %s7 = scalar_select 0, %s6, %s4
  loop: start=0, step=1, limit=4
  $region2: #{net_forward.10} parent=0 // loop_pre_header
    _
  $region3: #{net_forward.10} parent=0 // loop_header
    %s9 = sphi 0, %s13
    %p10 = scmp.ge.s32.totalorder %s9, 4
    %s19 = sphi 0, %s21
    %s22 = sphi 0, %s19
    %s23 = sphi 0, %s22
    %s39 = sphi 0, %s23
    %s43 = sphi 0, %s43
    %s45 = sphi 0, %s43
    %s46 = sphi 0, %s45
    %s60 = sphi 0, %s46
    %s64 = sphi 0, %s64
    %s66 = sphi 0, %s64
    %s67 = sphi 0, %s66
    %s81 = sphi 0, %s67
    %s87 = sphi 0, %s89
    %s90 = sphi 0, %s87
    %s91 = sphi 0, %s90
    %s107 = sphi 0, %s91
  $region4: #{net_forward.10} parent=0 // loop_header_branch
    %12 = sbr.rel (%p10) target = $region8
  $region5: #{net_forward.10} parent=0 // loop_body
    %s14 = ssub.s32 %s9, 1
    %s15 = ssub.s32 %s9, 2
    %s16 = sadd.s32 %s9, 1
    %s17 = ssub.s32 %s9, %s16
    %p18 = scmp.eq.s32.totalorder %s17, 0
    %s20 = sadd.s32 %s19, 1
    %s21 = scalar_select %p18, %s19, %s20
    %p24 = pneg %p18
    %p25 = scmp.eq.s32.totalorder %s9, 1
    %p26 = por %p24, %p25
    %p27 = scmp.ne.s32.totalorder %s19, %s22
    %p28 = scmp.eq.s32.totalorder %s9, 0
    %p29 = por %p27, %p28
    %p30 = scmp.ne.s32.totalorder %s19, %s22
    %p31 = scmp.eq.s32.totalorder %s14, 1
    %p32 = por %p30, %p31
    %p33 = scmp.ne.s32.totalorder %s22, %s23
    %p34 = scmp.eq.s32.totalorder %s14, 0
    %p35 = por %p33, %p34
    %p36 = scmp.ne.s32.totalorder %s22, %s23
    %p37 = scmp.eq.s32.totalorder %s15, 1
    %p38 = por %p36, %p37
    %p40 = scmp.ne.s32.totalorder %s23, %s39
    %p41 = scmp.eq.s32.totalorder %s15, 0
    %p42 = por %p40, %p41
    %s44 = sadd.s32 %s43, 1
    %p47 = scmp.eq.s32.totalorder %s9, 1
    %p48 = scmp.ne.s32.totalorder %s43, %s45
    %p49 = scmp.eq.s32.totalorder %s9, 0
    %p50 = por %p48, %p49
    %p51 = scmp.ne.s32.totalorder %s43, %s45
    %p52 = scmp.eq.s32.totalorder %s14, 1
    %p53 = por %p51, %p52
    %p54 = scmp.ne.s32.totalorder %s45, %s46
    %p55 = scmp.eq.s32.totalorder %s14, 0
    %p56 = por %p54, %p55
    %p57 = scmp.ne.s32.totalorder %s45, %s46
    %p58 = scmp.eq.s32.totalorder %s15, 1
    %p59 = por %p57, %p58
    %p61 = scmp.ne.s32.totalorder %s46, %s60
    %p62 = scmp.eq.s32.totalorder %s15, 0
    %p63 = por %p61, %p62
    %s65 = sadd.s32 %s64, 1
    %p68 = scmp.eq.s32.totalorder %s9, 1
    %p69 = scmp.ne.s32.totalorder %s64, %s66
    %p70 = scmp.eq.s32.totalorder %s9, 0
    %p71 = por %p69, %p70
    %p72 = scmp.ne.s32.totalorder %s64, %s66
    %p73 = scmp.eq.s32.totalorder %s14, 1
    %p74 = por %p72, %p73
    %p75 = scmp.ne.s32.totalorder %s66, %s67
    %p76 = scmp.eq.s32.totalorder %s14, 0
    %p77 = por %p75, %p76
    %p78 = scmp.ne.s32.totalorder %s66, %s67
    %p79 = scmp.eq.s32.totalorder %s15, 1
    %p80 = por %p78, %p79
    %p82 = scmp.ne.s32.totalorder %s67, %s81
    %p83 = scmp.eq.s32.totalorder %s15, 0
    %p84 = por %p82, %p83
    %s85 = ssub.s32 %s9, %s16
    %p86 = scmp.eq.s32.totalorder %s85, 0
    %s88 = sadd.s32 %s87, 1
    %s89 = scalar_select %p86, %s87, %s88
    %p92 = pneg %p86
    %p93 = scmp.eq.s32.totalorder %s9, 1
    %p94 = por %p92, %p93
    %p95 = scmp.ne.s32.totalorder %s87, %s90
    %p96 = scmp.eq.s32.totalorder %s9, 0
    %p97 = por %p95, %p96
    %p98 = scmp.ne.s32.totalorder %s87, %s90
    %p99 = scmp.eq.s32.totalorder %s14, 1
    %p100 = por %p98, %p99
    %p101 = scmp.ne.s32.totalorder %s90, %s91
    %p102 = scmp.eq.s32.totalorder %s14, 0
    %p103 = por %p101, %p102
    %p104 = scmp.ne.s32.totalorder %s90, %s91
    %p105 = scmp.eq.s32.totalorder %s15, 1
    %p106 = por %p104, %p105
    %p108 = scmp.ne.s32.totalorder %s91, %s107
    %p109 = scmp.eq.s32.totalorder %s15, 0
    %p110 = por %p108, %p109
    %p111 = scmp.le.s32.totalorder 1, %s9
    %p112 = scmp.lt.s32.totalorder %s9, 3
    %p113 = pnand %p111, %p112
    %p114 = pneg %p113
    // Predicated region
    $region9: #{net_forward.10} parent=5 // pred_check
      _
    $region10: #{net_forward.10} parent=5 // pred_check_branch
      %116 = sbr.rel (%p113) target = $region12
    $region11: #{net_forward.10} parent=5 // pred_region
      %s117 = ssub.s32 %s9, 1
      // Predicated region
      $region13: #{net_forward.10} parent=11 // pred_check
        %p118 = pneg %p56
      $region14: #{net_forward.10} parent=11 // pred_check_branch
        %120 = sbr.rel (%p118) target = $region16
      $region15: #{net_forward.10} parent=11 // pred_region
        _
      $region16: #{net_forward.10} parent=11 // pred_fallthru
        _
      // Predicated region
      $region17: #{net_forward.10} parent=11 // pred_check
        %p121 = pneg %p77
      $region18: #{net_forward.10} parent=11 // pred_check_branch
        %123 = sbr.rel (%p121) target = $region20
      $region19: #{net_forward.10} parent=11 // pred_region
        _
      $region20: #{net_forward.10} parent=11 // pred_fallthru
        _
    $region12: #{net_forward.10} parent=5 // pred_fallthru
      _
    %p124 = scmp.lt.s32.totalorder %s9, 2
    // Predicated region
    $region21: #{net_forward.10} parent=5 // pred_check
      %p125 = pneg %p124
    $region22: #{net_forward.10} parent=5 // pred_check_branch
      %127 = sbr.rel (%p125) target = $region24
    $region23: #{net_forward.10} parent=5 // pred_region
      // Predicated region
      $region25: #{net_forward.10} parent=23 // pred_check
        %p128 = pneg %p29
      $region26: #{net_forward.10} parent=23 // pred_check_branch
        %130 = sbr.rel (%p128) target = $region28
      $region27: #{net_forward.10} parent=23 // pred_region
        %s131 = smul.u32 18, %s9
        %p132 = scmp.lt.s32.totalorder %s131, 35
        %s133 = scalar_select %p132, %s131, 35
        %s134 = smul.addr %s133, 4
        %s135 = scalar_lea.vmem %s0, %s134
        %s136 = smul.u32 18, %s9
      $region28: #{net_forward.10} parent=23 // pred_fallthru
        _
    $region24: #{net_forward.10} parent=5 // pred_fallthru
      _
    %p137 = scmp.le.s32.totalorder 1, %s9
    %p138 = scmp.lt.s32.totalorder %s9, 3
    %p139 = pnand %p137, %p138
    %p140 = pneg %p139
    // Predicated region
    $region29: #{net_forward.10} parent=5 // pred_check
      _
    $region30: #{net_forward.10} parent=5 // pred_check_branch
      %142 = sbr.rel (%p139) target = $region32
    $region31: #{net_forward.10} parent=5 // pred_region
      %s143 = ssub.s32 %s9, 1
      %s144 = smul.u32 18, %s14
      %p145 = scmp.lt.s32.totalorder %s144, 35
      %s146 = scalar_select %p145, %s144, 35
      %s147 = smul.addr %s146, 4
      %s148 = scalar_lea.vmem %s0, %s147
      %p149 = pneg %p35
      %p150 = pneg %p32
      %p151 = pneg %p56
      %p152 = pneg %p53
      %p153 = pneg %p77
      %p154 = pneg %p74
      %p155 = pneg %p103
      %p156 = pneg %p100
      %s157 = smul.u32 18, %s14
      %p158 = scmp.lt.s32.totalorder %s157, 35
      %s159 = scalar_select %p158, %s157, 35
      %s160 = smul.addr %s159, 4
      %s161 = scalar_lea.vmem %s3, %s160
      %s162 = smul.u32 18, %s14
      %p163 = scmp.lt.s32.totalorder %s162, 35
      %s164 = scalar_select %p163, %s162, 35
      %s165 = smul.addr %s164, 4
      %s166 = scalar_lea.vmem %s0, %s165
      %s167 = smul.u32 18, %s14
      %s168 = smul.u32 18, %s14
      %p169 = scmp.lt.s32.totalorder %s168, 35
      %s170 = scalar_select %p169, %s168, 35
      %s171 = smul.addr %s170, 4
      %s172 = scalar_lea.vmem %s3, %s171
      %s173 = smul.u32 18, %s14
      %v175 = vld [vmem:[%s166] sm:$0xf]
      %v176 = vld [vmem:[%s166 + $0x4] sm:$0xf]
      %v177 = vld [vmem:[%s166 + $0x8] sm:$0xf]
      %v178 = vld [vmem:[%s166 + $0xc] sm:$0xf]
      %v179 = vld [vmem:[%s166 + $0x10] sm:$0xf]
      %v180 = vld [vmem:[%s166 + $0x14] sm:$0xf]
      %v181 = vld [vmem:[%s166 + $0x18] sm:$0xf]
      %v182 = vld [vmem:[%s166 + $0x1c] sm:$0xf]
      %v183 = vld [vmem:[%s166 + $0x20] sm:$0xf]
      %v184 = vld [vmem:[%s166 + $0x24] sm:$0xf]
      %v185 = vld [vmem:[%s166 + $0x28] sm:$0xf]
      %v186 = vld [vmem:[%s166 + $0x2c] sm:$0xf]
      %v187 = vld [vmem:[%s166 + $0x30] sm:$0xf]
      %v188 = vld [vmem:[%s166 + $0x34] sm:$0xf]
      %v189 = vld [vmem:[%s166 + $0x38] sm:$0xf]
      %v190 = vld [vmem:[%s166 + $0x3c] sm:$0xf]
      %v191 = vld [vmem:[%s166 + $0x40] sm:$0xf]
      %v192 = vld [vmem:[%s166 + $0x44] sm:$0xf]
      %v193 = vld [vmem:[%s1] sm:$0xf]
      %v194 = vld [vmem:[%s1 + $0x4] sm:$0x1]
      %v195 = vld [vmem:[%s2] sm:$0x1]
      %v197 = vlaneseq
      %v198 = vshrl.u32 %v197, 7
      %v199 = vsub.s32 0, %v198
      %v200 = vrot.slane %v195, %v199
      %v220 = vunpack.c.l.b16 %v175
      %v221 = vunpack.c.l.b16 %v176
      %v222 = vunpack.c.l.b16 %v177
      %v223 = vunpack.c.l.b16 %v178
      %v224 = vunpack.c.l.b16 %v179
      %v225 = vunpack.c.l.b16 %v180
      %v226 = vunpack.c.l.b16 %v181
      %v227 = vunpack.c.l.b16 %v182
      %v228 = vunpack.c.l.b16 %v183
      %v229 = vunpack.c.l.b16 %v184
      %v230 = vunpack.c.l.b16 %v185
      %v231 = vunpack.c.l.b16 %v186
      %v232 = vunpack.c.l.b16 %v187
      %v233 = vunpack.c.l.b16 %v188
      %v234 = vunpack.c.l.b16 %v189
      %v235 = vunpack.c.l.b16 %v190
      %v236 = vunpack.c.l.b16 %v191
      %v237 = vunpack.c.l.b16 %v192
      %v238 = vpack.c.b16 %v221, %v220
      %v239 = vpack.c.b16 %v223, %v222
      %v240 = vpack.c.b16 %v225, %v224
      %v241 = vpack.c.b16 %v227, %v226
      %v242 = vpack.c.b16 %v229, %v228
      %v243 = vpack.c.b16 %v231, %v230
      %v244 = vpack.c.b16 %v233, %v232
      %v245 = vpack.c.b16 %v235, %v234
      %v246 = vpack.c.b16 %v237, %v236
      %v249 = vunpack.c.l.b16 %v193
      %v250 = vunpack.c.l.b16 %v194
      %v251 = vpack.c.b16 %v250, %v249
      %vm252 = vcmask 80896
      %v254 = vsel %vm252, %v238, 0
      %v257 = vsel %vm252, %v239, 0
      %v260 = vsel %vm252, %v240, 0
      %v263 = vsel %vm252, %v241, 0
      %v266 = vsel %vm252, %v242, 0
      %v269 = vsel %vm252, %v243, 0
      %v272 = vsel %vm252, %v244, 0
      %v275 = vsel %vm252, %v245, 0
      %v278 = vsel %vm252, %v246, 0
      %vm280 = vcmask 1044480
      %v282 = vsel %vm280, %v251, 0
      %284 = vmatprep.subr.bf16.mxu0 0
      %285 = vmatpush1.bf16.msra.mxu0 %v282
      %286 = vmatprep.subr.bf16.mxu0 0
      %287 = vmatpush1.bf16.msra.mxu0 0
      %288 = vmatprep.subr.bf16.mxu0 0
      %289 = vmatpush1.bf16.msra.mxu0 0
      %290 = vmatprep.subr.bf16.mxu0 0
      %291 = vmatpush1.bf16.msra.mxu0 0
      %292 = vmatprep.subr.bf16.mxu0 0
      %293 = vmatpush1.bf16.msra.mxu0 0
      %294 = vmatprep.subr.bf16.mxu0 0
      %295 = vmatpush1.bf16.msra.mxu0 0
      %296 = vmatprep.subr.bf16.mxu0 0
      %297 = vmatpush1.bf16.msra.mxu0 0
      %298 = vmatprep.subr.bf16.mxu0 0
      %299 = vmatpush1.bf16.msra.mxu0 0
      %300 = vmatprep.subr.bf16.mxu0 0
      %301 = vmatpush1.bf16.msra.mxu0 0
      %302 = vmatprep.subr.bf16.mxu0 0
      %303 = vmatpush1.bf16.msra.mxu0 0
      %304 = vmatprep.subr.bf16.mxu0 0
      %305 = vmatpush1.bf16.msra.mxu0 0
      %306 = vmatprep.subr.bf16.mxu0 0
      %307 = vmatpush1.bf16.msra.mxu0 0
      %308 = vmatprep.subr.bf16.mxu0 0
      %309 = vmatpush1.bf16.msra.mxu0 0
      %310 = vmatprep.subr.bf16.mxu0 0
      %311 = vmatpush1.bf16.msra.mxu0 0
      %312 = vmatprep.subr.bf16.mxu0 0
      %313 = vmatpush1.bf16.msra.mxu0 0
      %314 = vmatprep.subr.bf16.mxu0 0
      %315 = vmatpush1.bf16.msra.mxu0 0
      %316 = vmatprep.mubr.bf16.mxu0 0
      %317 = vmatmul.mubr.bf16.gmra.mrb[0].mxu0 %v254
      %v318 = vpop.f32.mrb[0].mxu0
      %v319 = vadd.f32 %v200, %v318
      %v320 = vpop.f32.mrb[0].mxu0
      %v321 = vpop.f32.mrb[0].mxu0
      %v322 = vadd.f32 %v200, %v321
      %v323 = vpop.f32.mrb[0].mxu0
      %324 = vmatprep.mubr.bf16.mxu0 0
      %325 = vmatmul.mubr.bf16.gmra.mrb[0].mxu0 %v257
      %v326 = vpop.f32.mrb[0].mxu0
      %v327 = vadd.f32 %v200, %v326
      %v328 = vpop.f32.mrb[0].mxu0
      %v329 = vpop.f32.mrb[0].mxu0
      %v330 = vadd.f32 %v200, %v329
      %v331 = vpop.f32.mrb[0].mxu0
      %332 = vmatprep.mubr.bf16.mxu0 0
      %333 = vmatmul.mubr.bf16.gmra.mrb[0].mxu0 %v260
      %v334 = vpop.f32.mrb[0].mxu0
      %v335 = vadd.f32 %v200, %v334
      %v336 = vpop.f32.mrb[0].mxu0
      %v337 = vpop.f32.mrb[0].mxu0
      %v338 = vadd.f32 %v200, %v337
      %v339 = vpop.f32.mrb[0].mxu0
      %340 = vmatprep.mubr.bf16.mxu0 0
      %341 = vmatmul.mubr.bf16.gmra.mrb[0].mxu0 %v263
      %v342 = vpop.f32.mrb[0].mxu0
      %v343 = vadd.f32 %v200, %v342
      %v344 = vpop.f32.mrb[0].mxu0
      %v345 = vpop.f32.mrb[0].mxu0
      %v346 = vadd.f32 %v200, %v345
      %v347 = vpop.f32.mrb[0].mxu0
      %348 = vmatprep.mubr.bf16.mxu0 0
      %349 = vmatmul.mubr.bf16.gmra.mrb[0].mxu0 %v266
      %v350 = vpop.f32.mrb[0].mxu0
      %v351 = vadd.f32 %v200, %v350
      %v352 = vpop.f32.mrb[0].mxu0
      %v353 = vpop.f32.mrb[0].mxu0
      %v354 = vadd.f32 %v200, %v353
      %v355 = vpop.f32.mrb[0].mxu0
      %356 = vmatprep.mubr.bf16.mxu0 0
      %357 = vmatmul.mubr.bf16.gmra.mrb[0].mxu0 %v269
      %v358 = vpop.f32.mrb[0].mxu0
      %v359 = vadd.f32 %v200, %v358
      %v360 = vpop.f32.mrb[0].mxu0
      %v361 = vpop.f32.mrb[0].mxu0
      %v362 = vadd.f32 %v200, %v361
      %v363 = vpop.f32.mrb[0].mxu0
      %364 = vmatprep.mubr.bf16.mxu0 0
      %365 = vmatmul.mubr.bf16.gmra.mrb[0].mxu0 %v272
      %v366 = vpop.f32.mrb[0].mxu0
      %v367 = vadd.f32 %v200, %v366
      %v368 = vpop.f32.mrb[0].mxu0
      %v369 = vpop.f32.mrb[0].mxu0
      %v370 = vadd.f32 %v200, %v369
      %v371 = vpop.f32.mrb[0].mxu0
      %372 = vmatprep.mubr.bf16.mxu0 0
      %373 = vmatmul.mubr.bf16.gmra.mrb[0].mxu0 %v275
      %v374 = vpop.f32.mrb[0].mxu0
      %v375 = vadd.f32 %v200, %v374
      %v376 = vpop.f32.mrb[0].mxu0
      %v377 = vpop.f32.mrb[0].mxu0
      %v378 = vadd.f32 %v200, %v377
      %v379 = vpop.f32.mrb[0].mxu0
      %380 = vmatprep.mubr.bf16.mxu0 0
      %381 = vmatmul.mubr.bf16.gmra.mrb[0].mxu0 %v278
      %v382 = vpop.f32.mrb[0].mxu0
      %v383 = vadd.f32 %v200, %v382
      %v384 = vpop.f32.mrb[0].mxu0
      %v385 = vpop.f32.mrb[0].mxu0
      %v386 = vadd.f32 %v200, %v385
      %v387 = vpop.f32.mrb[0].mxu0
      %388 = vdwg.mxu0
      %v389 = vpack.c.bf16 %v322, %v319
      %v390 = vpack.c.bf16 %v330, %v327
      %v391 = vpack.c.bf16 %v338, %v335
      %v392 = vpack.c.bf16 %v346, %v343
      %v393 = vpack.c.bf16 %v354, %v351
      %v394 = vpack.c.bf16 %v362, %v359
      %v395 = vpack.c.bf16 %v370, %v367
      %v396 = vpack.c.bf16 %v378, %v375
      %v397 = vpack.c.bf16 %v386, %v383
      %v407 = vunpack.c.l.b16 %v389
      %v408 = vunpack.c.h.b16 %v389
      %v409 = vunpack.c.l.b16 %v390
      %v410 = vunpack.c.h.b16 %v390
      %v411 = vunpack.c.l.b16 %v391
      %v412 = vunpack.c.h.b16 %v391
      %v413 = vunpack.c.l.b16 %v392
      %v414 = vunpack.c.h.b16 %v392
      %v415 = vunpack.c.l.b16 %v393
      %v416 = vunpack.c.h.b16 %v393
      %v417 = vunpack.c.l.b16 %v394
      %v418 = vunpack.c.h.b16 %v394
      %v419 = vunpack.c.l.b16 %v395
      %v420 = vunpack.c.h.b16 %v395
      %v421 = vunpack.c.l.b16 %v396
      %v422 = vunpack.c.h.b16 %v396
      %v423 = vunpack.c.l.b16 %v397
      %v424 = vunpack.c.h.b16 %v397
      %v425 = vpack.c.b16 %v407, %v407
      %v426 = vpack.c.b16 %v408, %v408
      %v427 = vpack.c.b16 %v409, %v409
      %v428 = vpack.c.b16 %v410, %v410
      %v429 = vpack.c.b16 %v411, %v411
      %v430 = vpack.c.b16 %v412, %v412
      %v431 = vpack.c.b16 %v413, %v413
      %v432 = vpack.c.b16 %v414, %v414
      %v433 = vpack.c.b16 %v415, %v415
      %v434 = vpack.c.b16 %v416, %v416
      %v435 = vpack.c.b16 %v417, %v417
      %v436 = vpack.c.b16 %v418, %v418
      %v437 = vpack.c.b16 %v419, %v419
      %v438 = vpack.c.b16 %v420, %v420
      %v439 = vpack.c.b16 %v421, %v421
      %v440 = vpack.c.b16 %v422, %v422
      %v441 = vpack.c.b16 %v423, %v423
      %v442 = vpack.c.b16 %v424, %v424
      %vm461 = vcmask 388096
      %462 = vst.msk [vmem:[%s172] sm:$0xf] %vm461, %v425
      %463 = vst.msk [vmem:[%s172 + $0x4] sm:$0xf] %vm461, %v426
      %464 = vst.msk [vmem:[%s172 + $0x8] sm:$0xf] %vm461, %v427
      %465 = vst.msk [vmem:[%s172 + $0xc] sm:$0xf] %vm461, %v428
      %466 = vst.msk [vmem:[%s172 + $0x10] sm:$0xf] %vm461, %v429
      %467 = vst.msk [vmem:[%s172 + $0x14] sm:$0xf] %vm461, %v430
      %468 = vst.msk [vmem:[%s172 + $0x18] sm:$0xf] %vm461, %v431
      %469 = vst.msk [vmem:[%s172 + $0x1c] sm:$0xf] %vm461, %v432
      %470 = vst.msk [vmem:[%s172 + $0x20] sm:$0xf] %vm461, %v433
      %471 = vst.msk [vmem:[%s172 + $0x24] sm:$0xf] %vm461, %v434
      %472 = vst.msk [vmem:[%s172 + $0x28] sm:$0xf] %vm461, %v435
      %473 = vst.msk [vmem:[%s172 + $0x2c] sm:$0xf] %vm461, %v436
      %474 = vst.msk [vmem:[%s172 + $0x30] sm:$0xf] %vm461, %v437
      %475 = vst.msk [vmem:[%s172 + $0x34] sm:$0xf] %vm461, %v438
      %476 = vst.msk [vmem:[%s172 + $0x38] sm:$0xf] %vm461, %v439
      %477 = vst.msk [vmem:[%s172 + $0x3c] sm:$0xf] %vm461, %v440
      %478 = vst.msk [vmem:[%s172 + $0x40] sm:$0xf] %vm461, %v441
      %479 = vst.msk [vmem:[%s172 + $0x44] sm:$0xf] %vm461, %v442
      %s480 = smul.u32 18, %s14
      %p481 = scmp.lt.s32.totalorder %s480, 35
      %s482 = scalar_select %p481, %s480, 35
      %s483 = smul.addr %s482, 4
      %s484 = scalar_lea.vmem %s3, %s483
      // Predicated region
      $region33: #{net_forward.10} parent=31 // pred_check
        %p485 = pneg %p100
      $region34: #{net_forward.10} parent=31 // pred_check_branch
        %487 = sbr.rel (%p485) target = $region36
      $region35: #{net_forward.10} parent=31 // pred_region
        %s488 = smul.u32 18, %s14
      $region36: #{net_forward.10} parent=31 // pred_fallthru
        _
    $region32: #{net_forward.10} parent=5 // pred_fallthru
      _
    %p489 = scmp.le.s32.totalorder 2, %s9
    // Predicated region
    $region37: #{net_forward.10} parent=5 // pred_check
      %p490 = pneg %p489
    $region38: #{net_forward.10} parent=5 // pred_check_branch
      %492 = sbr.rel (%p490) target = $region40
    $region39: #{net_forward.10} parent=5 // pred_region
      %s493 = ssub.s32 %s9, 2
      // Predicated region
      $region41: #{net_forward.10} parent=39 // pred_check
        %p494 = pneg %p106
      $region42: #{net_forward.10} parent=39 // pred_check_branch
        %496 = sbr.rel (%p494) target = $region44
      $region43: #{net_forward.10} parent=39 // pred_region
        %s497 = smul.u32 18, %s15
        %p498 = scmp.lt.s32.totalorder %s497, 35
        %s499 = scalar_select %p498, %s497, 35
        %s500 = smul.addr %s499, 4
        %s501 = scalar_lea.vmem %s3, %s500
      $region44: #{net_forward.10} parent=39 // pred_fallthru
        _
    $region40: #{net_forward.10} parent=5 // pred_fallthru
      _
  $region6: #{net_forward.10} parent=0 // loop_footer
    %s13 = sadd.s32 1, %s9
  $region7: #{net_forward.10} parent=0 // loop_footer_branch
    %8 = sbr.rel target = $region3
  $region8: #{net_forward.10} parent=0 // loop_exit
    _

// kernel: net_forward.9
$region0: #{net_forward.9}
  #allocation0 [shape = 'u32[]', space=smem, size = 0x4, offset = 0x4, fixed_abs, tag = 'smem constant byte address 0x4 - core index']
  #allocation1 [shape = 'u32[144,128]{1,0:T(1,128)}', space=vmem, size = 0x12000, scoped, tag = 'internal scratch']
  %s0 = inlined_call_operand.vmem [shape: bf16[4,288,25], index: 0, kind: input, shape index: {}]
  %s1 = inlined_call_operand.vmem [shape: bf16[25,10], index: 1, kind: input, shape index: {}]
  %s2 = inlined_call_operand.vmem [shape: f32[1,10], index: 2, kind: input, shape index: {}]
  %s3 = inlined_call_operand.vmem [shape: bf16[288,10], index: 3, kind: output, shape index: {}]
  %s4 = sld [smem:[#allocation0]]
  $region86: #{net_forward.9} parent=0
    _
  %s6 = ssub.s32 1, %s4
  %s7 = scalar_select 0, %s6, %s4
  $region1: #{net_forward.9} parent=0
    #allocation2 [shape = 'u8[294912]{0}', space=vmem, size = 0x48000, scoped, tag = 'input window, operand 0']
    loop: start=0, step=1, limit=4
    $region2: #{net_forward.9} parent=1 // loop_pre_header
      _
    $region3: #{net_forward.9} parent=1 // loop_header
      %s9 = sphi 0, %s13
      %p10 = scmp.ge.s32.totalorder %s9, 4
      %s19 = sphi 0, %s21
      %s22 = sphi 0, %s19
      %s23 = sphi 0, %s22
      %s39 = sphi 0, %s23
      %s43 = sphi 0, %s43
      %s45 = sphi 0, %s43
      %s46 = sphi 0, %s45
      %s60 = sphi 0, %s46
      %s64 = sphi 0, %s64
      %s66 = sphi 0, %s64
      %s67 = sphi 0, %s66
      %s81 = sphi 0, %s67
      %s87 = sphi 0, %s89
      %s90 = sphi 0, %s87
      %s91 = sphi 0, %s90
      %s107 = sphi 0, %s91
    $region4: #{net_forward.9} parent=1 // loop_header_branch
      %12 = sbr.rel (%p10) target = $region8
    $region5: #{net_forward.9} parent=1 // loop_body
      %s14 = ssub.s32 %s9, 1
      %s15 = ssub.s32 %s9, 2
      %s16 = sadd.s32 %s9, 1
      %s17 = ssub.s32 %s9, %s16
      %p18 = scmp.eq.s32.totalorder %s17, 0
      %s20 = sadd.s32 %s19, 1
      %s21 = scalar_select %p18, %s19, %s20
      %p24 = pneg %p18
      %p25 = scmp.eq.s32.totalorder %s9, 1
      %p26 = por %p24, %p25
      %p27 = scmp.ne.s32.totalorder %s19, %s22
      %p28 = scmp.eq.s32.totalorder %s9, 0
      %p29 = por %p27, %p28
      %p30 = scmp.ne.s32.totalorder %s19, %s22
      %p31 = scmp.eq.s32.totalorder %s14, 1
      %p32 = por %p30, %p31
      %p33 = scmp.ne.s32.totalorder %s22, %s23
      %p34 = scmp.eq.s32.totalorder %s14, 0
      %p35 = por %p33, %p34
      %p36 = scmp.ne.s32.totalorder %s22, %s23
      %p37 = scmp.eq.s32.totalorder %s15, 1
      %p38 = por %p36, %p37
      %p40 = scmp.ne.s32.totalorder %s23, %s39
      %p41 = scmp.eq.s32.totalorder %s15, 0
      %p42 = por %p40, %p41
      %s44 = sadd.s32 %s43, 1
      %p47 = scmp.eq.s32.totalorder %s9, 1
      %p48 = scmp.ne.s32.totalorder %s43, %s45
      %p49 = scmp.eq.s32.totalorder %s9, 0
      %p50 = por %p48, %p49
      %p51 = scmp.ne.s32.totalorder %s43, %s45
      %p52 = scmp.eq.s32.totalorder %s14, 1
      %p53 = por %p51, %p52
      %p54 = scmp.ne.s32.totalorder %s45, %s46
      %p55 = scmp.eq.s32.totalorder %s14, 0
      %p56 = por %p54, %p55
      %p57 = scmp.ne.s32.totalorder %s45, %s46
      %p58 = scmp.eq.s32.totalorder %s15, 1
      %p59 = por %p57, %p58
      %p61 = scmp.ne.s32.totalorder %s46, %s60
      %p62 = scmp.eq.s32.totalorder %s15, 0
      %p63 = por %p61, %p62
      %s65 = sadd.s32 %s64, 1
      %p68 = scmp.eq.s32.totalorder %s9, 1
      %p69 = scmp.ne.s32.totalorder %s64, %s66
      %p70 = scmp.eq.s32.totalorder %s9, 0
      %p71 = por %p69, %p70
      %p72 = scmp.ne.s32.totalorder %s64, %s66
      %p73 = scmp.eq.s32.totalorder %s14, 1
      %p74 = por %p72, %p73
      %p75 = scmp.ne.s32.totalorder %s66, %s67
      %p76 = scmp.eq.s32.totalorder %s14, 0
      %p77 = por %p75, %p76
      %p78 = scmp.ne.s32.totalorder %s66, %s67
      %p79 = scmp.eq.s32.totalorder %s15, 1
      %p80 = por %p78, %p79
      %p82 = scmp.ne.s32.totalorder %s67, %s81
      %p83 = scmp.eq.s32.totalorder %s15, 0
      %p84 = por %p82, %p83
      %s85 = ssub.s32 %s9, %s16
      %p86 = scmp.eq.s32.totalorder %s85, 0
      %s88 = sadd.s32 %s87, 1
      %s89 = scalar_select %p86, %s87, %s88
      %p92 = pneg %p86
      %p93 = scmp.eq.s32.totalorder %s9, 1
      %p94 = por %p92, %p93
      %p95 = scmp.ne.s32.totalorder %s87, %s90
      %p96 = scmp.eq.s32.totalorder %s9, 0
      %p97 = por %p95, %p96
      %p98 = scmp.ne.s32.totalorder %s87, %s90
      %p99 = scmp.eq.s32.totalorder %s14, 1
      %p100 = por %p98, %p99
      %p101 = scmp.ne.s32.totalorder %s90, %s91
      %p102 = scmp.eq.s32.totalorder %s14, 0
      %p103 = por %p101, %p102
      %p104 = scmp.ne.s32.totalorder %s90, %s91
      %p105 = scmp.eq.s32.totalorder %s15, 1
      %p106 = por %p104, %p105
      %p108 = scmp.ne.s32.totalorder %s91, %s107
      %p109 = scmp.eq.s32.totalorder %s15, 0
      %p110 = por %p108, %p109
      %p111 = scmp.le.s32.totalorder 1, %s9
      %p112 = scmp.lt.s32.totalorder %s9, 3
      %p113 = pnand %p111, %p112
      %p114 = pneg %p113
      // Predicated region
      $region9: #{net_forward.9} parent=5 // pred_check
        _
      $region10: #{net_forward.9} parent=5 // pred_check_branch
        %116 = sbr.rel (%p113) target = $region12
      $region11: #{net_forward.9} parent=5 // pred_region
        %s117 = ssub.s32 %s9, 1
        // Predicated region
        $region13: #{net_forward.9} parent=11 // pred_check
          %p118 = pneg %p56
        $region14: #{net_forward.9} parent=11 // pred_check_branch
          %120 = sbr.rel (%p118) target = $region16
        $region15: #{net_forward.9} parent=11 // pred_region
          _
        $region16: #{net_forward.9} parent=11 // pred_fallthru
          _
        // Predicated region
        $region17: #{net_forward.9} parent=11 // pred_check
          %p121 = pneg %p77
        $region18: #{net_forward.9} parent=11 // pred_check_branch
          %123 = sbr.rel (%p121) target = $region20
        $region19: #{net_forward.9} parent=11 // pred_region
          _
        $region20: #{net_forward.9} parent=11 // pred_fallthru
          _
      $region12: #{net_forward.9} parent=5 // pred_fallthru
        _
      %p124 = scmp.lt.s32.totalorder %s9, 2
      // Predicated region
      $region21: #{net_forward.9} parent=5 // pred_check
        %p125 = pneg %p124
      $region22: #{net_forward.9} parent=5 // pred_check_branch
        %127 = sbr.rel (%p125) target = $region24
      $region23: #{net_forward.9} parent=5 // pred_region
        // Predicated region
        $region25: #{net_forward.9} parent=23 // pred_check
          %p128 = pneg %p29
        $region26: #{net_forward.9} parent=23 // pred_check_branch
          %130 = sbr.rel (%p128) target = $region28
        $region27: #{net_forward.9} parent=23 // pred_region
          %s131 = sand.u32 %s19, 1
          %s132 = sand.u32 %s19, 1
          %s133 = smul.addr %s132, 288
          %s134 = scalar_lea.vmem [#allocation2], %s133
          %s135 = smul.u32 18, %s9
          %s136 = smul.addr %s135, 4
          %s137 = scalar_lea.vmem %s0, %s136
          // Predicated region
          $region29: #{net_forward.9} parent=27 // pred_check
            _
          $region30: #{net_forward.9} parent=27 // pred_check_branch
            %139 = sbr.rel (0) target = $region32
          $region31: #{net_forward.9} parent=27 // pred_region
            // Predicated region
            $region33: #{net_forward.9} parent=31 // pred_check
              _
            $region34: #{net_forward.9} parent=31 // pred_check_branch
              %141 = sbr.rel target = $region36
            $region35: #{net_forward.9} parent=31 // pred_region
              // Predicated region
              $region48: #{net_forward.9} parent=35 // pred_check
                _
              $region49: #{net_forward.9} parent=35 // pred_check_branch
                %298 = sbr.rel (0) target = $region51
              $region50: #{net_forward.9} parent=35 // pred_region
                loop: start=0, step=1, limit=1
                $region52: #{net_forward.9} parent=50 // loop_pre_header
                  _
                $region53: #{net_forward.9} parent=50 // loop_header
                  %s300 = sphi 0, %s304
                  %p301 = scmp.ge.s32.totalorder %s300, 1
                  %s305 = sphi %s137, %s137
                  %s306 = sphi %s134, %s134
                $region54: #{net_forward.9} parent=50 // loop_header_branch
                  %303 = sbr.rel (%p301) target = $region58
                $region55: #{net_forward.9} parent=50 // loop_body
                  _
                $region56: #{net_forward.9} parent=50 // loop_footer
                  %s304 = sadd.s32 1, %s300
                $region57: #{net_forward.9} parent=50 // loop_footer_branch
                  %299 = sbr.rel target = $region53
                $region58: #{net_forward.9} parent=50 // loop_exit
                  _
                loop: start=0, step=1, limit=1
                $region59: #{net_forward.9} parent=50 // loop_pre_header
                  _
                $region60: #{net_forward.9} parent=50 // loop_header
                  %s309 = sphi 0, %s313
                  %p310 = scmp.ge.s32.totalorder %s309, 1
                  %s314 = sphi %s137, %s137
                  %s315 = sphi %s134, %s134
                $region61: #{net_forward.9} parent=50 // loop_header_branch
                  %312 = sbr.rel (%p310) target = $region65
                $region62: #{net_forward.9} parent=50 // loop_body
                  %v316 = vld [vmem:[%s314] sm:$0xf]
                  %317 = vst [vmem:[%s315] sm:$0xf] %v316
                  %v318 = vld [vmem:[%s314 + $0x4] sm:$0xf]
                  %319 = vst [vmem:[%s315 + $0x4] sm:$0xf] %v318
                  %v320 = vld [vmem:[%s314 + $0x8] sm:$0xf]
                  %321 = vst [vmem:[%s315 + $0x8] sm:$0xf] %v320
                  %v322 = vld [vmem:[%s314 + $0xc] sm:$0xf]
                  %323 = vst [vmem:[%s315 + $0xc] sm:$0xf] %v322
                  %v324 = vld [vmem:[%s314 + $0x10] sm:$0xf]
                  %325 = vst [vmem:[%s315 + $0x10] sm:$0xf] %v324
                  %v326 = vld [vmem:[%s314 + $0x14] sm:$0xf]
                  %327 = vst [vmem:[%s315 + $0x14] sm:$0xf] %v326
                  %v328 = vld [vmem:[%s314 + $0x18] sm:$0xf]
                  %329 = vst [vmem:[%s315 + $0x18] sm:$0xf] %v328
                  %v330 = vld [vmem:[%s314 + $0x1c] sm:$0xf]
                  %331 = vst [vmem:[%s315 + $0x1c] sm:$0xf] %v330
                  %v332 = vld [vmem:[%s314 + $0x20] sm:$0xf]
                  %333 = vst [vmem:[%s315 + $0x20] sm:$0xf] %v332
                  %v334 = vld [vmem:[%s314 + $0x24] sm:$0xf]
                  %335 = vst [vmem:[%s315 + $0x24] sm:$0xf] %v334
                  %v336 = vld [vmem:[%s314 + $0x28] sm:$0xf]
                  %337 = vst [vmem:[%s315 + $0x28] sm:$0xf] %v336
                  %v338 = vld [vmem:[%s314 + $0x2c] sm:$0xf]
                  %339 = vst [vmem:[%s315 + $0x2c] sm:$0xf] %v338
                  %v340 = vld [vmem:[%s314 + $0x30] sm:$0xf]
                  %341 = vst [vmem:[%s315 + $0x30] sm:$0xf] %v340
                  %v342 = vld [vmem:[%s314 + $0x34] sm:$0xf]
                  %343 = vst [vmem:[%s315 + $0x34] sm:$0xf] %v342
                  %v344 = vld [vmem:[%s314 + $0x38] sm:$0xf]
                  %345 = vst [vmem:[%s315 + $0x38] sm:$0xf] %v344
                  %v346 = vld [vmem:[%s314 + $0x3c] sm:$0xf]
                  %347 = vst [vmem:[%s315 + $0x3c] sm:$0xf] %v346
                  %v348 = vld [vmem:[%s314 + $0x40] sm:$0xf]
                  %349 = vst [vmem:[%s315 + $0x40] sm:$0xf] %v348
                  %v350 = vld [vmem:[%s314 + $0x44] sm:$0xf]
                  %351 = vst [vmem:[%s315 + $0x44] sm:$0xf] %v350
                  %v352 = vld [vmem:[%s314 + $0x90] sm:$0xf]
                  %353 = vst [vmem:[%s315 + $0x48] sm:$0xf] %v352
                  %v354 = vld [vmem:[%s314 + $0x94] sm:$0xf]
                  %355 = vst [vmem:[%s315 + $0x4c] sm:$0xf] %v354
                  %v356 = vld [vmem:[%s314 + $0x98] sm:$0xf]
                  %357 = vst [vmem:[%s315 + $0x50] sm:$0xf] %v356
                  %v358 = vld [vmem:[%s314 + $0x9c] sm:$0xf]
                  %359 = vst [vmem:[%s315 + $0x54] sm:$0xf] %v358
                  %v360 = vld [vmem:[%s314 + $0xa0] sm:$0xf]
                  %361 = vst [vmem:[%s315 + $0x58] sm:$0xf] %v360
                  %v362 = vld [vmem:[%s314 + $0xa4] sm:$0xf]
                  %363 = vst [vmem:[%s315 + $0x5c] sm:$0xf] %v362
                  %v364 = vld [vmem:[%s314 + $0xa8] sm:$0xf]
                  %365 = vst [vmem:[%s315 + $0x60] sm:$0xf] %v364
                  %v366 = vld [vmem:[%s314 + $0xac] sm:$0xf]
                  %367 = vst [vmem:[%s315 + $0x64] sm:$0xf] %v366
                  %v368 = vld [vmem:[%s314 + $0xb0] sm:$0xf]
                  %369 = vst [vmem:[%s315 + $0x68] sm:$0xf] %v368
                  %v370 = vld [vmem:[%s314 + $0xb4] sm:$0xf]
                  %371 = vst [vmem:[%s315 + $0x6c] sm:$0xf] %v370
                  %v372 = vld [vmem:[%s314 + $0xb8] sm:$0xf]
                  %373 = vst [vmem:[%s315 + $0x70] sm:$0xf] %v372
                  %v374 = vld [vmem:[%s314 + $0xbc] sm:$0xf]
                  %375 = vst [vmem:[%s315 + $0x74] sm:$0xf] %v374
                  %v376 = vld [vmem:[%s314 + $0xc0] sm:$0xf]
                  %377 = vst [vmem:[%s315 + $0x78] sm:$0xf] %v376
                  %v378 = vld [vmem:[%s314 + $0xc4] sm:$0xf]
                  %379 = vst [vmem:[%s315 + $0x7c] sm:$0xf] %v378
                  %v380 = vld [vmem:[%s314 + $0xc8] sm:$0xf]
                  %381 = vst [vmem:[%s315 + $0x80] sm:$0xf] %v380
                  %v382 = vld [vmem:[%s314 + $0xcc] sm:$0xf]
                  %383 = vst [vmem:[%s315 + $0x84] sm:$0xf] %v382
                  %v384 = vld [vmem:[%s314 + $0xd0] sm:$0xf]
                  %385 = vst [vmem:[%s315 + $0x88] sm:$0xf] %v384
                  %v386 = vld [vmem:[%s314 + $0xd4] sm:$0xf]
                  %387 = vst [vmem:[%s315 + $0x8c] sm:$0xf] %v386
                  %v388 = vld [vmem:[%s314 + $0x120] sm:$0xf]
                  %389 = vst [vmem:[%s315 + $0x90] sm:$0xf] %v388
                  %v390 = vld [vmem:[%s314 + $0x124] sm:$0xf]
                  %391 = vst [vmem:[%s315 + $0x94] sm:$0xf] %v390
                  %v392 = vld [vmem:[%s314 + $0x128] sm:$0xf]
                  %393 = vst [vmem:[%s315 + $0x98] sm:$0xf] %v392
                  %v394 = vld [vmem:[%s314 + $0x12c] sm:$0xf]
                  %395 = vst [vmem:[%s315 + $0x9c] sm:$0xf] %v394
                  %v396 = vld [vmem:[%s314 + $0x130] sm:$0xf]
                  %397 = vst [vmem:[%s315 + $0xa0] sm:$0xf] %v396
                  %v398 = vld [vmem:[%s314 + $0x134] sm:$0xf]
                  %399 = vst [vmem:[%s315 + $0xa4] sm:$0xf] %v398
                  %v400 = vld [vmem:[%s314 + $0x138] sm:$0xf]
                  %401 = vst [vmem:[%s315 + $0xa8] sm:$0xf] %v400
                  %v402 = vld [vmem:[%s314 + $0x13c] sm:$0xf]
                  %403 = vst [vmem:[%s315 + $0xac] sm:$0xf] %v402
                  %v404 = vld [vmem:[%s314 + $0x140] sm:$0xf]
                  %405 = vst [vmem:[%s315 + $0xb0] sm:$0xf] %v404
                  %v406 = vld [vmem:[%s314 + $0x144] sm:$0xf]
                  %407 = vst [vmem:[%s315 + $0xb4] sm:$0xf] %v406
                  %v408 = vld [vmem:[%s314 + $0x148] sm:$0xf]
                  %409 = vst [vmem:[%s315 + $0xb8] sm:$0xf] %v408
                  %v410 = vld [vmem:[%s314 + $0x14c] sm:$0xf]
                  %411 = vst [vmem:[%s315 + $0xbc] sm:$0xf] %v410
                  %v412 = vld [vmem:[%s314 + $0x150] sm:$0xf]
                  %413 = vst [vmem:[%s315 + $0xc0] sm:$0xf] %v412
                  %v414 = vld [vmem:[%s314 + $0x154] sm:$0xf]
                  %415 = vst [vmem:[%s315 + $0xc4] sm:$0xf] %v414
                  %v416 = vld [vmem:[%s314 + $0x158] sm:$0xf]
                  %417 = vst [vmem:[%s315 + $0xc8] sm:$0xf] %v416
                  %v418 = vld [vmem:[%s314 + $0x15c] sm:$0xf]
                  %419 = vst [vmem:[%s315 + $0xcc] sm:$0xf] %v418
                  %v420 = vld [vmem:[%s314 + $0x160] sm:$0xf]
                  %421 = vst [vmem:[%s315 + $0xd0] sm:$0xf] %v420
                  %v422 = vld [vmem:[%s314 + $0x164] sm:$0xf]
                  %423 = vst [vmem:[%s315 + $0xd4] sm:$0xf] %v422
                  %v424 = vld [vmem:[%s314 + $0x1b0] sm:$0xf]
                  %425 = vst [vmem:[%s315 + $0xd8] sm:$0xf] %v424
                  %v426 = vld [vmem:[%s314 + $0x1b4] sm:$0xf]
                  %427 = vst [vmem:[%s315 + $0xdc] sm:$0xf] %v426
                  %v428 = vld [vmem:[%s314 + $0x1b8] sm:$0xf]
                  %429 = vst [vmem:[%s315 + $0xe0] sm:$0xf] %v428
                  %v430 = vld [vmem:[%s314 + $0x1bc] sm:$0xf]
                  %431 = vst [vmem:[%s315 + $0xe4] sm:$0xf] %v430
                  %v432 = vld [vmem:[%s314 + $0x1c0] sm:$0xf]
                  %433 = vst [vmem:[%s315 + $0xe8] sm:$0xf] %v432
                  %v434 = vld [vmem:[%s314 + $0x1c4] sm:$0xf]
                  %435 = vst [vmem:[%s315 + $0xec] sm:$0xf] %v434
                  %v436 = vld [vmem:[%s314 + $0x1c8] sm:$0xf]
                  %437 = vst [vmem:[%s315 + $0xf0] sm:$0xf] %v436
                  %v438 = vld [vmem:[%s314 + $0x1cc] sm:$0xf]
                  %439 = vst [vmem:[%s315 + $0xf4] sm:$0xf] %v438
                  %v440 = vld [vmem:[%s314 + $0x1d0] sm:$0xf]
                  %441 = vst [vmem:[%s315 + $0xf8] sm:$0xf] %v440
                  %v442 = vld [vmem:[%s314 + $0x1d4] sm:$0xf]
                  %443 = vst [vmem:[%s315 + $0xfc] sm:$0xf] %v442
                  %v444 = vld [vmem:[%s314 + $0x1d8] sm:$0xf]
                  %445 = vst [vmem:[%s315 + $0x100] sm:$0xf] %v444
                  %v446 = vld [vmem:[%s314 + $0x1dc] sm:$0xf]
                  %447 = vst [vmem:[%s315 + $0x104] sm:$0xf] %v446
                  %v448 = vld [vmem:[%s314 + $0x1e0] sm:$0xf]
                  %449 = vst [vmem:[%s315 + $0x108] sm:$0xf] %v448
                  %v450 = vld [vmem:[%s314 + $0x1e4] sm:$0xf]
                  %451 = vst [vmem:[%s315 + $0x10c] sm:$0xf] %v450
                  %v452 = vld [vmem:[%s314 + $0x1e8] sm:$0xf]
                  %453 = vst [vmem:[%s315 + $0x110] sm:$0xf] %v452
                  %v454 = vld [vmem:[%s314 + $0x1ec] sm:$0xf]
                  %455 = vst [vmem:[%s315 + $0x114] sm:$0xf] %v454
                  %v456 = vld [vmem:[%s314 + $0x1f0] sm:$0xf]
                  %457 = vst [vmem:[%s315 + $0x118] sm:$0xf] %v456
                  %v458 = vld [vmem:[%s314 + $0x1f4] sm:$0xf]
                  %459 = vst [vmem:[%s315 + $0x11c] sm:$0xf] %v458
                $region63: #{net_forward.9} parent=50 // loop_footer
                  %s313 = sadd.s32 1, %s309
                $region64: #{net_forward.9} parent=50 // loop_footer_branch
                  %308 = sbr.rel target = $region60
                $region65: #{net_forward.9} parent=50 // loop_exit
                  _
              $region51: #{net_forward.9} parent=35 // pred_fallthru
                _
            $region36: #{net_forward.9} parent=31 // pred_fallthru
              _
            // Predicated region
            $region37: #{net_forward.9} parent=31 // pred_check
              _
            $region38: #{net_forward.9} parent=31 // pred_check_branch
              %143 = sbr.rel (0) target = $region40
            $region39: #{net_forward.9} parent=31 // pred_region
              loop: start=0, step=1, limit=1
              $region41: #{net_forward.9} parent=39 // loop_pre_header
                _
              $region42: #{net_forward.9} parent=39 // loop_header
                %s146 = sphi 0, %s150
                %p147 = scmp.ge.s32.totalorder %s146, 1
                %s151 = sphi %s137, %s137
                %s152 = sphi %s134, %s134
              $region43: #{net_forward.9} parent=39 // loop_header_branch
                %149 = sbr.rel (%p147) target = $region47
              $region44: #{net_forward.9} parent=39 // loop_body
                %v153 = vld [vmem:[%s151] sm:$0xf]
                %154 = vst [vmem:[%s152] sm:$0xf] %v153
                %v155 = vld [vmem:[%s151 + $0x4] sm:$0xf]
                %156 = vst [vmem:[%s152 + $0x4] sm:$0xf] %v155
                %v157 = vld [vmem:[%s151 + $0x8] sm:$0xf]
                %158 = vst [vmem:[%s152 + $0x8] sm:$0xf] %v157
                %v159 = vld [vmem:[%s151 + $0xc] sm:$0xf]
                %160 = vst [vmem:[%s152 + $0xc] sm:$0xf] %v159
                %v161 = vld [vmem:[%s151 + $0x10] sm:$0xf]
                %162 = vst [vmem:[%s152 + $0x10] sm:$0xf] %v161
                %v163 = vld [vmem:[%s151 + $0x14] sm:$0xf]
                %164 = vst [vmem:[%s152 + $0x14] sm:$0xf] %v163
                %v165 = vld [vmem:[%s151 + $0x18] sm:$0xf]
                %166 = vst [vmem:[%s152 + $0x18] sm:$0xf] %v165
                %v167 = vld [vmem:[%s151 + $0x1c] sm:$0xf]
                %168 = vst [vmem:[%s152 + $0x1c] sm:$0xf] %v167
                %v169 = vld [vmem:[%s151 + $0x20] sm:$0xf]
                %170 = vst [vmem:[%s152 + $0x20] sm:$0xf] %v169
                %v171 = vld [vmem:[%s151 + $0x24] sm:$0xf]
                %172 = vst [vmem:[%s152 + $0x24] sm:$0xf] %v171
                %v173 = vld [vmem:[%s151 + $0x28] sm:$0xf]
                %174 = vst [vmem:[%s152 + $0x28] sm:$0xf] %v173
                %v175 = vld [vmem:[%s151 + $0x2c] sm:$0xf]
                %176 = vst [vmem:[%s152 + $0x2c] sm:$0xf] %v175
                %v177 = vld [vmem:[%s151 + $0x30] sm:$0xf]
                %178 = vst [vmem:[%s152 + $0x30] sm:$0xf] %v177
                %v179 = vld [vmem:[%s151 + $0x34] sm:$0xf]
                %180 = vst [vmem:[%s152 + $0x34] sm:$0xf] %v179
                %v181 = vld [vmem:[%s151 + $0x38] sm:$0xf]
                %182 = vst [vmem:[%s152 + $0x38] sm:$0xf] %v181
                %v183 = vld [vmem:[%s151 + $0x3c] sm:$0xf]
                %184 = vst [vmem:[%s152 + $0x3c] sm:$0xf] %v183
                %v185 = vld [vmem:[%s151 + $0x40] sm:$0xf]
                %186 = vst [vmem:[%s152 + $0x40] sm:$0xf] %v185
                %v187 = vld [vmem:[%s151 + $0x44] sm:$0xf]
                %188 = vst [vmem:[%s152 + $0x44] sm:$0xf] %v187
                %v189 = vld [vmem:[%s151 + $0x90] sm:$0xf]
                %190 = vst [vmem:[%s152 + $0x48] sm:$0xf] %v189
                %v191 = vld [vmem:[%s151 + $0x94] sm:$0xf]
                %192 = vst [vmem:[%s152 + $0x4c] sm:$0xf] %v191
                %v193 = vld [vmem:[%s151 + $0x98] sm:$0xf]
                %194 = vst [vmem:[%s152 + $0x50] sm:$0xf] %v193
                %v195 = vld [vmem:[%s151 + $0x9c] sm:$0xf]
                %196 = vst [vmem:[%s152 + $0x54] sm:$0xf] %v195
                %v197 = vld [vmem:[%s151 + $0xa0] sm:$0xf]
                %198 = vst [vmem:[%s152 + $0x58] sm:$0xf] %v197
                %v199 = vld [vmem:[%s151 + $0xa4] sm:$0xf]
                %200 = vst [vmem:[%s152 + $0x5c] sm:$0xf] %v199
                %v201 = vld [vmem:[%s151 + $0xa8] sm:$0xf]
                %202 = vst [vmem:[%s152 + $0x60] sm:$0xf] %v201
                %v203 = vld [vmem:[%s151 + $0xac] sm:$0xf]
                %204 = vst [vmem:[%s152 + $0x64] sm:$0xf] %v203
                %v205 = vld [vmem:[%s151 + $0xb0] sm:$0xf]
                %206 = vst [vmem:[%s152 + $0x68] sm:$0xf] %v205
                %v207 = vld [vmem:[%s151 + $0xb4] sm:$0xf]
                %208 = vst [vmem:[%s152 + $0x6c] sm:$0xf] %v207
                %v209 = vld [vmem:[%s151 + $0xb8] sm:$0xf]
                %210 = vst [vmem:[%s152 + $0x70] sm:$0xf] %v209
                %v211 = vld [vmem:[%s151 + $0xbc] sm:$0xf]
                %212 = vst [vmem:[%s152 + $0x74] sm:$0xf] %v211
                %v213 = vld [vmem:[%s151 + $0xc0] sm:$0xf]
                %214 = vst [vmem:[%s152 + $0x78] sm:$0xf] %v213
                %v215 = vld [vmem:[%s151 + $0xc4] sm:$0xf]
                %216 = vst [vmem:[%s152 + $0x7c] sm:$0xf] %v215
                %v217 = vld [vmem:[%s151 + $0xc8] sm:$0xf]
                %218 = vst [vmem:[%s152 + $0x80] sm:$0xf] %v217
                %v219 = vld [vmem:[%s151 + $0xcc] sm:$0xf]
                %220 = vst [vmem:[%s152 + $0x84] sm:$0xf] %v219
                %v221 = vld [vmem:[%s151 + $0xd0] sm:$0xf]
                %222 = vst [vmem:[%s152 + $0x88] sm:$0xf] %v221
                %v223 = vld [vmem:[%s151 + $0xd4] sm:$0xf]
                %224 = vst [vmem:[%s152 + $0x8c] sm:$0xf] %v223
                %v225 = vld [vmem:[%s151 + $0x120] sm:$0xf]
                %226 = vst [vmem:[%s152 + $0x90] sm:$0xf] %v225
                %v227 = vld [vmem:[%s151 + $0x124] sm:$0xf]
                %228 = vst [vmem:[%s152 + $0x94] sm:$0xf] %v227
                %v229 = vld [vmem:[%s151 + $0x128] sm:$0xf]
                %230 = vst [vmem:[%s152 + $0x98] sm:$0xf] %v229
                %v231 = vld [vmem:[%s151 + $0x12c] sm:$0xf]
                %232 = vst [vmem:[%s152 + $0x9c] sm:$0xf] %v231
                %v233 = vld [vmem:[%s151 + $0x130] sm:$0xf]
                %234 = vst [vmem:[%s152 + $0xa0] sm:$0xf] %v233
                %v235 = vld [vmem:[%s151 + $0x134] sm:$0xf]
                %236 = vst [vmem:[%s152 + $0xa4] sm:$0xf] %v235
                %v237 = vld [vmem:[%s151 + $0x138] sm:$0xf]
                %238 = vst [vmem:[%s152 + $0xa8] sm:$0xf] %v237
                %v239 = vld [vmem:[%s151 + $0x13c] sm:$0xf]
                %240 = vst [vmem:[%s152 + $0xac] sm:$0xf] %v239
                %v241 = vld [vmem:[%s151 + $0x140] sm:$0xf]
                %242 = vst [vmem:[%s152 + $0xb0] sm:$0xf] %v241
                %v243 = vld [vmem:[%s151 + $0x144] sm:$0xf]
                %244 = vst [vmem:[%s152 + $0xb4] sm:$0xf] %v243
                %v245 = vld [vmem:[%s151 + $0x148] sm:$0xf]
                %246 = vst [vmem:[%s152 + $0xb8] sm:$0xf] %v245
                %v247 = vld [vmem:[%s151 + $0x14c] sm:$0xf]
                %248 = vst [vmem:[%s152 + $0xbc] sm:$0xf] %v247
                %v249 = vld [vmem:[%s151 + $0x150] sm:$0xf]
                %250 = vst [vmem:[%s152 + $0xc0] sm:$0xf] %v249
                %v251 = vld [vmem:[%s151 + $0x154] sm:$0xf]
                %252 = vst [vmem:[%s152 + $0xc4] sm:$0xf] %v251
                %v253 = vld [vmem:[%s151 + $0x158] sm:$0xf]
                %254 = vst [vmem:[%s152 + $0xc8] sm:$0xf] %v253
                %v255 = vld [vmem:[%s151 + $0x15c] sm:$0xf]
                %256 = vst [vmem:[%s152 + $0xcc] sm:$0xf] %v255
                %v257 = vld [vmem:[%s151 + $0x160] sm:$0xf]
                %258 = vst [vmem:[%s152 + $0xd0] sm:$0xf] %v257
                %v259 = vld [vmem:[%s151 + $0x164] sm:$0xf]
                %260 = vst [vmem:[%s152 + $0xd4] sm:$0xf] %v259
                %v261 = vld [vmem:[%s151 + $0x1b0] sm:$0xf]
                %262 = vst [vmem:[%s152 + $0xd8] sm:$0xf] %v261
                %v263 = vld [vmem:[%s151 + $0x1b4] sm:$0xf]
                %264 = vst [vmem:[%s152 + $0xdc] sm:$0xf] %v263
                %v265 = vld [vmem:[%s151 + $0x1b8] sm:$0xf]
                %266 = vst [vmem:[%s152 + $0xe0] sm:$0xf] %v265
                %v267 = vld [vmem:[%s151 + $0x1bc] sm:$0xf]
                %268 = vst [vmem:[%s152 + $0xe4] sm:$0xf] %v267
                %v269 = vld [vmem:[%s151 + $0x1c0] sm:$0xf]
                %270 = vst [vmem:[%s152 + $0xe8] sm:$0xf] %v269
                %v271 = vld [vmem:[%s151 + $0x1c4] sm:$0xf]
                %272 = vst [vmem:[%s152 + $0xec] sm:$0xf] %v271
                %v273 = vld [vmem:[%s151 + $0x1c8] sm:$0xf]
                %274 = vst [vmem:[%s152 + $0xf0] sm:$0xf] %v273
                %v275 = vld [vmem:[%s151 + $0x1cc] sm:$0xf]
                %276 = vst [vmem:[%s152 + $0xf4] sm:$0xf] %v275
                %v277 = vld [vmem:[%s151 + $0x1d0] sm:$0xf]
                %278 = vst [vmem:[%s152 + $0xf8] sm:$0xf] %v277
                %v279 = vld [vmem:[%s151 + $0x1d4] sm:$0xf]
                %280 = vst [vmem:[%s152 + $0xfc] sm:$0xf] %v279
                %v281 = vld [vmem:[%s151 + $0x1d8] sm:$0xf]
                %282 = vst [vmem:[%s152 + $0x100] sm:$0xf] %v281
                %v283 = vld [vmem:[%s151 + $0x1dc] sm:$0xf]
                %284 = vst [vmem:[%s152 + $0x104] sm:$0xf] %v283
                %v285 = vld [vmem:[%s151 + $0x1e0] sm:$0xf]
                %286 = vst [vmem:[%s152 + $0x108] sm:$0xf] %v285
                %v287 = vld [vmem:[%s151 + $0x1e4] sm:$0xf]
                %288 = vst [vmem:[%s152 + $0x10c] sm:$0xf] %v287
                %v289 = vld [vmem:[%s151 + $0x1e8] sm:$0xf]
                %290 = vst [vmem:[%s152 + $0x110] sm:$0xf] %v289
                %v291 = vld [vmem:[%s151 + $0x1ec] sm:$0xf]
                %292 = vst [vmem:[%s152 + $0x114] sm:$0xf] %v291
                %v293 = vld [vmem:[%s151 + $0x1f0] sm:$0xf]
                %294 = vst [vmem:[%s152 + $0x118] sm:$0xf] %v293
                %v295 = vld [vmem:[%s151 + $0x1f4] sm:$0xf]
                %296 = vst [vmem:[%s152 + $0x11c] sm:$0xf] %v295
              $region45: #{net_forward.9} parent=39 // loop_footer
                %s150 = sadd.s32 1, %s146
              $region46: #{net_forward.9} parent=39 // loop_footer_branch
                %145 = sbr.rel target = $region42
              $region47: #{net_forward.9} parent=39 // loop_exit
                _
            $region40: #{net_forward.9} parent=31 // pred_fallthru
              _
          $region32: #{net_forward.9} parent=27 // pred_fallthru
            _
          %460 = vnop
        $region28: #{net_forward.9} parent=23 // pred_fallthru
          _
      $region24: #{net_forward.9} parent=5 // pred_fallthru
        _
      %p461 = scmp.le.s32.totalorder 1, %s9
      %p462 = scmp.lt.s32.totalorder %s9, 3
      %p463 = pnand %p461, %p462
      %p464 = pneg %p463
      // Predicated region
      $region66: #{net_forward.9} parent=5 // pred_check
        _
      $region67: #{net_forward.9} parent=5 // pred_check_branch
        %466 = sbr.rel (%p463) target = $region69
      $region68: #{net_forward.9} parent=5 // pred_region
        %s467 = ssub.s32 %s9, 1
        %s468 = sand.u32 %s22, 1
        %s469 = sand.u32 %s22, 1
        %s470 = smul.addr %s469, 288
        %s471 = scalar_lea.vmem [#allocation2], %s470
        // Predicated region
        $region70: #{net_forward.9} parent=68 // pred_check
          %p472 = pneg %p35
        $region71: #{net_forward.9} parent=68 // pred_check_branch
          %474 = sbr.rel (%p472) target = $region73
        $region72: #{net_forward.9} parent=68 // pred_region
          _
        $region73: #{net_forward.9} parent=68 // pred_fallthru
          _
        %s475 = sand.u32 %s22, 1
        %s476 = sand.u32 %s22, 1
        %s477 = smul.addr %s476, 288
        %s478 = scalar_lea.vmem [#allocation2], %s477
        %p479 = pneg %p35
        %p480 = pneg %p32
        %p481 = pneg %p56
        %p482 = pneg %p53
        %p483 = pneg %p77
        %p484 = pneg %p74
        %p485 = pneg %p103
        %p486 = pneg %p100
        %s487 = smul.u32 18, %s14
        %p488 = scmp.lt.s32.totalorder %s487, 35
        %s489 = scalar_select %p488, %s487, 35
        %s490 = smul.addr %s489, 4
        %s491 = scalar_lea.vmem %s3, %s490
        %s492 = smul.u32 18, %s14
        %s493 = smul.u32 18, %s14
        %p494 = scmp.lt.s32.totalorder %s493, 35
        %s495 = scalar_select %p494, %s493, 35
        %s496 = smul.addr %s495, 4
        %s497 = scalar_lea.vmem %s3, %s496
        %s498 = smul.u32 18, %s14
        %v500 = vld [vmem:[%s1] sm:$0xf]
        %v501 = vld [vmem:[%s1 + $0x4] sm:$0xf]
        %v502 = vld [vmem:[%s1 + $0x8] sm:$0xf]
        %v503 = vld [vmem:[%s1 + $0xc] sm:$0x1]
        %v504 = vld [vmem:[%s471] sm:$0xf]
        %v505 = vld [vmem:[%s471 + $0x4] sm:$0xf]
        %v506 = vld [vmem:[%s471 + $0x8] sm:$0xf]
        %v507 = vld [vmem:[%s471 + $0xc] sm:$0xf]
        %v508 = vld [vmem:[%s471 + $0x10] sm:$0xf]
        %v509 = vld [vmem:[%s471 + $0x14] sm:$0xf]
        %v510 = vld [vmem:[%s471 + $0x18] sm:$0xf]
        %v511 = vld [vmem:[%s471 + $0x1c] sm:$0xf]
        %v512 = vld [vmem:[%s471 + $0x20] sm:$0xf]
        %v513 = vld [vmem:[%s471 + $0x24] sm:$0xf]
        %v514 = vld [vmem:[%s471 + $0x28] sm:$0xf]
        %v515 = vld [vmem:[%s471 + $0x2c] sm:$0xf]
        %v516 = vld [vmem:[%s471 + $0x30] sm:$0xf]
        %v517 = vld [vmem:[%s471 + $0x34] sm:$0xf]
        %v518 = vld [vmem:[%s471 + $0x38] sm:$0xf]
        %v519 = vld [vmem:[%s471 + $0x3c] sm:$0xf]
        %v520 = vld [vmem:[%s471 + $0x40] sm:$0xf]
        %v521 = vld [vmem:[%s471 + $0x44] sm:$0xf]
        %v540 = vunpack.c.l.b16 %v504
        %v541 = vunpack.c.l.b16 %v505
        %v542 = vunpack.c.l.b16 %v506
        %v543 = vunpack.c.l.b16 %v507
        %v544 = vunpack.c.l.b16 %v508
        %v545 = vunpack.c.l.b16 %v509
        %v546 = vunpack.c.l.b16 %v510
        %v547 = vunpack.c.l.b16 %v511
        %v548 = vunpack.c.l.b16 %v512
        %v549 = vunpack.c.l.b16 %v513
        %v550 = vunpack.c.l.b16 %v514
        %v551 = vunpack.c.l.b16 %v515
        %v552 = vunpack.c.l.b16 %v516
        %v553 = vunpack.c.l.b16 %v517
        %v554 = vunpack.c.l.b16 %v518
        %v555 = vunpack.c.l.b16 %v519
        %v556 = vunpack.c.l.b16 %v520
        %v557 = vunpack.c.l.b16 %v521
        %v558 = vpack.c.b16 %v541, %v540
        %v559 = vpack.c.b16 %v543, %v542
        %v560 = vpack.c.b16 %v545, %v544
        %v561 = vpack.c.b16 %v547, %v546
        %v562 = vpack.c.b16 %v549, %v548
        %v563 = vpack.c.b16 %v551, %v550
        %v564 = vpack.c.b16 %v553, %v552
        %v565 = vpack.c.b16 %v555, %v554
        %v566 = vpack.c.b16 %v557, %v556
        %v571 = vunpack.c.l.b16 %v500
        %v572 = vunpack.c.l.b16 %v501
        %v573 = vunpack.c.l.b16 %v502
        %v574 = vunpack.c.l.b16 %v503
        %v575 = vpack.c.b16 %v572, %v571
        %v576 = vpack.c.b16 %v574, %v573
        %vm578 = vcmask 203776
        %v580 = vsel %vm578, %v558, 0
        %v583 = vsel %vm578, %v559, 0
        %v586 = vsel %vm578, %v560, 0
        %v589 = vsel %vm578, %v561, 0
        %v592 = vsel %vm578, %v562, 0
        %v595 = vsel %vm578, %v563, 0
        %v598 = vsel %vm578, %v564, 0
        %v601 = vsel %vm578, %v565, 0
        %v604 = vsel %vm578, %v566, 0
        %vm606 = vcmask 1043456
        %vm607 = vcmask 1044480
        %v608 = vsel %vm606, 4294967295, 65535
        %v609 = vsel %vm607, %v608, 0
        %v611 = vand.u32 %v576, %v609
        %613 = vmatprep.subr.bf16.mxu0 0
        %614 = vmatpush1.bf16.msra.mxu0 %v575
        %615 = vmatprep.subr.bf16.mxu0 0
        %616 = vmatpush1.bf16.msra.mxu0 %v611
        %617 = vmatprep.subr.bf16.mxu0 0
        %618 = vmatpush1.bf16.msra.mxu0 0
        %619 = vmatprep.subr.bf16.mxu0 0
        %620 = vmatpush1.bf16.msra.mxu0 0
        %621 = vmatprep.subr.bf16.mxu0 0
        %622 = vmatpush1.bf16.msra.mxu0 0
        %623 = vmatprep.subr.bf16.mxu0 0
        %624 = vmatpush1.bf16.msra.mxu0 0
        %625 = vmatprep.subr.bf16.mxu0 0
        %626 = vmatpush1.bf16.msra.mxu0 0
        %627 = vmatprep.subr.bf16.mxu0 0
        %628 = vmatpush1.bf16.msra.mxu0 0
        %629 = vmatprep.subr.bf16.mxu0 0
        %630 = vmatpush1.bf16.msra.mxu0 0
        %631 = vmatprep.subr.bf16.mxu0 0
        %632 = vmatpush1.bf16.msra.mxu0 0
        %633 = vmatprep.subr.bf16.mxu0 0
        %634 = vmatpush1.bf16.msra.mxu0 0
        %635 = vmatprep.subr.bf16.mxu0 0
        %636 = vmatpush1.bf16.msra.mxu0 0
        %637 = vmatprep.subr.bf16.mxu0 0
        %638 = vmatpush1.bf16.msra.mxu0 0
        %639 = vmatprep.subr.bf16.mxu0 0
        %640 = vmatpush1.bf16.msra.mxu0 0
        %641 = vmatprep.subr.bf16.mxu0 0
        %642 = vmatpush1.bf16.msra.mxu0 0
        %643 = vmatprep.subr.bf16.mxu0 0
        %644 = vmatpush1.bf16.msra.mxu0 0
        %645 = vmatprep.mubr.bf16.mxu0 0
        %646 = vmatmul.mubr.bf16.gmra.mrb[0].mxu0 %v580
        %v647 = vpop.f32.mrb[0].mxu0
        %v648 = vadd.f32 0.0, %v647
        %v649 = vpop.f32.mrb[0].mxu0
        %v650 = vpop.f32.mrb[0].mxu0
        %v651 = vadd.f32 0.0, %v650
        %v652 = vpop.f32.mrb[0].mxu0
        %653 = vmatprep.mubr.bf16.mxu0 0
        %654 = vmatmul.mubr.bf16.gmra.mrb[0].mxu0 %v583
        %v655 = vpop.f32.mrb[0].mxu0
        %v656 = vadd.f32 0.0, %v655
        %v657 = vpop.f32.mrb[0].mxu0
        %v658 = vpop.f32.mrb[0].mxu0
        %v659 = vadd.f32 0.0, %v658
        %v660 = vpop.f32.mrb[0].mxu0
        %661 = vmatprep.mubr.bf16.mxu0 0
        %662 = vmatmul.mubr.bf16.gmra.mrb[0].mxu0 %v586
        %v663 = vpop.f32.mrb[0].mxu0
        %v664 = vadd.f32 0.0, %v663
        %v665 = vpop.f32.mrb[0].mxu0
        %v666 = vpop.f32.mrb[0].mxu0
        %v667 = vadd.f32 0.0, %v666
        %v668 = vpop.f32.mrb[0].mxu0
        %669 = vmatprep.mubr.bf16.mxu0 0
        %670 = vmatmul.mubr.bf16.gmra.mrb[0].mxu0 %v589
        %v671 = vpop.f32.mrb[0].mxu0
        %v672 = vadd.f32 0.0, %v671
        %v673 = vpop.f32.mrb[0].mxu0
        %v674 = vpop.f32.mrb[0].mxu0
        %v675 = vadd.f32 0.0, %v674
        %v676 = vpop.f32.mrb[0].mxu0
        %677 = vmatprep.mubr.bf16.mxu0 0
        %678 = vmatmul.mubr.bf16.gmra.mrb[0].mxu0 %v592
        %v679 = vpop.f32.mrb[0].mxu0
        %v680 = vadd.f32 0.0, %v679
        %v681 = vpop.f32.mrb[0].mxu0
        %v682 = vpop.f32.mrb[0].mxu0
        %v683 = vadd.f32 0.0, %v682
        %v684 = vpop.f32.mrb[0].mxu0
        %685 = vmatprep.mubr.bf16.mxu0 0
        %686 = vmatmul.mubr.bf16.gmra.mrb[0].mxu0 %v595
        %v687 = vpop.f32.mrb[0].mxu0
        %v688 = vadd.f32 0.0, %v687
        %v689 = vpop.f32.mrb[0].mxu0
        %v690 = vpop.f32.mrb[0].mxu0
        %v691 = vadd.f32 0.0, %v690
        %v692 = vpop.f32.mrb[0].mxu0
        %693 = vmatprep.mubr.bf16.mxu0 0
        %694 = vmatmul.mubr.bf16.gmra.mrb[0].mxu0 %v598
        %v695 = vpop.f32.mrb[0].mxu0
        %v696 = vadd.f32 0.0, %v695
        %v697 = vpop.f32.mrb[0].mxu0
        %v698 = vpop.f32.mrb[0].mxu0
        %v699 = vadd.f32 0.0, %v698
        %v700 = vpop.f32.mrb[0].mxu0
        %701 = vmatprep.mubr.bf16.mxu0 0
        %702 = vmatmul.mubr.bf16.gmra.mrb[0].mxu0 %v601
        %v703 = vpop.f32.mrb[0].mxu0
        %v704 = vadd.f32 0.0, %v703
        %v705 = vpop.f32.mrb[0].mxu0
        %v706 = vpop.f32.mrb[0].mxu0
        %v707 = vadd.f32 0.0, %v706
        %v708 = vpop.f32.mrb[0].mxu0
        %709 = vmatprep.mubr.bf16.mxu0 0
        %710 = vmatmul.mubr.bf16.gmra.mrb[0].mxu0 %v604
        %v711 = vpop.f32.mrb[0].mxu0
        %v712 = vadd.f32 0.0, %v711
        %v713 = vpop.f32.mrb[0].mxu0
        %v714 = vpop.f32.mrb[0].mxu0
        %v715 = vadd.f32 0.0, %v714
        %v716 = vpop.f32.mrb[0].mxu0
        %717 = vdwg.mxu0
        %s718 = scalar_lea.vmem %s471, 72 [#allocation2]
        %v719 = vld [vmem:[%s718] sm:$0xf]
        %v720 = vld [vmem:[%s718 + $0x4] sm:$0xf]
        %v721 = vld [vmem:[%s718 + $0x8] sm:$0xf]
        %v722 = vld [vmem:[%s718 + $0xc] sm:$0xf]
        %v723 = vld [vmem:[%s718 + $0x10] sm:$0xf]
        %v724 = vld [vmem:[%s718 + $0x14] sm:$0xf]
        %v725 = vld [vmem:[%s718 + $0x18] sm:$0xf]
        %v726 = vld [vmem:[%s718 + $0x1c] sm:$0xf]
        %v727 = vld [vmem:[%s718 + $0x20] sm:$0xf]
        %v728 = vld [vmem:[%s718 + $0x24] sm:$0xf]
        %v729 = vld [vmem:[%s718 + $0x28] sm:$0xf]
        %v730 = vld [vmem:[%s718 + $0x2c] sm:$0xf]
        %v731 = vld [vmem:[%s718 + $0x30] sm:$0xf]
        %v732 = vld [vmem:[%s718 + $0x34] sm:$0xf]
        %v733 = vld [vmem:[%s718 + $0x38] sm:$0xf]
        %v734 = vld [vmem:[%s718 + $0x3c] sm:$0xf]
        %v735 = vld [vmem:[%s718 + $0x40] sm:$0xf]
        %v736 = vld [vmem:[%s718 + $0x44] sm:$0xf]
        %v755 = vunpack.c.l.b16 %v719
        %v756 = vunpack.c.l.b16 %v720
        %v757 = vunpack.c.l.b16 %v721
        %v758 = vunpack.c.l.b16 %v722
        %v759 = vunpack.c.l.b16 %v723
        %v760 = vunpack.c.l.b16 %v724
        %v761 = vunpack.c.l.b16 %v725
        %v762 = vunpack.c.l.b16 %v726
        %v763 = vunpack.c.l.b16 %v727
        %v764 = vunpack.c.l.b16 %v728
        %v765 = vunpack.c.l.b16 %v729
        %v766 = vunpack.c.l.b16 %v730
        %v767 = vunpack.c.l.b16 %v731
        %v768 = vunpack.c.l.b16 %v732
        %v769 = vunpack.c.l.b16 %v733
        %v770 = vunpack.c.l.b16 %v734
        %v771 = vunpack.c.l.b16 %v735
        %v772 = vunpack.c.l.b16 %v736
        %v773 = vpack.c.b16 %v756, %v755
        %v774 = vpack.c.b16 %v758, %v757
        %v775 = vpack.c.b16 %v760, %v759
        %v776 = vpack.c.b16 %v762, %v761
        %v777 = vpack.c.b16 %v764, %v763
        %v778 = vpack.c.b16 %v766, %v765
        %v779 = vpack.c.b16 %v768, %v767
        %v780 = vpack.c.b16 %v770, %v769
        %v781 = vpack.c.b16 %v772, %v771
        %v783 = vsel %vm578, %v773, 0
        %v786 = vsel %vm578, %v774, 0
        %v789 = vsel %vm578, %v775, 0
        %v792 = vsel %vm578, %v776, 0
        %v795 = vsel %vm578, %v777, 0
        %v798 = vsel %vm578, %v778, 0
        %v801 = vsel %vm578, %v779, 0
        %v804 = vsel %vm578, %v780, 0
        %v807 = vsel %vm578, %v781, 0
        %809 = vmatprep.subr.bf16.mxu0 0
        %810 = vmatpush1.bf16.msra.mxu0 %v575
        %811 = vmatprep.subr.bf16.mxu0 0
        %812 = vmatpush1.bf16.msra.mxu0 %v611
        %813 = vmatprep.subr.bf16.mxu0 0
        %814 = vmatpush1.bf16.msra.mxu0 0
        %815 = vmatprep.subr.bf16.mxu0 0
        %816 = vmatpush1.bf16.msra.mxu0 0
        %817 = vmatprep.subr.bf16.mxu0 0
        %818 = vmatpush1.bf16.msra.mxu0 0
        %819 = vmatprep.subr.bf16.mxu0 0
        %820 = vmatpush1.bf16.msra.mxu0 0
        %821 = vmatprep.subr.bf16.mxu0 0
        %822 = vmatpush1.bf16.msra.mxu0 0
        %823 = vmatprep.subr.bf16.mxu0 0
        %824 = vmatpush1.bf16.msra.mxu0 0
        %825 = vmatprep.subr.bf16.mxu0 0
        %826 = vmatpush1.bf16.msra.mxu0 0
        %827 = vmatprep.subr.bf16.mxu0 0
        %828 = vmatpush1.bf16.msra.mxu0 0
        %829 = vmatprep.subr.bf16.mxu0 0
        %830 = vmatpush1.bf16.msra.mxu0 0
        %831 = vmatprep.subr.bf16.mxu0 0
        %832 = vmatpush1.bf16.msra.mxu0 0
        %833 = vmatprep.subr.bf16.mxu0 0
        %834 = vmatpush1.bf16.msra.mxu0 0
        %835 = vmatprep.subr.bf16.mxu0 0
        %836 = vmatpush1.bf16.msra.mxu0 0
        %837 = vmatprep.subr.bf16.mxu0 0
        %838 = vmatpush1.bf16.msra.mxu0 0
        %839 = vmatprep.subr.bf16.mxu0 0
        %840 = vmatpush1.bf16.msra.mxu0 0
        %841 = vmatprep.mubr.bf16.mxu0 0
        %842 = vmatmul.mubr.bf16.gmra.mrb[0].mxu0 %v783
        %v843 = vpop.f32.mrb[0].mxu0
        %v844 = vadd.f32 0.0, %v843
        %v845 = vpop.f32.mrb[0].mxu0
        %v846 = vpop.f32.mrb[0].mxu0
        %v847 = vadd.f32 0.0, %v846
        %v848 = vpop.f32.mrb[0].mxu0
        %849 = vmatprep.mubr.bf16.mxu0 0
        %850 = vmatmul.mubr.bf16.gmra.mrb[0].mxu0 %v786
        %v851 = vpop.f32.mrb[0].mxu0
        %v852 = vadd.f32 0.0, %v851
        %v853 = vpop.f32.mrb[0].mxu0
        %v854 = vpop.f32.mrb[0].mxu0
        %v855 = vadd.f32 0.0, %v854
        %v856 = vpop.f32.mrb[0].mxu0
        %857 = vmatprep.mubr.bf16.mxu0 0
        %858 = vmatmul.mubr.bf16.gmra.mrb[0].mxu0 %v789
        %v859 = vpop.f32.mrb[0].mxu0
        %v860 = vadd.f32 0.0, %v859
        %v861 = vpop.f32.mrb[0].mxu0
        %v862 = vpop.f32.mrb[0].mxu0
        %v863 = vadd.f32 0.0, %v862
        %v864 = vpop.f32.mrb[0].mxu0
        %865 = vmatprep.mubr.bf16.mxu0 0
        %866 = vmatmul.mubr.bf16.gmra.mrb[0].mxu0 %v792
        %v867 = vpop.f32.mrb[0].mxu0
        %v868 = vadd.f32 0.0, %v867
        %v869 = vpop.f32.mrb[0].mxu0
        %v870 = vpop.f32.mrb[0].mxu0
        %v871 = vadd.f32 0.0, %v870
        %v872 = vpop.f32.mrb[0].mxu0
        %873 = vmatprep.mubr.bf16.mxu0 0
        %874 = vmatmul.mubr.bf16.gmra.mrb[0].mxu0 %v795
        %v875 = vpop.f32.mrb[0].mxu0
        %v876 = vadd.f32 0.0, %v875
        %v877 = vpop.f32.mrb[0].mxu0
        %v878 = vpop.f32.mrb[0].mxu0
        %v879 = vadd.f32 0.0, %v878
        %v880 = vpop.f32.mrb[0].mxu0
        %881 = vmatprep.mubr.bf16.mxu0 0
        %882 = vmatmul.mubr.bf16.gmra.mrb[0].mxu0 %v798
        %v883 = vpop.f32.mrb[0].mxu0
        %v884 = vadd.f32 0.0, %v883
        %v885 = vpop.f32.mrb[0].mxu0
        %v886 = vpop.f32.mrb[0].mxu0
        %v887 = vadd.f32 0.0, %v886
        %v888 = vpop.f32.mrb[0].mxu0
        %889 = vmatprep.mubr.bf16.mxu0 0
        %890 = vmatmul.mubr.bf16.gmra.mrb[0].mxu0 %v801
        %v891 = vpop.f32.mrb[0].mxu0
        %v892 = vadd.f32 0.0, %v891
        %v893 = vpop.f32.mrb[0].mxu0
        %v894 = vpop.f32.mrb[0].mxu0
        %v895 = vadd.f32 0.0, %v894
        %v896 = vpop.f32.mrb[0].mxu0
        %897 = vmatprep.mubr.bf16.mxu0 0
        %898 = vmatmul.mubr.bf16.gmra.mrb[0].mxu0 %v804
        %v899 = vpop.f32.mrb[0].mxu0
        %v900 = vadd.f32 0.0, %v899
        %v901 = vpop.f32.mrb[0].mxu0
        %v902 = vpop.f32.mrb[0].mxu0
        %v903 = vadd.f32 0.0, %v902
        %v904 = vpop.f32.mrb[0].mxu0
        %905 = vmatprep.mubr.bf16.mxu0 0
        %906 = vmatmul.mubr.bf16.gmra.mrb[0].mxu0 %v807
        %v907 = vpop.f32.mrb[0].mxu0
        %v908 = vadd.f32 0.0, %v907
        %v909 = vpop.f32.mrb[0].mxu0
        %v910 = vpop.f32.mrb[0].mxu0
        %v911 = vadd.f32 0.0, %v910
        %v912 = vpop.f32.mrb[0].mxu0
        %913 = vdwg.mxu0
        %v914 = vmax.f32 %v648, %v844
        %v915 = vmax.f32 %v651, %v847
        %v916 = vmax.f32 %v656, %v852
        %v917 = vmax.f32 %v659, %v855
        %v918 = vmax.f32 %v664, %v860
        %v919 = vmax.f32 %v667, %v863
        %v920 = vmax.f32 %v672, %v868
        %v921 = vmax.f32 %v675, %v871
        %v922 = vmax.f32 %v680, %v876
        %v923 = vmax.f32 %v683, %v879
        %v924 = vmax.f32 %v688, %v884
        %v925 = vmax.f32 %v691, %v887
        %v926 = vmax.f32 %v696, %v892
        %v927 = vmax.f32 %v699, %v895
        %v928 = vmax.f32 %v704, %v900
        %v929 = vmax.f32 %v707, %v903
        %v930 = vmax.f32 %v712, %v908
        %v931 = vmax.f32 %v715, %v911
        %s932 = scalar_lea.vmem %s471, 144 [#allocation2]
        %v933 = vld [vmem:[%s932] sm:$0xf]
        %v934 = vld [vmem:[%s932 + $0x4] sm:$0xf]
        %v935 = vld [vmem:[%s932 + $0x8] sm:$0xf]
        %v936 = vld [vmem:[%s932 + $0xc] sm:$0xf]
        %v937 = vld [vmem:[%s932 + $0x10] sm:$0xf]
        %v938 = vld [vmem:[%s932 + $0x14] sm:$0xf]
        %v939 = vld [vmem:[%s932 + $0x18] sm:$0xf]
        %v940 = vld [vmem:[%s932 + $0x1c] sm:$0xf]
        %v941 = vld [vmem:[%s932 + $0x20] sm:$0xf]
        %v942 = vld [vmem:[%s932 + $0x24] sm:$0xf]
        %v943 = vld [vmem:[%s932 + $0x28] sm:$0xf]
        %v944 = vld [vmem:[%s932 + $0x2c] sm:$0xf]
        %v945 = vld [vmem:[%s932 + $0x30] sm:$0xf]
        %v946 = vld [vmem:[%s932 + $0x34] sm:$0xf]
        %v947 = vld [vmem:[%s932 + $0x38] sm:$0xf]
        %v948 = vld [vmem:[%s932 + $0x3c] sm:$0xf]
        %v949 = vld [vmem:[%s932 + $0x40] sm:$0xf]
        %v950 = vld [vmem:[%s932 + $0x44] sm:$0xf]
        %v969 = vunpack.c.l.b16 %v933
        %v970 = vunpack.c.l.b16 %v934
        %v971 = vunpack.c.l.b16 %v935
        %v972 = vunpack.c.l.b16 %v936
        %v973 = vunpack.c.l.b16 %v937
        %v974 = vunpack.c.l.b16 %v938
        %v975 = vunpack.c.l.b16 %v939
        %v976 = vunpack.c.l.b16 %v940
        %v977 = vunpack.c.l.b16 %v941
        %v978 = vunpack.c.l.b16 %v942
        %v979 = vunpack.c.l.b16 %v943
        %v980 = vunpack.c.l.b16 %v944
        %v981 = vunpack.c.l.b16 %v945
        %v982 = vunpack.c.l.b16 %v946
        %v983 = vunpack.c.l.b16 %v947
        %v984 = vunpack.c.l.b16 %v948
        %v985 = vunpack.c.l.b16 %v949
        %v986 = vunpack.c.l.b16 %v950
        %v987 = vpack.c.b16 %v970, %v969
        %v988 = vpack.c.b16 %v972, %v971
        %v989 = vpack.c.b16 %v974, %v973
        %v990 = vpack.c.b16 %v976, %v975
        %v991 = vpack.c.b16 %v978, %v977
        %v992 = vpack.c.b16 %v980, %v979
        %v993 = vpack.c.b16 %v982, %v981
        %v994 = vpack.c.b16 %v984, %v983
        %v995 = vpack.c.b16 %v986, %v985
        %v997 = vsel %vm578, %v987, 0
        %v1000 = vsel %vm578, %v988, 0
        %v1003 = vsel %vm578, %v989, 0
        %v1006 = vsel %vm578, %v990, 0
        %v1009 = vsel %vm578, %v991, 0
        %v1012 = vsel %vm578, %v992, 0
        %v1015 = vsel %vm578, %v993, 0
        %v1018 = vsel %vm578, %v994, 0
        %v1021 = vsel %vm578, %v995, 0
        %1023 = vmatprep.subr.bf16.mxu0 0
        %1024 = vmatpush1.bf16.msra.mxu0 %v575
        %1025 = vmatprep.subr.bf16.mxu0 0
        %1026 = vmatpush1.bf16.msra.mxu0 %v611
        %1027 = vmatprep.subr.bf16.mxu0 0
        %1028 = vmatpush1.bf16.msra.mxu0 0
        %1029 = vmatprep.subr.bf16.mxu0 0
        %1030 = vmatpush1.bf16.msra.mxu0 0
        %1031 = vmatprep.subr.bf16.mxu0 0
        %1032 = vmatpush1.bf16.msra.mxu0 0
        %1033 = vmatprep.subr.bf16.mxu0 0
        %1034 = vmatpush1.bf16.msra.mxu0 0
        %1035 = vmatprep.subr.bf16.mxu0 0
        %1036 = vmatpush1.bf16.msra.mxu0 0
        %1037 = vmatprep.subr.bf16.mxu0 0
        %1038 = vmatpush1.bf16.msra.mxu0 0
        %1039 = vmatprep.subr.bf16.mxu0 0
        %1040 = vmatpush1.bf16.msra.mxu0 0
        %1041 = vmatprep.subr.bf16.mxu0 0
        %1042 = vmatpush1.bf16.msra.mxu0 0
        %1043 = vmatprep.subr.bf16.mxu0 0
        %1044 = vmatpush1.bf16.msra.mxu0 0
        %1045 = vmatprep.subr.bf16.mxu0 0
        %1046 = vmatpush1.bf16.msra.mxu0 0
        %1047 = vmatprep.subr.bf16.mxu0 0
        %1048 = vmatpush1.bf16.msra.mxu0 0
        %1049 = vmatprep.subr.bf16.mxu0 0
        %1050 = vmatpush1.bf16.msra.mxu0 0
        %1051 = vmatprep.subr.bf16.mxu0 0
        %1052 = vmatpush1.bf16.msra.mxu0 0
        %1053 = vmatprep.subr.bf16.mxu0 0
        %1054 = vmatpush1.bf16.msra.mxu0 0
        %1055 = vmatprep.mubr.bf16.mxu0 0
        %1056 = vmatmul.mubr.bf16.gmra.mrb[0].mxu0 %v997
        %v1057 = vpop.f32.mrb[0].mxu0
        %v1058 = vadd.f32 0.0, %v1057
        %v1059 = vpop.f32.mrb[0].mxu0
        %v1060 = vpop.f32.mrb[0].mxu0
        %v1061 = vadd.f32 0.0, %v1060
        %v1062 = vpop.f32.mrb[0].mxu0
        %1063 = vmatprep.mubr.bf16.mxu0 0
        %1064 = vmatmul.mubr.bf16.gmra.mrb[0].mxu0 %v1000
        %v1065 = vpop.f32.mrb[0].mxu0
        %v1066 = vadd.f32 0.0, %v1065
        %v1067 = vpop.f32.mrb[0].mxu0
        %v1068 = vpop.f32.mrb[0].mxu0
        %v1069 = vadd.f32 0.0, %v1068
        %v1070 = vpop.f32.mrb[0].mxu0
        %1071 = vmatprep.mubr.bf16.mxu0 0
        %1072 = vmatmul.mubr.bf16.gmra.mrb[0].mxu0 %v1003
        %v1073 = vpop.f32.mrb[0].mxu0
        %v1074 = vadd.f32 0.0, %v1073
        %v1075 = vpop.f32.mrb[0].mxu0
        %v1076 = vpop.f32.mrb[0].mxu0
        %v1077 = vadd.f32 0.0, %v1076
        %v1078 = vpop.f32.mrb[0].mxu0
        %1079 = vmatprep.mubr.bf16.mxu0 0
        %1080 = vmatmul.mubr.bf16.gmra.mrb[0].mxu0 %v1006
        %v1081 = vpop.f32.mrb[0].mxu0
        %v1082 = vadd.f32 0.0, %v1081
        %v1083 = vpop.f32.mrb[0].mxu0
        %v1084 = vpop.f32.mrb[0].mxu0
        %v1085 = vadd.f32 0.0, %v1084
        %v1086 = vpop.f32.mrb[0].mxu0
        %1087 = vmatprep.mubr.bf16.mxu0 0
        %1088 = vmatmul.mubr.bf16.gmra.mrb[0].mxu0 %v1009
        %v1089 = vpop.f32.mrb[0].mxu0
        %v1090 = vadd.f32 0.0, %v1089
        %v1091 = vpop.f32.mrb[0].mxu0
        %v1092 = vpop.f32.mrb[0].mxu0
        %v1093 = vadd.f32 0.0, %v1092
        %v1094 = vpop.f32.mrb[0].mxu0
        %1095 = vmatprep.mubr.bf16.mxu0 0
        %1096 = vmatmul.mubr.bf16.gmra.mrb[0].mxu0 %v1012
        %v1097 = vpop.f32.mrb[0].mxu0
        %v1098 = vadd.f32 0.0, %v1097
        %v1099 = vpop.f32.mrb[0].mxu0
        %v1100 = vpop.f32.mrb[0].mxu0
        %v1101 = vadd.f32 0.0, %v1100
        %v1102 = vpop.f32.mrb[0].mxu0
        %1103 = vmatprep.mubr.bf16.mxu0 0
        %1104 = vmatmul.mubr.bf16.gmra.mrb[0].mxu0 %v1015
        %v1105 = vpop.f32.mrb[0].mxu0
        %v1106 = vadd.f32 0.0, %v1105
        %v1107 = vpop.f32.mrb[0].mxu0
        %v1108 = vpop.f32.mrb[0].mxu0
        %v1109 = vadd.f32 0.0, %v1108
        %v1110 = vpop.f32.mrb[0].mxu0
        %1111 = vmatprep.mubr.bf16.mxu0 0
        %1112 = vmatmul.mubr.bf16.gmra.mrb[0].mxu0 %v1018
        %v1113 = vpop.f32.mrb[0].mxu0
        %v1114 = vadd.f32 0.0, %v1113
        %v1115 = vpop.f32.mrb[0].mxu0
        %v1116 = vpop.f32.mrb[0].mxu0
        %v1117 = vadd.f32 0.0, %v1116
        %v1118 = vpop.f32.mrb[0].mxu0
        %1119 = vmatprep.mubr.bf16.mxu0 0
        %1120 = vmatmul.mubr.bf16.gmra.mrb[0].mxu0 %v1021
        %v1121 = vpop.f32.mrb[0].mxu0
        %v1122 = vadd.f32 0.0, %v1121
        %v1123 = vpop.f32.mrb[0].mxu0
        %v1124 = vpop.f32.mrb[0].mxu0
        %v1125 = vadd.f32 0.0, %v1124
        %v1126 = vpop.f32.mrb[0].mxu0
        %1127 = vdwg.mxu0
        %v1128 = vmax.f32 %v914, %v1058
        %v1129 = vmax.f32 %v915, %v1061
        %v1130 = vmax.f32 %v916, %v1066
        %v1131 = vmax.f32 %v917, %v1069
        %v1132 = vmax.f32 %v918, %v1074
        %v1133 = vmax.f32 %v919, %v1077
        %v1134 = vmax.f32 %v920, %v1082
        %v1135 = vmax.f32 %v921, %v1085
        %v1136 = vmax.f32 %v922, %v1090
        %v1137 = vmax.f32 %v923, %v1093
        %v1138 = vmax.f32 %v924, %v1098
        %v1139 = vmax.f32 %v925, %v1101
        %v1140 = vmax.f32 %v926, %v1106
        %v1141 = vmax.f32 %v927, %v1109
        %v1142 = vmax.f32 %v928, %v1114
        %v1143 = vmax.f32 %v929, %v1117
        %v1144 = vmax.f32 %v930, %v1122
        %v1145 = vmax.f32 %v931, %v1125
        %s1146 = scalar_lea.vmem %s471, 216 [#allocation2]
        %v1147 = vld [vmem:[%s1146] sm:$0xf]
        %v1148 = vld [vmem:[%s1146 + $0x4] sm:$0xf]
        %v1149 = vld [vmem:[%s1146 + $0x8] sm:$0xf]
        %v1150 = vld [vmem:[%s1146 + $0xc] sm:$0xf]
        %v1151 = vld [vmem:[%s1146 + $0x10] sm:$0xf]
        %v1152 = vld [vmem:[%s1146 + $0x14] sm:$0xf]
        %v1153 = vld [vmem:[%s1146 + $0x18] sm:$0xf]
        %v1154 = vld [vmem:[%s1146 + $0x1c] sm:$0xf]
        %v1155 = vld [vmem:[%s1146 + $0x20] sm:$0xf]
        %v1156 = vld [vmem:[%s1146 + $0x24] sm:$0xf]
        %v1157 = vld [vmem:[%s1146 + $0x28] sm:$0xf]
        %v1158 = vld [vmem:[%s1146 + $0x2c] sm:$0xf]
        %v1159 = vld [vmem:[%s1146 + $0x30] sm:$0xf]
        %v1160 = vld [vmem:[%s1146 + $0x34] sm:$0xf]
        %v1161 = vld [vmem:[%s1146 + $0x38] sm:$0xf]
        %v1162 = vld [vmem:[%s1146 + $0x3c] sm:$0xf]
        %v1163 = vld [vmem:[%s1146 + $0x40] sm:$0xf]
        %v1164 = vld [vmem:[%s1146 + $0x44] sm:$0xf]
        %v1183 = vunpack.c.l.b16 %v1147
        %v1184 = vunpack.c.l.b16 %v1148
        %v1185 = vunpack.c.l.b16 %v1149
        %v1186 = vunpack.c.l.b16 %v1150
        %v1187 = vunpack.c.l.b16 %v1151
        %v1188 = vunpack.c.l.b16 %v1152
        %v1189 = vunpack.c.l.b16 %v1153
        %v1190 = vunpack.c.l.b16 %v1154
        %v1191 = vunpack.c.l.b16 %v1155
        %v1192 = vunpack.c.l.b16 %v1156
        %v1193 = vunpack.c.l.b16 %v1157
        %v1194 = vunpack.c.l.b16 %v1158
        %v1195 = vunpack.c.l.b16 %v1159
        %v1196 = vunpack.c.l.b16 %v1160
        %v1197 = vunpack.c.l.b16 %v1161
        %v1198 = vunpack.c.l.b16 %v1162
        %v1199 = vunpack.c.l.b16 %v1163
        %v1200 = vunpack.c.l.b16 %v1164
        %v1201 = vpack.c.b16 %v1184, %v1183
        %v1202 = vpack.c.b16 %v1186, %v1185
        %v1203 = vpack.c.b16 %v1188, %v1187
        %v1204 = vpack.c.b16 %v1190, %v1189
        %v1205 = vpack.c.b16 %v1192, %v1191
        %v1206 = vpack.c.b16 %v1194, %v1193
        %v1207 = vpack.c.b16 %v1196, %v1195
        %v1208 = vpack.c.b16 %v1198, %v1197
        %v1209 = vpack.c.b16 %v1200, %v1199
        %v1211 = vsel %vm578, %v1201, 0
        %v1214 = vsel %vm578, %v1202, 0
        %v1217 = vsel %vm578, %v1203, 0
        %v1220 = vsel %vm578, %v1204, 0
        %v1223 = vsel %vm578, %v1205, 0
        %v1226 = vsel %vm578, %v1206, 0
        %v1229 = vsel %vm578, %v1207, 0
        %v1232 = vsel %vm578, %v1208, 0
        %v1235 = vsel %vm578, %v1209, 0
        %1237 = vmatprep.subr.bf16.mxu0 0
        %1238 = vmatpush1.bf16.msra.mxu0 %v575
        %1239 = vmatprep.subr.bf16.mxu0 0
        %1240 = vmatpush1.bf16.msra.mxu0 %v611
        %1241 = vmatprep.subr.bf16.mxu0 0
        %1242 = vmatpush1.bf16.msra.mxu0 0
        %1243 = vmatprep.subr.bf16.mxu0 0
        %1244 = vmatpush1.bf16.msra.mxu0 0
        %1245 = vmatprep.subr.bf16.mxu0 0
        %1246 = vmatpush1.bf16.msra.mxu0 0
        %1247 = vmatprep.subr.bf16.mxu0 0
        %1248 = vmatpush1.bf16.msra.mxu0 0
        %1249 = vmatprep.subr.bf16.mxu0 0
        %1250 = vmatpush1.bf16.msra.mxu0 0
        %1251 = vmatprep.subr.bf16.mxu0 0
        %1252 = vmatpush1.bf16.msra.mxu0 0
        %1253 = vmatprep.subr.bf16.mxu0 0
        %1254 = vmatpush1.bf16.msra.mxu0 0
        %1255 = vmatprep.subr.bf16.mxu0 0
        %1256 = vmatpush1.bf16.msra.mxu0 0
        %1257 = vmatprep.subr.bf16.mxu0 0
        %1258 = vmatpush1.bf16.msra.mxu0 0
        %1259 = vmatprep.subr.bf16.mxu0 0
        %1260 = vmatpush1.bf16.msra.mxu0 0
        %1261 = vmatprep.subr.bf16.mxu0 0
        %1262 = vmatpush1.bf16.msra.mxu0 0
        %1263 = vmatprep.subr.bf16.mxu0 0
        %1264 = vmatpush1.bf16.msra.mxu0 0
        %1265 = vmatprep.subr.bf16.mxu0 0
        %1266 = vmatpush1.bf16.msra.mxu0 0
        %1267 = vmatprep.subr.bf16.mxu0 0
        %1268 = vmatpush1.bf16.msra.mxu0 0
        %1269 = vmatprep.mubr.bf16.mxu0 0
        %1270 = vmatmul.mubr.bf16.gmra.mrb[0].mxu0 %v1211
        %v1271 = vpop.f32.mrb[0].mxu0
        %v1272 = vadd.f32 0.0, %v1271
        %v1273 = vpop.f32.mrb[0].mxu0
        %v1274 = vpop.f32.mrb[0].mxu0
        %v1275 = vadd.f32 0.0, %v1274
        %v1276 = vpop.f32.mrb[0].mxu0
        %1277 = vmatprep.mubr.bf16.mxu0 0
        %1278 = vmatmul.mubr.bf16.gmra.mrb[0].mxu0 %v1214
        %v1279 = vpop.f32.mrb[0].mxu0
        %v1280 = vadd.f32 0.0, %v1279
        %v1281 = vpop.f32.mrb[0].mxu0
        %v1282 = vpop.f32.mrb[0].mxu0
        %v1283 = vadd.f32 0.0, %v1282
        %v1284 = vpop.f32.mrb[0].mxu0
        %1285 = vmatprep.mubr.bf16.mxu0 0
        %1286 = vmatmul.mubr.bf16.gmra.mrb[0].mxu0 %v1217
        %v1287 = vpop.f32.mrb[0].mxu0
        %v1288 = vadd.f32 0.0, %v1287
        %v1289 = vpop.f32.mrb[0].mxu0
        %v1290 = vpop.f32.mrb[0].mxu0
        %v1291 = vadd.f32 0.0, %v1290
        %v1292 = vpop.f32.mrb[0].mxu0
        %1293 = vmatprep.mubr.bf16.mxu0 0
        %1294 = vmatmul.mubr.bf16.gmra.mrb[0].mxu0 %v1220
        %v1295 = vpop.f32.mrb[0].mxu0
        %v1296 = vadd.f32 0.0, %v1295
        %v1297 = vpop.f32.mrb[0].mxu0
        %v1298 = vpop.f32.mrb[0].mxu0
        %v1299 = vadd.f32 0.0, %v1298
        %v1300 = vpop.f32.mrb[0].mxu0
        %1301 = vmatprep.mubr.bf16.mxu0 0
        %1302 = vmatmul.mubr.bf16.gmra.mrb[0].mxu0 %v1223
        %v1303 = vpop.f32.mrb[0].mxu0
        %v1304 = vadd.f32 0.0, %v1303
        %v1305 = vpop.f32.mrb[0].mxu0
        %v1306 = vpop.f32.mrb[0].mxu0
        %v1307 = vadd.f32 0.0, %v1306
        %v1308 = vpop.f32.mrb[0].mxu0
        %1309 = vmatprep.mubr.bf16.mxu0 0
        %1310 = vmatmul.mubr.bf16.gmra.mrb[0].mxu0 %v1226
        %v1311 = vpop.f32.mrb[0].mxu0
        %v1312 = vadd.f32 0.0, %v1311
        %v1313 = vpop.f32.mrb[0].mxu0
        %v1314 = vpop.f32.mrb[0].mxu0
        %v1315 = vadd.f32 0.0, %v1314
        %v1316 = vpop.f32.mrb[0].mxu0
        %1317 = vmatprep.mubr.bf16.mxu0 0
        %1318 = vmatmul.mubr.bf16.gmra.mrb[0].mxu0 %v1229
        %v1319 = vpop.f32.mrb[0].mxu0
        %v1320 = vadd.f32 0.0, %v1319
        %v1321 = vpop.f32.mrb[0].mxu0
        %v1322 = vpop.f32.mrb[0].mxu0
        %v1323 = vadd.f32 0.0, %v1322
        %v1324 = vpop.f32.mrb[0].mxu0
        %1325 = vmatprep.mubr.bf16.mxu0 0
        %1326 = vmatmul.mubr.bf16.gmra.mrb[0].mxu0 %v1232
        %v1327 = vpop.f32.mrb[0].mxu0
        %v1328 = vadd.f32 0.0, %v1327
        %v1329 = vpop.f32.mrb[0].mxu0
        %v1330 = vpop.f32.mrb[0].mxu0
        %v1331 = vadd.f32 0.0, %v1330
        %v1332 = vpop.f32.mrb[0].mxu0
        %1333 = vmatprep.mubr.bf16.mxu0 0
        %1334 = vmatmul.mubr.bf16.gmra.mrb[0].mxu0 %v1235
        %v1335 = vpop.f32.mrb[0].mxu0
        %v1336 = vadd.f32 0.0, %v1335
        %v1337 = vpop.f32.mrb[0].mxu0
        %v1338 = vpop.f32.mrb[0].mxu0
        %v1339 = vadd.f32 0.0, %v1338
        %v1340 = vpop.f32.mrb[0].mxu0
        %1341 = vdwg.mxu0
        %v1342 = vmax.f32 %v1128, %v1272
        %v1343 = vmax.f32 %v1129, %v1275
        %v1344 = vmax.f32 %v1130, %v1280
        %v1345 = vmax.f32 %v1131, %v1283
        %v1346 = vmax.f32 %v1132, %v1288
        %v1347 = vmax.f32 %v1133, %v1291
        %v1348 = vmax.f32 %v1134, %v1296
        %v1349 = vmax.f32 %v1135, %v1299
        %v1350 = vmax.f32 %v1136, %v1304
        %v1351 = vmax.f32 %v1137, %v1307
        %v1352 = vmax.f32 %v1138, %v1312
        %v1353 = vmax.f32 %v1139, %v1315
        %v1354 = vmax.f32 %v1140, %v1320
        %v1355 = vmax.f32 %v1141, %v1323
        %v1356 = vmax.f32 %v1142, %v1328
        %v1357 = vmax.f32 %v1143, %v1331
        %v1358 = vmax.f32 %v1144, %v1336
        %v1359 = vmax.f32 %v1145, %v1339
        %v1360 = vld [vmem:[%s2] sm:$0x1]
        %v1362 = vlaneseq
        %v1363 = vshrl.u32 %v1362, 7
        %v1364 = vsub.s32 0, %v1363
        %v1365 = vrot.slane %v1360, %v1364
        %v1367 = vadd.f32 %v1342, %v1365
        %v1368 = vadd.f32 %v1343, %v1365
        %v1369 = vadd.f32 %v1344, %v1365
        %v1370 = vadd.f32 %v1345, %v1365
        %v1371 = vadd.f32 %v1346, %v1365
        %v1372 = vadd.f32 %v1347, %v1365
        %v1373 = vadd.f32 %v1348, %v1365
        %v1374 = vadd.f32 %v1349, %v1365
        %v1375 = vadd.f32 %v1350, %v1365
        %v1376 = vadd.f32 %v1351, %v1365
        %v1377 = vadd.f32 %v1352, %v1365
        %v1378 = vadd.f32 %v1353, %v1365
        %v1379 = vadd.f32 %v1354, %v1365
        %v1380 = vadd.f32 %v1355, %v1365
        %v1381 = vadd.f32 %v1356, %v1365
        %v1382 = vadd.f32 %v1357, %v1365
        %v1383 = vadd.f32 %v1358, %v1365
        %v1384 = vadd.f32 %v1359, %v1365
        %v1385 = vmax.f32 %v1367, 0.0
        %v1386 = vmax.f32 %v1368, 0.0
        %v1387 = vmax.f32 %v1369, 0.0
        %v1388 = vmax.f32 %v1370, 0.0
        %v1389 = vmax.f32 %v1371, 0.0
        %v1390 = vmax.f32 %v1372, 0.0
        %v1391 = vmax.f32 %v1373, 0.0
        %v1392 = vmax.f32 %v1374, 0.0
        %v1393 = vmax.f32 %v1375, 0.0
        %v1394 = vmax.f32 %v1376, 0.0
        %v1395 = vmax.f32 %v1377, 0.0
        %v1396 = vmax.f32 %v1378, 0.0
        %v1397 = vmax.f32 %v1379, 0.0
        %v1398 = vmax.f32 %v1380, 0.0
        %v1399 = vmax.f32 %v1381, 0.0
        %v1400 = vmax.f32 %v1382, 0.0
        %v1401 = vmax.f32 %v1383, 0.0
        %v1402 = vmax.f32 %v1384, 0.0
        %v1403 = vpack.c.bf16 %v1386, %v1385
        %v1404 = vpack.c.bf16 %v1388, %v1387
        %v1405 = vpack.c.bf16 %v1390, %v1389
        %v1406 = vpack.c.bf16 %v1392, %v1391
        %v1407 = vpack.c.bf16 %v1394, %v1393
        %v1408 = vpack.c.bf16 %v1396, %v1395
        %v1409 = vpack.c.bf16 %v1398, %v1397
        %v1410 = vpack.c.bf16 %v1400, %v1399
        %v1411 = vpack.c.bf16 %v1402, %v1401
        %v1421 = vunpack.c.l.b16 %v1403
        %v1422 = vunpack.c.h.b16 %v1403
        %v1423 = vunpack.c.l.b16 %v1404
        %v1424 = vunpack.c.h.b16 %v1404
        %v1425 = vunpack.c.l.b16 %v1405
        %v1426 = vunpack.c.h.b16 %v1405
        %v1427 = vunpack.c.l.b16 %v1406
        %v1428 = vunpack.c.h.b16 %v1406
        %v1429 = vunpack.c.l.b16 %v1407
        %v1430 = vunpack.c.h.b16 %v1407
        %v1431 = vunpack.c.l.b16 %v1408
        %v1432 = vunpack.c.h.b16 %v1408
        %v1433 = vunpack.c.l.b16 %v1409
        %v1434 = vunpack.c.h.b16 %v1409
        %v1435 = vunpack.c.l.b16 %v1410
        %v1436 = vunpack.c.h.b16 %v1410
        %v1437 = vunpack.c.l.b16 %v1411
        %v1438 = vunpack.c.h.b16 %v1411
        %v1439 = vpack.c.b16 %v1421, %v1421
        %v1440 = vpack.c.b16 %v1422, %v1422
        %v1441 = vpack.c.b16 %v1423, %v1423
        %v1442 = vpack.c.b16 %v1424, %v1424
        %v1443 = vpack.c.b16 %v1425, %v1425
        %v1444 = vpack.c.b16 %v1426, %v1426
        %v1445 = vpack.c.b16 %v1427, %v1427
        %v1446 = vpack.c.b16 %v1428, %v1428
        %v1447 = vpack.c.b16 %v1429, %v1429
        %v1448 = vpack.c.b16 %v1430, %v1430
        %v1449 = vpack.c.b16 %v1431, %v1431
        %v1450 = vpack.c.b16 %v1432, %v1432
        %v1451 = vpack.c.b16 %v1433, %v1433
        %v1452 = vpack.c.b16 %v1434, %v1434
        %v1453 = vpack.c.b16 %v1435, %v1435
        %v1454 = vpack.c.b16 %v1436, %v1436
        %v1455 = vpack.c.b16 %v1437, %v1437
        %v1456 = vpack.c.b16 %v1438, %v1438
        %vm1475 = vcmask 76800
        %1476 = vst.msk [vmem:[%s497] sm:$0xf] %vm1475, %v1439
        %1477 = vst.msk [vmem:[%s497 + $0x4] sm:$0xf] %vm1475, %v1440
        %1478 = vst.msk [vmem:[%s497 + $0x8] sm:$0xf] %vm1475, %v1441
        %1479 = vst.msk [vmem:[%s497 + $0xc] sm:$0xf] %vm1475, %v1442
        %1480 = vst.msk [vmem:[%s497 + $0x10] sm:$0xf] %vm1475, %v1443
        %1481 = vst.msk [vmem:[%s497 + $0x14] sm:$0xf] %vm1475, %v1444
        %1482 = vst.msk [vmem:[%s497 + $0x18] sm:$0xf] %vm1475, %v1445
        %1483 = vst.msk [vmem:[%s497 + $0x1c] sm:$0xf] %vm1475, %v1446
        %1484 = vst.msk [vmem:[%s497 + $0x20] sm:$0xf] %vm1475, %v1447
        %1485 = vst.msk [vmem:[%s497 + $0x24] sm:$0xf] %vm1475, %v1448
        %1486 = vst.msk [vmem:[%s497 + $0x28] sm:$0xf] %vm1475, %v1449
        %1487 = vst.msk [vmem:[%s497 + $0x2c] sm:$0xf] %vm1475, %v1450
        %1488 = vst.msk [vmem:[%s497 + $0x30] sm:$0xf] %vm1475, %v1451
        %1489 = vst.msk [vmem:[%s497 + $0x34] sm:$0xf] %vm1475, %v1452
        %1490 = vst.msk [vmem:[%s497 + $0x38] sm:$0xf] %vm1475, %v1453
        %1491 = vst.msk [vmem:[%s497 + $0x3c] sm:$0xf] %vm1475, %v1454
        %1492 = vst.msk [vmem:[%s497 + $0x40] sm:$0xf] %vm1475, %v1455
        %1493 = vst.msk [vmem:[%s497 + $0x44] sm:$0xf] %vm1475, %v1456
        %s1494 = smul.u32 18, %s14
        %p1495 = scmp.lt.s32.totalorder %s1494, 35
        %s1496 = scalar_select %p1495, %s1494, 35
        %s1497 = smul.addr %s1496, 4
        %s1498 = scalar_lea.vmem %s3, %s1497
        // Predicated region
        $region74: #{net_forward.9} parent=68 // pred_check
          %p1499 = pneg %p100
        $region75: #{net_forward.9} parent=68 // pred_check_branch
          %1501 = sbr.rel (%p1499) target = $region77
        $region76: #{net_forward.9} parent=68 // pred_region
          %s1502 = smul.u32 18, %s14
        $region77: #{net_forward.9} parent=68 // pred_fallthru
          _
      $region69: #{net_forward.9} parent=5 // pred_fallthru
        _
      %p1503 = scmp.le.s32.totalorder 2, %s9
      // Predicated region
      $region78: #{net_forward.9} parent=5 // pred_check
        %p1504 = pneg %p1503
      $region79: #{net_forward.9} parent=5 // pred_check_branch
        %1506 = sbr.rel (%p1504) target = $region81
      $region80: #{net_forward.9} parent=5 // pred_region
        %s1507 = ssub.s32 %s9, 2
        // Predicated region
        $region82: #{net_forward.9} parent=80 // pred_check
          %p1508 = pneg %p106
        $region83: #{net_forward.9} parent=80 // pred_check_branch
          %1510 = sbr.rel (%p1508) target = $region85
        $region84: #{net_forward.9} parent=80 // pred_region
          %s1511 = smul.u32 18, %s15
          %p1512 = scmp.lt.s32.totalorder %s1511, 35
          %s1513 = scalar_select %p1512, %s1511, 35
          %s1514 = smul.addr %s1513, 4
          %s1515 = scalar_lea.vmem %s3, %s1514
        $region85: #{net_forward.9} parent=80 // pred_fallthru
          _
      $region81: #{net_forward.9} parent=5 // pred_fallthru
        _
    $region6: #{net_forward.9} parent=1 // loop_footer
      %s13 = sadd.s32 1, %s9
    $region7: #{net_forward.9} parent=1 // loop_footer_branch
      %8 = sbr.rel target = $region3
    $region8: #{net_forward.9} parent=1 // loop_exit
      _

// kernel: net_forward.11
$region0: #{net_forward.11}
  #allocation0 [shape = 'u32[]', space=smem, size = 0x4, offset = 0x4, fixed_abs, tag = 'smem constant byte address 0x4 - core index']
  #allocation1 [shape = 'u32[144,128]{1,0:T(1,128)}', space=vmem, size = 0x12000, scoped, tag = 'internal scratch']
  %s0 = inlined_call_operand.vmem [shape: bf16[288,634], index: 0, kind: input, shape index: {}]
  %s1 = inlined_call_operand.vmem [shape: bf16[634,72], index: 1, kind: input, shape index: {}]
  %s2 = inlined_call_operand.vmem [shape: f32[1,72], index: 2, kind: input, shape index: {}]
  %s3 = inlined_call_operand.vmem [shape: bf16[288,72], index: 3, kind: output, shape index: {}]
  %s4 = sld [smem:[#allocation0]]
  $region45: #{net_forward.11} parent=0
    _
  %s6 = ssub.s32 1, %s4
  %s7 = scalar_select 0, %s6, %s4
  loop: start=0, step=1, limit=4
  $region2: #{net_forward.11} parent=0 // loop_pre_header
    _
  $region3: #{net_forward.11} parent=0 // loop_header
    %s9 = sphi 0, %s13
    %p10 = scmp.ge.s32.totalorder %s9, 4
    %s19 = sphi 0, %s21
    %s22 = sphi 0, %s19
    %s23 = sphi 0, %s22
    %s39 = sphi 0, %s23
    %s43 = sphi 0, %s43
    %s45 = sphi 0, %s43
    %s46 = sphi 0, %s45
    %s60 = sphi 0, %s46
    %s64 = sphi 0, %s64
    %s66 = sphi 0, %s64
    %s67 = sphi 0, %s66
    %s81 = sphi 0, %s67
    %s87 = sphi 0, %s89
    %s90 = sphi 0, %s87
    %s91 = sphi 0, %s90
    %s107 = sphi 0, %s91
  $region4: #{net_forward.11} parent=0 // loop_header_branch
    %12 = sbr.rel (%p10) target = $region8
  $region5: #{net_forward.11} parent=0 // loop_body
    %s14 = ssub.s32 %s9, 1
    %s15 = ssub.s32 %s9, 2
    %s16 = sadd.s32 %s9, 1
    %s17 = ssub.s32 %s9, %s16
    %p18 = scmp.eq.s32.totalorder %s17, 0
    %s20 = sadd.s32 %s19, 1
    %s21 = scalar_select %p18, %s19, %s20
    %p24 = pneg %p18
    %p25 = scmp.eq.s32.totalorder %s9, 1
    %p26 = por %p24, %p25
    %p27 = scmp.ne.s32.totalorder %s19, %s22
    %p28 = scmp.eq.s32.totalorder %s9, 0
    %p29 = por %p27, %p28
    %p30 = scmp.ne.s32.totalorder %s19, %s22
    %p31 = scmp.eq.s32.totalorder %s14, 1
    %p32 = por %p30, %p31
    %p33 = scmp.ne.s32.totalorder %s22, %s23
    %p34 = scmp.eq.s32.totalorder %s14, 0
    %p35 = por %p33, %p34
    %p36 = scmp.ne.s32.totalorder %s22, %s23
    %p37 = scmp.eq.s32.totalorder %s15, 1
    %p38 = por %p36, %p37
    %p40 = scmp.ne.s32.totalorder %s23, %s39
    %p41 = scmp.eq.s32.totalorder %s15, 0
    %p42 = por %p40, %p41
    %s44 = sadd.s32 %s43, 1
    %p47 = scmp.eq.s32.totalorder %s9, 1
    %p48 = scmp.ne.s32.totalorder %s43, %s45
    %p49 = scmp.eq.s32.totalorder %s9, 0
    %p50 = por %p48, %p49
    %p51 = scmp.ne.s32.totalorder %s43, %s45
    %p52 = scmp.eq.s32.totalorder %s14, 1
    %p53 = por %p51, %p52
    %p54 = scmp.ne.s32.totalorder %s45, %s46
    %p55 = scmp.eq.s32.totalorder %s14, 0
    %p56 = por %p54, %p55
    %p57 = scmp.ne.s32.totalorder %s45, %s46
    %p58 = scmp.eq.s32.totalorder %s15, 1
    %p59 = por %p57, %p58
    %p61 = scmp.ne.s32.totalorder %s46, %s60
    %p62 = scmp.eq.s32.totalorder %s15, 0
    %p63 = por %p61, %p62
    %s65 = sadd.s32 %s64, 1
    %p68 = scmp.eq.s32.totalorder %s9, 1
    %p69 = scmp.ne.s32.totalorder %s64, %s66
    %p70 = scmp.eq.s32.totalorder %s9, 0
    %p71 = por %p69, %p70
    %p72 = scmp.ne.s32.totalorder %s64, %s66
    %p73 = scmp.eq.s32.totalorder %s14, 1
    %p74 = por %p72, %p73
    %p75 = scmp.ne.s32.totalorder %s66, %s67
    %p76 = scmp.eq.s32.totalorder %s14, 0
    %p77 = por %p75, %p76
    %p78 = scmp.ne.s32.totalorder %s66, %s67
    %p79 = scmp.eq.s32.totalorder %s15, 1
    %p80 = por %p78, %p79
    %p82 = scmp.ne.s32.totalorder %s67, %s81
    %p83 = scmp.eq.s32.totalorder %s15, 0
    %p84 = por %p82, %p83
    %s85 = ssub.s32 %s9, %s16
    %p86 = scmp.eq.s32.totalorder %s85, 0
    %s88 = sadd.s32 %s87, 1
    %s89 = scalar_select %p86, %s87, %s88
    %p92 = pneg %p86
    %p93 = scmp.eq.s32.totalorder %s9, 1
    %p94 = por %p92, %p93
    %p95 = scmp.ne.s32.totalorder %s87, %s90
    %p96 = scmp.eq.s32.totalorder %s9, 0
    %p97 = por %p95, %p96
    %p98 = scmp.ne.s32.totalorder %s87, %s90
    %p99 = scmp.eq.s32.totalorder %s14, 1
    %p100 = por %p98, %p99
    %p101 = scmp.ne.s32.totalorder %s90, %s91
    %p102 = scmp.eq.s32.totalorder %s14, 0
    %p103 = por %p101, %p102
    %p104 = scmp.ne.s32.totalorder %s90, %s91
    %p105 = scmp.eq.s32.totalorder %s15, 1
    %p106 = por %p104, %p105
    %p108 = scmp.ne.s32.totalorder %s91, %s107
    %p109 = scmp.eq.s32.totalorder %s15, 0
    %p110 = por %p108, %p109
    %p111 = scmp.le.s32.totalorder 1, %s9
    %p112 = scmp.lt.s32.totalorder %s9, 3
    %p113 = pnand %p111, %p112
    %p114 = pneg %p113
    // Predicated region
    $region9: #{net_forward.11} parent=5 // pred_check
      _
    $region10: #{net_forward.11} parent=5 // pred_check_branch
      %116 = sbr.rel (%p113) target = $region12
    $region11: #{net_forward.11} parent=5 // pred_region
      %s117 = ssub.s32 %s9, 1
      // Predicated region
      $region13: #{net_forward.11} parent=11 // pred_check
        %p118 = pneg %p56
      $region14: #{net_forward.11} parent=11 // pred_check_branch
        %120 = sbr.rel (%p118) target = $region16
      $region15: #{net_forward.11} parent=11 // pred_region
        _
      $region16: #{net_forward.11} parent=11 // pred_fallthru
        _
      // Predicated region
      $region17: #{net_forward.11} parent=11 // pred_check
        %p121 = pneg %p77
      $region18: #{net_forward.11} parent=11 // pred_check_branch
        %123 = sbr.rel (%p121) target = $region20
      $region19: #{net_forward.11} parent=11 // pred_region
        _
      $region20: #{net_forward.11} parent=11 // pred_fallthru
        _
    $region12: #{net_forward.11} parent=5 // pred_fallthru
      _
    %p124 = scmp.lt.s32.totalorder %s9, 2
    // Predicated region
    $region21: #{net_forward.11} parent=5 // pred_check
      %p125 = pneg %p124
    $region22: #{net_forward.11} parent=5 // pred_check_branch
      %127 = sbr.rel (%p125) target = $region24
    $region23: #{net_forward.11} parent=5 // pred_region
      // Predicated region
      $region25: #{net_forward.11} parent=23 // pred_check
        %p128 = pneg %p29
      $region26: #{net_forward.11} parent=23 // pred_check_branch
        %130 = sbr.rel (%p128) target = $region28
      $region27: #{net_forward.11} parent=23 // pred_region
        %s131 = smul.u32 18, %s9
        %p132 = scmp.lt.s32.totalorder %s131, 35
        %s133 = scalar_select %p132, %s131, 35
        %s134 = smul.addr %s133, 5
        %s135 = smul.addr %s134, 4
        %s136 = scalar_lea.vmem %s0, %s135
        %s137 = smul.u32 18, %s9
      $region28: #{net_forward.11} parent=23 // pred_fallthru
        _
    $region24: #{net_forward.11} parent=5 // pred_fallthru
      _
    %p138 = scmp.le.s32.totalorder 1, %s9
    %p139 = scmp.lt.s32.totalorder %s9, 3
    %p140 = pnand %p138, %p139
    %p141 = pneg %p140
    // Predicated region
    $region29: #{net_forward.11} parent=5 // pred_check
      _
    $region30: #{net_forward.11} parent=5 // pred_check_branch
      %143 = sbr.rel (%p140) target = $region32
    $region31: #{net_forward.11} parent=5 // pred_region
      %s144 = ssub.s32 %s9, 1
      %s145 = smul.u32 18, %s14
      %p146 = scmp.lt.s32.totalorder %s145, 35
      %s147 = scalar_select %p146, %s145, 35
      %s148 = smul.addr %s147, 5
      %s149 = smul.addr %s148, 4
      %s150 = scalar_lea.vmem %s0, %s149
      %p151 = pneg %p35
      %p152 = pneg %p32
      %p153 = pneg %p56
      %p154 = pneg %p53
      %p155 = pneg %p77
      %p156 = pneg %p74
      %p157 = pneg %p103
      %p158 = pneg %p100
      %s159 = smul.u32 18, %s14
      %p160 = scmp.lt.s32.totalorder %s159, 35
      %s161 = scalar_select %p160, %s159, 35
      %s162 = smul.addr %s161, 4
      %s163 = scalar_lea.vmem %s3, %s162
      %s164 = smul.u32 18, %s14
      %p165 = scmp.lt.s32.totalorder %s164, 35
      %s166 = scalar_select %p165, %s164, 35
      %s167 = smul.addr %s166, 5
      %s168 = smul.addr %s167, 4
      %s169 = scalar_lea.vmem %s0, %s168
      %s170 = smul.u32 18, %s14
      %s171 = smul.u32 18, %s14
      %p172 = scmp.lt.s32.totalorder %s171, 35
      %s173 = scalar_select %p172, %s171, 35
      %s174 = smul.addr %s173, 4
      %s175 = scalar_lea.vmem %s3, %s174
      %s176 = smul.u32 18, %s14
      %v178 = vld [vmem:[%s169] sm:$0xff]
      %v179 = vld [vmem:[%s169 + $0x8] sm:$0xff]
      %v180 = vld [vmem:[%s169 + $0x10] sm:$0xf]
      %v181 = vld [vmem:[%s169 + $0x14] sm:$0xff]
      %v182 = vld [vmem:[%s169 + $0x1c] sm:$0xff]
      %v183 = vld [vmem:[%s169 + $0x24] sm:$0xf]
      %v184 = vld [vmem:[%s169 + $0x28] sm:$0xff]
      %v185 = vld [vmem:[%s169 + $0x30] sm:$0xff]
      %v186 = vld [vmem:[%s169 + $0x38] sm:$0xf]
      %v187 = vld [vmem:[%s169 + $0x3c] sm:$0xff]
      %v188 = vld [vmem:[%s169 + $0x44] sm:$0xff]
      %v189 = vld [vmem:[%s169 + $0x4c] sm:$0xf]
      %v190 = vld [vmem:[%s169 + $0x50] sm:$0xff]
      %v191 = vld [vmem:[%s169 + $0x58] sm:$0xff]
      %v192 = vld [vmem:[%s169 + $0x60] sm:$0xf]
      %v193 = vld [vmem:[%s169 + $0x64] sm:$0xff]
      %v194 = vld [vmem:[%s169 + $0x6c] sm:$0xff]
      %v195 = vld [vmem:[%s169 + $0x74] sm:$0xf]
      %v196 = vld [vmem:[%s169 + $0x78] sm:$0xff]
      %v197 = vld [vmem:[%s169 + $0x80] sm:$0xff]
      %v198 = vld [vmem:[%s169 + $0x88] sm:$0xf]
      %v199 = vld [vmem:[%s169 + $0x8c] sm:$0xff]
      %v200 = vld [vmem:[%s169 + $0x94] sm:$0xff]
      %v201 = vld [vmem:[%s169 + $0x9c] sm:$0xf]
      %v202 = vld [vmem:[%s169 + $0xa0] sm:$0xff]
      %v203 = vld [vmem:[%s169 + $0xa8] sm:$0xff]
      %v204 = vld [vmem:[%s169 + $0xb0] sm:$0xf]
      %v205 = vld [vmem:[%s169 + $0xb4] sm:$0xff]
      %v206 = vld [vmem:[%s169 + $0xbc] sm:$0xff]
      %v207 = vld [vmem:[%s169 + $0xc4] sm:$0xf]
      %v208 = vld [vmem:[%s169 + $0xc8] sm:$0xff]
      %v209 = vld [vmem:[%s169 + $0xd0] sm:$0xff]
      %v210 = vld [vmem:[%s169 + $0xd8] sm:$0xf]
      %v211 = vld [vmem:[%s169 + $0xdc] sm:$0xff]
      %v212 = vld [vmem:[%s169 + $0xe4] sm:$0xff]
      %v213 = vld [vmem:[%s169 + $0xec] sm:$0xf]
      %v214 = vld [vmem:[%s169 + $0xf0] sm:$0xff]
      %v215 = vld [vmem:[%s169 + $0xf8] sm:$0xff]
      %v216 = vld [vmem:[%s169 + $0x100] sm:$0xf]
      %v217 = vld [vmem:[%s169 + $0x104] sm:$0xff]
      %v218 = vld [vmem:[%s169 + $0x10c] sm:$0xff]
      %v219 = vld [vmem:[%s169 + $0x114] sm:$0xf]
      %v220 = vld [vmem:[%s169 + $0x118] sm:$0xff]
      %v221 = vld [vmem:[%s169 + $0x120] sm:$0xff]
      %v222 = vld [vmem:[%s169 + $0x128] sm:$0xf]
      %v223 = vld [vmem:[%s169 + $0x12c] sm:$0xff]
      %v224 = vld [vmem:[%s169 + $0x134] sm:$0xff]
      %v225 = vld [vmem:[%s169 + $0x13c] sm:$0xf]
      %v226 = vld [vmem:[%s169 + $0x140] sm:$0xff]
      %v227 = vld [vmem:[%s169 + $0x148] sm:$0xff]
      %v228 = vld [vmem:[%s169 + $0x150] sm:$0xf]
      %v229 = vld [vmem:[%s169 + $0x154] sm:$0xff]
      %v230 = vld [vmem:[%s169 + $0x15c] sm:$0xff]
      %v231 = vld [vmem:[%s169 + $0x164] sm:$0xf]
      %v232 = vld [vmem:[%s1] sm:$0xf]
      %v233 = vld [vmem:[%s1 + $0x4] sm:$0xf]
      %v234 = vld [vmem:[%s1 + $0x8] sm:$0xf]
      %v235 = vld [vmem:[%s1 + $0xc] sm:$0xf]
      %v236 = vld [vmem:[%s1 + $0x10] sm:$0xf]
      %v237 = vld [vmem:[%s1 + $0x14] sm:$0xf]
      %v238 = vld [vmem:[%s1 + $0x18] sm:$0xf]
      %v239 = vld [vmem:[%s1 + $0x1c] sm:$0xf]
      %v240 = vld [vmem:[%s1 + $0x20] sm:$0xf]
      %v241 = vld [vmem:[%s1 + $0x24] sm:$0xf]
      %v242 = vld [vmem:[%s1 + $0x28] sm:$0xf]
      %v243 = vld [vmem:[%s1 + $0x2c] sm:$0xf]
      %v244 = vld [vmem:[%s1 + $0x30] sm:$0xf]
      %v245 = vld [vmem:[%s1 + $0x34] sm:$0xf]
      %v246 = vld [vmem:[%s1 + $0x38] sm:$0xf]
      %v247 = vld [vmem:[%s1 + $0x3c] sm:$0xf]
      %v248 = vld [vmem:[%s1 + $0x40] sm:$0xf]
      %v249 = vld [vmem:[%s1 + $0x44] sm:$0xf]
      %v250 = vld [vmem:[%s1 + $0x48] sm:$0xf]
      %v251 = vld [vmem:[%s1 + $0x4c] sm:$0xf]
      %v252 = vld [vmem:[%s1 + $0x50] sm:$0xf]
      %v253 = vld [vmem:[%s1 + $0x54] sm:$0xf]
      %v254 = vld [vmem:[%s1 + $0x58] sm:$0xf]
      %v255 = vld [vmem:[%s1 + $0x5c] sm:$0xf]
      %v256 = vld [vmem:[%s1 + $0x60] sm:$0xf]
      %v257 = vld [vmem:[%s1 + $0x64] sm:$0xf]
      %v258 = vld [vmem:[%s1 + $0x68] sm:$0xf]
      %v259 = vld [vmem:[%s1 + $0x6c] sm:$0xf]
      %v260 = vld [vmem:[%s1 + $0x70] sm:$0xf]
      %v261 = vld [vmem:[%s1 + $0x74] sm:$0xf]
      %v262 = vld [vmem:[%s1 + $0x78] sm:$0xf]
      %v263 = vld [vmem:[%s1 + $0x7c] sm:$0xf]
      %v264 = vld [vmem:[%s1 + $0x80] sm:$0xf]
      %v265 = vld [vmem:[%s1 + $0x84] sm:$0xf]
      %v266 = vld [vmem:[%s1 + $0x88] sm:$0xf]
      %v267 = vld [vmem:[%s1 + $0x8c] sm:$0xf]
      %v268 = vld [vmem:[%s1 + $0x90] sm:$0xf]
      %v269 = vld [vmem:[%s1 + $0x94] sm:$0xf]
      %v270 = vld [vmem:[%s1 + $0x98] sm:$0xf]
      %v271 = vld [vmem:[%s1 + $0x9c] sm:$0xf]
      %v272 = vld [vmem:[%s1 + $0xa0] sm:$0xf]
      %v273 = vld [vmem:[%s1 + $0xa4] sm:$0xf]
      %v274 = vld [vmem:[%s1 + $0xa8] sm:$0xf]
      %v275 = vld [vmem:[%s1 + $0xac] sm:$0xf]
      %v276 = vld [vmem:[%s1 + $0xb0] sm:$0xf]
      %v277 = vld [vmem:[%s1 + $0xb4] sm:$0xf]
      %v278 = vld [vmem:[%s1 + $0xb8] sm:$0xf]
      %v279 = vld [vmem:[%s1 + $0xbc] sm:$0xf]
      %v280 = vld [vmem:[%s1 + $0xc0] sm:$0xf]
      %v281 = vld [vmem:[%s1 + $0xc4] sm:$0xf]
      %v282 = vld [vmem:[%s1 + $0xc8] sm:$0xf]
      %v283 = vld [vmem:[%s1 + $0xcc] sm:$0xf]
      %v284 = vld [vmem:[%s1 + $0xd0] sm:$0xf]
      %v285 = vld [vmem:[%s1 + $0xd4] sm:$0xf]
      %v286 = vld [vmem:[%s1 + $0xd8] sm:$0xf]
      %v287 = vld [vmem:[%s1 + $0xdc] sm:$0xf]
      %v288 = vld [vmem:[%s1 + $0xe0] sm:$0xf]
      %v289 = vld [vmem:[%s1 + $0xe4] sm:$0xf]
      %v290 = vld [vmem:[%s1 + $0xe8] sm:$0xf]
      %v291 = vld [vmem:[%s1 + $0xec] sm:$0xf]
      %v292 = vld [vmem:[%s1 + $0xf0] sm:$0xf]
      %v293 = vld [vmem:[%s1 + $0xf4] sm:$0xf]
      %v294 = vld [vmem:[%s1 + $0xf8] sm:$0xf]
      %v295 = vld [vmem:[%s1 + $0xfc] sm:$0xf]
      %v296 = vld [vmem:[%s1 + $0x100] sm:$0xf]
      %v297 = vld [vmem:[%s1 + $0x104] sm:$0xf]
      %v298 = vld [vmem:[%s1 + $0x108] sm:$0xf]
      %v299 = vld [vmem:[%s1 + $0x10c] sm:$0xf]
      %v300 = vld [vmem:[%s1 + $0x110] sm:$0xf]
      %v301 = vld [vmem:[%s1 + $0x114] sm:$0xf]
      %v302 = vld [vmem:[%s1 + $0x118] sm:$0xf]
      %v303 = vld [vmem:[%s1 + $0x11c] sm:$0xf]
      %v304 = vld [vmem:[%s1 + $0x120] sm:$0xf]
      %v305 = vld [vmem:[%s1 + $0x124] sm:$0xf]
      %v306 = vld [vmem:[%s1 + $0x128] sm:$0xf]
      %v307 = vld [vmem:[%s1 + $0x12c] sm:$0xf]
      %v308 = vld [vmem:[%s1 + $0x130] sm:$0xf]
      %v309 = vld [vmem:[%s1 + $0x134] sm:$0xf]
      %v310 = vld [vmem:[%s1 + $0x138] sm:$0xf]
      %v311 = vld [vmem:[%s1 + $0x13c] sm:$0x1]
      %v312 = vld [vmem:[%s2] sm:$0x1]
      %v314 = vlaneseq
      %v315 = vshrl.u32 %v314, 7
      %v316 = vsub.s32 0, %v315
      %v317 = vrot.slane %v312, %v316
      %v373 = vunpack.c.l.b16 %v178
      %v374 = vunpack.c.h.b16 %v178
      %v375 = vunpack.c.l.b16 %v179
      %v376 = vunpack.c.h.b16 %v179
      %v377 = vunpack.c.l.b16 %v180
      %v378 = vunpack.c.l.b16 %v181
      %v379 = vunpack.c.h.b16 %v181
      %v380 = vunpack.c.l.b16 %v182
      %v381 = vunpack.c.h.b16 %v182
      %v382 = vunpack.c.l.b16 %v183
      %v383 = vunpack.c.l.b16 %v184
      %v384 = vunpack.c.h.b16 %v184
      %v385 = vunpack.c.l.b16 %v185
      %v386 = vunpack.c.h.b16 %v185
      %v387 = vunpack.c.l.b16 %v186
      %v388 = vunpack.c.l.b16 %v187
      %v389 = vunpack.c.h.b16 %v187
      %v390 = vunpack.c.l.b16 %v188
      %v391 = vunpack.c.h.b16 %v188
      %v392 = vunpack.c.l.b16 %v189
      %v393 = vunpack.c.l.b16 %v190
      %v394 = vunpack.c.h.b16 %v190
      %v395 = vunpack.c.l.b16 %v191
      %v396 = vunpack.c.h.b16 %v191
      %v397 = vunpack.c.l.b16 %v192
      %v398 = vunpack.c.l.b16 %v193
      %v399 = vunpack.c.h.b16 %v193
      %v400 = vunpack.c.l.b16 %v194
      %v401 = vunpack.c.h.b16 %v194
      %v402 = vunpack.c.l.b16 %v195
      %v403 = vunpack.c.l.b16 %v196
      %v404 = vunpack.c.h.b16 %v196
      %v405 = vunpack.c.l.b16 %v197
      %v406 = vunpack.c.h.b16 %v197
      %v407 = vunpack.c.l.b16 %v198
      %v408 = vunpack.c.l.b16 %v199
      %v409 = vunpack.c.h.b16 %v199
      %v410 = vunpack.c.l.b16 %v200
      %v411 = vunpack.c.h.b16 %v200
      %v412 = vunpack.c.l.b16 %v201
      %v413 = vunpack.c.l.b16 %v202
      %v414 = vunpack.c.h.b16 %v202
      %v415 = vunpack.c.l.b16 %v203
      %v416 = vunpack.c.h.b16 %v203
      %v417 = vunpack.c.l.b16 %v204
      %v418 = vunpack.c.l.b16 %v205
      %v419 = vunpack.c.h.b16 %v205
      %v420 = vunpack.c.l.b16 %v206
      %v421 = vunpack.c.h.b16 %v206
      %v422 = vunpack.c.l.b16 %v207
      %v423 = vunpack.c.l.b16 %v208
      %v424 = vunpack.c.h.b16 %v208
      %v425 = vunpack.c.l.b16 %v209
      %v426 = vunpack.c.h.b16 %v209
      %v427 = vunpack.c.l.b16 %v210
      %v428 = vunpack.c.l.b16 %v211
      %v429 = vunpack.c.h.b16 %v211
      %v430 = vunpack.c.l.b16 %v212
      %v431 = vunpack.c.h.b16 %v212
      %v432 = vunpack.c.l.b16 %v213
      %v433 = vunpack.c.l.b16 %v214
      %v434 = vunpack.c.h.b16 %v214
      %v435 = vunpack.c.l.b16 %v215
      %v436 = vunpack.c.h.b16 %v215
      %v437 = vunpack.c.l.b16 %v216
      %v438 = vunpack.c.l.b16 %v217
      %v439 = vunpack.c.h.b16 %v217
      %v440 = vunpack.c.l.b16 %v218
      %v441 = vunpack.c.h.b16 %v218
      %v442 = vunpack.c.l.b16 %v219
      %v443 = vunpack.c.l.b16 %v220
      %v444 = vunpack.c.h.b16 %v220
      %v445 = vunpack.c.l.b16 %v221
      %v446 = vunpack.c.h.b16 %v221
      %v447 = vunpack.c.l.b16 %v222
      %v448 = vunpack.c.l.b16 %v223
      %v449 = vunpack.c.h.b16 %v223
      %v450 = vunpack.c.l.b16 %v224
      %v451 = vunpack.c.h.b16 %v224
      %v452 = vunpack.c.l.b16 %v225
      %v453 = vunpack.c.l.b16 %v226
      %v454 = vunpack.c.h.b16 %v226
      %v455 = vunpack.c.l.b16 %v227
      %v456 = vunpack.c.h.b16 %v227
      %v457 = vunpack.c.l.b16 %v228
      %v458 = vunpack.c.l.b16 %v229
      %v459 = vunpack.c.h.b16 %v229
      %v460 = vunpack.c.l.b16 %v230
      %v461 = vunpack.c.h.b16 %v230
      %v462 = vunpack.c.l.b16 %v231
      %v463 = vpack.c.b16 %v378, %v373
      %v464 = vpack.c.b16 %v379, %v374
      %v465 = vpack.c.b16 %v380, %v375
      %v466 = vpack.c.b16 %v381, %v376
      %v467 = vpack.c.b16 %v382, %v377
      %v468 = vpack.c.b16 %v388, %v383
      %v469 = vpack.c.b16 %v389, %v384
      %v470 = vpack.c.b16 %v390, %v385
      %v471 = vpack.c.b16 %v391, %v386
      %v472 = vpack.c.b16 %v392, %v387
      %v473 = vpack.c.b16 %v398, %v393
      %v474 = vpack.c.b16 %v399, %v394
      %v475 = vpack.c.b16 %v400, %v395
      %v476 = vpack.c.b16 %v401, %v396
      %v477 = vpack.c.b16 %v402, %v397
      %v478 = vpack.c.b16 %v408, %v403
      %v479 = vpack.c.b16 %v409, %v404
      %v480 = vpack.c.b16 %v410, %v405
      %v481 = vpack.c.b16 %v411, %v406
      %v482 = vpack.c.b16 %v412, %v407
      %v483 = vpack.c.b16 %v418, %v413
      %v484 = vpack.c.b16 %v419, %v414
      %v485 = vpack.c.b16 %v420, %v415
      %v486 = vpack.c.b16 %v421, %v416
      %v487 = vpack.c.b16 %v422, %v417
      %v488 = vpack.c.b16 %v428, %v423
      %v489 = vpack.c.b16 %v429, %v424
      %v490 = vpack.c.b16 %v430, %v425
      %v491 = vpack.c.b16 %v431, %v426
      %v492 = vpack.c.b16 %v432, %v427
      %v493 = vpack.c.b16 %v438, %v433
      %v494 = vpack.c.b16 %v439, %v434
      %v495 = vpack.c.b16 %v440, %v435
      %v496 = vpack.c.b16 %v441, %v436
      %v497 = vpack.c.b16 %v442, %v437
      %v498 = vpack.c.b16 %v448, %v443
      %v499 = vpack.c.b16 %v449, %v444
      %v500 = vpack.c.b16 %v450, %v445
      %v501 = vpack.c.b16 %v451, %v446
      %v502 = vpack.c.b16 %v452, %v447
      %v503 = vpack.c.b16 %v458, %v453
      %v504 = vpack.c.b16 %v459, %v454
      %v505 = vpack.c.b16 %v460, %v455
      %v506 = vpack.c.b16 %v461, %v456
      %v507 = vpack.c.b16 %v462, %v457
      %v624 = vunpack.c.l.b16 %v232
      %v625 = vunpack.c.l.b16 %v233
      %v626 = vunpack.c.l.b16 %v234
      %v627 = vunpack.c.l.b16 %v235
      %v628 = vunpack.c.l.b16 %v236
      %v629 = vunpack.c.l.b16 %v237
      %v630 = vunpack.c.l.b16 %v238
      %v631 = vunpack.c.l.b16 %v239
      %v632 = vunpack.c.l.b16 %v240
      %v633 = vunpack.c.l.b16 %v241
      %v634 = vunpack.c.l.b16 %v242
      %v635 = vunpack.c.l.b16 %v243
      %v636 = vunpack.c.l.b16 %v244
      %v637 = vunpack.c.l.b16 %v245
      %v638 = vunpack.c.l.b16 %v246
      %v639 = vunpack.c.l.b16 %v247
      %v640 = vunpack.c.l.b16 %v248
      %v641 = vunpack.c.l.b16 %v249
      %v642 = vunpack.c.l.b16 %v250
      %v643 = vunpack.c.l.b16 %v251
      %v644 = vunpack.c.l.b16 %v252
      %v645 = vunpack.c.l.b16 %v253
      %v646 = vunpack.c.l.b16 %v254
      %v647 = vunpack.c.l.b16 %v255
      %v648 = vunpack.c.l.b16 %v256
      %v649 = vunpack.c.l.b16 %v257
      %v650 = vunpack.c.l.b16 %v258
      %v651 = vunpack.c.l.b16 %v259
      %v652 = vunpack.c.l.b16 %v260
      %v653 = vunpack.c.l.b16 %v261
      %v654 = vunpack.c.l.b16 %v262
      %v655 = vunpack.c.l.b16 %v263
      %v656 = vunpack.c.l.b16 %v264
      %v657 = vunpack.c.l.b16 %v265
      %v658 = vunpack.c.l.b16 %v266
      %v659 = vunpack.c.l.b16 %v267
      %v660 = vunpack.c.l.b16 %v268
      %v661 = vunpack.c.l.b16 %v269
      %v662 = vunpack.c.l.b16 %v270
      %v663 = vunpack.c.l.b16 %v271
      %v664 = vunpack.c.l.b16 %v272
      %v665 = vunpack.c.l.b16 %v273
      %v666 = vunpack.c.l.b16 %v274
      %v667 = vunpack.c.l.b16 %v275
      %v668 = vunpack.c.l.b16 %v276
      %v669 = vunpack.c.l.b16 %v277
      %v670 = vunpack.c.l.b16 %v278
      %v671 = vunpack.c.l.b16 %v279
      %v672 = vunpack.c.l.b16 %v280
      %v673 = vunpack.c.l.b16 %v281
      %v674 = vunpack.c.l.b16 %v282
      %v675 = vunpack.c.l.b16 %v283
      %v676 = vunpack.c.l.b16 %v284
      %v677 = vunpack.c.l.b16 %v285
      %v678 = vunpack.c.l.b16 %v286
      %v679 = vunpack.c.l.b16 %v287
      %v680 = vunpack.c.l.b16 %v288
      %v681 = vunpack.c.l.b16 %v289
      %v682 = vunpack.c.l.b16 %v290
      %v683 = vunpack.c.l.b16 %v291
      %v684 = vunpack.c.l.b16 %v292
      %v685 = vunpack.c.l.b16 %v293
      %v686 = vunpack.c.l.b16 %v294
      %v687 = vunpack.c.l.b16 %v295
      %v688 = vunpack.c.l.b16 %v296
      %v689 = vunpack.c.l.b16 %v297
      %v690 = vunpack.c.l.b16 %v298
      %v691 = vunpack.c.l.b16 %v299
      %v692 = vunpack.c.l.b16 %v300
      %v693 = vunpack.c.l.b16 %v301
      %v694 = vunpack.c.l.b16 %v302
      %v695 = vunpack.c.l.b16 %v303
      %v696 = vunpack.c.l.b16 %v304
      %v697 = vunpack.c.l.b16 %v305
      %v698 = vunpack.c.l.b16 %v306
      %v699 = vunpack.c.l.b16 %v307
      %v700 = vunpack.c.l.b16 %v308
      %v701 = vunpack.c.l.b16 %v309
      %v702 = vunpack.c.l.b16 %v310
      %v703 = vunpack.c.l.b16 %v311
      %v704 = vpack.c.b16 %v625, %v624
      %v705 = vpack.c.b16 %v627, %v626
      %v706 = vpack.c.b16 %v629, %v628
      %v707 = vpack.c.b16 %v631, %v630
      %v708 = vpack.c.b16 %v633, %v632
      %v709 = vpack.c.b16 %v635, %v634
      %v710 = vpack.c.b16 %v637, %v636
      %v711 = vpack.c.b16 %v639, %v638
      %v712 = vpack.c.b16 %v641, %v640
      %v713 = vpack.c.b16 %v643, %v642
      %v714 = vpack.c.b16 %v645, %v644
      %v715 = vpack.c.b16 %v647, %v646
      %v716 = vpack.c.b16 %v649, %v648
      %v717 = vpack.c.b16 %v651, %v650
      %v718 = vpack.c.b16 %v653, %v652
      %v719 = vpack.c.b16 %v655, %v654
      %v720 = vpack.c.b16 %v657, %v656
      %v721 = vpack.c.b16 %v659, %v658
      %v722 = vpack.c.b16 %v661, %v660
      %v723 = vpack.c.b16 %v663, %v662
      %v724 = vpack.c.b16 %v665, %v664
      %v725 = vpack.c.b16 %v667, %v666
      %v726 = vpack.c.b16 %v669, %v668
      %v727 = vpack.c.b16 %v671, %v670
      %v728 = vpack.c.b16 %v673, %v672
      %v729 = vpack.c.b16 %v675, %v674
      %v730 = vpack.c.b16 %v677, %v676
      %v731 = vpack.c.b16 %v679, %v678
      %v732 = vpack.c.b16 %v681, %v680
      %v733 = vpack.c.b16 %v683, %v682
      %v734 = vpack.c.b16 %v685, %v684
      %v735 = vpack.c.b16 %v687, %v686
      %v736 = vpack.c.b16 %v689, %v688
      %v737 = vpack.c.b16 %v691, %v690
      %v738 = vpack.c.b16 %v693, %v692
      %v739 = vpack.c.b16 %v695, %v694
      %v740 = vpack.c.b16 %v697, %v696
      %v741 = vpack.c.b16 %v699, %v698
      %v742 = vpack.c.b16 %v701, %v700
      %v743 = vpack.c.b16 %v703, %v702
      %vm783 = vcmask 998400
      %v785 = vsel %vm783, %v467, 0
      %v788 = vsel %vm783, %v472, 0
      %v791 = vsel %vm783, %v477, 0
      %v794 = vsel %vm783, %v482, 0
      %v797 = vsel %vm783, %v487, 0
      %v800 = vsel %vm783, %v492, 0
      %v803 = vsel %vm783, %v497, 0
      %v806 = vsel %vm783, %v502, 0
      %v809 = vsel %vm783, %v507, 0
      %vm811 = vcmask 1044480
      %v813 = vsel %vm811, %v743, 0
      %815 = vmatprep.subr.bf16.mxu0 0
      %816 = vmatpush1.bf16.msra.mxu0 %v704
      %817 = vmatprep.subr.bf16.mxu0 0
      %818 = vmatpush1.bf16.msra.mxu0 %v705
      %819 = vmatprep.subr.bf16.mxu0 0
      %820 = vmatpush1.bf16.msra.mxu0 %v706
      %821 = vmatprep.subr.bf16.mxu0 0
      %822 = vmatpush1.bf16.msra.mxu0 %v707
      %823 = vmatprep.subr.bf16.mxu0 0
      %824 = vmatpush1.bf16.msra.mxu0 %v708
      %825 = vmatprep.subr.bf16.mxu0 0
      %826 = vmatpush1.bf16.msra.mxu0 %v709
      %827 = vmatprep.subr.bf16.mxu0 0
      %828 = vmatpush1.bf16.msra.mxu0 %v710
      %829 = vmatprep.subr.bf16.mxu0 0
      %830 = vmatpush1.bf16.msra.mxu0 %v711
      %831 = vmatprep.subr.bf16.mxu0 0
      %832 = vmatpush1.bf16.msra.mxu0 %v712
      %833 = vmatprep.subr.bf16.mxu0 0
      %834 = vmatpush1.bf16.msra.mxu0 %v713
      %835 = vmatprep.subr.bf16.mxu0 0
      %836 = vmatpush1.bf16.msra.mxu0 %v714
      %837 = vmatprep.subr.bf16.mxu0 0
      %838 = vmatpush1.bf16.msra.mxu0 %v715
      %839 = vmatprep.subr.bf16.mxu0 0
      %840 = vmatpush1.bf16.msra.mxu0 %v716
      %841 = vmatprep.subr.bf16.mxu0 0
      %842 = vmatpush1.bf16.msra.mxu0 %v717
      %843 = vmatprep.subr.bf16.mxu0 0
      %844 = vmatpush1.bf16.msra.mxu0 %v718
      %845 = vmatprep.subr.bf16.mxu0 0
      %846 = vmatpush1.bf16.msra.mxu0 %v719
      %847 = vmatprep.mubr.bf16.mxu0 %v464
      %848 = vmatmul.mubr.bf16.gmra.mrb[0].mxu0 %v463
      %v849 = vpop.f32.mrb[0].mxu0
      %v850 = vadd.f32 %v317, %v849
      %v851 = vpop.f32.mrb[0].mxu0
      %v852 = vpop.f32.mrb[0].mxu0
      %v853 = vadd.f32 %v317, %v852
      %v854 = vpop.f32.mrb[0].mxu0
      %855 = vmatprep.mubr.bf16.mxu0 %v469
      %856 = vmatmul.mubr.bf16.gmra.mrb[0].mxu0 %v468
      %v857 = vpop.f32.mrb[0].mxu0
      %v858 = vadd.f32 %v317, %v857
      %v859 = vpop.f32.mrb[0].mxu0
      %v860 = vpop.f32.mrb[0].mxu0
      %v861 = vadd.f32 %v317, %v860
      %v862 = vpop.f32.mrb[0].mxu0
      %863 = vmatprep.mubr.bf16.mxu0 %v474
      %864 = vmatmul.mubr.bf16.gmra.mrb[0].mxu0 %v473
      %v865 = vpop.f32.mrb[0].mxu0
      %v866 = vadd.f32 %v317, %v865
      %v867 = vpop.f32.mrb[0].mxu0
      %v868 = vpop.f32.mrb[0].mxu0
      %v869 = vadd.f32 %v317, %v868
      %v870 = vpop.f32.mrb[0].mxu0
      %871 = vmatprep.mubr.bf16.mxu0 %v479
      %872 = vmatmul.mubr.bf16.gmra.mrb[0].mxu0 %v478
      %v873 = vpop.f32.mrb[0].mxu0
      %v874 = vadd.f32 %v317, %v873
      %v875 = vpop.f32.mrb[0].mxu0
      %v876 = vpop.f32.mrb[0].mxu0
      %v877 = vadd.f32 %v317, %v876
      %v878 = vpop.f32.mrb[0].mxu0
      %879 = vmatprep.mubr.bf16.mxu0 %v484
      %880 = vmatmul.mubr.bf16.gmra.mrb[0].mxu0 %v483
      %v881 = vpop.f32.mrb[0].mxu0
      %v882 = vadd.f32 %v317, %v881
      %v883 = vpop.f32.mrb[0].mxu0
      %v884 = vpop.f32.mrb[0].mxu0
      %v885 = vadd.f32 %v317, %v884
      %v886 = vpop.f32.mrb[0].mxu0
      %887 = vmatprep.mubr.bf16.mxu0 %v489
      %888 = vmatmul.mubr.bf16.gmra.mrb[0].mxu0 %v488
      %v889 = vpop.f32.mrb[0].mxu0
      %v890 = vadd.f32 %v317, %v889
      %v891 = vpop.f32.mrb[0].mxu0
      %v892 = vpop.f32.mrb[0].mxu0
      %v893 = vadd.f32 %v317, %v892
      %v894 = vpop.f32.mrb[0].mxu0
      %895 = vmatprep.mubr.bf16.mxu0 %v494
      %896 = vmatmul.mubr.bf16.gmra.mrb[0].mxu0 %v493
      %v897 = vpop.f32.mrb[0].mxu0
      %v898 = vadd.f32 %v317, %v897
      %v899 = vpop.f32.mrb[0].mxu0
      %v900 = vpop.f32.mrb[0].mxu0
      %v901 = vadd.f32 %v317, %v900
      %v902 = vpop.f32.mrb[0].mxu0
      %903 = vmatprep.mubr.bf16.mxu0 %v499
      %904 = vmatmul.mubr.bf16.gmra.mrb[0].mxu0 %v498
      %v905 = vpop.f32.mrb[0].mxu0
      %v906 = vadd.f32 %v317, %v905
      %v907 = vpop.f32.mrb[0].mxu0
      %v908 = vpop.f32.mrb[0].mxu0
      %v909 = vadd.f32 %v317, %v908
      %v910 = vpop.f32.mrb[0].mxu0
      %911 = vmatprep.mubr.bf16.mxu0 %v504
      %912 = vmatmul.mubr.bf16.gmra.mrb[0].mxu0 %v503
      %v913 = vpop.f32.mrb[0].mxu0
      %v914 = vadd.f32 %v317, %v913
      %v915 = vpop.f32.mrb[0].mxu0
      %v916 = vpop.f32.mrb[0].mxu0
      %v917 = vadd.f32 %v317, %v916
      %v918 = vpop.f32.mrb[0].mxu0
      %919 = vdwg.mxu0
      %920 = vmatprep.subr.bf16.mxu0 0
      %921 = vmatpush1.bf16.msra.mxu0 %v720
      %922 = vmatprep.subr.bf16.mxu0 0
      %923 = vmatpush1.bf16.msra.mxu0 %v721
      %924 = vmatprep.subr.bf16.mxu0 0
      %925 = vmatpush1.bf16.msra.mxu0 %v722
      %926 = vmatprep.subr.bf16.mxu0 0
      %927 = vmatpush1.bf16.msra.mxu0 %v723
      %928 = vmatprep.subr.bf16.mxu0 0
      %929 = vmatpush1.bf16.msra.mxu0 %v724
      %930 = vmatprep.subr.bf16.mxu0 0
      %931 = vmatpush1.bf16.msra.mxu0 %v725
      %932 = vmatprep.subr.bf16.mxu0 0
      %933 = vmatpush1.bf16.msra.mxu0 %v726
      %934 = vmatprep.subr.bf16.mxu0 0
      %935 = vmatpush1.bf16.msra.mxu0 %v727
      %936 = vmatprep.subr.bf16.mxu0 0
      %937 = vmatpush1.bf16.msra.mxu0 %v728
      %938 = vmatprep.subr.bf16.mxu0 0
      %939 = vmatpush1.bf16.msra.mxu0 %v729
      %940 = vmatprep.subr.bf16.mxu0 0
      %941 = vmatpush1.bf16.msra.mxu0 %v730
      %942 = vmatprep.subr.bf16.mxu0 0
      %943 = vmatpush1.bf16.msra.mxu0 %v731
      %944 = vmatprep.subr.bf16.mxu0 0
      %945 = vmatpush1.bf16.msra.mxu0 %v732
      %946 = vmatprep.subr.bf16.mxu0 0
      %947 = vmatpush1.bf16.msra.mxu0 %v733
      %948 = vmatprep.subr.bf16.mxu0 0
      %949 = vmatpush1.bf16.msra.mxu0 %v734
      %950 = vmatprep.subr.bf16.mxu0 0
      %951 = vmatpush1.bf16.msra.mxu0 %v735
      %952 = vmatprep.mubr.bf16.mxu0 %v466
      %953 = vmatmul.mubr.bf16.gmra.mrb[0].mxu0 %v465
      %v954 = vpop.f32.mrb[0].mxu0
      %v955 = vadd.f32 %v850, %v954
      %v956 = vpop.f32.mrb[0].mxu0
      %v957 = vpop.f32.mrb[0].mxu0
      %v958 = vadd.f32 %v853, %v957
      %v959 = vpop.f32.mrb[0].mxu0
      %960 = vmatprep.mubr.bf16.mxu0 %v471
      %961 = vmatmul.mubr.bf16.gmra.mrb[0].mxu0 %v470
      %v962 = vpop.f32.mrb[0].mxu0
      %v963 = vadd.f32 %v858, %v962
      %v964 = vpop.f32.mrb[0].mxu0
      %v965 = vpop.f32.mrb[0].mxu0
      %v966 = vadd.f32 %v861, %v965
      %v967 = vpop.f32.mrb[0].mxu0
      %968 = vmatprep.mubr.bf16.mxu0 %v476
      %969 = vmatmul.mubr.bf16.gmra.mrb[0].mxu0 %v475
      %v970 = vpop.f32.mrb[0].mxu0
      %v971 = vadd.f32 %v866, %v970
      %v972 = vpop.f32.mrb[0].mxu0
      %v973 = vpop.f32.mrb[0].mxu0
      %v974 = vadd.f32 %v869, %v973
      %v975 = vpop.f32.mrb[0].mxu0
      %976 = vmatprep.mubr.bf16.mxu0 %v481
      %977 = vmatmul.mubr.bf16.gmra.mrb[0].mxu0 %v480
      %v978 = vpop.f32.mrb[0].mxu0
      %v979 = vadd.f32 %v874, %v978
      %v980 = vpop.f32.mrb[0].mxu0
      %v981 = vpop.f32.mrb[0].mxu0
      %v982 = vadd.f32 %v877, %v981
      %v983 = vpop.f32.mrb[0].mxu0
      %984 = vmatprep.mubr.bf16.mxu0 %v486
      %985 = vmatmul.mubr.bf16.gmra.mrb[0].mxu0 %v485
      %v986 = vpop.f32.mrb[0].mxu0
      %v987 = vadd.f32 %v882, %v986
      %v988 = vpop.f32.mrb[0].mxu0
      %v989 = vpop.f32.mrb[0].mxu0
      %v990 = vadd.f32 %v885, %v989
      %v991 = vpop.f32.mrb[0].mxu0
      %992 = vmatprep.mubr.bf16.mxu0 %v491
      %993 = vmatmul.mubr.bf16.gmra.mrb[0].mxu0 %v490
      %v994 = vpop.f32.mrb[0].mxu0
      %v995 = vadd.f32 %v890, %v994
      %v996 = vpop.f32.mrb[0].mxu0
      %v997 = vpop.f32.mrb[0].mxu0
      %v998 = vadd.f32 %v893, %v997
      %v999 = vpop.f32.mrb[0].mxu0
      %1000 = vmatprep.mubr.bf16.mxu0 %v496
      %1001 = vmatmul.mubr.bf16.gmra.mrb[0].mxu0 %v495
      %v1002 = vpop.f32.mrb[0].mxu0
      %v1003 = vadd.f32 %v898, %v1002
      %v1004 = vpop.f32.mrb[0].mxu0
      %v1005 = vpop.f32.mrb[0].mxu0
      %v1006 = vadd.f32 %v901, %v1005
      %v1007 = vpop.f32.mrb[0].mxu0
      %1008 = vmatprep.mubr.bf16.mxu0 %v501
      %1009 = vmatmul.mubr.bf16.gmra.mrb[0].mxu0 %v500
      %v1010 = vpop.f32.mrb[0].mxu0
      %v1011 = vadd.f32 %v906, %v1010
      %v1012 = vpop.f32.mrb[0].mxu0
      %v1013 = vpop.f32.mrb[0].mxu0
      %v1014 = vadd.f32 %v909, %v1013
      %v1015 = vpop.f32.mrb[0].mxu0
      %1016 = vmatprep.mubr.bf16.mxu0 %v506
      %1017 = vmatmul.mubr.bf16.gmra.mrb[0].mxu0 %v505
      %v1018 = vpop.f32.mrb[0].mxu0
      %v1019 = vadd.f32 %v914, %v1018
      %v1020 = vpop.f32.mrb[0].mxu0
      %v1021 = vpop.f32.mrb[0].mxu0
      %v1022 = vadd.f32 %v917, %v1021
      %v1023 = vpop.f32.mrb[0].mxu0
      %1024 = vdwg.mxu0
      %1025 = vmatprep.subr.bf16.mxu0 0
      %1026 = vmatpush1.bf16.msra.mxu0 %v736
      %1027 = vmatprep.subr.bf16.mxu0 0
      %1028 = vmatpush1.bf16.msra.mxu0 %v737
      %1029 = vmatprep.subr.bf16.mxu0 0
      %1030 = vmatpush1.bf16.msra.mxu0 %v738
      %1031 = vmatprep.subr.bf16.mxu0 0
      %1032 = vmatpush1.bf16.msra.mxu0 %v739
      %1033 = vmatprep.subr.bf16.mxu0 0
      %1034 = vmatpush1.bf16.msra.mxu0 %v740
      %1035 = vmatprep.subr.bf16.mxu0 0
      %1036 = vmatpush1.bf16.msra.mxu0 %v741
      %1037 = vmatprep.subr.bf16.mxu0 0
      %1038 = vmatpush1.bf16.msra.mxu0 %v742
      %1039 = vmatprep.subr.bf16.mxu0 0
      %1040 = vmatpush1.bf16.msra.mxu0 %v813
      %1041 = vmatprep.subr.bf16.mxu0 0
      %1042 = vmatpush1.bf16.msra.mxu0 0
      %1043 = vmatprep.subr.bf16.mxu0 0
      %1044 = vmatpush1.bf16.msra.mxu0 0
      %1045 = vmatprep.subr.bf16.mxu0 0
      %1046 = vmatpush1.bf16.msra.mxu0 0
      %1047 = vmatprep.subr.bf16.mxu0 0
      %1048 = vmatpush1.bf16.msra.mxu0 0
      %1049 = vmatprep.subr.bf16.mxu0 0
      %1050 = vmatpush1.bf16.msra.mxu0 0
      %1051 = vmatprep.subr.bf16.mxu0 0
      %1052 = vmatpush1.bf16.msra.mxu0 0
      %1053 = vmatprep.subr.bf16.mxu0 0
      %1054 = vmatpush1.bf16.msra.mxu0 0
      %1055 = vmatprep.subr.bf16.mxu0 0
      %1056 = vmatpush1.bf16.msra.mxu0 0
      %1057 = vmatprep.mubr.bf16.mxu0 0
      %1058 = vmatmul.mubr.bf16.gmra.mrb[0].mxu0 %v785
      %v1059 = vpop.f32.mrb[0].mxu0
      %v1060 = vadd.f32 %v955, %v1059
      %v1061 = vpop.f32.mrb[0].mxu0
      %v1062 = vpop.f32.mrb[0].mxu0
      %v1063 = vadd.f32 %v958, %v1062
      %v1064 = vpop.f32.mrb[0].mxu0
      %1065 = vmatprep.mubr.bf16.mxu0 0
      %1066 = vmatmul.mubr.bf16.gmra.mrb[0].mxu0 %v788
      %v1067 = vpop.f32.mrb[0].mxu0
      %v1068 = vadd.f32 %v963, %v1067
      %v1069 = vpop.f32.mrb[0].mxu0
      %v1070 = vpop.f32.mrb[0].mxu0
      %v1071 = vadd.f32 %v966, %v1070
      %v1072 = vpop.f32.mrb[0].mxu0
      %1073 = vmatprep.mubr.bf16.mxu0 0
      %1074 = vmatmul.mubr.bf16.gmra.mrb[0].mxu0 %v791
      %v1075 = vpop.f32.mrb[0].mxu0
      %v1076 = vadd.f32 %v971, %v1075
      %v1077 = vpop.f32.mrb[0].mxu0
      %v1078 = vpop.f32.mrb[0].mxu0
      %v1079 = vadd.f32 %v974, %v1078
      %v1080 = vpop.f32.mrb[0].mxu0
      %1081 = vmatprep.mubr.bf16.mxu0 0
      %1082 = vmatmul.mubr.bf16.gmra.mrb[0].mxu0 %v794
      %v1083 = vpop.f32.mrb[0].mxu0
      %v1084 = vadd.f32 %v979, %v1083
      %v1085 = vpop.f32.mrb[0].mxu0
      %v1086 = vpop.f32.mrb[0].mxu0
      %v1087 = vadd.f32 %v982, %v1086
      %v1088 = vpop.f32.mrb[0].mxu0
      %1089 = vmatprep.mubr.bf16.mxu0 0
      %1090 = vmatmul.mubr.bf16.gmra.mrb[0].mxu0 %v797
      %v1091 = vpop.f32.mrb[0].mxu0
      %v1092 = vadd.f32 %v987, %v1091
      %v1093 = vpop.f32.mrb[0].mxu0
      %v1094 = vpop.f32.mrb[0].mxu0
      %v1095 = vadd.f32 %v990, %v1094
      %v1096 = vpop.f32.mrb[0].mxu0
      %1097 = vmatprep.mubr.bf16.mxu0 0
      %1098 = vmatmul.mubr.bf16.gmra.mrb[0].mxu0 %v800
      %v1099 = vpop.f32.mrb[0].mxu0
      %v1100 = vadd.f32 %v995, %v1099
      %v1101 = vpop.f32.mrb[0].mxu0
      %v1102 = vpop.f32.mrb[0].mxu0
      %v1103 = vadd.f32 %v998, %v1102
      %v1104 = vpop.f32.mrb[0].mxu0
      %1105 = vmatprep.mubr.bf16.mxu0 0
      %1106 = vmatmul.mubr.bf16.gmra.mrb[0].mxu0 %v803
      %v1107 = vpop.f32.mrb[0].mxu0
      %v1108 = vadd.f32 %v1003, %v1107
      %v1109 = vpop.f32.mrb[0].mxu0
      %v1110 = vpop.f32.mrb[0].mxu0
      %v1111 = vadd.f32 %v1006, %v1110
      %v1112 = vpop.f32.mrb[0].mxu0
      %1113 = vmatprep.mubr.bf16.mxu0 0
      %1114 = vmatmul.mubr.bf16.gmra.mrb[0].mxu0 %v806
      %v1115 = vpop.f32.mrb[0].mxu0
      %v1116 = vadd.f32 %v1011, %v1115
      %v1117 = vpop.f32.mrb[0].mxu0
      %v1118 = vpop.f32.mrb[0].mxu0
      %v1119 = vadd.f32 %v1014, %v1118
      %v1120 = vpop.f32.mrb[0].mxu0
      %1121 = vmatprep.mubr.bf16.mxu0 0
      %1122 = vmatmul.mubr.bf16.gmra.mrb[0].mxu0 %v809
      %v1123 = vpop.f32.mrb[0].mxu0
      %v1124 = vadd.f32 %v1019, %v1123
      %v1125 = vpop.f32.mrb[0].mxu0
      %v1126 = vpop.f32.mrb[0].mxu0
      %v1127 = vadd.f32 %v1022, %v1126
      %v1128 = vpop.f32.mrb[0].mxu0
      %1129 = vdwg.mxu0
      %v1130 = vpack.c.bf16 %v1063, %v1060
      %v1131 = vpack.c.bf16 %v1071, %v1068
      %v1132 = vpack.c.bf16 %v1079, %v1076
      %v1133 = vpack.c.bf16 %v1087, %v1084
      %v1134 = vpack.c.bf16 %v1095, %v1092
      %v1135 = vpack.c.bf16 %v1103, %v1100
      %v1136 = vpack.c.bf16 %v1111, %v1108
      %v1137 = vpack.c.bf16 %v1119, %v1116
      %v1138 = vpack.c.bf16 %v1127, %v1124
      %v1148 = vunpack.c.l.b16 %v1130
      %v1149 = vunpack.c.h.b16 %v1130
      %v1150 = vunpack.c.l.b16 %v1131
      %v1151 = vunpack.c.h.b16 %v1131
      %v1152 = vunpack.c.l.b16 %v1132
      %v1153 = vunpack.c.h.b16 %v1132
      %v1154 = vunpack.c.l.b16 %v1133
      %v1155 = vunpack.c.h.b16 %v1133
      %v1156 = vunpack.c.l.b16 %v1134
      %v1157 = vunpack.c.h.b16 %v1134
      %v1158 = vunpack.c.l.b16 %v1135
      %v1159 = vunpack.c.h.b16 %v1135
      %v1160 = vunpack.c.l.b16 %v1136
      %v1161 = vunpack.c.h.b16 %v1136
      %v1162 = vunpack.c.l.b16 %v1137
      %v1163 = vunpack.c.h.b16 %v1137
      %v1164 = vunpack.c.l.b16 %v1138
      %v1165 = vunpack.c.h.b16 %v1138
      %v1166 = vpack.c.b16 %v1148, %v1148
      %v1167 = vpack.c.b16 %v1149, %v1149
      %v1168 = vpack.c.b16 %v1150, %v1150
      %v1169 = vpack.c.b16 %v1151, %v1151
      %v1170 = vpack.c.b16 %v1152, %v1152
      %v1171 = vpack.c.b16 %v1153, %v1153
      %v1172 = vpack.c.b16 %v1154, %v1154
      %v1173 = vpack.c.b16 %v1155, %v1155
      %v1174 = vpack.c.b16 %v1156, %v1156
      %v1175 = vpack.c.b16 %v1157, %v1157
      %v1176 = vpack.c.b16 %v1158, %v1158
      %v1177 = vpack.c.b16 %v1159, %v1159
      %v1178 = vpack.c.b16 %v1160, %v1160
      %v1179 = vpack.c.b16 %v1161, %v1161
      %v1180 = vpack.c.b16 %v1162, %v1162
      %v1181 = vpack.c.b16 %v1163, %v1163
      %v1182 = vpack.c.b16 %v1164, %v1164
      %v1183 = vpack.c.b16 %v1165, %v1165
      %vm1202 = vcmask 584704
      %1203 = vst.msk [vmem:[%s175] sm:$0xf] %vm1202, %v1166
      %1204 = vst.msk [vmem:[%s175 + $0x4] sm:$0xf] %vm1202, %v1167
      %1205 = vst.msk [vmem:[%s175 + $0x8] sm:$0xf] %vm1202, %v1168
      %1206 = vst.msk [vmem:[%s175 + $0xc] sm:$0xf] %vm1202, %v1169
      %1207 = vst.msk [vmem:[%s175 + $0x10] sm:$0xf] %vm1202, %v1170
      %1208 = vst.msk [vmem:[%s175 + $0x14] sm:$0xf] %vm1202, %v1171
      %1209 = vst.msk [vmem:[%s175 + $0x18] sm:$0xf] %vm1202, %v1172
      %1210 = vst.msk [vmem:[%s175 + $0x1c] sm:$0xf] %vm1202, %v1173
      %1211 = vst.msk [vmem:[%s175 + $0x20] sm:$0xf] %vm1202, %v1174
      %1212 = vst.msk [vmem:[%s175 + $0x24] sm:$0xf] %vm1202, %v1175
      %1213 = vst.msk [vmem:[%s175 + $0x28] sm:$0xf] %vm1202, %v1176
      %1214 = vst.msk [vmem:[%s175 + $0x2c] sm:$0xf] %vm1202, %v1177
      %1215 = vst.msk [vmem:[%s175 + $0x30] sm:$0xf] %vm1202, %v1178
      %1216 = vst.msk [vmem:[%s175 + $0x34] sm:$0xf] %vm1202, %v1179
      %1217 = vst.msk [vmem:[%s175 + $0x38] sm:$0xf] %vm1202, %v1180
      %1218 = vst.msk [vmem:[%s175 + $0x3c] sm:$0xf] %vm1202, %v1181
      %1219 = vst.msk [vmem:[%s175 + $0x40] sm:$0xf] %vm1202, %v1182
      %1220 = vst.msk [vmem:[%s175 + $0x44] sm:$0xf] %vm1202, %v1183
      %s1221 = smul.u32 18, %s14
      %p1222 = scmp.lt.s32.totalorder %s1221, 35
      %s1223 = scalar_select %p1222, %s1221, 35
      %s1224 = smul.addr %s1223, 4
      %s1225 = scalar_lea.vmem %s3, %s1224
      // Predicated region
      $region33: #{net_forward.11} parent=31 // pred_check
        %p1226 = pneg %p100
      $region34: #{net_forward.11} parent=31 // pred_check_branch
        %1228 = sbr.rel (%p1226) target = $region36
      $region35: #{net_forward.11} parent=31 // pred_region
        %s1229 = smul.u32 18, %s14
      $region36: #{net_forward.11} parent=31 // pred_fallthru
        _
    $region32: #{net_forward.11} parent=5 // pred_fallthru
      _
    %p1230 = scmp.le.s32.totalorder 2, %s9
    // Predicated region
    $region37: #{net_forward.11} parent=5 // pred_check
      %p1231 = pneg %p1230
    $region38: #{net_forward.11} parent=5 // pred_check_branch
      %1233 = sbr.rel (%p1231) target = $region40
    $region39: #{net_forward.11} parent=5 // pred_region
      %s1234 = ssub.s32 %s9, 2
      // Predicated region
      $region41: #{net_forward.11} parent=39 // pred_check
        %p1235 = pneg %p106
      $region42: #{net_forward.11} parent=39 // pred_check_branch
        %1237 = sbr.rel (%p1235) target = $region44
      $region43: #{net_forward.11} parent=39 // pred_region
        %s1238 = smul.u32 18, %s15
        %p1239 = scmp.lt.s32.totalorder %s1238, 35
        %s1240 = scalar_select %p1239, %s1238, 35
        %s1241 = smul.addr %s1240, 4
        %s1242 = scalar_lea.vmem %s3, %s1241
      $region44: #{net_forward.11} parent=39 // pred_fallthru
        _
    $region40: #{net_forward.11} parent=5 // pred_fallthru
      _
  $region6: #{net_forward.11} parent=0 // loop_footer
    %s13 = sadd.s32 1, %s9
  $region7: #{net_forward.11} parent=0 // loop_footer_branch
    %8 = sbr.rel target = $region3
  $region8: #{net_forward.11} parent=0 // loop_exit
    _

// kernel: net_forward.12
$region0: #{net_forward.12}
  #allocation0 [shape = 'u32[]', space=smem, size = 0x4, offset = 0x4, fixed_abs, tag = 'smem constant byte address 0x4 - core index']
  #allocation1 [shape = 'u32[144,128]{1,0:T(1,128)}', space=vmem, size = 0x12000, scoped, tag = 'internal scratch']
  %s0 = inlined_call_operand.vmem [shape: bf16[288,216], index: 0, kind: input, shape index: {}]
  %s1 = inlined_call_operand.vmem [shape: bf16[216,24], index: 1, kind: input, shape index: {}]
  %s2 = inlined_call_operand.vmem [shape: f32[1,24], index: 2, kind: input, shape index: {}]
  %s3 = inlined_call_operand.vmem [shape: bf16[288,24], index: 3, kind: output, shape index: {}]
  %s4 = sld [smem:[#allocation0]]
  $region45: #{net_forward.12} parent=0
    _
  %s6 = ssub.s32 1, %s4
  %s7 = scalar_select 0, %s6, %s4
  loop: start=0, step=1, limit=4
  $region2: #{net_forward.12} parent=0 // loop_pre_header
    _
  $region3: #{net_forward.12} parent=0 // loop_header
    %s9 = sphi 0, %s13
    %p10 = scmp.ge.s32.totalorder %s9, 4
    %s19 = sphi 0, %s21
    %s22 = sphi 0, %s19
    %s23 = sphi 0, %s22
    %s39 = sphi 0, %s23
    %s43 = sphi 0, %s43
    %s45 = sphi 0, %s43
    %s46 = sphi 0, %s45
    %s60 = sphi 0, %s46
    %s64 = sphi 0, %s64
    %s66 = sphi 0, %s64
    %s67 = sphi 0, %s66
    %s81 = sphi 0, %s67
    %s87 = sphi 0, %s89
    %s90 = sphi 0, %s87
    %s91 = sphi 0, %s90
    %s107 = sphi 0, %s91
  $region4: #{net_forward.12} parent=0 // loop_header_branch
    %12 = sbr.rel (%p10) target = $region8
  $region5: #{net_forward.12} parent=0 // loop_body
    %s14 = ssub.s32 %s9, 1
    %s15 = ssub.s32 %s9, 2
    %s16 = sadd.s32 %s9, 1
    %s17 = ssub.s32 %s9, %s16
    %p18 = scmp.eq.s32.totalorder %s17, 0
    %s20 = sadd.s32 %s19, 1
    %s21 = scalar_select %p18, %s19, %s20
    %p24 = pneg %p18
    %p25 = scmp.eq.s32.totalorder %s9, 1
    %p26 = por %p24, %p25
    %p27 = scmp.ne.s32.totalorder %s19, %s22
    %p28 = scmp.eq.s32.totalorder %s9, 0
    %p29 = por %p27, %p28
    %p30 = scmp.ne.s32.totalorder %s19, %s22
    %p31 = scmp.eq.s32.totalorder %s14, 1
    %p32 = por %p30, %p31
    %p33 = scmp.ne.s32.totalorder %s22, %s23
    %p34 = scmp.eq.s32.totalorder %s14, 0
    %p35 = por %p33, %p34
    %p36 = scmp.ne.s32.totalorder %s22, %s23
    %p37 = scmp.eq.s32.totalorder %s15, 1
    %p38 = por %p36, %p37
    %p40 = scmp.ne.s32.totalorder %s23, %s39
    %p41 = scmp.eq.s32.totalorder %s15, 0
    %p42 = por %p40, %p41
    %s44 = sadd.s32 %s43, 1
    %p47 = scmp.eq.s32.totalorder %s9, 1
    %p48 = scmp.ne.s32.totalorder %s43, %s45
    %p49 = scmp.eq.s32.totalorder %s9, 0
    %p50 = por %p48, %p49
    %p51 = scmp.ne.s32.totalorder %s43, %s45
    %p52 = scmp.eq.s32.totalorder %s14, 1
    %p53 = por %p51, %p52
    %p54 = scmp.ne.s32.totalorder %s45, %s46
    %p55 = scmp.eq.s32.totalorder %s14, 0
    %p56 = por %p54, %p55
    %p57 = scmp.ne.s32.totalorder %s45, %s46
    %p58 = scmp.eq.s32.totalorder %s15, 1
    %p59 = por %p57, %p58
    %p61 = scmp.ne.s32.totalorder %s46, %s60
    %p62 = scmp.eq.s32.totalorder %s15, 0
    %p63 = por %p61, %p62
    %s65 = sadd.s32 %s64, 1
    %p68 = scmp.eq.s32.totalorder %s9, 1
    %p69 = scmp.ne.s32.totalorder %s64, %s66
    %p70 = scmp.eq.s32.totalorder %s9, 0
    %p71 = por %p69, %p70
    %p72 = scmp.ne.s32.totalorder %s64, %s66
    %p73 = scmp.eq.s32.totalorder %s14, 1
    %p74 = por %p72, %p73
    %p75 = scmp.ne.s32.totalorder %s66, %s67
    %p76 = scmp.eq.s32.totalorder %s14, 0
    %p77 = por %p75, %p76
    %p78 = scmp.ne.s32.totalorder %s66, %s67
    %p79 = scmp.eq.s32.totalorder %s15, 1
    %p80 = por %p78, %p79
    %p82 = scmp.ne.s32.totalorder %s67, %s81
    %p83 = scmp.eq.s32.totalorder %s15, 0
    %p84 = por %p82, %p83
    %s85 = ssub.s32 %s9, %s16
    %p86 = scmp.eq.s32.totalorder %s85, 0
    %s88 = sadd.s32 %s87, 1
    %s89 = scalar_select %p86, %s87, %s88
    %p92 = pneg %p86
    %p93 = scmp.eq.s32.totalorder %s9, 1
    %p94 = por %p92, %p93
    %p95 = scmp.ne.s32.totalorder %s87, %s90
    %p96 = scmp.eq.s32.totalorder %s9, 0
    %p97 = por %p95, %p96
    %p98 = scmp.ne.s32.totalorder %s87, %s90
    %p99 = scmp.eq.s32.totalorder %s14, 1
    %p100 = por %p98, %p99
    %p101 = scmp.ne.s32.totalorder %s90, %s91
    %p102 = scmp.eq.s32.totalorder %s14, 0
    %p103 = por %p101, %p102
    %p104 = scmp.ne.s32.totalorder %s90, %s91
    %p105 = scmp.eq.s32.totalorder %s15, 1
    %p106 = por %p104, %p105
    %p108 = scmp.ne.s32.totalorder %s91, %s107
    %p109 = scmp.eq.s32.totalorder %s15, 0
    %p110 = por %p108, %p109
    %p111 = scmp.le.s32.totalorder 1, %s9
    %p112 = scmp.lt.s32.totalorder %s9, 3
    %p113 = pnand %p111, %p112
    %p114 = pneg %p113
    // Predicated region
    $region9: #{net_forward.12} parent=5 // pred_check
      _
    $region10: #{net_forward.12} parent=5 // pred_check_branch
      %116 = sbr.rel (%p113) target = $region12
    $region11: #{net_forward.12} parent=5 // pred_region
      %s117 = ssub.s32 %s9, 1
      // Predicated region
      $region13: #{net_forward.12} parent=11 // pred_check
        %p118 = pneg %p56
      $region14: #{net_forward.12} parent=11 // pred_check_branch
        %120 = sbr.rel (%p118) target = $region16
      $region15: #{net_forward.12} parent=11 // pred_region
        _
      $region16: #{net_forward.12} parent=11 // pred_fallthru
        _
      // Predicated region
      $region17: #{net_forward.12} parent=11 // pred_check
        %p121 = pneg %p77
      $region18: #{net_forward.12} parent=11 // pred_check_branch
        %123 = sbr.rel (%p121) target = $region20
      $region19: #{net_forward.12} parent=11 // pred_region
        _
      $region20: #{net_forward.12} parent=11 // pred_fallthru
        _
    $region12: #{net_forward.12} parent=5 // pred_fallthru
      _
    %p124 = scmp.lt.s32.totalorder %s9, 2
    // Predicated region
    $region21: #{net_forward.12} parent=5 // pred_check
      %p125 = pneg %p124
    $region22: #{net_forward.12} parent=5 // pred_check_branch
      %127 = sbr.rel (%p125) target = $region24
    $region23: #{net_forward.12} parent=5 // pred_region
      // Predicated region
      $region25: #{net_forward.12} parent=23 // pred_check
        %p128 = pneg %p29
      $region26: #{net_forward.12} parent=23 // pred_check_branch
        %130 = sbr.rel (%p128) target = $region28
      $region27: #{net_forward.12} parent=23 // pred_region
        %s131 = smul.u32 18, %s9
        %p132 = scmp.lt.s32.totalorder %s131, 35
        %s133 = scalar_select %p132, %s131, 35
        %s134 = smul.addr %s133, 2
        %s135 = smul.addr %s134, 4
        %s136 = scalar_lea.vmem %s0, %s135
        %s137 = smul.u32 18, %s9
      $region28: #{net_forward.12} parent=23 // pred_fallthru
        _
    $region24: #{net_forward.12} parent=5 // pred_fallthru
      _
    %p138 = scmp.le.s32.totalorder 1, %s9
    %p139 = scmp.lt.s32.totalorder %s9, 3
    %p140 = pnand %p138, %p139
    %p141 = pneg %p140
    // Predicated region
    $region29: #{net_forward.12} parent=5 // pred_check
      _
    $region30: #{net_forward.12} parent=5 // pred_check_branch
      %143 = sbr.rel (%p140) target = $region32
    $region31: #{net_forward.12} parent=5 // pred_region
      %s144 = ssub.s32 %s9, 1
      %s145 = smul.u32 18, %s14
      %p146 = scmp.lt.s32.totalorder %s145, 35
      %s147 = scalar_select %p146, %s145, 35
      %s148 = smul.addr %s147, 2
      %s149 = smul.addr %s148, 4
      %s150 = scalar_lea.vmem %s0, %s149
      %p151 = pneg %p35
      %p152 = pneg %p32
      %p153 = pneg %p56
      %p154 = pneg %p53
      %p155 = pneg %p77
      %p156 = pneg %p74
      %p157 = pneg %p103
      %p158 = pneg %p100
      %s159 = smul.u32 18, %s14
      %p160 = scmp.lt.s32.totalorder %s159, 35
      %s161 = scalar_select %p160, %s159, 35
      %s162 = smul.addr %s161, 4
      %s163 = scalar_lea.vmem %s3, %s162
      %s164 = smul.u32 18, %s14
      %p165 = scmp.lt.s32.totalorder %s164, 35
      %s166 = scalar_select %p165, %s164, 35
      %s167 = smul.addr %s166, 2
      %s168 = smul.addr %s167, 4
      %s169 = scalar_lea.vmem %s0, %s168
      %s170 = smul.u32 18, %s14
      %s171 = smul.u32 18, %s14
      %p172 = scmp.lt.s32.totalorder %s171, 35
      %s173 = scalar_select %p172, %s171, 35
      %s174 = smul.addr %s173, 4
      %s175 = scalar_lea.vmem %s3, %s174
      %s176 = smul.u32 18, %s14
      %v178 = vld [vmem:[%s169] sm:$0xff]
      %v179 = vld [vmem:[%s169 + $0x8] sm:$0xff]
      %v180 = vld [vmem:[%s169 + $0x10] sm:$0xff]
      %v181 = vld [vmem:[%s169 + $0x18] sm:$0xff]
      %v182 = vld [vmem:[%s169 + $0x20] sm:$0xff]
      %v183 = vld [vmem:[%s169 + $0x28] sm:$0xff]
      %v184 = vld [vmem:[%s169 + $0x30] sm:$0xff]
      %v185 = vld [vmem:[%s169 + $0x38] sm:$0xff]
      %v186 = vld [vmem:[%s169 + $0x40] sm:$0xff]
      %v187 = vld [vmem:[%s169 + $0x48] sm:$0xff]
      %v188 = vld [vmem:[%s169 + $0x50] sm:$0xff]
      %v189 = vld [vmem:[%s169 + $0x58] sm:$0xff]
      %v190 = vld [vmem:[%s169 + $0x60] sm:$0xff]
      %v191 = vld [vmem:[%s169 + $0x68] sm:$0xff]
      %v192 = vld [vmem:[%s169 + $0x70] sm:$0xff]
      %v193 = vld [vmem:[%s169 + $0x78] sm:$0xff]
      %v194 = vld [vmem:[%s169 + $0x80] sm:$0xff]
      %v195 = vld [vmem:[%s169 + $0x88] sm:$0xff]
      %v196 = vld [vmem:[%s1] sm:$0xf]
      %v197 = vld [vmem:[%s1 + $0x4] sm:$0xf]
      %v198 = vld [vmem:[%s1 + $0x8] sm:$0xf]
      %v199 = vld [vmem:[%s1 + $0xc] sm:$0xf]
      %v200 = vld [vmem:[%s1 + $0x10] sm:$0xf]
      %v201 = vld [vmem:[%s1 + $0x14] sm:$0xf]
      %v202 = vld [vmem:[%s1 + $0x18] sm:$0xf]
      %v203 = vld [vmem:[%s1 + $0x1c] sm:$0xf]
      %v204 = vld [vmem:[%s1 + $0x20] sm:$0xf]
      %v205 = vld [vmem:[%s1 + $0x24] sm:$0xf]
      %v206 = vld [vmem:[%s1 + $0x28] sm:$0xf]
      %v207 = vld [vmem:[%s1 + $0x2c] sm:$0xf]
      %v208 = vld [vmem:[%s1 + $0x30] sm:$0xf]
      %v209 = vld [vmem:[%s1 + $0x34] sm:$0xf]
      %v210 = vld [vmem:[%s1 + $0x38] sm:$0xf]
      %v211 = vld [vmem:[%s1 + $0x3c] sm:$0xf]
      %v212 = vld [vmem:[%s1 + $0x40] sm:$0xf]
      %v213 = vld [vmem:[%s1 + $0x44] sm:$0xf]
      %v214 = vld [vmem:[%s1 + $0x48] sm:$0xf]
      %v215 = vld [vmem:[%s1 + $0x4c] sm:$0xf]
      %v216 = vld [vmem:[%s1 + $0x50] sm:$0xf]
      %v217 = vld [vmem:[%s1 + $0x54] sm:$0xf]
      %v218 = vld [vmem:[%s1 + $0x58] sm:$0xf]
      %v219 = vld [vmem:[%s1 + $0x5c] sm:$0xf]
      %v220 = vld [vmem:[%s1 + $0x60] sm:$0xf]
      %v221 = vld [vmem:[%s1 + $0x64] sm:$0xf]
      %v222 = vld [vmem:[%s1 + $0x68] sm:$0xf]
      %v223 = vld [vmem:[%s2] sm:$0x1]
      %v225 = vlaneseq
      %v226 = vshrl.u32 %v225, 7
      %v227 = vsub.s32 0, %v226
      %v228 = vrot.slane %v223, %v227
      %v248 = vunpack.c.l.b16 %v178
      %v249 = vunpack.c.h.b16 %v178
      %v250 = vunpack.c.l.b16 %v179
      %v251 = vunpack.c.h.b16 %v179
      %v252 = vunpack.c.l.b16 %v180
      %v253 = vunpack.c.h.b16 %v180
      %v254 = vunpack.c.l.b16 %v181
      %v255 = vunpack.c.h.b16 %v181
      %v256 = vunpack.c.l.b16 %v182
      %v257 = vunpack.c.h.b16 %v182
      %v258 = vunpack.c.l.b16 %v183
      %v259 = vunpack.c.h.b16 %v183
      %v260 = vunpack.c.l.b16 %v184
      %v261 = vunpack.c.h.b16 %v184
      %v262 = vunpack.c.l.b16 %v185
      %v263 = vunpack.c.h.b16 %v185
      %v264 = vunpack.c.l.b16 %v186
      %v265 = vunpack.c.h.b16 %v186
      %v266 = vunpack.c.l.b16 %v187
      %v267 = vunpack.c.h.b16 %v187
      %v268 = vunpack.c.l.b16 %v188
      %v269 = vunpack.c.h.b16 %v188
      %v270 = vunpack.c.l.b16 %v189
      %v271 = vunpack.c.h.b16 %v189
      %v272 = vunpack.c.l.b16 %v190
      %v273 = vunpack.c.h.b16 %v190
      %v274 = vunpack.c.l.b16 %v191
      %v275 = vunpack.c.h.b16 %v191
      %v276 = vunpack.c.l.b16 %v192
      %v277 = vunpack.c.h.b16 %v192
      %v278 = vunpack.c.l.b16 %v193
      %v279 = vunpack.c.h.b16 %v193
      %v280 = vunpack.c.l.b16 %v194
      %v281 = vunpack.c.h.b16 %v194
      %v282 = vunpack.c.l.b16 %v195
      %v283 = vunpack.c.h.b16 %v195
      %v284 = vpack.c.b16 %v250, %v248
      %v285 = vpack.c.b16 %v251, %v249
      %v286 = vpack.c.b16 %v254, %v252
      %v287 = vpack.c.b16 %v255, %v253
      %v288 = vpack.c.b16 %v258, %v256
      %v289 = vpack.c.b16 %v259, %v257
      %v290 = vpack.c.b16 %v262, %v260
      %v291 = vpack.c.b16 %v263, %v261
      %v292 = vpack.c.b16 %v266, %v264
      %v293 = vpack.c.b16 %v267, %v265
      %v294 = vpack.c.b16 %v270, %v268
      %v295 = vpack.c.b16 %v271, %v269
      %v296 = vpack.c.b16 %v274, %v272
      %v297 = vpack.c.b16 %v275, %v273
      %v298 = vpack.c.b16 %v278, %v276
      %v299 = vpack.c.b16 %v279, %v277
      %v300 = vpack.c.b16 %v282, %v280
      %v301 = vpack.c.b16 %v283, %v281
      %v338 = vunpack.c.l.b16 %v196
      %v339 = vunpack.c.l.b16 %v197
      %v340 = vunpack.c.l.b16 %v198
      %v341 = vunpack.c.l.b16 %v199
      %v342 = vunpack.c.l.b16 %v200
      %v343 = vunpack.c.l.b16 %v201
      %v344 = vunpack.c.l.b16 %v202
      %v345 = vunpack.c.l.b16 %v203
      %v346 = vunpack.c.l.b16 %v204
      %v347 = vunpack.c.l.b16 %v205
      %v348 = vunpack.c.l.b16 %v206
      %v349 = vunpack.c.l.b16 %v207
      %v350 = vunpack.c.l.b16 %v208
      %v351 = vunpack.c.l.b16 %v209
      %v352 = vunpack.c.l.b16 %v210
      %v353 = vunpack.c.l.b16 %v211
      %v354 = vunpack.c.l.b16 %v212
      %v355 = vunpack.c.l.b16 %v213
      %v356 = vunpack.c.l.b16 %v214
      %v357 = vunpack.c.l.b16 %v215
      %v358 = vunpack.c.l.b16 %v216
      %v359 = vunpack.c.l.b16 %v217
      %v360 = vunpack.c.l.b16 %v218
      %v361 = vunpack.c.l.b16 %v219
      %v362 = vunpack.c.l.b16 %v220
      %v363 = vunpack.c.l.b16 %v221
      %v364 = vunpack.c.l.b16 %v222
      %v365 = vpack.c.b16 %v339, %v338
      %v366 = vpack.c.b16 %v341, %v340
      %v367 = vpack.c.b16 %v343, %v342
      %v368 = vpack.c.b16 %v345, %v344
      %v369 = vpack.c.b16 %v347, %v346
      %v370 = vpack.c.b16 %v349, %v348
      %v371 = vpack.c.b16 %v351, %v350
      %v372 = vpack.c.b16 %v353, %v352
      %v373 = vpack.c.b16 %v355, %v354
      %v374 = vpack.c.b16 %v357, %v356
      %v375 = vpack.c.b16 %v359, %v358
      %v376 = vpack.c.b16 %v361, %v360
      %v377 = vpack.c.b16 %v363, %v362
      %v378 = vpack.c.b16 %v364, %v364
      %vm392 = vcmask 719872
      %v394 = vsel %vm392, %v285, 0
      %v397 = vsel %vm392, %v287, 0
      %v400 = vsel %vm392, %v289, 0
      %v403 = vsel %vm392, %v291, 0
      %v406 = vsel %vm392, %v293, 0
      %v409 = vsel %vm392, %v295, 0
      %v412 = vsel %vm392, %v297, 0
      %v415 = vsel %vm392, %v299, 0
      %v418 = vsel %vm392, %v301, 0
      %vm420 = vcmask 1043456
      %v422 = vsel %vm420, %v378, 0
      %424 = vmatprep.subr.bf16.mxu0 0
      %425 = vmatpush1.bf16.msra.mxu0 %v365
      %426 = vmatprep.subr.bf16.mxu0 0
      %427 = vmatpush1.bf16.msra.mxu0 %v366
      %428 = vmatprep.subr.bf16.mxu0 0
      %429 = vmatpush1.bf16.msra.mxu0 %v367
      %430 = vmatprep.subr.bf16.mxu0 0
      %431 = vmatpush1.bf16.msra.mxu0 %v368
      %432 = vmatprep.subr.bf16.mxu0 0
      %433 = vmatpush1.bf16.msra.mxu0 %v369
      %434 = vmatprep.subr.bf16.mxu0 0
      %435 = vmatpush1.bf16.msra.mxu0 %v370
      %436 = vmatprep.subr.bf16.mxu0 0
      %437 = vmatpush1.bf16.msra.mxu0 %v371
      %438 = vmatprep.subr.bf16.mxu0 0
      %439 = vmatpush1.bf16.msra.mxu0 %v372
      %440 = vmatprep.subr.bf16.mxu0 0
      %441 = vmatpush1.bf16.msra.mxu0 %v373
      %442 = vmatprep.subr.bf16.mxu0 0
      %443 = vmatpush1.bf16.msra.mxu0 %v374
      %444 = vmatprep.subr.bf16.mxu0 0
      %445 = vmatpush1.bf16.msra.mxu0 %v375
      %446 = vmatprep.subr.bf16.mxu0 0
      %447 = vmatpush1.bf16.msra.mxu0 %v376
      %448 = vmatprep.subr.bf16.mxu0 0
      %449 = vmatpush1.bf16.msra.mxu0 %v377
      %450 = vmatprep.subr.bf16.mxu0 0
      %451 = vmatpush1.bf16.msra.mxu0 %v422
      %452 = vmatprep.subr.bf16.mxu0 0
      %453 = vmatpush1.bf16.msra.mxu0 0
      %454 = vmatprep.subr.bf16.mxu0 0
      %455 = vmatpush1.bf16.msra.mxu0 0
      %456 = vmatprep.mubr.bf16.mxu0 %v394
      %457 = vmatmul.mubr.bf16.gmra.mrb[0].mxu0 %v284
      %v458 = vpop.f32.mrb[0].mxu0
      %v459 = vadd.f32 %v228, %v458
      %v460 = vpop.f32.mrb[0].mxu0
      %v461 = vpop.f32.mrb[0].mxu0
      %v462 = vadd.f32 %v228, %v461
      %v463 = vpop.f32.mrb[0].mxu0
      %464 = vmatprep.mubr.bf16.mxu0 %v397
      %465 = vmatmul.mubr.bf16.gmra.mrb[0].mxu0 %v286
      %v466 = vpop.f32.mrb[0].mxu0
      %v467 = vadd.f32 %v228, %v466
      %v468 = vpop.f32.mrb[0].mxu0
      %v469 = vpop.f32.mrb[0].mxu0
      %v470 = vadd.f32 %v228, %v469
      %v471 = vpop.f32.mrb[0].mxu0
      %472 = vmatprep.mubr.bf16.mxu0 %v400
      %473 = vmatmul.mubr.bf16.gmra.mrb[0].mxu0 %v288
      %v474 = vpop.f32.mrb[0].mxu0
      %v475 = vadd.f32 %v228, %v474
      %v476 = vpop.f32.mrb[0].mxu0
      %v477 = vpop.f32.mrb[0].mxu0
      %v478 = vadd.f32 %v228, %v477
      %v479 = vpop.f32.mrb[0].mxu0
      %480 = vmatprep.mubr.bf16.mxu0 %v403
      %481 = vmatmul.mubr.bf16.gmra.mrb[0].mxu0 %v290
      %v482 = vpop.f32.mrb[0].mxu0
      %v483 = vadd.f32 %v228, %v482
      %v484 = vpop.f32.mrb[0].mxu0
      %v485 = vpop.f32.mrb[0].mxu0
      %v486 = vadd.f32 %v228, %v485
      %v487 = vpop.f32.mrb[0].mxu0
      %488 = vmatprep.mubr.bf16.mxu0 %v406
      %489 = vmatmul.mubr.bf16.gmra.mrb[0].mxu0 %v292
      %v490 = vpop.f32.mrb[0].mxu0
      %v491 = vadd.f32 %v228, %v490
      %v492 = vpop.f32.mrb[0].mxu0
      %v493 = vpop.f32.mrb[0].mxu0
      %v494 = vadd.f32 %v228, %v493
      %v495 = vpop.f32.mrb[0].mxu0
      %496 = vmatprep.mubr.bf16.mxu0 %v409
      %497 = vmatmul.mubr.bf16.gmra.mrb[0].mxu0 %v294
      %v498 = vpop.f32.mrb[0].mxu0
      %v499 = vadd.f32 %v228, %v498
      %v500 = vpop.f32.mrb[0].mxu0
      %v501 = vpop.f32.mrb[0].mxu0
      %v502 = vadd.f32 %v228, %v501
      %v503 = vpop.f32.mrb[0].mxu0
      %504 = vmatprep.mubr.bf16.mxu0 %v412
      %505 = vmatmul.mubr.bf16.gmra.mrb[0].mxu0 %v296
      %v506 = vpop.f32.mrb[0].mxu0
      %v507 = vadd.f32 %v228, %v506
      %v508 = vpop.f32.mrb[0].mxu0
      %v509 = vpop.f32.mrb[0].mxu0
      %v510 = vadd.f32 %v228, %v509
      %v511 = vpop.f32.mrb[0].mxu0
      %512 = vmatprep.mubr.bf16.mxu0 %v415
      %513 = vmatmul.mubr.bf16.gmra.mrb[0].mxu0 %v298
      %v514 = vpop.f32.mrb[0].mxu0
      %v515 = vadd.f32 %v228, %v514
      %v516 = vpop.f32.mrb[0].mxu0
      %v517 = vpop.f32.mrb[0].mxu0
      %v518 = vadd.f32 %v228, %v517
      %v519 = vpop.f32.mrb[0].mxu0
      %520 = vmatprep.mubr.bf16.mxu0 %v418
      %521 = vmatmul.mubr.bf16.gmra.mrb[0].mxu0 %v300
      %v522 = vpop.f32.mrb[0].mxu0
      %v523 = vadd.f32 %v228, %v522
      %v524 = vpop.f32.mrb[0].mxu0
      %v525 = vpop.f32.mrb[0].mxu0
      %v526 = vadd.f32 %v228, %v525
      %v527 = vpop.f32.mrb[0].mxu0
      %528 = vdwg.mxu0
      %v529 = vpack.c.bf16 %v462, %v459
      %v530 = vpack.c.bf16 %v470, %v467
      %v531 = vpack.c.bf16 %v478, %v475
      %v532 = vpack.c.bf16 %v486, %v483
      %v533 = vpack.c.bf16 %v494, %v491
      %v534 = vpack.c.bf16 %v502, %v499
      %v535 = vpack.c.bf16 %v510, %v507
      %v536 = vpack.c.bf16 %v518, %v515
      %v537 = vpack.c.bf16 %v526, %v523
      %v547 = vunpack.c.l.b16 %v529
      %v548 = vunpack.c.h.b16 %v529
      %v549 = vunpack.c.l.b16 %v530
      %v550 = vunpack.c.h.b16 %v530
      %v551 = vunpack.c.l.b16 %v531
      %v552 = vunpack.c.h.b16 %v531
      %v553 = vunpack.c.l.b16 %v532
      %v554 = vunpack.c.h.b16 %v532
      %v555 = vunpack.c.l.b16 %v533
      %v556 = vunpack.c.h.b16 %v533
      %v557 = vunpack.c.l.b16 %v534
      %v558 = vunpack.c.h.b16 %v534
      %v559 = vunpack.c.l.b16 %v535
      %v560 = vunpack.c.h.b16 %v535
      %v561 = vunpack.c.l.b16 %v536
      %v562 = vunpack.c.h.b16 %v536
      %v563 = vunpack.c.l.b16 %v537
      %v564 = vunpack.c.h.b16 %v537
      %v565 = vpack.c.b16 %v547, %v547
      %v566 = vpack.c.b16 %v548, %v548
      %v567 = vpack.c.b16 %v549, %v549
      %v568 = vpack.c.b16 %v550, %v550
      %v569 = vpack.c.b16 %v551, %v551
      %v570 = vpack.c.b16 %v552, %v552
      %v571 = vpack.c.b16 %v553, %v553
      %v572 = vpack.c.b16 %v554, %v554
      %v573 = vpack.c.b16 %v555, %v555
      %v574 = vpack.c.b16 %v556, %v556
      %v575 = vpack.c.b16 %v557, %v557
      %v576 = vpack.c.b16 %v558, %v558
      %v577 = vpack.c.b16 %v559, %v559
      %v578 = vpack.c.b16 %v560, %v560
      %v579 = vpack.c.b16 %v561, %v561
      %v580 = vpack.c.b16 %v562, %v562
      %v581 = vpack.c.b16 %v563, %v563
      %v582 = vpack.c.b16 %v564, %v564
      %vm601 = vcmask 191488
      %602 = vst.msk [vmem:[%s175] sm:$0xf] %vm601, %v565
      %603 = vst.msk [vmem:[%s175 + $0x4] sm:$0xf] %vm601, %v566
      %604 = vst.msk [vmem:[%s175 + $0x8] sm:$0xf] %vm601, %v567
      %605 = vst.msk [vmem:[%s175 + $0xc] sm:$0xf] %vm601, %v568
      %606 = vst.msk [vmem:[%s175 + $0x10] sm:$0xf] %vm601, %v569
      %607 = vst.msk [vmem:[%s175 + $0x14] sm:$0xf] %vm601, %v570
      %608 = vst.msk [vmem:[%s175 + $0x18] sm:$0xf] %vm601, %v571
      %609 = vst.msk [vmem:[%s175 + $0x1c] sm:$0xf] %vm601, %v572
      %610 = vst.msk [vmem:[%s175 + $0x20] sm:$0xf] %vm601, %v573
      %611 = vst.msk [vmem:[%s175 + $0x24] sm:$0xf] %vm601, %v574
      %612 = vst.msk [vmem:[%s175 + $0x28] sm:$0xf] %vm601, %v575
      %613 = vst.msk [vmem:[%s175 + $0x2c] sm:$0xf] %vm601, %v576
      %614 = vst.msk [vmem:[%s175 + $0x30] sm:$0xf] %vm601, %v577
      %615 = vst.msk [vmem:[%s175 + $0x34] sm:$0xf] %vm601, %v578
      %616 = vst.msk [vmem:[%s175 + $0x38] sm:$0xf] %vm601, %v579
      %617 = vst.msk [vmem:[%s175 + $0x3c] sm:$0xf] %vm601, %v580
      %618 = vst.msk [vmem:[%s175 + $0x40] sm:$0xf] %vm601, %v581
      %619 = vst.msk [vmem:[%s175 + $0x44] sm:$0xf] %vm601, %v582
      %s620 = smul.u32 18, %s14
      %p621 = scmp.lt.s32.totalorder %s620, 35
      %s622 = scalar_select %p621, %s620, 35
      %s623 = smul.addr %s622, 4
      %s624 = scalar_lea.vmem %s3, %s623
      // Predicated region
      $region33: #{net_forward.12} parent=31 // pred_check
        %p625 = pneg %p100
      $region34: #{net_forward.12} parent=31 // pred_check_branch
        %627 = sbr.rel (%p625) target = $region36
      $region35: #{net_forward.12} parent=31 // pred_region
        %s628 = smul.u32 18, %s14
      $region36: #{net_forward.12} parent=31 // pred_fallthru
        _
    $region32: #{net_forward.12} parent=5 // pred_fallthru
      _
    %p629 = scmp.le.s32.totalorder 2, %s9
    // Predicated region
    $region37: #{net_forward.12} parent=5 // pred_check
      %p630 = pneg %p629
    $region38: #{net_forward.12} parent=5 // pred_check_branch
      %632 = sbr.rel (%p630) target = $region40
    $region39: #{net_forward.12} parent=5 // pred_region
      %s633 = ssub.s32 %s9, 2
      // Predicated region
      $region41: #{net_forward.12} parent=39 // pred_check
        %p634 = pneg %p106
      $region42: #{net_forward.12} parent=39 // pred_check_branch
        %636 = sbr.rel (%p634) target = $region44
      $region43: #{net_forward.12} parent=39 // pred_region
        %s637 = smul.u32 18, %s15
        %p638 = scmp.lt.s32.totalorder %s637, 35
        %s639 = scalar_select %p638, %s637, 35
        %s640 = smul.addr %s639, 4
        %s641 = scalar_lea.vmem %s3, %s640
      $region44: #{net_forward.12} parent=39 // pred_fallthru
        _
    $region40: #{net_forward.12} parent=5 // pred_fallthru
      _
  $region6: #{net_forward.12} parent=0 // loop_footer
    %s13 = sadd.s32 1, %s9
  $region7: #{net_forward.12} parent=0 // loop_footer_branch
    %8 = sbr.rel target = $region3
  $region8: #{net_forward.12} parent=0 // loop_exit
    _

// kernel: net_forward.14
$region0: #{net_forward.14}
  #allocation0 [shape = 'u32[]', space=smem, size = 0x4, offset = 0x4, fixed_abs, tag = 'smem constant byte address 0x4 - core index']
  #allocation1 [shape = 'u32[144,128]{1,0:T(1,128)}', space=vmem, size = 0x12000, scoped, tag = 'internal scratch']
  %s0 = inlined_call_operand.vmem [shape: bf16[32,20], index: 0, kind: input, shape index: {}]
  %s1 = inlined_call_operand.vmem [shape: bf16[20,48], index: 1, kind: input, shape index: {}]
  %s2 = inlined_call_operand.vmem [shape: f32[1,48], index: 2, kind: input, shape index: {}]
  %s3 = inlined_call_operand.vmem [shape: bf16[32,48], index: 3, kind: output, shape index: {}]
  %s4 = sld [smem:[#allocation0]]
  $region45: #{net_forward.14} parent=0
    _
  %s6 = ssub.s32 1, %s4
  %s7 = scalar_select 0, %s6, %s4
  loop: start=0, step=1, limit=4
  $region2: #{net_forward.14} parent=0 // loop_pre_header
    _
  $region3: #{net_forward.14} parent=0 // loop_header
    %s9 = sphi 0, %s13
    %p10 = scmp.ge.s32.totalorder %s9, 4
    %s19 = sphi 0, %s21
    %s22 = sphi 0, %s19
    %s23 = sphi 0, %s22
    %s39 = sphi 0, %s23
    %s43 = sphi 0, %s43
    %s45 = sphi 0, %s43
    %s46 = sphi 0, %s45
    %s60 = sphi 0, %s46
    %s64 = sphi 0, %s64
    %s66 = sphi 0, %s64
    %s67 = sphi 0, %s66
    %s81 = sphi 0, %s67
    %s87 = sphi 0, %s89
    %s90 = sphi 0, %s87
    %s91 = sphi 0, %s90
    %s107 = sphi 0, %s91
  $region4: #{net_forward.14} parent=0 // loop_header_branch
    %12 = sbr.rel (%p10) target = $region8
  $region5: #{net_forward.14} parent=0 // loop_body
    %s14 = ssub.s32 %s9, 1
    %s15 = ssub.s32 %s9, 2
    %s16 = sadd.s32 %s9, 1
    %s17 = ssub.s32 %s9, %s16
    %p18 = scmp.eq.s32.totalorder %s17, 0
    %s20 = sadd.s32 %s19, 1
    %s21 = scalar_select %p18, %s19, %s20
    %p24 = pneg %p18
    %p25 = scmp.eq.s32.totalorder %s9, 1
    %p26 = por %p24, %p25
    %p27 = scmp.ne.s32.totalorder %s19, %s22
    %p28 = scmp.eq.s32.totalorder %s9, 0
    %p29 = por %p27, %p28
    %p30 = scmp.ne.s32.totalorder %s19, %s22
    %p31 = scmp.eq.s32.totalorder %s14, 1
    %p32 = por %p30, %p31
    %p33 = scmp.ne.s32.totalorder %s22, %s23
    %p34 = scmp.eq.s32.totalorder %s14, 0
    %p35 = por %p33, %p34
    %p36 = scmp.ne.s32.totalorder %s22, %s23
    %p37 = scmp.eq.s32.totalorder %s15, 1
    %p38 = por %p36, %p37
    %p40 = scmp.ne.s32.totalorder %s23, %s39
    %p41 = scmp.eq.s32.totalorder %s15, 0
    %p42 = por %p40, %p41
    %s44 = sadd.s32 %s43, 1
    %p47 = scmp.eq.s32.totalorder %s9, 1
    %p48 = scmp.ne.s32.totalorder %s43, %s45
    %p49 = scmp.eq.s32.totalorder %s9, 0
    %p50 = por %p48, %p49
    %p51 = scmp.ne.s32.totalorder %s43, %s45
    %p52 = scmp.eq.s32.totalorder %s14, 1
    %p53 = por %p51, %p52
    %p54 = scmp.ne.s32.totalorder %s45, %s46
    %p55 = scmp.eq.s32.totalorder %s14, 0
    %p56 = por %p54, %p55
    %p57 = scmp.ne.s32.totalorder %s45, %s46
    %p58 = scmp.eq.s32.totalorder %s15, 1
    %p59 = por %p57, %p58
    %p61 = scmp.ne.s32.totalorder %s46, %s60
    %p62 = scmp.eq.s32.totalorder %s15, 0
    %p63 = por %p61, %p62
    %s65 = sadd.s32 %s64, 1
    %p68 = scmp.eq.s32.totalorder %s9, 1
    %p69 = scmp.ne.s32.totalorder %s64, %s66
    %p70 = scmp.eq.s32.totalorder %s9, 0
    %p71 = por %p69, %p70
    %p72 = scmp.ne.s32.totalorder %s64, %s66
    %p73 = scmp.eq.s32.totalorder %s14, 1
    %p74 = por %p72, %p73
    %p75 = scmp.ne.s32.totalorder %s66, %s67
    %p76 = scmp.eq.s32.totalorder %s14, 0
    %p77 = por %p75, %p76
    %p78 = scmp.ne.s32.totalorder %s66, %s67
    %p79 = scmp.eq.s32.totalorder %s15, 1
    %p80 = por %p78, %p79
    %p82 = scmp.ne.s32.totalorder %s67, %s81
    %p83 = scmp.eq.s32.totalorder %s15, 0
    %p84 = por %p82, %p83
    %s85 = ssub.s32 %s9, %s16
    %p86 = scmp.eq.s32.totalorder %s85, 0
    %s88 = sadd.s32 %s87, 1
    %s89 = scalar_select %p86, %s87, %s88
    %p92 = pneg %p86
    %p93 = scmp.eq.s32.totalorder %s9, 1
    %p94 = por %p92, %p93
    %p95 = scmp.ne.s32.totalorder %s87, %s90
    %p96 = scmp.eq.s32.totalorder %s9, 0
    %p97 = por %p95, %p96
    %p98 = scmp.ne.s32.totalorder %s87, %s90
    %p99 = scmp.eq.s32.totalorder %s14, 1
    %p100 = por %p98, %p99
    %p101 = scmp.ne.s32.totalorder %s90, %s91
    %p102 = scmp.eq.s32.totalorder %s14, 0
    %p103 = por %p101, %p102
    %p104 = scmp.ne.s32.totalorder %s90, %s91
    %p105 = scmp.eq.s32.totalorder %s15, 1
    %p106 = por %p104, %p105
    %p108 = scmp.ne.s32.totalorder %s91, %s107
    %p109 = scmp.eq.s32.totalorder %s15, 0
    %p110 = por %p108, %p109
    %p111 = scmp.le.s32.totalorder 1, %s9
    %p112 = scmp.lt.s32.totalorder %s9, 3
    %p113 = pnand %p111, %p112
    %p114 = pneg %p113
    // Predicated region
    $region9: #{net_forward.14} parent=5 // pred_check
      _
    $region10: #{net_forward.14} parent=5 // pred_check_branch
      %116 = sbr.rel (%p113) target = $region12
    $region11: #{net_forward.14} parent=5 // pred_region
      %s117 = ssub.s32 %s9, 1
      // Predicated region
      $region13: #{net_forward.14} parent=11 // pred_check
        %p118 = pneg %p56
      $region14: #{net_forward.14} parent=11 // pred_check_branch
        %120 = sbr.rel (%p118) target = $region16
      $region15: #{net_forward.14} parent=11 // pred_region
        _
      $region16: #{net_forward.14} parent=11 // pred_fallthru
        _
      // Predicated region
      $region17: #{net_forward.14} parent=11 // pred_check
        %p121 = pneg %p77
      $region18: #{net_forward.14} parent=11 // pred_check_branch
        %123 = sbr.rel (%p121) target = $region20
      $region19: #{net_forward.14} parent=11 // pred_region
        _
      $region20: #{net_forward.14} parent=11 // pred_fallthru
        _
    $region12: #{net_forward.14} parent=5 // pred_fallthru
      _
    %p124 = scmp.lt.s32.totalorder %s9, 2
    // Predicated region
    $region21: #{net_forward.14} parent=5 // pred_check
      %p125 = pneg %p124
    $region22: #{net_forward.14} parent=5 // pred_check_branch
      %127 = sbr.rel (%p125) target = $region24
    $region23: #{net_forward.14} parent=5 // pred_region
      // Predicated region
      $region25: #{net_forward.14} parent=23 // pred_check
        %p128 = pneg %p29
      $region26: #{net_forward.14} parent=23 // pred_check_branch
        %130 = sbr.rel (%p128) target = $region28
      $region27: #{net_forward.14} parent=23 // pred_region
        %s131 = smul.u32 2, %s9
        %p132 = scmp.lt.s32.totalorder %s131, 3
        %s133 = scalar_select %p132, %s131, 3
        %s134 = smul.addr %s133, 4
        %s135 = scalar_lea.vmem %s0, %s134
        %s136 = smul.u32 2, %s9
      $region28: #{net_forward.14} parent=23 // pred_fallthru
        _
    $region24: #{net_forward.14} parent=5 // pred_fallthru
      _
    %p137 = scmp.le.s32.totalorder 1, %s9
    %p138 = scmp.lt.s32.totalorder %s9, 3
    %p139 = pnand %p137, %p138
    %p140 = pneg %p139
    // Predicated region
    $region29: #{net_forward.14} parent=5 // pred_check
      _
    $region30: #{net_forward.14} parent=5 // pred_check_branch
      %142 = sbr.rel (%p139) target = $region32
    $region31: #{net_forward.14} parent=5 // pred_region
      %s143 = ssub.s32 %s9, 1
      %s144 = smul.u32 2, %s14
      %p145 = scmp.lt.s32.totalorder %s144, 3
      %s146 = scalar_select %p145, %s144, 3
      %s147 = smul.addr %s146, 4
      %s148 = scalar_lea.vmem %s0, %s147
      %p149 = pneg %p35
      %p150 = pneg %p32
      %p151 = pneg %p56
      %p152 = pneg %p53
      %p153 = pneg %p77
      %p154 = pneg %p74
      %p155 = pneg %p103
      %p156 = pneg %p100
      %s157 = smul.u32 2, %s14
      %p158 = scmp.lt.s32.totalorder %s157, 3
      %s159 = scalar_select %p158, %s157, 3
      %s160 = smul.addr %s159, 4
      %s161 = scalar_lea.vmem %s3, %s160
      %s162 = smul.u32 2, %s14
      %p163 = scmp.lt.s32.totalorder %s162, 3
      %s164 = scalar_select %p163, %s162, 3
      %s165 = smul.addr %s164, 4
      %s166 = scalar_lea.vmem %s0, %s165
      %s167 = smul.u32 2, %s14
      %s168 = smul.u32 2, %s14
      %p169 = scmp.lt.s32.totalorder %s168, 3
      %s170 = scalar_select %p169, %s168, 3
      %s171 = smul.addr %s170, 4
      %s172 = scalar_lea.vmem %s3, %s171
      %s173 = smul.u32 2, %s14
      %v175 = vld [vmem:[%s166] sm:$0xf]
      %v176 = vld [vmem:[%s166 + $0x4] sm:$0xf]
      %v177 = vld [vmem:[%s1] sm:$0xf]
      %v178 = vld [vmem:[%s1 + $0x4] sm:$0xf]
      %v179 = vld [vmem:[%s1 + $0x8] sm:$0x3]
      %v180 = vld [vmem:[%s2] sm:$0x1]
      %v182 = vlaneseq
      %v183 = vshrl.u32 %v182, 7
      %v184 = vsub.s32 0, %v183
      %v185 = vrot.slane %v180, %v184
      %v189 = vunpack.c.l.b16 %v175
      %v190 = vunpack.c.l.b16 %v176
      %v191 = vpack.c.b16 %v190, %v189
      %v195 = vunpack.c.l.b16 %v177
      %v196 = vunpack.c.l.b16 %v178
      %v197 = vunpack.c.l.b16 %v179
      %v198 = vpack.c.b16 %v196, %v195
      %v199 = vpack.c.b16 %v197, %v197
      %vm201 = vcmask 162816
      %v203 = vsel %vm201, %v191, 0
      %vm205 = vcmask 1041408
      %v207 = vsel %vm205, %v199, 0
      %209 = vmatprep.subr.bf16.mxu0 0
      %210 = vmatpush1.bf16.msra.mxu0 %v198
      %211 = vmatprep.subr.bf16.mxu0 0
      %212 = vmatpush1.bf16.msra.mxu0 %v207
      %213 = vmatprep.subr.bf16.mxu0 0
      %214 = vmatpush1.bf16.msra.mxu0 0
      %215 = vmatprep.subr.bf16.mxu0 0
      %216 = vmatpush1.bf16.msra.mxu0 0
      %217 = vmatprep.subr.bf16.mxu0 0
      %218 = vmatpush1.bf16.msra.mxu0 0
      %219 = vmatprep.subr.bf16.mxu0 0
      %220 = vmatpush1.bf16.msra.mxu0 0
      %221 = vmatprep.subr.bf16.mxu0 0
      %222 = vmatpush1.bf16.msra.mxu0 0
      %223 = vmatprep.subr.bf16.mxu0 0
      %224 = vmatpush1.bf16.msra.mxu0 0
      %225 = vmatprep.subr.bf16.mxu0 0
      %226 = vmatpush1.bf16.msra.mxu0 0
      %227 = vmatprep.subr.bf16.mxu0 0
      %228 = vmatpush1.bf16.msra.mxu0 0
      %229 = vmatprep.subr.bf16.mxu0 0
      %230 = vmatpush1.bf16.msra.mxu0 0
      %231 = vmatprep.subr.bf16.mxu0 0
      %232 = vmatpush1.bf16.msra.mxu0 0
      %233 = vmatprep.subr.bf16.mxu0 0
      %234 = vmatpush1.bf16.msra.mxu0 0
      %235 = vmatprep.subr.bf16.mxu0 0
      %236 = vmatpush1.bf16.msra.mxu0 0
      %237 = vmatprep.subr.bf16.mxu0 0
      %238 = vmatpush1.bf16.msra.mxu0 0
      %239 = vmatprep.subr.bf16.mxu0 0
      %240 = vmatpush1.bf16.msra.mxu0 0
      %241 = vmatprep.mubr.bf16.mxu0 0
      %242 = vmatmul.mubr.bf16.gmra.mrb[0].mxu0 %v203
      %v243 = vpop.f32.mrb[0].mxu0
      %v244 = vadd.f32 %v185, %v243
      %v245 = vpop.f32.mrb[0].mxu0
      %v246 = vpop.f32.mrb[0].mxu0
      %v247 = vadd.f32 %v185, %v246
      %v248 = vpop.f32.mrb[0].mxu0
      %249 = vdwg.mxu0
      %v250 = vpack.c.bf16 %v247, %v244
      %v252 = vunpack.c.l.b16 %v250
      %v253 = vunpack.c.h.b16 %v250
      %v254 = vpack.c.b16 %v252, %v252
      %v255 = vpack.c.b16 %v253, %v253
      %vm258 = vcmask 388096
      %259 = vst.msk [vmem:[%s172] sm:$0xf] %vm258, %v254
      %260 = vst.msk [vmem:[%s172 + $0x4] sm:$0xf] %vm258, %v255
      %s261 = smul.u32 2, %s14
      %p262 = scmp.lt.s32.totalorder %s261, 3
      %s263 = scalar_select %p262, %s261, 3
      %s264 = smul.addr %s263, 4
      %s265 = scalar_lea.vmem %s3, %s264
      // Predicated region
      $region33: #{net_forward.14} parent=31 // pred_check
        %p266 = pneg %p100
      $region34: #{net_forward.14} parent=31 // pred_check_branch
        %268 = sbr.rel (%p266) target = $region36
      $region35: #{net_forward.14} parent=31 // pred_region
        %s269 = smul.u32 2, %s14
      $region36: #{net_forward.14} parent=31 // pred_fallthru
        _
    $region32: #{net_forward.14} parent=5 // pred_fallthru
      _
    %p270 = scmp.le.s32.totalorder 2, %s9
    // Predicated region
    $region37: #{net_forward.14} parent=5 // pred_check
      %p271 = pneg %p270
    $region38: #{net_forward.14} parent=5 // pred_check_branch
      %273 = sbr.rel (%p271) target = $region40
    $region39: #{net_forward.14} parent=5 // pred_region
      %s274 = ssub.s32 %s9, 2
      // Predicated region
      $region41: #{net_forward.14} parent=39 // pred_check
        %p275 = pneg %p106
      $region42: #{net_forward.14} parent=39 // pred_check_branch
        %277 = sbr.rel (%p275) target = $region44
      $region43: #{net_forward.14} parent=39 // pred_region
        %s278 = smul.u32 2, %s15
        %p279 = scmp.lt.s32.totalorder %s278, 3
        %s280 = scalar_select %p279, %s278, 3
        %s281 = smul.addr %s280, 4
        %s282 = scalar_lea.vmem %s3, %s281
      $region44: #{net_forward.14} parent=39 // pred_fallthru
        _
    $region40: #{net_forward.14} parent=5 // pred_fallthru
      _
  $region6: #{net_forward.14} parent=0 // loop_footer
    %s13 = sadd.s32 1, %s9
  $region7: #{net_forward.14} parent=0 // loop_footer_branch
    %8 = sbr.rel target = $region3
  $region8: #{net_forward.14} parent=0 // loop_exit
    _

// kernel: net_forward.13
$region0: #{net_forward.13}
  #allocation0 [shape = 'u32[]', space=smem, size = 0x4, offset = 0x4, fixed_abs, tag = 'smem constant byte address 0x4 - core index']
  #allocation1 [shape = 'u32[144,128]{1,0:T(1,128)}', space=vmem, size = 0x12000, scoped, tag = 'internal scratch']
  %s0 = inlined_call_operand.vmem [shape: bf16[4,32,2200], index: 0, kind: input, shape index: {}]
  %s1 = inlined_call_operand.vmem [shape: bf16[2200,20], index: 1, kind: input, shape index: {}]
  %s2 = inlined_call_operand.vmem [shape: f32[1,20], index: 2, kind: input, shape index: {}]
  %s3 = inlined_call_operand.vmem [shape: bf16[32,20], index: 3, kind: output, shape index: {}]
  %s4 = sld [smem:[#allocation0]]
  $region68: #{net_forward.13} parent=0
    _
  %s6 = ssub.s32 1, %s4
  %s7 = scalar_select 0, %s6, %s4
  $region1: #{net_forward.13} parent=0
    #allocation2 [shape = 'u8[589824]{0}', space=vmem, size = 0x90000, scoped, tag = 'input window, operand 0']
    loop: start=0, step=1, limit=4
    $region2: #{net_forward.13} parent=1 // loop_pre_header
      _
    $region3: #{net_forward.13} parent=1 // loop_header
      %s9 = sphi 0, %s13
      %p10 = scmp.ge.s32.totalorder %s9, 4
      %s19 = sphi 0, %s21
      %s22 = sphi 0, %s19
      %s23 = sphi 0, %s22
      %s39 = sphi 0, %s23
      %s43 = sphi 0, %s43
      %s45 = sphi 0, %s43
      %s46 = sphi 0, %s45
      %s60 = sphi 0, %s46
      %s64 = sphi 0, %s64
      %s66 = sphi 0, %s64
      %s67 = sphi 0, %s66
      %s81 = sphi 0, %s67
      %s87 = sphi 0, %s89
      %s90 = sphi 0, %s87
      %s91 = sphi 0, %s90
      %s107 = sphi 0, %s91
    $region4: #{net_forward.13} parent=1 // loop_header_branch
      %12 = sbr.rel (%p10) target = $region8
    $region5: #{net_forward.13} parent=1 // loop_body
      %s14 = ssub.s32 %s9, 1
      %s15 = ssub.s32 %s9, 2
      %s16 = sadd.s32 %s9, 1
      %s17 = ssub.s32 %s9, %s16
      %p18 = scmp.eq.s32.totalorder %s17, 0
      %s20 = sadd.s32 %s19, 1
      %s21 = scalar_select %p18, %s19, %s20
      %p24 = pneg %p18
      %p25 = scmp.eq.s32.totalorder %s9, 1
      %p26 = por %p24, %p25
      %p27 = scmp.ne.s32.totalorder %s19, %s22
      %p28 = scmp.eq.s32.totalorder %s9, 0
      %p29 = por %p27, %p28
      %p30 = scmp.ne.s32.totalorder %s19, %s22
      %p31 = scmp.eq.s32.totalorder %s14, 1
      %p32 = por %p30, %p31
      %p33 = scmp.ne.s32.totalorder %s22, %s23
      %p34 = scmp.eq.s32.totalorder %s14, 0
      %p35 = por %p33, %p34
      %p36 = scmp.ne.s32.totalorder %s22, %s23
      %p37 = scmp.eq.s32.totalorder %s15, 1
      %p38 = por %p36, %p37
      %p40 = scmp.ne.s32.totalorder %s23, %s39
      %p41 = scmp.eq.s32.totalorder %s15, 0
      %p42 = por %p40, %p41
      %s44 = sadd.s32 %s43, 1
      %p47 = scmp.eq.s32.totalorder %s9, 1
      %p48 = scmp.ne.s32.totalorder %s43, %s45
      %p49 = scmp.eq.s32.totalorder %s9, 0
      %p50 = por %p48, %p49
      %p51 = scmp.ne.s32.totalorder %s43, %s45
      %p52 = scmp.eq.s32.totalorder %s14, 1
      %p53 = por %p51, %p52
      %p54 = scmp.ne.s32.totalorder %s45, %s46
      %p55 = scmp.eq.s32.totalorder %s14, 0
      %p56 = por %p54, %p55
      %p57 = scmp.ne.s32.totalorder %s45, %s46
      %p58 = scmp.eq.s32.totalorder %s15, 1
      %p59 = por %p57, %p58
      %p61 = scmp.ne.s32.totalorder %s46, %s60
      %p62 = scmp.eq.s32.totalorder %s15, 0
      %p63 = por %p61, %p62
      %s65 = sadd.s32 %s64, 1
      %p68 = scmp.eq.s32.totalorder %s9, 1
      %p69 = scmp.ne.s32.totalorder %s64, %s66
      %p70 = scmp.eq.s32.totalorder %s9, 0
      %p71 = por %p69, %p70
      %p72 = scmp.ne.s32.totalorder %s64, %s66
      %p73 = scmp.eq.s32.totalorder %s14, 1
      %p74 = por %p72, %p73
      %p75 = scmp.ne.s32.totalorder %s66, %s67
      %p76 = scmp.eq.s32.totalorder %s14, 0
      %p77 = por %p75, %p76
      %p78 = scmp.ne.s32.totalorder %s66, %s67
      %p79 = scmp.eq.s32.totalorder %s15, 1
      %p80 = por %p78, %p79
      %p82 = scmp.ne.s32.totalorder %s67, %s81
      %p83 = scmp.eq.s32.totalorder %s15, 0
      %p84 = por %p82, %p83
      %s85 = ssub.s32 %s9, %s16
      %p86 = scmp.eq.s32.totalorder %s85, 0
      %s88 = sadd.s32 %s87, 1
      %s89 = scalar_select %p86, %s87, %s88
      %p92 = pneg %p86
      %p93 = scmp.eq.s32.totalorder %s9, 1
      %p94 = por %p92, %p93
      %p95 = scmp.ne.s32.totalorder %s87, %s90
      %p96 = scmp.eq.s32.totalorder %s9, 0
      %p97 = por %p95, %p96
      %p98 = scmp.ne.s32.totalorder %s87, %s90
      %p99 = scmp.eq.s32.totalorder %s14, 1
      %p100 = por %p98, %p99
      %p101 = scmp.ne.s32.totalorder %s90, %s91
      %p102 = scmp.eq.s32.totalorder %s14, 0
      %p103 = por %p101, %p102
      %p104 = scmp.ne.s32.totalorder %s90, %s91
      %p105 = scmp.eq.s32.totalorder %s15, 1
      %p106 = por %p104, %p105
      %p108 = scmp.ne.s32.totalorder %s91, %s107
      %p109 = scmp.eq.s32.totalorder %s15, 0
      %p110 = por %p108, %p109
      %p111 = scmp.le.s32.totalorder 1, %s9
      %p112 = scmp.lt.s32.totalorder %s9, 3
      %p113 = pnand %p111, %p112
      %p114 = pneg %p113
      // Predicated region
      $region9: #{net_forward.13} parent=5 // pred_check
        _
      $region10: #{net_forward.13} parent=5 // pred_check_branch
        %116 = sbr.rel (%p113) target = $region12
      $region11: #{net_forward.13} parent=5 // pred_region
        %s117 = ssub.s32 %s9, 1
        // Predicated region
        $region13: #{net_forward.13} parent=11 // pred_check
          %p118 = pneg %p56
        $region14: #{net_forward.13} parent=11 // pred_check_branch
          %120 = sbr.rel (%p118) target = $region16
        $region15: #{net_forward.13} parent=11 // pred_region
          _
        $region16: #{net_forward.13} parent=11 // pred_fallthru
          _
        // Predicated region
        $region17: #{net_forward.13} parent=11 // pred_check
          %p121 = pneg %p77
        $region18: #{net_forward.13} parent=11 // pred_check_branch
          %123 = sbr.rel (%p121) target = $region20
        $region19: #{net_forward.13} parent=11 // pred_region
          _
        $region20: #{net_forward.13} parent=11 // pred_fallthru
          _
      $region12: #{net_forward.13} parent=5 // pred_fallthru
        _
      %p124 = scmp.lt.s32.totalorder %s9, 2
      // Predicated region
      $region21: #{net_forward.13} parent=5 // pred_check
        %p125 = pneg %p124
      $region22: #{net_forward.13} parent=5 // pred_check_branch
        %127 = sbr.rel (%p125) target = $region24
      $region23: #{net_forward.13} parent=5 // pred_region
        // Predicated region
        $region25: #{net_forward.13} parent=23 // pred_check
          %p128 = pneg %p29
        $region26: #{net_forward.13} parent=23 // pred_check_branch
          %130 = sbr.rel (%p128) target = $region28
        $region27: #{net_forward.13} parent=23 // pred_region
          %s131 = sand.u32 %s19, 1
          %s132 = sand.u32 %s19, 1
          %s133 = smul.addr %s132, 576
          %s134 = scalar_lea.vmem [#allocation2], %s133
          %s135 = smul.u32 2, %s9
          %s136 = smul.addr %s135, 18
          %s137 = smul.addr %s136, 4
          %s138 = scalar_lea.vmem %s0, %s137
          // Predicated region
          $region29: #{net_forward.13} parent=27 // pred_check
            _
          $region30: #{net_forward.13} parent=27 // pred_check_branch
            %140 = sbr.rel (0) target = $region32
          $region31: #{net_forward.13} parent=27 // pred_region
            // Predicated region
            $region33: #{net_forward.13} parent=31 // pred_check
              _
            $region34: #{net_forward.13} parent=31 // pred_check_branch
              %142 = sbr.rel (0) target = $region36
            $region35: #{net_forward.13} parent=31 // pred_region
              loop: start=0, step=1, limit=1
              $region37: #{net_forward.13} parent=35 // loop_pre_header
                _
              $region38: #{net_forward.13} parent=35 // loop_header
                %s144 = sphi 0, %s148
                %p145 = scmp.ge.s32.totalorder %s144, 1
                %s149 = sphi %s138, %s138
                %s150 = sphi %s134, %s134
              $region39: #{net_forward.13} parent=35 // loop_header_branch
                %147 = sbr.rel (%p145) target = $region43
              $region40: #{net_forward.13} parent=35 // loop_body
                %v151 = vld [vmem:[%s149] sm:$0xff]
                %152 = vst [vmem:[%s150] sm:$0xff] %v151
                %v153 = vld [vmem:[%s149 + $0x8] sm:$0xff]
                %154 = vst [vmem:[%s150 + $0x8] sm:$0xff] %v153
                %v155 = vld [vmem:[%s149 + $0x10] sm:$0xff]
                %156 = vst [vmem:[%s150 + $0x10] sm:$0xff] %v155
                %v157 = vld [vmem:[%s149 + $0x18] sm:$0xff]
                %158 = vst [vmem:[%s150 + $0x18] sm:$0xff] %v157
                %v159 = vld [vmem:[%s149 + $0x20] sm:$0xff]
                %160 = vst [vmem:[%s150 + $0x20] sm:$0xff] %v159
                %v161 = vld [vmem:[%s149 + $0x28] sm:$0xff]
                %162 = vst [vmem:[%s150 + $0x28] sm:$0xff] %v161
                %v163 = vld [vmem:[%s149 + $0x30] sm:$0xff]
                %164 = vst [vmem:[%s150 + $0x30] sm:$0xff] %v163
                %v165 = vld [vmem:[%s149 + $0x38] sm:$0xff]
                %166 = vst [vmem:[%s150 + $0x38] sm:$0xff] %v165
                %v167 = vld [vmem:[%s149 + $0x40] sm:$0xff]
                %168 = vst [vmem:[%s150 + $0x40] sm:$0xff] %v167
                %v169 = vld [vmem:[%s149 + $0x48] sm:$0xff]
                %170 = vst [vmem:[%s150 + $0x48] sm:$0xff] %v169
                %v171 = vld [vmem:[%s149 + $0x50] sm:$0xff]
                %172 = vst [vmem:[%s150 + $0x50] sm:$0xff] %v171
                %v173 = vld [vmem:[%s149 + $0x58] sm:$0xff]
                %174 = vst [vmem:[%s150 + $0x58] sm:$0xff] %v173
                %v175 = vld [vmem:[%s149 + $0x60] sm:$0xff]
                %176 = vst [vmem:[%s150 + $0x60] sm:$0xff] %v175
                %v177 = vld [vmem:[%s149 + $0x68] sm:$0xff]
                %178 = vst [vmem:[%s150 + $0x68] sm:$0xff] %v177
                %v179 = vld [vmem:[%s149 + $0x70] sm:$0xff]
                %180 = vst [vmem:[%s150 + $0x70] sm:$0xff] %v179
                %v181 = vld [vmem:[%s149 + $0x78] sm:$0xff]
                %182 = vst [vmem:[%s150 + $0x78] sm:$0xff] %v181
                %v183 = vld [vmem:[%s149 + $0x80] sm:$0xff]
                %184 = vst [vmem:[%s150 + $0x80] sm:$0xff] %v183
                %v185 = vld [vmem:[%s149 + $0x88] sm:$0xff]
                %186 = vst [vmem:[%s150 + $0x88] sm:$0xff] %v185
                %v187 = vld [vmem:[%s149 + $0x120] sm:$0xff]
                %188 = vst [vmem:[%s150 + $0x90] sm:$0xff] %v187
                %v189 = vld [vmem:[%s149 + $0x128] sm:$0xff]
                %190 = vst [vmem:[%s150 + $0x98] sm:$0xff] %v189
                %v191 = vld [vmem:[%s149 + $0x130] sm:$0xff]
                %192 = vst [vmem:[%s150 + $0xa0] sm:$0xff] %v191
                %v193 = vld [vmem:[%s149 + $0x138] sm:$0xff]
                %194 = vst [vmem:[%s150 + $0xa8] sm:$0xff] %v193
                %v195 = vld [vmem:[%s149 + $0x140] sm:$0xff]
                %196 = vst [vmem:[%s150 + $0xb0] sm:$0xff] %v195
                %v197 = vld [vmem:[%s149 + $0x148] sm:$0xff]
                %198 = vst [vmem:[%s150 + $0xb8] sm:$0xff] %v197
                %v199 = vld [vmem:[%s149 + $0x150] sm:$0xff]
                %200 = vst [vmem:[%s150 + $0xc0] sm:$0xff] %v199
                %v201 = vld [vmem:[%s149 + $0x158] sm:$0xff]
                %202 = vst [vmem:[%s150 + $0xc8] sm:$0xff] %v201
                %v203 = vld [vmem:[%s149 + $0x160] sm:$0xff]
                %204 = vst [vmem:[%s150 + $0xd0] sm:$0xff] %v203
                %v205 = vld [vmem:[%s149 + $0x168] sm:$0xff]
                %206 = vst [vmem:[%s150 + $0xd8] sm:$0xff] %v205
                %v207 = vld [vmem:[%s149 + $0x170] sm:$0xff]
                %208 = vst [vmem:[%s150 + $0xe0] sm:$0xff] %v207
                %v209 = vld [vmem:[%s149 + $0x178] sm:$0xff]
                %210 = vst [vmem:[%s150 + $0xe8] sm:$0xff] %v209
                %v211 = vld [vmem:[%s149 + $0x180] sm:$0xff]
                %212 = vst [vmem:[%s150 + $0xf0] sm:$0xff] %v211
                %v213 = vld [vmem:[%s149 + $0x188] sm:$0xff]
                %214 = vst [vmem:[%s150 + $0xf8] sm:$0xff] %v213
                %v215 = vld [vmem:[%s149 + $0x190] sm:$0xff]
                %216 = vst [vmem:[%s150 + $0x100] sm:$0xff] %v215
                %v217 = vld [vmem:[%s149 + $0x198] sm:$0xff]
                %218 = vst [vmem:[%s150 + $0x108] sm:$0xff] %v217
                %v219 = vld [vmem:[%s149 + $0x1a0] sm:$0xff]
                %220 = vst [vmem:[%s150 + $0x110] sm:$0xff] %v219
                %v221 = vld [vmem:[%s149 + $0x1a8] sm:$0xff]
                %222 = vst [vmem:[%s150 + $0x118] sm:$0xff] %v221
                %v223 = vld [vmem:[%s149 + $0x240] sm:$0xff]
                %224 = vst [vmem:[%s150 + $0x120] sm:$0xff] %v223
                %v225 = vld [vmem:[%s149 + $0x248] sm:$0xff]
                %226 = vst [vmem:[%s150 + $0x128] sm:$0xff] %v225
                %v227 = vld [vmem:[%s149 + $0x250] sm:$0xff]
                %228 = vst [vmem:[%s150 + $0x130] sm:$0xff] %v227
                %v229 = vld [vmem:[%s149 + $0x258] sm:$0xff]
                %230 = vst [vmem:[%s150 + $0x138] sm:$0xff] %v229
                %v231 = vld [vmem:[%s149 + $0x260] sm:$0xff]
                %232 = vst [vmem:[%s150 + $0x140] sm:$0xff] %v231
                %v233 = vld [vmem:[%s149 + $0x268] sm:$0xff]
                %234 = vst [vmem:[%s150 + $0x148] sm:$0xff] %v233
                %v235 = vld [vmem:[%s149 + $0x270] sm:$0xff]
                %236 = vst [vmem:[%s150 + $0x150] sm:$0xff] %v235
                %v237 = vld [vmem:[%s149 + $0x278] sm:$0xff]
                %238 = vst [vmem:[%s150 + $0x158] sm:$0xff] %v237
                %v239 = vld [vmem:[%s149 + $0x280] sm:$0xff]
                %240 = vst [vmem:[%s150 + $0x160] sm:$0xff] %v239
                %v241 = vld [vmem:[%s149 + $0x288] sm:$0xff]
                %242 = vst [vmem:[%s150 + $0x168] sm:$0xff] %v241
                %v243 = vld [vmem:[%s149 + $0x290] sm:$0xff]
                %244 = vst [vmem:[%s150 + $0x170] sm:$0xff] %v243
                %v245 = vld [vmem:[%s149 + $0x298] sm:$0xff]
                %246 = vst [vmem:[%s150 + $0x178] sm:$0xff] %v245
                %v247 = vld [vmem:[%s149 + $0x2a0] sm:$0xff]
                %248 = vst [vmem:[%s150 + $0x180] sm:$0xff] %v247
                %v249 = vld [vmem:[%s149 + $0x2a8] sm:$0xff]
                %250 = vst [vmem:[%s150 + $0x188] sm:$0xff] %v249
                %v251 = vld [vmem:[%s149 + $0x2b0] sm:$0xff]
                %252 = vst [vmem:[%s150 + $0x190] sm:$0xff] %v251
                %v253 = vld [vmem:[%s149 + $0x2b8] sm:$0xff]
                %254 = vst [vmem:[%s150 + $0x198] sm:$0xff] %v253
                %v255 = vld [vmem:[%s149 + $0x2c0] sm:$0xff]
                %256 = vst [vmem:[%s150 + $0x1a0] sm:$0xff] %v255
                %v257 = vld [vmem:[%s149 + $0x2c8] sm:$0xff]
                %258 = vst [vmem:[%s150 + $0x1a8] sm:$0xff] %v257
                %v259 = vld [vmem:[%s149 + $0x360] sm:$0xff]
                %260 = vst [vmem:[%s150 + $0x1b0] sm:$0xff] %v259
                %v261 = vld [vmem:[%s149 + $0x368] sm:$0xff]
                %262 = vst [vmem:[%s150 + $0x1b8] sm:$0xff] %v261
                %v263 = vld [vmem:[%s149 + $0x370] sm:$0xff]
                %264 = vst [vmem:[%s150 + $0x1c0] sm:$0xff] %v263
                %v265 = vld [vmem:[%s149 + $0x378] sm:$0xff]
                %266 = vst [vmem:[%s150 + $0x1c8] sm:$0xff] %v265
                %v267 = vld [vmem:[%s149 + $0x380] sm:$0xff]
                %268 = vst [vmem:[%s150 + $0x1d0] sm:$0xff] %v267
                %v269 = vld [vmem:[%s149 + $0x388] sm:$0xff]
                %270 = vst [vmem:[%s150 + $0x1d8] sm:$0xff] %v269
                %v271 = vld [vmem:[%s149 + $0x390] sm:$0xff]
                %272 = vst [vmem:[%s150 + $0x1e0] sm:$0xff] %v271
                %v273 = vld [vmem:[%s149 + $0x398] sm:$0xff]
                %274 = vst [vmem:[%s150 + $0x1e8] sm:$0xff] %v273
                %v275 = vld [vmem:[%s149 + $0x3a0] sm:$0xff]
                %276 = vst [vmem:[%s150 + $0x1f0] sm:$0xff] %v275
                %v277 = vld [vmem:[%s149 + $0x3a8] sm:$0xff]
                %278 = vst [vmem:[%s150 + $0x1f8] sm:$0xff] %v277
                %v279 = vld [vmem:[%s149 + $0x3b0] sm:$0xff]
                %280 = vst [vmem:[%s150 + $0x200] sm:$0xff] %v279
                %v281 = vld [vmem:[%s149 + $0x3b8] sm:$0xff]
                %282 = vst [vmem:[%s150 + $0x208] sm:$0xff] %v281
                %v283 = vld [vmem:[%s149 + $0x3c0] sm:$0xff]
                %284 = vst [vmem:[%s150 + $0x210] sm:$0xff] %v283
                %v285 = vld [vmem:[%s149 + $0x3c8] sm:$0xff]
                %286 = vst [vmem:[%s150 + $0x218] sm:$0xff] %v285
                %v287 = vld [vmem:[%s149 + $0x3d0] sm:$0xff]
                %288 = vst [vmem:[%s150 + $0x220] sm:$0xff] %v287
                %v289 = vld [vmem:[%s149 + $0x3d8] sm:$0xff]
                %290 = vst [vmem:[%s150 + $0x228] sm:$0xff] %v289
                %v291 = vld [vmem:[%s149 + $0x3e0] sm:$0xff]
                %292 = vst [vmem:[%s150 + $0x230] sm:$0xff] %v291
                %v293 = vld [vmem:[%s149 + $0x3e8] sm:$0xff]
                %294 = vst [vmem:[%s150 + $0x238] sm:$0xff] %v293
              $region41: #{net_forward.13} parent=35 // loop_footer
                %s148 = sadd.s32 1, %s144
              $region42: #{net_forward.13} parent=35 // loop_footer_branch
                %143 = sbr.rel target = $region38
              $region43: #{net_forward.13} parent=35 // loop_exit
                _
            $region36: #{net_forward.13} parent=31 // pred_fallthru
              _
            // Predicated region
            $region44: #{net_forward.13} parent=31 // pred_check
              _
            $region45: #{net_forward.13} parent=31 // pred_check_branch
              %296 = sbr.rel target = $region47
            $region46: #{net_forward.13} parent=31 // pred_region
              _
            $region47: #{net_forward.13} parent=31 // pred_fallthru
              _
          $region32: #{net_forward.13} parent=27 // pred_fallthru
            _
          %297 = vnop
        $region28: #{net_forward.13} parent=23 // pred_fallthru
          _
      $region24: #{net_forward.13} parent=5 // pred_fallthru
        _
      %p298 = scmp.le.s32.totalorder 1, %s9
      %p299 = scmp.lt.s32.totalorder %s9, 3
      %p300 = pnand %p298, %p299
      %p301 = pneg %p300
      // Predicated region
      $region48: #{net_forward.13} parent=5 // pred_check
        _
      $region49: #{net_forward.13} parent=5 // pred_check_branch
        %303 = sbr.rel (%p300) target = $region51
      $region50: #{net_forward.13} parent=5 // pred_region
        %s304 = ssub.s32 %s9, 1
        %s305 = sand.u32 %s22, 1
        %s306 = sand.u32 %s22, 1
        %s307 = smul.addr %s306, 576
        %s308 = scalar_lea.vmem [#allocation2], %s307
        // Predicated region
        $region52: #{net_forward.13} parent=50 // pred_check
          %p309 = pneg %p35
        $region53: #{net_forward.13} parent=50 // pred_check_branch
          %311 = sbr.rel (%p309) target = $region55
        $region54: #{net_forward.13} parent=50 // pred_region
          _
        $region55: #{net_forward.13} parent=50 // pred_fallthru
          _
        %s312 = sand.u32 %s22, 1
        %s313 = sand.u32 %s22, 1
        %s314 = smul.addr %s313, 576
        %s315 = scalar_lea.vmem [#allocation2], %s314
        %p316 = pneg %p35
        %p317 = pneg %p32
        %p318 = pneg %p56
        %p319 = pneg %p53
        %p320 = pneg %p77
        %p321 = pneg %p74
        %p322 = pneg %p103
        %p323 = pneg %p100
        %s324 = smul.u32 2, %s14
        %p325 = scmp.lt.s32.totalorder %s324, 3
        %s326 = scalar_select %p325, %s324, 3
        %s327 = smul.addr %s326, 4
        %s328 = scalar_lea.vmem %s3, %s327
        %s329 = smul.u32 2, %s14
        %s330 = smul.u32 2, %s14
        %p331 = scmp.lt.s32.totalorder %s330, 3
        %s332 = scalar_select %p331, %s330, 3
        %s333 = smul.addr %s332, 4
        %s334 = scalar_lea.vmem %s3, %s333
        %s335 = smul.u32 2, %s14
        %v337 = vld [vmem:[%s1] sm:$0xf]
        %v338 = vld [vmem:[%s1 + $0x4] sm:$0xf]
        %v339 = vld [vmem:[%s1 + $0x8] sm:$0xf]
        %v340 = vld [vmem:[%s1 + $0xc] sm:$0xf]
        %v341 = vld [vmem:[%s1 + $0x10] sm:$0xf]
        %v342 = vld [vmem:[%s1 + $0x14] sm:$0xf]
        %v343 = vld [vmem:[%s1 + $0x18] sm:$0xf]
        %v344 = vld [vmem:[%s1 + $0x1c] sm:$0xf]
        %v345 = vld [vmem:[%s1 + $0x20] sm:$0xf]
        %v346 = vld [vmem:[%s1 + $0x24] sm:$0xf]
        %v347 = vld [vmem:[%s1 + $0x28] sm:$0xf]
        %v348 = vld [vmem:[%s1 + $0x2c] sm:$0xf]
        %v349 = vld [vmem:[%s1 + $0x30] sm:$0xf]
        %v350 = vld [vmem:[%s1 + $0x34] sm:$0xf]
        %v351 = vld [vmem:[%s1 + $0x38] sm:$0xf]
        %v352 = vld [vmem:[%s1 + $0x3c] sm:$0xf]
        %v353 = vld [vmem:[%s1 + $0x40] sm:$0xf]
        %v354 = vld [vmem:[%s1 + $0x44] sm:$0xf]
        %v355 = vld [vmem:[%s1 + $0x48] sm:$0xf]
        %v356 = vld [vmem:[%s1 + $0x4c] sm:$0xf]
        %v357 = vld [vmem:[%s1 + $0x50] sm:$0xf]
        %v358 = vld [vmem:[%s1 + $0x54] sm:$0xf]
        %v359 = vld [vmem:[%s1 + $0x58] sm:$0xf]
        %v360 = vld [vmem:[%s1 + $0x5c] sm:$0xf]
        %v361 = vld [vmem:[%s1 + $0x60] sm:$0xf]
        %v362 = vld [vmem:[%s1 + $0x64] sm:$0xf]
        %v363 = vld [vmem:[%s1 + $0x68] sm:$0xf]
        %v364 = vld [vmem:[%s1 + $0x6c] sm:$0xf]
        %v365 = vld [vmem:[%s1 + $0x70] sm:$0xf]
        %v366 = vld [vmem:[%s1 + $0x74] sm:$0xf]
        %v367 = vld [vmem:[%s1 + $0x78] sm:$0xf]
        %v368 = vld [vmem:[%s1 + $0x7c] sm:$0xf]
        %v369 = vld [vmem:[%s1 + $0x80] sm:$0xf]
        %v370 = vld [vmem:[%s1 + $0x84] sm:$0xf]
        %v371 = vld [vmem:[%s1 + $0x88] sm:$0xf]
        %v372 = vld [vmem:[%s1 + $0x8c] sm:$0xf]
        %v373 = vld [vmem:[%s1 + $0x90] sm:$0xf]
        %v374 = vld [vmem:[%s1 + $0x94] sm:$0xf]
        %v375 = vld [vmem:[%s1 + $0x98] sm:$0xf]
        %v376 = vld [vmem:[%s1 + $0x9c] sm:$0xf]
        %v377 = vld [vmem:[%s1 + $0xa0] sm:$0xf]
        %v378 = vld [vmem:[%s1 + $0xa4] sm:$0xf]
        %v379 = vld [vmem:[%s1 + $0xa8] sm:$0xf]
        %v380 = vld [vmem:[%s1 + $0xac] sm:$0xf]
        %v381 = vld [vmem:[%s1 + $0xb0] sm:$0xf]
        %v382 = vld [vmem:[%s1 + $0xb4] sm:$0xf]
        %v383 = vld [vmem:[%s1 + $0xb8] sm:$0xf]
        %v384 = vld [vmem:[%s1 + $0xbc] sm:$0xf]
        %v385 = vld [vmem:[%s1 + $0xc0] sm:$0xf]
        %v386 = vld [vmem:[%s1 + $0xc4] sm:$0xf]
        %v387 = vld [vmem:[%s1 + $0xc8] sm:$0xf]
        %v388 = vld [vmem:[%s1 + $0xcc] sm:$0xf]
        %v389 = vld [vmem:[%s1 + $0xd0] sm:$0xf]
        %v390 = vld [vmem:[%s1 + $0xd4] sm:$0xf]
        %v391 = vld [vmem:[%s1 + $0xd8] sm:$0xf]
        %v392 = vld [vmem:[%s1 + $0xdc] sm:$0xf]
        %v393 = vld [vmem:[%s1 + $0xe0] sm:$0xf]
        %v394 = vld [vmem:[%s1 + $0xe4] sm:$0xf]
        %v395 = vld [vmem:[%s1 + $0xe8] sm:$0xf]
        %v396 = vld [vmem:[%s1 + $0xec] sm:$0xf]
        %v397 = vld [vmem:[%s1 + $0xf0] sm:$0xf]
        %v398 = vld [vmem:[%s1 + $0xf4] sm:$0xf]
        %v399 = vld [vmem:[%s1 + $0xf8] sm:$0xf]
        %v400 = vld [vmem:[%s1 + $0xfc] sm:$0xf]
        %v401 = vld [vmem:[%s1 + $0x100] sm:$0xf]
        %v402 = vld [vmem:[%s1 + $0x104] sm:$0xf]
        %v403 = vld [vmem:[%s1 + $0x108] sm:$0xf]
        %v404 = vld [vmem:[%s1 + $0x10c] sm:$0xf]
        %v405 = vld [vmem:[%s1 + $0x110] sm:$0xf]
        %v406 = vld [vmem:[%s1 + $0x114] sm:$0xf]
        %v407 = vld [vmem:[%s1 + $0x118] sm:$0xf]
        %v408 = vld [vmem:[%s1 + $0x11c] sm:$0xf]
        %v409 = vld [vmem:[%s1 + $0x120] sm:$0xf]
        %v410 = vld [vmem:[%s1 + $0x124] sm:$0xf]
        %v411 = vld [vmem:[%s1 + $0x128] sm:$0xf]
        %v412 = vld [vmem:[%s1 + $0x12c] sm:$0xf]
        %v413 = vld [vmem:[%s1 + $0x130] sm:$0xf]
        %v414 = vld [vmem:[%s1 + $0x134] sm:$0xf]
        %v415 = vld [vmem:[%s1 + $0x138] sm:$0xf]
        %v416 = vld [vmem:[%s1 + $0x13c] sm:$0xf]
        %v417 = vld [vmem:[%s1 + $0x140] sm:$0xf]
        %v418 = vld [vmem:[%s1 + $0x144] sm:$0xf]
        %v419 = vld [vmem:[%s1 + $0x148] sm:$0xf]
        %v420 = vld [vmem:[%s1 + $0x14c] sm:$0xf]
        %v421 = vld [vmem:[%s1 + $0x150] sm:$0xf]
        %v422 = vld [vmem:[%s1 + $0x154] sm:$0xf]
        %v423 = vld [vmem:[%s1 + $0x158] sm:$0xf]
        %v424 = vld [vmem:[%s1 + $0x15c] sm:$0xf]
        %v425 = vld [vmem:[%s1 + $0x160] sm:$0xf]
        %v426 = vld [vmem:[%s1 + $0x164] sm:$0xf]
        %v427 = vld [vmem:[%s1 + $0x168] sm:$0xf]
        %v428 = vld [vmem:[%s1 + $0x16c] sm:$0xf]
        %v429 = vld [vmem:[%s1 + $0x170] sm:$0xf]
        %v430 = vld [vmem:[%s1 + $0x174] sm:$0xf]
        %v431 = vld [vmem:[%s1 + $0x178] sm:$0xf]
        %v432 = vld [vmem:[%s1 + $0x17c] sm:$0xf]
        %v433 = vld [vmem:[%s1 + $0x180] sm:$0xf]
        %v434 = vld [vmem:[%s1 + $0x184] sm:$0xf]
        %v435 = vld [vmem:[%s1 + $0x188] sm:$0xf]
        %v436 = vld [vmem:[%s1 + $0x18c] sm:$0xf]
        %v437 = vld [vmem:[%s1 + $0x190] sm:$0xf]
        %v438 = vld [vmem:[%s1 + $0x194] sm:$0xf]
        %v439 = vld [vmem:[%s1 + $0x198] sm:$0xf]
        %v440 = vld [vmem:[%s1 + $0x19c] sm:$0xf]
        %v441 = vld [vmem:[%s1 + $0x1a0] sm:$0xf]
        %v442 = vld [vmem:[%s1 + $0x1a4] sm:$0xf]
        %v443 = vld [vmem:[%s1 + $0x1a8] sm:$0xf]
        %v444 = vld [vmem:[%s1 + $0x1ac] sm:$0xf]
        %v445 = vld [vmem:[%s1 + $0x1b0] sm:$0xf]
        %v446 = vld [vmem:[%s1 + $0x1b4] sm:$0xf]
        %v447 = vld [vmem:[%s1 + $0x1b8] sm:$0xf]
        %v448 = vld [vmem:[%s1 + $0x1bc] sm:$0xf]
        %v449 = vld [vmem:[%s1 + $0x1c0] sm:$0xf]
        %v450 = vld [vmem:[%s1 + $0x1c4] sm:$0xf]
        %v451 = vld [vmem:[%s1 + $0x1c8] sm:$0xf]
        %v452 = vld [vmem:[%s1 + $0x1cc] sm:$0xf]
        %v453 = vld [vmem:[%s1 + $0x1d0] sm:$0xf]
        %v454 = vld [vmem:[%s1 + $0x1d4] sm:$0xf]
        %v455 = vld [vmem:[%s1 + $0x1d8] sm:$0xf]
        %v456 = vld [vmem:[%s1 + $0x1dc] sm:$0xf]
        %v457 = vld [vmem:[%s1 + $0x1e0] sm:$0xf]
        %v458 = vld [vmem:[%s1 + $0x1e4] sm:$0xf]
        %v459 = vld [vmem:[%s1 + $0x1e8] sm:$0xf]
        %v460 = vld [vmem:[%s1 + $0x1ec] sm:$0xf]
        %v461 = vld [vmem:[%s1 + $0x1f0] sm:$0xf]
        %v462 = vld [vmem:[%s1 + $0x1f4] sm:$0xf]
        %v463 = vld [vmem:[%s1 + $0x1f8] sm:$0xf]
        %v464 = vld [vmem:[%s1 + $0x1fc] sm:$0xf]
        %v465 = vld [vmem:[%s1 + $0x200] sm:$0xf]
        %v466 = vld [vmem:[%s1 + $0x204] sm:$0xf]
        %v467 = vld [vmem:[%s1 + $0x208] sm:$0xf]
        %v468 = vld [vmem:[%s1 + $0x20c] sm:$0xf]
        %v469 = vld [vmem:[%s1 + $0x210] sm:$0xf]
        %v470 = vld [vmem:[%s1 + $0x214] sm:$0xf]
        %v471 = vld [vmem:[%s1 + $0x218] sm:$0xf]
        %v472 = vld [vmem:[%s1 + $0x21c] sm:$0xf]
        %v473 = vld [vmem:[%s1 + $0x220] sm:$0xf]
        %v474 = vld [vmem:[%s1 + $0x224] sm:$0xf]
        %v475 = vld [vmem:[%s1 + $0x228] sm:$0xf]
        %v476 = vld [vmem:[%s1 + $0x22c] sm:$0xf]
        %v477 = vld [vmem:[%s1 + $0x230] sm:$0xf]
        %v478 = vld [vmem:[%s1 + $0x234] sm:$0xf]
        %v479 = vld [vmem:[%s1 + $0x238] sm:$0xf]
        %v480 = vld [vmem:[%s1 + $0x23c] sm:$0xf]
        %v481 = vld [vmem:[%s1 + $0x240] sm:$0xf]
        %v482 = vld [vmem:[%s1 + $0x244] sm:$0xf]
        %v483 = vld [vmem:[%s1 + $0x248] sm:$0xf]
        %v484 = vld [vmem:[%s1 + $0x24c] sm:$0xf]
        %v485 = vld [vmem:[%s1 + $0x250] sm:$0xf]
        %v486 = vld [vmem:[%s1 + $0x254] sm:$0xf]
        %v487 = vld [vmem:[%s1 + $0x258] sm:$0xf]
        %v488 = vld [vmem:[%s1 + $0x25c] sm:$0xf]
        %v489 = vld [vmem:[%s1 + $0x260] sm:$0xf]
        %v490 = vld [vmem:[%s1 + $0x264] sm:$0xf]
        %v491 = vld [vmem:[%s1 + $0x268] sm:$0xf]
        %v492 = vld [vmem:[%s1 + $0x26c] sm:$0xf]
        %v493 = vld [vmem:[%s1 + $0x270] sm:$0xf]
        %v494 = vld [vmem:[%s1 + $0x274] sm:$0xf]
        %v495 = vld [vmem:[%s1 + $0x278] sm:$0xf]
        %v496 = vld [vmem:[%s1 + $0x27c] sm:$0xf]
        %v497 = vld [vmem:[%s1 + $0x280] sm:$0xf]
        %v498 = vld [vmem:[%s1 + $0x284] sm:$0xf]
        %v499 = vld [vmem:[%s1 + $0x288] sm:$0xf]
        %v500 = vld [vmem:[%s1 + $0x28c] sm:$0xf]
        %v501 = vld [vmem:[%s1 + $0x290] sm:$0xf]
        %v502 = vld [vmem:[%s1 + $0x294] sm:$0xf]
        %v503 = vld [vmem:[%s1 + $0x298] sm:$0xf]
        %v504 = vld [vmem:[%s1 + $0x29c] sm:$0xf]
        %v505 = vld [vmem:[%s1 + $0x2a0] sm:$0xf]
        %v506 = vld [vmem:[%s1 + $0x2a4] sm:$0xf]
        %v507 = vld [vmem:[%s1 + $0x2a8] sm:$0xf]
        %v508 = vld [vmem:[%s1 + $0x2ac] sm:$0xf]
        %v509 = vld [vmem:[%s1 + $0x2b0] sm:$0xf]
        %v510 = vld [vmem:[%s1 + $0x2b4] sm:$0xf]
        %v511 = vld [vmem:[%s1 + $0x2b8] sm:$0xf]
        %v512 = vld [vmem:[%s1 + $0x2bc] sm:$0xf]
        %v513 = vld [vmem:[%s1 + $0x2c0] sm:$0xf]
        %v514 = vld [vmem:[%s1 + $0x2c4] sm:$0xf]
        %v515 = vld [vmem:[%s1 + $0x2c8] sm:$0xf]
        %v516 = vld [vmem:[%s1 + $0x2cc] sm:$0xf]
        %v517 = vld [vmem:[%s1 + $0x2d0] sm:$0xf]
        %v518 = vld [vmem:[%s1 + $0x2d4] sm:$0xf]
        %v519 = vld [vmem:[%s1 + $0x2d8] sm:$0xf]
        %v520 = vld [vmem:[%s1 + $0x2dc] sm:$0xf]
        %v521 = vld [vmem:[%s1 + $0x2e0] sm:$0xf]
        %v522 = vld [vmem:[%s1 + $0x2e4] sm:$0xf]
        %v523 = vld [vmem:[%s1 + $0x2e8] sm:$0xf]
        %v524 = vld [vmem:[%s1 + $0x2ec] sm:$0xf]
        %v525 = vld [vmem:[%s1 + $0x2f0] sm:$0xf]
        %v526 = vld [vmem:[%s1 + $0x2f4] sm:$0xf]
        %v527 = vld [vmem:[%s1 + $0x2f8] sm:$0xf]
        %v528 = vld [vmem:[%s1 + $0x2fc] sm:$0xf]
        %v529 = vld [vmem:[%s1 + $0x300] sm:$0xf]
        %v530 = vld [vmem:[%s1 + $0x304] sm:$0xf]
        %v531 = vld [vmem:[%s1 + $0x308] sm:$0xf]
        %v532 = vld [vmem:[%s1 + $0x30c] sm:$0xf]
        %v533 = vld [vmem:[%s1 + $0x310] sm:$0xf]
        %v534 = vld [vmem:[%s1 + $0x314] sm:$0xf]
        %v535 = vld [vmem:[%s1 + $0x318] sm:$0xf]
        %v536 = vld [vmem:[%s1 + $0x31c] sm:$0xf]
        %v537 = vld [vmem:[%s1 + $0x320] sm:$0xf]
        %v538 = vld [vmem:[%s1 + $0x324] sm:$0xf]
        %v539 = vld [vmem:[%s1 + $0x328] sm:$0xf]
        %v540 = vld [vmem:[%s1 + $0x32c] sm:$0xf]
        %v541 = vld [vmem:[%s1 + $0x330] sm:$0xf]
        %v542 = vld [vmem:[%s1 + $0x334] sm:$0xf]
        %v543 = vld [vmem:[%s1 + $0x338] sm:$0xf]
        %v544 = vld [vmem:[%s1 + $0x33c] sm:$0xf]
        %v545 = vld [vmem:[%s1 + $0x340] sm:$0xf]
        %v546 = vld [vmem:[%s1 + $0x344] sm:$0xf]
        %v547 = vld [vmem:[%s1 + $0x348] sm:$0xf]
        %v548 = vld [vmem:[%s1 + $0x34c] sm:$0xf]
        %v549 = vld [vmem:[%s1 + $0x350] sm:$0xf]
        %v550 = vld [vmem:[%s1 + $0x354] sm:$0xf]
        %v551 = vld [vmem:[%s1 + $0x358] sm:$0xf]
        %v552 = vld [vmem:[%s1 + $0x35c] sm:$0xf]
        %v553 = vld [vmem:[%s1 + $0x360] sm:$0xf]
        %v554 = vld [vmem:[%s1 + $0x364] sm:$0xf]
        %v555 = vld [vmem:[%s1 + $0x368] sm:$0xf]
        %v556 = vld [vmem:[%s1 + $0x36c] sm:$0xf]
        %v557 = vld [vmem:[%s1 + $0x370] sm:$0xf]
        %v558 = vld [vmem:[%s1 + $0x374] sm:$0xf]
        %v559 = vld [vmem:[%s1 + $0x378] sm:$0xf]
        %v560 = vld [vmem:[%s1 + $0x37c] sm:$0xf]
        %v561 = vld [vmem:[%s1 + $0x380] sm:$0xf]
        %v562 = vld [vmem:[%s1 + $0x384] sm:$0xf]
        %v563 = vld [vmem:[%s1 + $0x388] sm:$0xf]
        %v564 = vld [vmem:[%s1 + $0x38c] sm:$0xf]
        %v565 = vld [vmem:[%s1 + $0x390] sm:$0xf]
        %v566 = vld [vmem:[%s1 + $0x394] sm:$0xf]
        %v567 = vld [vmem:[%s1 + $0x398] sm:$0xf]
        %v568 = vld [vmem:[%s1 + $0x39c] sm:$0xf]
        %v569 = vld [vmem:[%s1 + $0x3a0] sm:$0xf]
        %v570 = vld [vmem:[%s1 + $0x3a4] sm:$0xf]
        %v571 = vld [vmem:[%s1 + $0x3a8] sm:$0xf]
        %v572 = vld [vmem:[%s1 + $0x3ac] sm:$0xf]
        %v573 = vld [vmem:[%s1 + $0x3b0] sm:$0xf]
        %v574 = vld [vmem:[%s1 + $0x3b4] sm:$0xf]
        %v575 = vld [vmem:[%s1 + $0x3b8] sm:$0xf]
        %v576 = vld [vmem:[%s1 + $0x3bc] sm:$0xf]
        %v577 = vld [vmem:[%s1 + $0x3c0] sm:$0xf]
        %v578 = vld [vmem:[%s1 + $0x3c4] sm:$0xf]
        %v579 = vld [vmem:[%s1 + $0x3c8] sm:$0xf]
        %v580 = vld [vmem:[%s1 + $0x3cc] sm:$0xf]
        %v581 = vld [vmem:[%s1 + $0x3d0] sm:$0xf]
        %v582 = vld [vmem:[%s1 + $0x3d4] sm:$0xf]
        %v583 = vld [vmem:[%s1 + $0x3d8] sm:$0xf]
        %v584 = vld [vmem:[%s1 + $0x3dc] sm:$0xf]
        %v585 = vld [vmem:[%s1 + $0x3e0] sm:$0xf]
        %v586 = vld [vmem:[%s1 + $0x3e4] sm:$0xf]
        %v587 = vld [vmem:[%s1 + $0x3e8] sm:$0xf]
        %v588 = vld [vmem:[%s1 + $0x3ec] sm:$0xf]
        %v589 = vld [vmem:[%s1 + $0x3f0] sm:$0xf]
        %v590 = vld [vmem:[%s1 + $0x3f4] sm:$0xf]
        %v591 = vld [vmem:[%s1 + $0x3f8] sm:$0xf]
        %v592 = vld [vmem:[%s1 + $0x3fc] sm:$0xf]
        %v593 = vld [vmem:[%s1 + $0x400] sm:$0xf]
        %v594 = vld [vmem:[%s1 + $0x404] sm:$0xf]
        %v595 = vld [vmem:[%s1 + $0x408] sm:$0xf]
        %v596 = vld [vmem:[%s1 + $0x40c] sm:$0xf]
        %v597 = vld [vmem:[%s1 + $0x410] sm:$0xf]
        %v598 = vld [vmem:[%s1 + $0x414] sm:$0xf]
        %v599 = vld [vmem:[%s1 + $0x418] sm:$0xf]
        %v600 = vld [vmem:[%s1 + $0x41c] sm:$0xf]
        %v601 = vld [vmem:[%s1 + $0x420] sm:$0xf]
        %v602 = vld [vmem:[%s1 + $0x424] sm:$0xf]
        %v603 = vld [vmem:[%s1 + $0x428] sm:$0xf]
        %v604 = vld [vmem:[%s1 + $0x42c] sm:$0xf]
        %v605 = vld [vmem:[%s1 + $0x430] sm:$0xf]
        %v606 = vld [vmem:[%s1 + $0x434] sm:$0xf]
        %v607 = vld [vmem:[%s1 + $0x438] sm:$0xf]
        %v608 = vld [vmem:[%s1 + $0x43c] sm:$0xf]
        %v609 = vld [vmem:[%s1 + $0x440] sm:$0xf]
        %v610 = vld [vmem:[%s1 + $0x444] sm:$0xf]
        %v611 = vld [vmem:[%s1 + $0x448] sm:$0xf]
        %v612 = vld [vmem:[%s308] sm:$0xff]
        %v613 = vld [vmem:[%s308 + $0x8] sm:$0xff]
        %v614 = vld [vmem:[%s308 + $0x10] sm:$0xff]
        %v615 = vld [vmem:[%s308 + $0x18] sm:$0xff]
        %v616 = vld [vmem:[%s308 + $0x20] sm:$0xff]
        %v617 = vld [vmem:[%s308 + $0x28] sm:$0xff]
        %v618 = vld [vmem:[%s308 + $0x30] sm:$0xff]
        %v619 = vld [vmem:[%s308 + $0x38] sm:$0xff]
        %v620 = vld [vmem:[%s308 + $0x40] sm:$0xff]
        %v621 = vld [vmem:[%s308 + $0x48] sm:$0xff]
        %v622 = vld [vmem:[%s308 + $0x50] sm:$0xff]
        %v623 = vld [vmem:[%s308 + $0x58] sm:$0xff]
        %v624 = vld [vmem:[%s308 + $0x60] sm:$0xff]
        %v625 = vld [vmem:[%s308 + $0x68] sm:$0xff]
        %v626 = vld [vmem:[%s308 + $0x70] sm:$0xff]
        %v627 = vld [vmem:[%s308 + $0x78] sm:$0xff]
        %v628 = vld [vmem:[%s308 + $0x80] sm:$0xff]
        %v629 = vld [vmem:[%s308 + $0x88] sm:$0xff]
        %v648 = vunpack.c.l.b16 %v612
        %v649 = vunpack.c.h.b16 %v612
        %v650 = vunpack.c.l.b16 %v613
        %v651 = vunpack.c.h.b16 %v613
        %v652 = vunpack.c.l.b16 %v614
        %v653 = vunpack.c.h.b16 %v614
        %v654 = vunpack.c.l.b16 %v615
        %v655 = vunpack.c.h.b16 %v615
        %v656 = vunpack.c.l.b16 %v616
        %v657 = vunpack.c.h.b16 %v616
        %v658 = vunpack.c.l.b16 %v617
        %v659 = vunpack.c.h.b16 %v617
        %v660 = vunpack.c.l.b16 %v618
        %v661 = vunpack.c.h.b16 %v618
        %v662 = vunpack.c.l.b16 %v619
        %v663 = vunpack.c.h.b16 %v619
        %v664 = vunpack.c.l.b16 %v620
        %v665 = vunpack.c.h.b16 %v620
        %v666 = vunpack.c.l.b16 %v621
        %v667 = vunpack.c.h.b16 %v621
        %v668 = vunpack.c.l.b16 %v622
        %v669 = vunpack.c.h.b16 %v622
        %v670 = vunpack.c.l.b16 %v623
        %v671 = vunpack.c.h.b16 %v623
        %v672 = vunpack.c.l.b16 %v624
        %v673 = vunpack.c.h.b16 %v624
        %v674 = vunpack.c.l.b16 %v625
        %v675 = vunpack.c.h.b16 %v625
        %v676 = vunpack.c.l.b16 %v626
        %v677 = vunpack.c.h.b16 %v626
        %v678 = vunpack.c.l.b16 %v627
        %v679 = vunpack.c.h.b16 %v627
        %v680 = vunpack.c.l.b16 %v628
        %v681 = vunpack.c.h.b16 %v628
        %v682 = vunpack.c.l.b16 %v629
        %v683 = vunpack.c.h.b16 %v629
        %v684 = vpack.c.b16 %v666, %v648
        %v685 = vpack.c.b16 %v667, %v649
        %v686 = vpack.c.b16 %v668, %v650
        %v687 = vpack.c.b16 %v669, %v651
        %v688 = vpack.c.b16 %v670, %v652
        %v689 = vpack.c.b16 %v671, %v653
        %v690 = vpack.c.b16 %v672, %v654
        %v691 = vpack.c.b16 %v673, %v655
        %v692 = vpack.c.b16 %v674, %v656
        %v693 = vpack.c.b16 %v675, %v657
        %v694 = vpack.c.b16 %v676, %v658
        %v695 = vpack.c.b16 %v677, %v659
        %v696 = vpack.c.b16 %v678, %v660
        %v697 = vpack.c.b16 %v679, %v661
        %v698 = vpack.c.b16 %v680, %v662
        %v699 = vpack.c.b16 %v681, %v663
        %v700 = vpack.c.b16 %v682, %v664
        %v701 = vpack.c.b16 %v683, %v665
        %v994 = vunpack.c.l.b16 %v337
        %v995 = vunpack.c.l.b16 %v338
        %v996 = vunpack.c.l.b16 %v339
        %v997 = vunpack.c.l.b16 %v340
        %v998 = vunpack.c.l.b16 %v341
        %v999 = vunpack.c.l.b16 %v342
        %v1000 = vunpack.c.l.b16 %v343
        %v1001 = vunpack.c.l.b16 %v344
        %v1002 = vunpack.c.l.b16 %v345
        %v1003 = vunpack.c.l.b16 %v346
        %v1004 = vunpack.c.l.b16 %v347
        %v1005 = vunpack.c.l.b16 %v348
        %v1006 = vunpack.c.l.b16 %v349
        %v1007 = vunpack.c.l.b16 %v350
        %v1008 = vunpack.c.l.b16 %v351
        %v1009 = vunpack.c.l.b16 %v352
        %v1010 = vunpack.c.l.b16 %v353
        %v1011 = vunpack.c.l.b16 %v354
        %v1012 = vunpack.c.l.b16 %v355
        %v1013 = vunpack.c.l.b16 %v356
        %v1014 = vunpack.c.l.b16 %v357
        %v1015 = vunpack.c.l.b16 %v358
        %v1016 = vunpack.c.l.b16 %v359
        %v1017 = vunpack.c.l.b16 %v360
        %v1018 = vunpack.c.l.b16 %v361
        %v1019 = vunpack.c.l.b16 %v362
        %v1020 = vunpack.c.l.b16 %v363
        %v1021 = vunpack.c.l.b16 %v364
        %v1022 = vunpack.c.l.b16 %v365
        %v1023 = vunpack.c.l.b16 %v366
        %v1024 = vunpack.c.l.b16 %v367
        %v1025 = vunpack.c.l.b16 %v368
        %v1026 = vunpack.c.l.b16 %v369
        %v1027 = vunpack.c.l.b16 %v370
        %v1028 = vunpack.c.l.b16 %v371
        %v1029 = vunpack.c.l.b16 %v372
        %v1030 = vunpack.c.l.b16 %v373
        %v1031 = vunpack.c.l.b16 %v374
        %v1032 = vunpack.c.l.b16 %v375
        %v1033 = vunpack.c.l.b16 %v376
        %v1034 = vunpack.c.l.b16 %v377
        %v1035 = vunpack.c.l.b16 %v378
        %v1036 = vunpack.c.l.b16 %v379
        %v1037 = vunpack.c.l.b16 %v380
        %v1038 = vunpack.c.l.b16 %v381
        %v1039 = vunpack.c.l.b16 %v382
        %v1040 = vunpack.c.l.b16 %v383
        %v1041 = vunpack.c.l.b16 %v384
        %v1042 = vunpack.c.l.b16 %v385
        %v1043 = vunpack.c.l.b16 %v386
        %v1044 = vunpack.c.l.b16 %v387
        %v1045 = vunpack.c.l.b16 %v388
        %v1046 = vunpack.c.l.b16 %v389
        %v1047 = vunpack.c.l.b16 %v390
        %v1048 = vunpack.c.l.b16 %v391
        %v1049 = vunpack.c.l.b16 %v392
        %v1050 = vunpack.c.l.b16 %v393
        %v1051 = vunpack.c.l.b16 %v394
        %v1052 = vunpack.c.l.b16 %v395
        %v1053 = vunpack.c.l.b16 %v396
        %v1054 = vunpack.c.l.b16 %v397
        %v1055 = vunpack.c.l.b16 %v398
        %v1056 = vunpack.c.l.b16 %v399
        %v1057 = vunpack.c.l.b16 %v400
        %v1058 = vunpack.c.l.b16 %v401
        %v1059 = vunpack.c.l.b16 %v402
        %v1060 = vunpack.c.l.b16 %v403
        %v1061 = vunpack.c.l.b16 %v404
        %v1062 = vunpack.c.l.b16 %v405
        %v1063 = vunpack.c.l.b16 %v406
        %v1064 = vunpack.c.l.b16 %v407
        %v1065 = vunpack.c.l.b16 %v408
        %v1066 = vunpack.c.l.b16 %v409
        %v1067 = vunpack.c.l.b16 %v410
        %v1068 = vunpack.c.l.b16 %v411
        %v1069 = vunpack.c.l.b16 %v412
        %v1070 = vunpack.c.l.b16 %v413
        %v1071 = vunpack.c.l.b16 %v414
        %v1072 = vunpack.c.l.b16 %v415
        %v1073 = vunpack.c.l.b16 %v416
        %v1074 = vunpack.c.l.b16 %v417
        %v1075 = vunpack.c.l.b16 %v418
        %v1076 = vunpack.c.l.b16 %v419
        %v1077 = vunpack.c.l.b16 %v420
        %v1078 = vunpack.c.l.b16 %v421
        %v1079 = vunpack.c.l.b16 %v422
        %v1080 = vunpack.c.l.b16 %v423
        %v1081 = vunpack.c.l.b16 %v424
        %v1082 = vunpack.c.l.b16 %v425
        %v1083 = vunpack.c.l.b16 %v426
        %v1084 = vunpack.c.l.b16 %v427
        %v1085 = vunpack.c.l.b16 %v428
        %v1086 = vunpack.c.l.b16 %v429
        %v1087 = vunpack.c.l.b16 %v430
        %v1088 = vunpack.c.l.b16 %v431
        %v1089 = vunpack.c.l.b16 %v432
        %v1090 = vunpack.c.l.b16 %v433
        %v1091 = vunpack.c.l.b16 %v434
        %v1092 = vunpack.c.l.b16 %v435
        %v1093 = vunpack.c.l.b16 %v436
        %v1094 = vunpack.c.l.b16 %v437
        %v1095 = vunpack.c.l.b16 %v438
        %v1096 = vunpack.c.l.b16 %v439
        %v1097 = vunpack.c.l.b16 %v440
        %v1098 = vunpack.c.l.b16 %v441
        %v1099 = vunpack.c.l.b16 %v442
        %v1100 = vunpack.c.l.b16 %v443
        %v1101 = vunpack.c.l.b16 %v444
        %v1102 = vunpack.c.l.b16 %v445
        %v1103 = vunpack.c.l.b16 %v446
        %v1104 = vunpack.c.l.b16 %v447
        %v1105 = vunpack.c.l.b16 %v448
        %v1106 = vunpack.c.l.b16 %v449
        %v1107 = vunpack.c.l.b16 %v450
        %v1108 = vunpack.c.l.b16 %v451
        %v1109 = vunpack.c.l.b16 %v452
        %v1110 = vunpack.c.l.b16 %v453
        %v1111 = vunpack.c.l.b16 %v454
        %v1112 = vunpack.c.l.b16 %v455
        %v1113 = vunpack.c.l.b16 %v456
        %v1114 = vunpack.c.l.b16 %v457
        %v1115 = vunpack.c.l.b16 %v458
        %v1116 = vunpack.c.l.b16 %v459
        %v1117 = vunpack.c.l.b16 %v460
        %v1118 = vunpack.c.l.b16 %v461
        %v1119 = vunpack.c.l.b16 %v462
        %v1120 = vunpack.c.l.b16 %v463
        %v1121 = vunpack.c.l.b16 %v464
        %v1122 = vunpack.c.l.b16 %v465
        %v1123 = vunpack.c.l.b16 %v466
        %v1124 = vunpack.c.l.b16 %v467
        %v1125 = vunpack.c.l.b16 %v468
        %v1126 = vunpack.c.l.b16 %v469
        %v1127 = vunpack.c.l.b16 %v470
        %v1128 = vunpack.c.l.b16 %v471
        %v1129 = vunpack.c.l.b16 %v472
        %v1130 = vunpack.c.l.b16 %v473
        %v1131 = vunpack.c.l.b16 %v474
        %v1132 = vunpack.c.l.b16 %v475
        %v1133 = vunpack.c.l.b16 %v476
        %v1134 = vunpack.c.l.b16 %v477
        %v1135 = vunpack.c.l.b16 %v478
        %v1136 = vunpack.c.l.b16 %v479
        %v1137 = vunpack.c.l.b16 %v480
        %v1138 = vunpack.c.l.b16 %v481
        %v1139 = vunpack.c.l.b16 %v482
        %v1140 = vunpack.c.l.b16 %v483
        %v1141 = vunpack.c.l.b16 %v484
        %v1142 = vunpack.c.l.b16 %v485
        %v1143 = vunpack.c.l.b16 %v486
        %v1144 = vunpack.c.l.b16 %v487
        %v1145 = vunpack.c.l.b16 %v488
        %v1146 = vunpack.c.l.b16 %v489
        %v1147 = vunpack.c.l.b16 %v490
        %v1148 = vunpack.c.l.b16 %v491
        %v1149 = vunpack.c.l.b16 %v492
        %v1150 = vunpack.c.l.b16 %v493
        %v1151 = vunpack.c.l.b16 %v494
        %v1152 = vunpack.c.l.b16 %v495
        %v1153 = vunpack.c.l.b16 %v496
        %v1154 = vunpack.c.l.b16 %v497
        %v1155 = vunpack.c.l.b16 %v498
        %v1156 = vunpack.c.l.b16 %v499
        %v1157 = vunpack.c.l.b16 %v500
        %v1158 = vunpack.c.l.b16 %v501
        %v1159 = vunpack.c.l.b16 %v502
        %v1160 = vunpack.c.l.b16 %v503
        %v1161 = vunpack.c.l.b16 %v504
        %v1162 = vunpack.c.l.b16 %v505
        %v1163 = vunpack.c.l.b16 %v506
        %v1164 = vunpack.c.l.b16 %v507
        %v1165 = vunpack.c.l.b16 %v508
        %v1166 = vunpack.c.l.b16 %v509
        %v1167 = vunpack.c.l.b16 %v510
        %v1168 = vunpack.c.l.b16 %v511
        %v1169 = vunpack.c.l.b16 %v512
        %v1170 = vunpack.c.l.b16 %v513
        %v1171 = vunpack.c.l.b16 %v514
        %v1172 = vunpack.c.l.b16 %v515
        %v1173 = vunpack.c.l.b16 %v516
        %v1174 = vunpack.c.l.b16 %v517
        %v1175 = vunpack.c.l.b16 %v518
        %v1176 = vunpack.c.l.b16 %v519
        %v1177 = vunpack.c.l.b16 %v520
        %v1178 = vunpack.c.l.b16 %v521
        %v1179 = vunpack.c.l.b16 %v522
        %v1180 = vunpack.c.l.b16 %v523
        %v1181 = vunpack.c.l.b16 %v524
        %v1182 = vunpack.c.l.b16 %v525
        %v1183 = vunpack.c.l.b16 %v526
        %v1184 = vunpack.c.l.b16 %v527
        %v1185 = vunpack.c.l.b16 %v528
        %v1186 = vunpack.c.l.b16 %v529
        %v1187 = vunpack.c.l.b16 %v530
        %v1188 = vunpack.c.l.b16 %v531
        %v1189 = vunpack.c.l.b16 %v532
        %v1190 = vunpack.c.l.b16 %v533
        %v1191 = vunpack.c.l.b16 %v534
        %v1192 = vunpack.c.l.b16 %v535
        %v1193 = vunpack.c.l.b16 %v536
        %v1194 = vunpack.c.l.b16 %v537
        %v1195 = vunpack.c.l.b16 %v538
        %v1196 = vunpack.c.l.b16 %v539
        %v1197 = vunpack.c.l.b16 %v540
        %v1198 = vunpack.c.l.b16 %v541
        %v1199 = vunpack.c.l.b16 %v542
        %v1200 = vunpack.c.l.b16 %v543
        %v1201 = vunpack.c.l.b16 %v544
        %v1202 = vunpack.c.l.b16 %v545
        %v1203 = vunpack.c.l.b16 %v546
        %v1204 = vunpack.c.l.b16 %v547
        %v1205 = vunpack.c.l.b16 %v548
        %v1206 = vunpack.c.l.b16 %v549
        %v1207 = vunpack.c.l.b16 %v550
        %v1208 = vunpack.c.l.b16 %v551
        %v1209 = vunpack.c.l.b16 %v552
        %v1210 = vunpack.c.l.b16 %v553
        %v1211 = vunpack.c.l.b16 %v554
        %v1212 = vunpack.c.l.b16 %v555
        %v1213 = vunpack.c.l.b16 %v556
        %v1214 = vunpack.c.l.b16 %v557
        %v1215 = vunpack.c.l.b16 %v558
        %v1216 = vunpack.c.l.b16 %v559
        %v1217 = vunpack.c.l.b16 %v560
        %v1218 = vunpack.c.l.b16 %v561
        %v1219 = vunpack.c.l.b16 %v562
        %v1220 = vunpack.c.l.b16 %v563
        %v1221 = vunpack.c.l.b16 %v564
        %v1222 = vunpack.c.l.b16 %v565
        %v1223 = vunpack.c.l.b16 %v566
        %v1224 = vunpack.c.l.b16 %v567
        %v1225 = vunpack.c.l.b16 %v568
        %v1226 = vunpack.c.l.b16 %v569
        %v1227 = vunpack.c.l.b16 %v570
        %v1228 = vunpack.c.l.b16 %v571
        %v1229 = vunpack.c.l.b16 %v572
        %v1230 = vunpack.c.l.b16 %v573
        %v1231 = vunpack.c.l.b16 %v574
        %v1232 = vunpack.c.l.b16 %v575
        %v1233 = vunpack.c.l.b16 %v576
        %v1234 = vunpack.c.l.b16 %v577
        %v1235 = vunpack.c.l.b16 %v578
        %v1236 = vunpack.c.l.b16 %v579
        %v1237 = vunpack.c.l.b16 %v580
        %v1238 = vunpack.c.l.b16 %v581
        %v1239 = vunpack.c.l.b16 %v582
        %v1240 = vunpack.c.l.b16 %v583
        %v1241 = vunpack.c.l.b16 %v584
        %v1242 = vunpack.c.l.b16 %v585
        %v1243 = vunpack.c.l.b16 %v586
        %v1244 = vunpack.c.l.b16 %v587
        %v1245 = vunpack.c.l.b16 %v588
        %v1246 = vunpack.c.l.b16 %v589
        %v1247 = vunpack.c.l.b16 %v590
        %v1248 = vunpack.c.l.b16 %v591
        %v1249 = vunpack.c.l.b16 %v592
        %v1250 = vunpack.c.l.b16 %v593
        %v1251 = vunpack.c.l.b16 %v594
        %v1252 = vunpack.c.l.b16 %v595
        %v1253 = vunpack.c.l.b16 %v596
        %v1254 = vunpack.c.l.b16 %v597
        %v1255 = vunpack.c.l.b16 %v598
        %v1256 = vunpack.c.l.b16 %v599
        %v1257 = vunpack.c.l.b16 %v600
        %v1258 = vunpack.c.l.b16 %v601
        %v1259 = vunpack.c.l.b16 %v602
        %v1260 = vunpack.c.l.b16 %v603
        %v1261 = vunpack.c.l.b16 %v604
        %v1262 = vunpack.c.l.b16 %v605
        %v1263 = vunpack.c.l.b16 %v606
        %v1264 = vunpack.c.l.b16 %v607
        %v1265 = vunpack.c.l.b16 %v608
        %v1266 = vunpack.c.l.b16 %v609
        %v1267 = vunpack.c.l.b16 %v610
        %v1268 = vunpack.c.l.b16 %v611
        %v1269 = vpack.c.b16 %v995, %v994
        %v1270 = vpack.c.b16 %v997, %v996
        %v1271 = vpack.c.b16 %v999, %v998
        %v1272 = vpack.c.b16 %v1001, %v1000
        %v1273 = vpack.c.b16 %v1003, %v1002
        %v1274 = vpack.c.b16 %v1005, %v1004
        %v1275 = vpack.c.b16 %v1007, %v1006
        %v1276 = vpack.c.b16 %v1009, %v1008
        %v1277 = vpack.c.b16 %v1011, %v1010
        %v1278 = vpack.c.b16 %v1013, %v1012
        %v1279 = vpack.c.b16 %v1015, %v1014
        %v1280 = vpack.c.b16 %v1017, %v1016
        %v1281 = vpack.c.b16 %v1019, %v1018
        %v1282 = vpack.c.b16 %v1021, %v1020
        %v1283 = vpack.c.b16 %v1023, %v1022
        %v1284 = vpack.c.b16 %v1025, %v1024
        %v1285 = vpack.c.b16 %v1027, %v1026
        %v1286 = vpack.c.b16 %v1029, %v1028
        %v1287 = vpack.c.b16 %v1031, %v1030
        %v1288 = vpack.c.b16 %v1033, %v1032
        %v1289 = vpack.c.b16 %v1035, %v1034
        %v1290 = vpack.c.b16 %v1037, %v1036
        %v1291 = vpack.c.b16 %v1039, %v1038
        %v1292 = vpack.c.b16 %v1041, %v1040
        %v1293 = vpack.c.b16 %v1043, %v1042
        %v1294 = vpack.c.b16 %v1045, %v1044
        %v1295 = vpack.c.b16 %v1047, %v1046
        %v1296 = vpack.c.b16 %v1049, %v1048
        %v1297 = vpack.c.b16 %v1051, %v1050
        %v1298 = vpack.c.b16 %v1053, %v1052
        %v1299 = vpack.c.b16 %v1055, %v1054
        %v1300 = vpack.c.b16 %v1057, %v1056
        %v1301 = vpack.c.b16 %v1059, %v1058
        %v1302 = vpack.c.b16 %v1061, %v1060
        %v1303 = vpack.c.b16 %v1063, %v1062
        %v1304 = vpack.c.b16 %v1065, %v1064
        %v1305 = vpack.c.b16 %v1067, %v1066
        %v1306 = vpack.c.b16 %v1069, %v1068
        %v1307 = vpack.c.b16 %v1071, %v1070
        %v1308 = vpack.c.b16 %v1073, %v1072
        %v1309 = vpack.c.b16 %v1075, %v1074
        %v1310 = vpack.c.b16 %v1077, %v1076
        %v1311 = vpack.c.b16 %v1079, %v1078
        %v1312 = vpack.c.b16 %v1081, %v1080
        %v1313 = vpack.c.b16 %v1083, %v1082
        %v1314 = vpack.c.b16 %v1085, %v1084
        %v1315 = vpack.c.b16 %v1087, %v1086
        %v1316 = vpack.c.b16 %v1089, %v1088
        %v1317 = vpack.c.b16 %v1091, %v1090
        %v1318 = vpack.c.b16 %v1093, %v1092
        %v1319 = vpack.c.b16 %v1095, %v1094
        %v1320 = vpack.c.b16 %v1097, %v1096
        %v1321 = vpack.c.b16 %v1099, %v1098
        %v1322 = vpack.c.b16 %v1101, %v1100
        %v1323 = vpack.c.b16 %v1103, %v1102
        %v1324 = vpack.c.b16 %v1105, %v1104
        %v1325 = vpack.c.b16 %v1107, %v1106
        %v1326 = vpack.c.b16 %v1109, %v1108
        %v1327 = vpack.c.b16 %v1111, %v1110
        %v1328 = vpack.c.b16 %v1113, %v1112
        %v1329 = vpack.c.b16 %v1115, %v1114
        %v1330 = vpack.c.b16 %v1117, %v1116
        %v1331 = vpack.c.b16 %v1119, %v1118
        %v1332 = vpack.c.b16 %v1121, %v1120
        %v1333 = vpack.c.b16 %v1123, %v1122
        %v1334 = vpack.c.b16 %v1125, %v1124
        %v1335 = vpack.c.b16 %v1127, %v1126
        %v1336 = vpack.c.b16 %v1129, %v1128
        %v1337 = vpack.c.b16 %v1131, %v1130
        %v1338 = vpack.c.b16 %v1133, %v1132
        %v1339 = vpack.c.b16 %v1135, %v1134
        %v1340 = vpack.c.b16 %v1137, %v1136
        %v1341 = vpack.c.b16 %v1139, %v1138
        %v1342 = vpack.c.b16 %v1141, %v1140
        %v1343 = vpack.c.b16 %v1143, %v1142
        %v1344 = vpack.c.b16 %v1145, %v1144
        %v1345 = vpack.c.b16 %v1147, %v1146
        %v1346 = vpack.c.b16 %v1149, %v1148
        %v1347 = vpack.c.b16 %v1151, %v1150
        %v1348 = vpack.c.b16 %v1153, %v1152
        %v1349 = vpack.c.b16 %v1155, %v1154
        %v1350 = vpack.c.b16 %v1157, %v1156
        %v1351 = vpack.c.b16 %v1159, %v1158
        %v1352 = vpack.c.b16 %v1161, %v1160
        %v1353 = vpack.c.b16 %v1163, %v1162
        %v1354 = vpack.c.b16 %v1165, %v1164
        %v1355 = vpack.c.b16 %v1167, %v1166
        %v1356 = vpack.c.b16 %v1169, %v1168
        %v1357 = vpack.c.b16 %v1171, %v1170
        %v1358 = vpack.c.b16 %v1173, %v1172
        %v1359 = vpack.c.b16 %v1175, %v1174
        %v1360 = vpack.c.b16 %v1177, %v1176
        %v1361 = vpack.c.b16 %v1179, %v1178
        %v1362 = vpack.c.b16 %v1181, %v1180
        %v1363 = vpack.c.b16 %v1183, %v1182
        %v1364 = vpack.c.b16 %v1185, %v1184
        %v1365 = vpack.c.b16 %v1187, %v1186
        %v1366 = vpack.c.b16 %v1189, %v1188
        %v1367 = vpack.c.b16 %v1191, %v1190
        %v1368 = vpack.c.b16 %v1193, %v1192
        %v1369 = vpack.c.b16 %v1195, %v1194
        %v1370 = vpack.c.b16 %v1197, %v1196
        %v1371 = vpack.c.b16 %v1199, %v1198
        %v1372 = vpack.c.b16 %v1201, %v1200
        %v1373 = vpack.c.b16 %v1203, %v1202
        %v1374 = vpack.c.b16 %v1205, %v1204
        %v1375 = vpack.c.b16 %v1207, %v1206
        %v1376 = vpack.c.b16 %v1209, %v1208
        %v1377 = vpack.c.b16 %v1211, %v1210
        %v1378 = vpack.c.b16 %v1213, %v1212
        %v1379 = vpack.c.b16 %v1215, %v1214
        %v1380 = vpack.c.b16 %v1217, %v1216
        %v1381 = vpack.c.b16 %v1219, %v1218
        %v1382 = vpack.c.b16 %v1221, %v1220
        %v1383 = vpack.c.b16 %v1223, %v1222
        %v1384 = vpack.c.b16 %v1225, %v1224
        %v1385 = vpack.c.b16 %v1227, %v1226
        %v1386 = vpack.c.b16 %v1229, %v1228
        %v1387 = vpack.c.b16 %v1231, %v1230
        %v1388 = vpack.c.b16 %v1233, %v1232
        %v1389 = vpack.c.b16 %v1235, %v1234
        %v1390 = vpack.c.b16 %v1237, %v1236
        %v1391 = vpack.c.b16 %v1239, %v1238
        %v1392 = vpack.c.b16 %v1241, %v1240
        %v1393 = vpack.c.b16 %v1243, %v1242
        %v1394 = vpack.c.b16 %v1245, %v1244
        %v1395 = vpack.c.b16 %v1247, %v1246
        %v1396 = vpack.c.b16 %v1249, %v1248
        %v1397 = vpack.c.b16 %v1251, %v1250
        %v1398 = vpack.c.b16 %v1253, %v1252
        %v1399 = vpack.c.b16 %v1255, %v1254
        %v1400 = vpack.c.b16 %v1257, %v1256
        %v1401 = vpack.c.b16 %v1259, %v1258
        %v1402 = vpack.c.b16 %v1261, %v1260
        %v1403 = vpack.c.b16 %v1263, %v1262
        %v1404 = vpack.c.b16 %v1265, %v1264
        %v1405 = vpack.c.b16 %v1267, %v1266
        %v1406 = vpack.c.b16 %v1268, %v1268
        %vm1544 = vcmask 195584
        %v1546 = vsel %vm1544, %v701, 0
        %vm1548 = vcmask 1043456
        %v1550 = vsel %vm1548, %v1406, 0
        %1552 = vmatprep.subr.bf16.mxu0 0
        %1553 = vmatpush1.bf16.msra.mxu0 %v1269
        %1554 = vmatprep.subr.bf16.mxu0 0
        %1555 = vmatpush1.bf16.msra.mxu0 %v1270
        %1556 = vmatprep.subr.bf16.mxu0 0
        %1557 = vmatpush1.bf16.msra.mxu0 %v1271
        %1558 = vmatprep.subr.bf16.mxu0 0
        %1559 = vmatpush1.bf16.msra.mxu0 %v1272
        %1560 = vmatprep.subr.bf16.mxu0 0
        %1561 = vmatpush1.bf16.msra.mxu0 %v1273
        %1562 = vmatprep.subr.bf16.mxu0 0
        %1563 = vmatpush1.bf16.msra.mxu0 %v1274
        %1564 = vmatprep.subr.bf16.mxu0 0
        %1565 = vmatpush1.bf16.msra.mxu0 %v1275
        %1566 = vmatprep.subr.bf16.mxu0 0
        %1567 = vmatpush1.bf16.msra.mxu0 %v1276
        %1568 = vmatprep.subr.bf16.mxu0 0
        %1569 = vmatpush1.bf16.msra.mxu0 %v1277
        %1570 = vmatprep.subr.bf16.mxu0 0
        %1571 = vmatpush1.bf16.msra.mxu0 %v1278
        %1572 = vmatprep.subr.bf16.mxu0 0
        %1573 = vmatpush1.bf16.msra.mxu0 %v1279
        %1574 = vmatprep.subr.bf16.mxu0 0
        %1575 = vmatpush1.bf16.msra.mxu0 %v1280
        %1576 = vmatprep.subr.bf16.mxu0 0
        %1577 = vmatpush1.bf16.msra.mxu0 %v1281
        %1578 = vmatprep.subr.bf16.mxu0 0
        %1579 = vmatpush1.bf16.msra.mxu0 %v1282
        %1580 = vmatprep.subr.bf16.mxu0 0
        %1581 = vmatpush1.bf16.msra.mxu0 %v1283
        %1582 = vmatprep.subr.bf16.mxu0 0
        %1583 = vmatpush1.bf16.msra.mxu0 %v1284
        %1584 = vmatprep.mubr.bf16.mxu0 %v685
        %1585 = vmatmul.mubr.bf16.gmra.mrb[0].mxu0 %v684
        %v1586 = vpop.f32.mrb[0].mxu0
        %v1587 = vadd.f32 0.0, %v1586
        %v1588 = vpop.f32.mrb[0].mxu0
        %v1589 = vpop.f32.mrb[0].mxu0
        %v1590 = vadd.f32 0.0, %v1589
        %v1591 = vpop.f32.mrb[0].mxu0
        %1592 = vdwg.mxu0
        %1593 = vmatprep.subr.bf16.mxu0 0
        %1594 = vmatpush1.bf16.msra.mxu0 %v1285
        %1595 = vmatprep.subr.bf16.mxu0 0
        %1596 = vmatpush1.bf16.msra.mxu0 %v1286
        %1597 = vmatprep.subr.bf16.mxu0 0
        %1598 = vmatpush1.bf16.msra.mxu0 %v1287
        %1599 = vmatprep.subr.bf16.mxu0 0
        %1600 = vmatpush1.bf16.msra.mxu0 %v1288
        %1601 = vmatprep.subr.bf16.mxu0 0
        %1602 = vmatpush1.bf16.msra.mxu0 %v1289
        %1603 = vmatprep.subr.bf16.mxu0 0
        %1604 = vmatpush1.bf16.msra.mxu0 %v1290
        %1605 = vmatprep.subr.bf16.mxu0 0
        %1606 = vmatpush1.bf16.msra.mxu0 %v1291
        %1607 = vmatprep.subr.bf16.mxu0 0
        %1608 = vmatpush1.bf16.msra.mxu0 %v1292
        %1609 = vmatprep.subr.bf16.mxu0 0
        %1610 = vmatpush1.bf16.msra.mxu0 %v1293
        %1611 = vmatprep.subr.bf16.mxu0 0
        %1612 = vmatpush1.bf16.msra.mxu0 %v1294
        %1613 = vmatprep.subr.bf16.mxu0 0
        %1614 = vmatpush1.bf16.msra.mxu0 %v1295
        %1615 = vmatprep.subr.bf16.mxu0 0
        %1616 = vmatpush1.bf16.msra.mxu0 %v1296
        %1617 = vmatprep.subr.bf16.mxu0 0
        %1618 = vmatpush1.bf16.msra.mxu0 %v1297
        %1619 = vmatprep.subr.bf16.mxu0 0
        %1620 = vmatpush1.bf16.msra.mxu0 %v1298
        %1621 = vmatprep.subr.bf16.mxu0 0
        %1622 = vmatpush1.bf16.msra.mxu0 %v1299
        %1623 = vmatprep.subr.bf16.mxu0 0
        %1624 = vmatpush1.bf16.msra.mxu0 %v1300
        %1625 = vmatprep.mubr.bf16.mxu0 %v687
        %1626 = vmatmul.mubr.bf16.gmra.mrb[0].mxu0 %v686
        %v1627 = vpop.f32.mrb[0].mxu0
        %v1628 = vadd.f32 %v1587, %v1627
        %v1629 = vpop.f32.mrb[0].mxu0
        %v1630 = vpop.f32.mrb[0].mxu0
        %v1631 = vadd.f32 %v1590, %v1630
        %v1632 = vpop.f32.mrb[0].mxu0
        %1633 = vdwg.mxu0
        %1634 = vmatprep.subr.bf16.mxu0 0
        %1635 = vmatpush1.bf16.msra.mxu0 %v1301
        %1636 = vmatprep.subr.bf16.mxu0 0
        %1637 = vmatpush1.bf16.msra.mxu0 %v1302
        %1638 = vmatprep.subr.bf16.mxu0 0
        %1639 = vmatpush1.bf16.msra.mxu0 %v1303
        %1640 = vmatprep.subr.bf16.mxu0 0
        %1641 = vmatpush1.bf16.msra.mxu0 %v1304
        %1642 = vmatprep.subr.bf16.mxu0 0
        %1643 = vmatpush1.bf16.msra.mxu0 %v1305
        %1644 = vmatprep.subr.bf16.mxu0 0
        %1645 = vmatpush1.bf16.msra.mxu0 %v1306
        %1646 = vmatprep.subr.bf16.mxu0 0
        %1647 = vmatpush1.bf16.msra.mxu0 %v1307
        %1648 = vmatprep.subr.bf16.mxu0 0
        %1649 = vmatpush1.bf16.msra.mxu0 %v1308
        %1650 = vmatprep.subr.bf16.mxu0 0
        %1651 = vmatpush1.bf16.msra.mxu0 %v1309
        %1652 = vmatprep.subr.bf16.mxu0 0
        %1653 = vmatpush1.bf16.msra.mxu0 %v1310
        %1654 = vmatprep.subr.bf16.mxu0 0
        %1655 = vmatpush1.bf16.msra.mxu0 %v1311
        %1656 = vmatprep.subr.bf16.mxu0 0
        %1657 = vmatpush1.bf16.msra.mxu0 %v1312
        %1658 = vmatprep.subr.bf16.mxu0 0
        %1659 = vmatpush1.bf16.msra.mxu0 %v1313
        %1660 = vmatprep.subr.bf16.mxu0 0
        %1661 = vmatpush1.bf16.msra.mxu0 %v1314
        %1662 = vmatprep.subr.bf16.mxu0 0
        %1663 = vmatpush1.bf16.msra.mxu0 %v1315
        %1664 = vmatprep.subr.bf16.mxu0 0
        %1665 = vmatpush1.bf16.msra.mxu0 %v1316
        %1666 = vmatprep.mubr.bf16.mxu0 %v689
        %1667 = vmatmul.mubr.bf16.gmra.mrb[0].mxu0 %v688
        %v1668 = vpop.f32.mrb[0].mxu0
        %v1669 = vadd.f32 %v1628, %v1668
        %v1670 = vpop.f32.mrb[0].mxu0
        %v1671 = vpop.f32.mrb[0].mxu0
        %v1672 = vadd.f32 %v1631, %v1671
        %v1673 = vpop.f32.mrb[0].mxu0
        %1674 = vdwg.mxu0
        %1675 = vmatprep.subr.bf16.mxu0 0
        %1676 = vmatpush1.bf16.msra.mxu0 %v1317
        %1677 = vmatprep.subr.bf16.mxu0 0
        %1678 = vmatpush1.bf16.msra.mxu0 %v1318
        %1679 = vmatprep.subr.bf16.mxu0 0
        %1680 = vmatpush1.bf16.msra.mxu0 %v1319
        %1681 = vmatprep.subr.bf16.mxu0 0
        %1682 = vmatpush1.bf16.msra.mxu0 %v1320
        %1683 = vmatprep.subr.bf16.mxu0 0
        %1684 = vmatpush1.bf16.msra.mxu0 %v1321
        %1685 = vmatprep.subr.bf16.mxu0 0
        %1686 = vmatpush1.bf16.msra.mxu0 %v1322
        %1687 = vmatprep.subr.bf16.mxu0 0
        %1688 = vmatpush1.bf16.msra.mxu0 %v1323
        %1689 = vmatprep.subr.bf16.mxu0 0
        %1690 = vmatpush1.bf16.msra.mxu0 %v1324
        %1691 = vmatprep.subr.bf16.mxu0 0
        %1692 = vmatpush1.bf16.msra.mxu0 %v1325
        %1693 = vmatprep.subr.bf16.mxu0 0
        %1694 = vmatpush1.bf16.msra.mxu0 %v1326
        %1695 = vmatprep.subr.bf16.mxu0 0
        %1696 = vmatpush1.bf16.msra.mxu0 %v1327
        %1697 = vmatprep.subr.bf16.mxu0 0
        %1698 = vmatpush1.bf16.msra.mxu0 %v1328
        %1699 = vmatprep.subr.bf16.mxu0 0
        %1700 = vmatpush1.bf16.msra.mxu0 %v1329
        %1701 = vmatprep.subr.bf16.mxu0 0
        %1702 = vmatpush1.bf16.msra.mxu0 %v1330
        %1703 = vmatprep.subr.bf16.mxu0 0
        %1704 = vmatpush1.bf16.msra.mxu0 %v1331
        %1705 = vmatprep.subr.bf16.mxu0 0
        %1706 = vmatpush1.bf16.msra.mxu0 %v1332
        %1707 = vmatprep.mubr.bf16.mxu0 %v691
        %1708 = vmatmul.mubr.bf16.gmra.mrb[0].mxu0 %v690
        %v1709 = vpop.f32.mrb[0].mxu0
        %v1710 = vadd.f32 %v1669, %v1709
        %v1711 = vpop.f32.mrb[0].mxu0
        %v1712 = vpop.f32.mrb[0].mxu0
        %v1713 = vadd.f32 %v1672, %v1712
        %v1714 = vpop.f32.mrb[0].mxu0
        %1715 = vdwg.mxu0
        %1716 = vmatprep.subr.bf16.mxu0 0
        %1717 = vmatpush1.bf16.msra.mxu0 %v1333
        %1718 = vmatprep.subr.bf16.mxu0 0
        %1719 = vmatpush1.bf16.msra.mxu0 %v1334
        %1720 = vmatprep.subr.bf16.mxu0 0
        %1721 = vmatpush1.bf16.msra.mxu0 %v1335
        %1722 = vmatprep.subr.bf16.mxu0 0
        %1723 = vmatpush1.bf16.msra.mxu0 %v1336
        %1724 = vmatprep.subr.bf16.mxu0 0
        %1725 = vmatpush1.bf16.msra.mxu0 %v1337
        %1726 = vmatprep.subr.bf16.mxu0 0
        %1727 = vmatpush1.bf16.msra.mxu0 %v1338
        %1728 = vmatprep.subr.bf16.mxu0 0
        %1729 = vmatpush1.bf16.msra.mxu0 %v1339
        %1730 = vmatprep.subr.bf16.mxu0 0
        %1731 = vmatpush1.bf16.msra.mxu0 %v1340
        %1732 = vmatprep.subr.bf16.mxu0 0
        %1733 = vmatpush1.bf16.msra.mxu0 %v1341
        %1734 = vmatprep.subr.bf16.mxu0 0
        %1735 = vmatpush1.bf16.msra.mxu0 %v1342
        %1736 = vmatprep.subr.bf16.mxu0 0
        %1737 = vmatpush1.bf16.msra.mxu0 %v1343
        %1738 = vmatprep.subr.bf16.mxu0 0
        %1739 = vmatpush1.bf16.msra.mxu0 %v1344
        %1740 = vmatprep.subr.bf16.mxu0 0
        %1741 = vmatpush1.bf16.msra.mxu0 %v1345
        %1742 = vmatprep.subr.bf16.mxu0 0
        %1743 = vmatpush1.bf16.msra.mxu0 %v1346
        %1744 = vmatprep.subr.bf16.mxu0 0
        %1745 = vmatpush1.bf16.msra.mxu0 %v1347
        %1746 = vmatprep.subr.bf16.mxu0 0
        %1747 = vmatpush1.bf16.msra.mxu0 %v1348
        %1748 = vmatprep.mubr.bf16.mxu0 %v693
        %1749 = vmatmul.mubr.bf16.gmra.mrb[0].mxu0 %v692
        %v1750 = vpop.f32.mrb[0].mxu0
        %v1751 = vadd.f32 %v1710, %v1750
        %v1752 = vpop.f32.mrb[0].mxu0
        %v1753 = vpop.f32.mrb[0].mxu0
        %v1754 = vadd.f32 %v1713, %v1753
        %v1755 = vpop.f32.mrb[0].mxu0
        %1756 = vdwg.mxu0
        %1757 = vmatprep.subr.bf16.mxu0 0
        %1758 = vmatpush1.bf16.msra.mxu0 %v1349
        %1759 = vmatprep.subr.bf16.mxu0 0
        %1760 = vmatpush1.bf16.msra.mxu0 %v1350
        %1761 = vmatprep.subr.bf16.mxu0 0
        %1762 = vmatpush1.bf16.msra.mxu0 %v1351
        %1763 = vmatprep.subr.bf16.mxu0 0
        %1764 = vmatpush1.bf16.msra.mxu0 %v1352
        %1765 = vmatprep.subr.bf16.mxu0 0
        %1766 = vmatpush1.bf16.msra.mxu0 %v1353
        %1767 = vmatprep.subr.bf16.mxu0 0
        %1768 = vmatpush1.bf16.msra.mxu0 %v1354
        %1769 = vmatprep.subr.bf16.mxu0 0
        %1770 = vmatpush1.bf16.msra.mxu0 %v1355
        %1771 = vmatprep.subr.bf16.mxu0 0
        %1772 = vmatpush1.bf16.msra.mxu0 %v1356
        %1773 = vmatprep.subr.bf16.mxu0 0
        %1774 = vmatpush1.bf16.msra.mxu0 %v1357
        %1775 = vmatprep.subr.bf16.mxu0 0
        %1776 = vmatpush1.bf16.msra.mxu0 %v1358
        %1777 = vmatprep.subr.bf16.mxu0 0
        %1778 = vmatpush1.bf16.msra.mxu0 %v1359
        %1779 = vmatprep.subr.bf16.mxu0 0
        %1780 = vmatpush1.bf16.msra.mxu0 %v1360
        %1781 = vmatprep.subr.bf16.mxu0 0
        %1782 = vmatpush1.bf16.msra.mxu0 %v1361
        %1783 = vmatprep.subr.bf16.mxu0 0
        %1784 = vmatpush1.bf16.msra.mxu0 %v1362
        %1785 = vmatprep.subr.bf16.mxu0 0
        %1786 = vmatpush1.bf16.msra.mxu0 %v1363
        %1787 = vmatprep.subr.bf16.mxu0 0
        %1788 = vmatpush1.bf16.msra.mxu0 %v1364
        %1789 = vmatprep.mubr.bf16.mxu0 %v695
        %1790 = vmatmul.mubr.bf16.gmra.mrb[0].mxu0 %v694
        %v1791 = vpop.f32.mrb[0].mxu0
        %v1792 = vadd.f32 %v1751, %v1791
        %v1793 = vpop.f32.mrb[0].mxu0
        %v1794 = vpop.f32.mrb[0].mxu0
        %v1795 = vadd.f32 %v1754, %v1794
        %v1796 = vpop.f32.mrb[0].mxu0
        %1797 = vdwg.mxu0
        %1798 = vmatprep.subr.bf16.mxu0 0
        %1799 = vmatpush1.bf16.msra.mxu0 %v1365
        %1800 = vmatprep.subr.bf16.mxu0 0
        %1801 = vmatpush1.bf16.msra.mxu0 %v1366
        %1802 = vmatprep.subr.bf16.mxu0 0
        %1803 = vmatpush1.bf16.msra.mxu0 %v1367
        %1804 = vmatprep.subr.bf16.mxu0 0
        %1805 = vmatpush1.bf16.msra.mxu0 %v1368
        %1806 = vmatprep.subr.bf16.mxu0 0
        %1807 = vmatpush1.bf16.msra.mxu0 %v1369
        %1808 = vmatprep.subr.bf16.mxu0 0
        %1809 = vmatpush1.bf16.msra.mxu0 %v1370
        %1810 = vmatprep.subr.bf16.mxu0 0
        %1811 = vmatpush1.bf16.msra.mxu0 %v1371
        %1812 = vmatprep.subr.bf16.mxu0 0
        %1813 = vmatpush1.bf16.msra.mxu0 %v1372
        %1814 = vmatprep.subr.bf16.mxu0 0
        %1815 = vmatpush1.bf16.msra.mxu0 %v1373
        %1816 = vmatprep.subr.bf16.mxu0 0
        %1817 = vmatpush1.bf16.msra.mxu0 %v1374
        %1818 = vmatprep.subr.bf16.mxu0 0
        %1819 = vmatpush1.bf16.msra.mxu0 %v1375
        %1820 = vmatprep.subr.bf16.mxu0 0
        %1821 = vmatpush1.bf16.msra.mxu0 %v1376
        %1822 = vmatprep.subr.bf16.mxu0 0
        %1823 = vmatpush1.bf16.msra.mxu0 %v1377
        %1824 = vmatprep.subr.bf16.mxu0 0
        %1825 = vmatpush1.bf16.msra.mxu0 %v1378
        %1826 = vmatprep.subr.bf16.mxu0 0
        %1827 = vmatpush1.bf16.msra.mxu0 %v1379
        %1828 = vmatprep.subr.bf16.mxu0 0
        %1829 = vmatpush1.bf16.msra.mxu0 %v1380
        %1830 = vmatprep.mubr.bf16.mxu0 %v697
        %1831 = vmatmul.mubr.bf16.gmra.mrb[0].mxu0 %v696
        %v1832 = vpop.f32.mrb[0].mxu0
        %v1833 = vadd.f32 %v1792, %v1832
        %v1834 = vpop.f32.mrb[0].mxu0
        %v1835 = vpop.f32.mrb[0].mxu0
        %v1836 = vadd.f32 %v1795, %v1835
        %v1837 = vpop.f32.mrb[0].mxu0
        %1838 = vdwg.mxu0
        %1839 = vmatprep.subr.bf16.mxu0 0
        %1840 = vmatpush1.bf16.msra.mxu0 %v1381
        %1841 = vmatprep.subr.bf16.mxu0 0
        %1842 = vmatpush1.bf16.msra.mxu0 %v1382
        %1843 = vmatprep.subr.bf16.mxu0 0
        %1844 = vmatpush1.bf16.msra.mxu0 %v1383
        %1845 = vmatprep.subr.bf16.mxu0 0
        %1846 = vmatpush1.bf16.msra.mxu0 %v1384
        %1847 = vmatprep.subr.bf16.mxu0 0
        %1848 = vmatpush1.bf16.msra.mxu0 %v1385
        %1849 = vmatprep.subr.bf16.mxu0 0
        %1850 = vmatpush1.bf16.msra.mxu0 %v1386
        %1851 = vmatprep.subr.bf16.mxu0 0
        %1852 = vmatpush1.bf16.msra.mxu0 %v1387
        %1853 = vmatprep.subr.bf16.mxu0 0
        %1854 = vmatpush1.bf16.msra.mxu0 %v1388
        %1855 = vmatprep.subr.bf16.mxu0 0
        %1856 = vmatpush1.bf16.msra.mxu0 %v1389
        %1857 = vmatprep.subr.bf16.mxu0 0
        %1858 = vmatpush1.bf16.msra.mxu0 %v1390
        %1859 = vmatprep.subr.bf16.mxu0 0
        %1860 = vmatpush1.bf16.msra.mxu0 %v1391
        %1861 = vmatprep.subr.bf16.mxu0 0
        %1862 = vmatpush1.bf16.msra.mxu0 %v1392
        %1863 = vmatprep.subr.bf16.mxu0 0
        %1864 = vmatpush1.bf16.msra.mxu0 %v1393
        %1865 = vmatprep.subr.bf16.mxu0 0
        %1866 = vmatpush1.bf16.msra.mxu0 %v1394
        %1867 = vmatprep.subr.bf16.mxu0 0
        %1868 = vmatpush1.bf16.msra.mxu0 %v1395
        %1869 = vmatprep.subr.bf16.mxu0 0
        %1870 = vmatpush1.bf16.msra.mxu0 %v1396
        %1871 = vmatprep.mubr.bf16.mxu0 %v699
        %1872 = vmatmul.mubr.bf16.gmra.mrb[0].mxu0 %v698
        %v1873 = vpop.f32.mrb[0].mxu0
        %v1874 = vadd.f32 %v1833, %v1873
        %v1875 = vpop.f32.mrb[0].mxu0
        %v1876 = vpop.f32.mrb[0].mxu0
        %v1877 = vadd.f32 %v1836, %v1876
        %v1878 = vpop.f32.mrb[0].mxu0
        %1879 = vdwg.mxu0
        %1880 = vmatprep.subr.bf16.mxu0 0
        %1881 = vmatpush1.bf16.msra.mxu0 %v1397
        %1882 = vmatprep.subr.bf16.mxu0 0
        %1883 = vmatpush1.bf16.msra.mxu0 %v1398
        %1884 = vmatprep.subr.bf16.mxu0 0
        %1885 = vmatpush1.bf16.msra.mxu0 %v1399
        %1886 = vmatprep.subr.bf16.mxu0 0
        %1887 = vmatpush1.bf16.msra.mxu0 %v1400
        %1888 = vmatprep.subr.bf16.mxu0 0
        %1889 = vmatpush1.bf16.msra.mxu0 %v1401
        %1890 = vmatprep.subr.bf16.mxu0 0
        %1891 = vmatpush1.bf16.msra.mxu0 %v1402
        %1892 = vmatprep.subr.bf16.mxu0 0
        %1893 = vmatpush1.bf16.msra.mxu0 %v1403
        %1894 = vmatprep.subr.bf16.mxu0 0
        %1895 = vmatpush1.bf16.msra.mxu0 %v1404
        %1896 = vmatprep.subr.bf16.mxu0 0
        %1897 = vmatpush1.bf16.msra.mxu0 %v1405
        %1898 = vmatprep.subr.bf16.mxu0 0
        %1899 = vmatpush1.bf16.msra.mxu0 %v1550
        %1900 = vmatprep.subr.bf16.mxu0 0
        %1901 = vmatpush1.bf16.msra.mxu0 0
        %1902 = vmatprep.subr.bf16.mxu0 0
        %1903 = vmatpush1.bf16.msra.mxu0 0
        %1904 = vmatprep.subr.bf16.mxu0 0
        %1905 = vmatpush1.bf16.msra.mxu0 0
        %1906 = vmatprep.subr.bf16.mxu0 0
        %1907 = vmatpush1.bf16.msra.mxu0 0
        %1908 = vmatprep.subr.bf16.mxu0 0
        %1909 = vmatpush1.bf16.msra.mxu0 0
        %1910 = vmatprep.subr.bf16.mxu0 0
        %1911 = vmatpush1.bf16.msra.mxu0 0
        %1912 = vmatprep.mubr.bf16.mxu0 %v1546
        %1913 = vmatmul.mubr.bf16.gmra.mrb[0].mxu0 %v700
        %v1914 = vpop.f32.mrb[0].mxu0
        %v1915 = vadd.f32 %v1874, %v1914
        %v1916 = vpop.f32.mrb[0].mxu0
        %v1917 = vpop.f32.mrb[0].mxu0
        %v1918 = vadd.f32 %v1877, %v1917
        %v1919 = vpop.f32.mrb[0].mxu0
        %1920 = vdwg.mxu0
        %s1921 = scalar_lea.vmem %s308, 144 [#allocation2]
        %v1922 = vld [vmem:[%s1921] sm:$0xff]
        %v1923 = vld [vmem:[%s1921 + $0x8] sm:$0xff]
        %v1924 = vld [vmem:[%s1921 + $0x10] sm:$0xff]
        %v1925 = vld [vmem:[%s1921 + $0x18] sm:$0xff]
        %v1926 = vld [vmem:[%s1921 + $0x20] sm:$0xff]
        %v1927 = vld [vmem:[%s1921 + $0x28] sm:$0xff]
        %v1928 = vld [vmem:[%s1921 + $0x30] sm:$0xff]
        %v1929 = vld [vmem:[%s1921 + $0x38] sm:$0xff]
        %v1930 = vld [vmem:[%s1921 + $0x40] sm:$0xff]
        %v1931 = vld [vmem:[%s1921 + $0x48] sm:$0xff]
        %v1932 = vld [vmem:[%s1921 + $0x50] sm:$0xff]
        %v1933 = vld [vmem:[%s1921 + $0x58] sm:$0xff]
        %v1934 = vld [vmem:[%s1921 + $0x60] sm:$0xff]
        %v1935 = vld [vmem:[%s1921 + $0x68] sm:$0xff]
        %v1936 = vld [vmem:[%s1921 + $0x70] sm:$0xff]
        %v1937 = vld [vmem:[%s1921 + $0x78] sm:$0xff]
        %v1938 = vld [vmem:[%s1921 + $0x80] sm:$0xff]
        %v1939 = vld [vmem:[%s1921 + $0x88] sm:$0xff]
        %v1958 = vunpack.c.l.b16 %v1922
        %v1959 = vunpack.c.h.b16 %v1922
        %v1960 = vunpack.c.l.b16 %v1923
        %v1961 = vunpack.c.h.b16 %v1923
        %v1962 = vunpack.c.l.b16 %v1924
        %v1963 = vunpack.c.h.b16 %v1924
        %v1964 = vunpack.c.l.b16 %v1925
        %v1965 = vunpack.c.h.b16 %v1925
        %v1966 = vunpack.c.l.b16 %v1926
        %v1967 = vunpack.c.h.b16 %v1926
        %v1968 = vunpack.c.l.b16 %v1927
        %v1969 = vunpack.c.h.b16 %v1927
        %v1970 = vunpack.c.l.b16 %v1928
        %v1971 = vunpack.c.h.b16 %v1928
        %v1972 = vunpack.c.l.b16 %v1929
        %v1973 = vunpack.c.h.b16 %v1929
        %v1974 = vunpack.c.l.b16 %v1930
        %v1975 = vunpack.c.h.b16 %v1930
        %v1976 = vunpack.c.l.b16 %v1931
        %v1977 = vunpack.c.h.b16 %v1931
        %v1978 = vunpack.c.l.b16 %v1932
        %v1979 = vunpack.c.h.b16 %v1932
        %v1980 = vunpack.c.l.b16 %v1933
        %v1981 = vunpack.c.h.b16 %v1933
        %v1982 = vunpack.c.l.b16 %v1934
        %v1983 = vunpack.c.h.b16 %v1934
        %v1984 = vunpack.c.l.b16 %v1935
        %v1985 = vunpack.c.h.b16 %v1935
        %v1986 = vunpack.c.l.b16 %v1936
        %v1987 = vunpack.c.h.b16 %v1936
        %v1988 = vunpack.c.l.b16 %v1937
        %v1989 = vunpack.c.h.b16 %v1937
        %v1990 = vunpack.c.l.b16 %v1938
        %v1991 = vunpack.c.h.b16 %v1938
        %v1992 = vunpack.c.l.b16 %v1939
        %v1993 = vunpack.c.h.b16 %v1939
        %v1994 = vpack.c.b16 %v1976, %v1958
        %v1995 = vpack.c.b16 %v1977, %v1959
        %v1996 = vpack.c.b16 %v1978, %v1960
        %v1997 = vpack.c.b16 %v1979, %v1961
        %v1998 = vpack.c.b16 %v1980, %v1962
        %v1999 = vpack.c.b16 %v1981, %v1963
        %v2000 = vpack.c.b16 %v1982, %v1964
        %v2001 = vpack.c.b16 %v1983, %v1965
        %v2002 = vpack.c.b16 %v1984, %v1966
        %v2003 = vpack.c.b16 %v1985, %v1967
        %v2004 = vpack.c.b16 %v1986, %v1968
        %v2005 = vpack.c.b16 %v1987, %v1969
        %v2006 = vpack.c.b16 %v1988, %v1970
        %v2007 = vpack.c.b16 %v1989, %v1971
        %v2008 = vpack.c.b16 %v1990, %v1972
        %v2009 = vpack.c.b16 %v1991, %v1973
        %v2010 = vpack.c.b16 %v1992, %v1974
        %v2011 = vpack.c.b16 %v1993, %v1975
        %v2030 = vsel %vm1544, %v2011, 0
        %2032 = vmatprep.subr.bf16.mxu0 0
        %2033 = vmatpush1.bf16.msra.mxu0 %v1269
        %2034 = vmatprep.subr.bf16.mxu0 0
        %2035 = vmatpush1.bf16.msra.mxu0 %v1270
        %2036 = vmatprep.subr.bf16.mxu0 0
        %2037 = vmatpush1.bf16.msra.mxu0 %v1271
        %2038 = vmatprep.subr.bf16.mxu0 0
        %2039 = vmatpush1.bf16.msra.mxu0 %v1272
        %2040 = vmatprep.subr.bf16.mxu0 0
        %2041 = vmatpush1.bf16.msra.mxu0 %v1273
        %2042 = vmatprep.subr.bf16.mxu0 0
        %2043 = vmatpush1.bf16.msra.mxu0 %v1274
        %2044 = vmatprep.subr.bf16.mxu0 0
        %2045 = vmatpush1.bf16.msra.mxu0 %v1275
        %2046 = vmatprep.subr.bf16.mxu0 0
        %2047 = vmatpush1.bf16.msra.mxu0 %v1276
        %2048 = vmatprep.subr.bf16.mxu0 0
        %2049 = vmatpush1.bf16.msra.mxu0 %v1277
        %2050 = vmatprep.subr.bf16.mxu0 0
        %2051 = vmatpush1.bf16.msra.mxu0 %v1278
        %2052 = vmatprep.subr.bf16.mxu0 0
        %2053 = vmatpush1.bf16.msra.mxu0 %v1279
        %2054 = vmatprep.subr.bf16.mxu0 0
        %2055 = vmatpush1.bf16.msra.mxu0 %v1280
        %2056 = vmatprep.subr.bf16.mxu0 0
        %2057 = vmatpush1.bf16.msra.mxu0 %v1281
        %2058 = vmatprep.subr.bf16.mxu0 0
        %2059 = vmatpush1.bf16.msra.mxu0 %v1282
        %2060 = vmatprep.subr.bf16.mxu0 0
        %2061 = vmatpush1.bf16.msra.mxu0 %v1283
        %2062 = vmatprep.subr.bf16.mxu0 0
        %2063 = vmatpush1.bf16.msra.mxu0 %v1284
        %2064 = vmatprep.mubr.bf16.mxu0 %v1995
        %2065 = vmatmul.mubr.bf16.gmra.mrb[0].mxu0 %v1994
        %v2066 = vpop.f32.mrb[0].mxu0
        %v2067 = vadd.f32 0.0, %v2066
        %v2068 = vpop.f32.mrb[0].mxu0
        %v2069 = vpop.f32.mrb[0].mxu0
        %v2070 = vadd.f32 0.0, %v2069
        %v2071 = vpop.f32.mrb[0].mxu0
        %2072 = vdwg.mxu0
        %2073 = vmatprep.subr.bf16.mxu0 0
        %2074 = vmatpush1.bf16.msra.mxu0 %v1285
        %2075 = vmatprep.subr.bf16.mxu0 0
        %2076 = vmatpush1.bf16.msra.mxu0 %v1286
        %2077 = vmatprep.subr.bf16.mxu0 0
        %2078 = vmatpush1.bf16.msra.mxu0 %v1287
        %2079 = vmatprep.subr.bf16.mxu0 0
        %2080 = vmatpush1.bf16.msra.mxu0 %v1288
        %2081 = vmatprep.subr.bf16.mxu0 0
        %2082 = vmatpush1.bf16.msra.mxu0 %v1289
        %2083 = vmatprep.subr.bf16.mxu0 0
        %2084 = vmatpush1.bf16.msra.mxu0 %v1290
        %2085 = vmatprep.subr.bf16.mxu0 0
        %2086 = vmatpush1.bf16.msra.mxu0 %v1291
        %2087 = vmatprep.subr.bf16.mxu0 0
        %2088 = vmatpush1.bf16.msra.mxu0 %v1292
        %2089 = vmatprep.subr.bf16.mxu0 0
        %2090 = vmatpush1.bf16.msra.mxu0 %v1293
        %2091 = vmatprep.subr.bf16.mxu0 0
        %2092 = vmatpush1.bf16.msra.mxu0 %v1294
        %2093 = vmatprep.subr.bf16.mxu0 0
        %2094 = vmatpush1.bf16.msra.mxu0 %v1295
        %2095 = vmatprep.subr.bf16.mxu0 0
        %2096 = vmatpush1.bf16.msra.mxu0 %v1296
        %2097 = vmatprep.subr.bf16.mxu0 0
        %2098 = vmatpush1.bf16.msra.mxu0 %v1297
        %2099 = vmatprep.subr.bf16.mxu0 0
        %2100 = vmatpush1.bf16.msra.mxu0 %v1298
        %2101 = vmatprep.subr.bf16.mxu0 0
        %2102 = vmatpush1.bf16.msra.mxu0 %v1299
        %2103 = vmatprep.subr.bf16.mxu0 0
        %2104 = vmatpush1.bf16.msra.mxu0 %v1300
        %2105 = vmatprep.mubr.bf16.mxu0 %v1997
        %2106 = vmatmul.mubr.bf16.gmra.mrb[0].mxu0 %v1996
        %v2107 = vpop.f32.mrb[0].mxu0
        %v2108 = vadd.f32 %v2067, %v2107
        %v2109 = vpop.f32.mrb[0].mxu0
        %v2110 = vpop.f32.mrb[0].mxu0
        %v2111 = vadd.f32 %v2070, %v2110
        %v2112 = vpop.f32.mrb[0].mxu0
        %2113 = vdwg.mxu0
        %2114 = vmatprep.subr.bf16.mxu0 0
        %2115 = vmatpush1.bf16.msra.mxu0 %v1301
        %2116 = vmatprep.subr.bf16.mxu0 0
        %2117 = vmatpush1.bf16.msra.mxu0 %v1302
        %2118 = vmatprep.subr.bf16.mxu0 0
        %2119 = vmatpush1.bf16.msra.mxu0 %v1303
        %2120 = vmatprep.subr.bf16.mxu0 0
        %2121 = vmatpush1.bf16.msra.mxu0 %v1304
        %2122 = vmatprep.subr.bf16.mxu0 0
        %2123 = vmatpush1.bf16.msra.mxu0 %v1305
        %2124 = vmatprep.subr.bf16.mxu0 0
        %2125 = vmatpush1.bf16.msra.mxu0 %v1306
        %2126 = vmatprep.subr.bf16.mxu0 0
        %2127 = vmatpush1.bf16.msra.mxu0 %v1307
        %2128 = vmatprep.subr.bf16.mxu0 0
        %2129 = vmatpush1.bf16.msra.mxu0 %v1308
        %2130 = vmatprep.subr.bf16.mxu0 0
        %2131 = vmatpush1.bf16.msra.mxu0 %v1309
        %2132 = vmatprep.subr.bf16.mxu0 0
        %2133 = vmatpush1.bf16.msra.mxu0 %v1310
        %2134 = vmatprep.subr.bf16.mxu0 0
        %2135 = vmatpush1.bf16.msra.mxu0 %v1311
        %2136 = vmatprep.subr.bf16.mxu0 0
        %2137 = vmatpush1.bf16.msra.mxu0 %v1312
        %2138 = vmatprep.subr.bf16.mxu0 0
        %2139 = vmatpush1.bf16.msra.mxu0 %v1313
        %2140 = vmatprep.subr.bf16.mxu0 0
        %2141 = vmatpush1.bf16.msra.mxu0 %v1314
        %2142 = vmatprep.subr.bf16.mxu0 0
        %2143 = vmatpush1.bf16.msra.mxu0 %v1315
        %2144 = vmatprep.subr.bf16.mxu0 0
        %2145 = vmatpush1.bf16.msra.mxu0 %v1316
        %2146 = vmatprep.mubr.bf16.mxu0 %v1999
        %2147 = vmatmul.mubr.bf16.gmra.mrb[0].mxu0 %v1998
        %v2148 = vpop.f32.mrb[0].mxu0
        %v2149 = vadd.f32 %v2108, %v2148
        %v2150 = vpop.f32.mrb[0].mxu0
        %v2151 = vpop.f32.mrb[0].mxu0
        %v2152 = vadd.f32 %v2111, %v2151
        %v2153 = vpop.f32.mrb[0].mxu0
        %2154 = vdwg.mxu0
        %2155 = vmatprep.subr.bf16.mxu0 0
        %2156 = vmatpush1.bf16.msra.mxu0 %v1317
        %2157 = vmatprep.subr.bf16.mxu0 0
        %2158 = vmatpush1.bf16.msra.mxu0 %v1318
        %2159 = vmatprep.subr.bf16.mxu0 0
        %2160 = vmatpush1.bf16.msra.mxu0 %v1319
        %2161 = vmatprep.subr.bf16.mxu0 0
        %2162 = vmatpush1.bf16.msra.mxu0 %v1320
        %2163 = vmatprep.subr.bf16.mxu0 0
        %2164 = vmatpush1.bf16.msra.mxu0 %v1321
        %2165 = vmatprep.subr.bf16.mxu0 0
        %2166 = vmatpush1.bf16.msra.mxu0 %v1322
        %2167 = vmatprep.subr.bf16.mxu0 0
        %2168 = vmatpush1.bf16.msra.mxu0 %v1323
        %2169 = vmatprep.subr.bf16.mxu0 0
        %2170 = vmatpush1.bf16.msra.mxu0 %v1324
        %2171 = vmatprep.subr.bf16.mxu0 0
        %2172 = vmatpush1.bf16.msra.mxu0 %v1325
        %2173 = vmatprep.subr.bf16.mxu0 0
        %2174 = vmatpush1.bf16.msra.mxu0 %v1326
        %2175 = vmatprep.subr.bf16.mxu0 0
        %2176 = vmatpush1.bf16.msra.mxu0 %v1327
        %2177 = vmatprep.subr.bf16.mxu0 0
        %2178 = vmatpush1.bf16.msra.mxu0 %v1328
        %2179 = vmatprep.subr.bf16.mxu0 0
        %2180 = vmatpush1.bf16.msra.mxu0 %v1329
        %2181 = vmatprep.subr.bf16.mxu0 0
        %2182 = vmatpush1.bf16.msra.mxu0 %v1330
        %2183 = vmatprep.subr.bf16.mxu0 0
        %2184 = vmatpush1.bf16.msra.mxu0 %v1331
        %2185 = vmatprep.subr.bf16.mxu0 0
        %2186 = vmatpush1.bf16.msra.mxu0 %v1332
        %2187 = vmatprep.mubr.bf16.mxu0 %v2001
        %2188 = vmatmul.mubr.bf16.gmra.mrb[0].mxu0 %v2000
        %v2189 = vpop.f32.mrb[0].mxu0
        %v2190 = vadd.f32 %v2149, %v2189
        %v2191 = vpop.f32.mrb[0].mxu0
        %v2192 = vpop.f32.mrb[0].mxu0
        %v2193 = vadd.f32 %v2152, %v2192
        %v2194 = vpop.f32.mrb[0].mxu0
        %2195 = vdwg.mxu0
        %2196 = vmatprep.subr.bf16.mxu0 0
        %2197 = vmatpush1.bf16.msra.mxu0 %v1333
        %2198 = vmatprep.subr.bf16.mxu0 0
        %2199 = vmatpush1.bf16.msra.mxu0 %v1334
        %2200 = vmatprep.subr.bf16.mxu0 0
        %2201 = vmatpush1.bf16.msra.mxu0 %v1335
        %2202 = vmatprep.subr.bf16.mxu0 0
        %2203 = vmatpush1.bf16.msra.mxu0 %v1336
        %2204 = vmatprep.subr.bf16.mxu0 0
        %2205 = vmatpush1.bf16.msra.mxu0 %v1337
        %2206 = vmatprep.subr.bf16.mxu0 0
        %2207 = vmatpush1.bf16.msra.mxu0 %v1338
        %2208 = vmatprep.subr.bf16.mxu0 0
        %2209 = vmatpush1.bf16.msra.mxu0 %v1339
        %2210 = vmatprep.subr.bf16.mxu0 0
        %2211 = vmatpush1.bf16.msra.mxu0 %v1340
        %2212 = vmatprep.subr.bf16.mxu0 0
        %2213 = vmatpush1.bf16.msra.mxu0 %v1341
        %2214 = vmatprep.subr.bf16.mxu0 0
        %2215 = vmatpush1.bf16.msra.mxu0 %v1342
        %2216 = vmatprep.subr.bf16.mxu0 0
        %2217 = vmatpush1.bf16.msra.mxu0 %v1343
        %2218 = vmatprep.subr.bf16.mxu0 0
        %2219 = vmatpush1.bf16.msra.mxu0 %v1344
        %2220 = vmatprep.subr.bf16.mxu0 0
        %2221 = vmatpush1.bf16.msra.mxu0 %v1345
        %2222 = vmatprep.subr.bf16.mxu0 0
        %2223 = vmatpush1.bf16.msra.mxu0 %v1346
        %2224 = vmatprep.subr.bf16.mxu0 0
        %2225 = vmatpush1.bf16.msra.mxu0 %v1347
        %2226 = vmatprep.subr.bf16.mxu0 0
        %2227 = vmatpush1.bf16.msra.mxu0 %v1348
        %2228 = vmatprep.mubr.bf16.mxu0 %v2003
        %2229 = vmatmul.mubr.bf16.gmra.mrb[0].mxu0 %v2002
        %v2230 = vpop.f32.mrb[0].mxu0
        %v2231 = vadd.f32 %v2190, %v2230
        %v2232 = vpop.f32.mrb[0].mxu0
        %v2233 = vpop.f32.mrb[0].mxu0
        %v2234 = vadd.f32 %v2193, %v2233
        %v2235 = vpop.f32.mrb[0].mxu0
        %2236 = vdwg.mxu0
        %2237 = vmatprep.subr.bf16.mxu0 0
        %2238 = vmatpush1.bf16.msra.mxu0 %v1349
        %2239 = vmatprep.subr.bf16.mxu0 0
        %2240 = vmatpush1.bf16.msra.mxu0 %v1350
        %2241 = vmatprep.subr.bf16.mxu0 0
        %2242 = vmatpush1.bf16.msra.mxu0 %v1351
        %2243 = vmatprep.subr.bf16.mxu0 0
        %2244 = vmatpush1.bf16.msra.mxu0 %v1352
        %2245 = vmatprep.subr.bf16.mxu0 0
        %2246 = vmatpush1.bf16.msra.mxu0 %v1353
        %2247 = vmatprep.subr.bf16.mxu0 0
        %2248 = vmatpush1.bf16.msra.mxu0 %v1354
        %2249 = vmatprep.subr.bf16.mxu0 0
        %2250 = vmatpush1.bf16.msra.mxu0 %v1355
        %2251 = vmatprep.subr.bf16.mxu0 0
        %2252 = vmatpush1.bf16.msra.mxu0 %v1356
        %2253 = vmatprep.subr.bf16.mxu0 0
        %2254 = vmatpush1.bf16.msra.mxu0 %v1357
        %2255 = vmatprep.subr.bf16.mxu0 0
        %2256 = vmatpush1.bf16.msra.mxu0 %v1358
        %2257 = vmatprep.subr.bf16.mxu0 0
        %2258 = vmatpush1.bf16.msra.mxu0 %v1359
        %2259 = vmatprep.subr.bf16.mxu0 0
        %2260 = vmatpush1.bf16.msra.mxu0 %v1360
        %2261 = vmatprep.subr.bf16.mxu0 0
        %2262 = vmatpush1.bf16.msra.mxu0 %v1361
        %2263 = vmatprep.subr.bf16.mxu0 0
        %2264 = vmatpush1.bf16.msra.mxu0 %v1362
        %2265 = vmatprep.subr.bf16.mxu0 0
        %2266 = vmatpush1.bf16.msra.mxu0 %v1363
        %2267 = vmatprep.subr.bf16.mxu0 0
        %2268 = vmatpush1.bf16.msra.mxu0 %v1364
        %2269 = vmatprep.mubr.bf16.mxu0 %v2005
        %2270 = vmatmul.mubr.bf16.gmra.mrb[0].mxu0 %v2004
        %v2271 = vpop.f32.mrb[0].mxu0
        %v2272 = vadd.f32 %v2231, %v2271
        %v2273 = vpop.f32.mrb[0].mxu0
        %v2274 = vpop.f32.mrb[0].mxu0
        %v2275 = vadd.f32 %v2234, %v2274
        %v2276 = vpop.f32.mrb[0].mxu0
        %2277 = vdwg.mxu0
        %2278 = vmatprep.subr.bf16.mxu0 0
        %2279 = vmatpush1.bf16.msra.mxu0 %v1365
        %2280 = vmatprep.subr.bf16.mxu0 0
        %2281 = vmatpush1.bf16.msra.mxu0 %v1366
        %2282 = vmatprep.subr.bf16.mxu0 0
        %2283 = vmatpush1.bf16.msra.mxu0 %v1367
        %2284 = vmatprep.subr.bf16.mxu0 0
        %2285 = vmatpush1.bf16.msra.mxu0 %v1368
        %2286 = vmatprep.subr.bf16.mxu0 0
        %2287 = vmatpush1.bf16.msra.mxu0 %v1369
        %2288 = vmatprep.subr.bf16.mxu0 0
        %2289 = vmatpush1.bf16.msra.mxu0 %v1370
        %2290 = vmatprep.subr.bf16.mxu0 0
        %2291 = vmatpush1.bf16.msra.mxu0 %v1371
        %2292 = vmatprep.subr.bf16.mxu0 0
        %2293 = vmatpush1.bf16.msra.mxu0 %v1372
        %2294 = vmatprep.subr.bf16.mxu0 0
        %2295 = vmatpush1.bf16.msra.mxu0 %v1373
        %2296 = vmatprep.subr.bf16.mxu0 0
        %2297 = vmatpush1.bf16.msra.mxu0 %v1374
        %2298 = vmatprep.subr.bf16.mxu0 0
        %2299 = vmatpush1.bf16.msra.mxu0 %v1375
        %2300 = vmatprep.subr.bf16.mxu0 0
        %2301 = vmatpush1.bf16.msra.mxu0 %v1376
        %2302 = vmatprep.subr.bf16.mxu0 0
        %2303 = vmatpush1.bf16.msra.mxu0 %v1377
        %2304 = vmatprep.subr.bf16.mxu0 0
        %2305 = vmatpush1.bf16.msra.mxu0 %v1378
        %2306 = vmatprep.subr.bf16.mxu0 0
        %2307 = vmatpush1.bf16.msra.mxu0 %v1379
        %2308 = vmatprep.subr.bf16.mxu0 0
        %2309 = vmatpush1.bf16.msra.mxu0 %v1380
        %2310 = vmatprep.mubr.bf16.mxu0 %v2007
        %2311 = vmatmul.mubr.bf16.gmra.mrb[0].mxu0 %v2006
        %v2312 = vpop.f32.mrb[0].mxu0
        %v2313 = vadd.f32 %v2272, %v2312
        %v2314 = vpop.f32.mrb[0].mxu0
        %v2315 = vpop.f32.mrb[0].mxu0
        %v2316 = vadd.f32 %v2275, %v2315
        %v2317 = vpop.f32.mrb[0].mxu0
        %2318 = vdwg.mxu0
        %2319 = vmatprep.subr.bf16.mxu0 0
        %2320 = vmatpush1.bf16.msra.mxu0 %v1381
        %2321 = vmatprep.subr.bf16.mxu0 0
        %2322 = vmatpush1.bf16.msra.mxu0 %v1382
        %2323 = vmatprep.subr.bf16.mxu0 0
        %2324 = vmatpush1.bf16.msra.mxu0 %v1383
        %2325 = vmatprep.subr.bf16.mxu0 0
        %2326 = vmatpush1.bf16.msra.mxu0 %v1384
        %2327 = vmatprep.subr.bf16.mxu0 0
        %2328 = vmatpush1.bf16.msra.mxu0 %v1385
        %2329 = vmatprep.subr.bf16.mxu0 0
        %2330 = vmatpush1.bf16.msra.mxu0 %v1386
        %2331 = vmatprep.subr.bf16.mxu0 0
        %2332 = vmatpush1.bf16.msra.mxu0 %v1387
        %2333 = vmatprep.subr.bf16.mxu0 0
        %2334 = vmatpush1.bf16.msra.mxu0 %v1388
        %2335 = vmatprep.subr.bf16.mxu0 0
        %2336 = vmatpush1.bf16.msra.mxu0 %v1389
        %2337 = vmatprep.subr.bf16.mxu0 0
        %2338 = vmatpush1.bf16.msra.mxu0 %v1390
        %2339 = vmatprep.subr.bf16.mxu0 0
        %2340 = vmatpush1.bf16.msra.mxu0 %v1391
        %2341 = vmatprep.subr.bf16.mxu0 0
        %2342 = vmatpush1.bf16.msra.mxu0 %v1392
        %2343 = vmatprep.subr.bf16.mxu0 0
        %2344 = vmatpush1.bf16.msra.mxu0 %v1393
        %2345 = vmatprep.subr.bf16.mxu0 0
        %2346 = vmatpush1.bf16.msra.mxu0 %v1394
        %2347 = vmatprep.subr.bf16.mxu0 0
        %2348 = vmatpush1.bf16.msra.mxu0 %v1395
        %2349 = vmatprep.subr.bf16.mxu0 0
        %2350 = vmatpush1.bf16.msra.mxu0 %v1396
        %2351 = vmatprep.mubr.bf16.mxu0 %v2009
        %2352 = vmatmul.mubr.bf16.gmra.mrb[0].mxu0 %v2008
        %v2353 = vpop.f32.mrb[0].mxu0
        %v2354 = vadd.f32 %v2313, %v2353
        %v2355 = vpop.f32.mrb[0].mxu0
        %v2356 = vpop.f32.mrb[0].mxu0
        %v2357 = vadd.f32 %v2316, %v2356
        %v2358 = vpop.f32.mrb[0].mxu0
        %2359 = vdwg.mxu0
        %2360 = vmatprep.subr.bf16.mxu0 0
        %2361 = vmatpush1.bf16.msra.mxu0 %v1397
        %2362 = vmatprep.subr.bf16.mxu0 0
        %2363 = vmatpush1.bf16.msra.mxu0 %v1398
        %2364 = vmatprep.subr.bf16.mxu0 0
        %2365 = vmatpush1.bf16.msra.mxu0 %v1399
        %2366 = vmatprep.subr.bf16.mxu0 0
        %2367 = vmatpush1.bf16.msra.mxu0 %v1400
        %2368 = vmatprep.subr.bf16.mxu0 0
        %2369 = vmatpush1.bf16.msra.mxu0 %v1401
        %2370 = vmatprep.subr.bf16.mxu0 0
        %2371 = vmatpush1.bf16.msra.mxu0 %v1402
        %2372 = vmatprep.subr.bf16.mxu0 0
        %2373 = vmatpush1.bf16.msra.mxu0 %v1403
        %2374 = vmatprep.subr.bf16.mxu0 0
        %2375 = vmatpush1.bf16.msra.mxu0 %v1404
        %2376 = vmatprep.subr.bf16.mxu0 0
        %2377 = vmatpush1.bf16.msra.mxu0 %v1405
        %2378 = vmatprep.subr.bf16.mxu0 0
        %2379 = vmatpush1.bf16.msra.mxu0 %v1550
        %2380 = vmatprep.subr.bf16.mxu0 0
        %2381 = vmatpush1.bf16.msra.mxu0 0
        %2382 = vmatprep.subr.bf16.mxu0 0
        %2383 = vmatpush1.bf16.msra.mxu0 0
        %2384 = vmatprep.subr.bf16.mxu0 0
        %2385 = vmatpush1.bf16.msra.mxu0 0
        %2386 = vmatprep.subr.bf16.mxu0 0
        %2387 = vmatpush1.bf16.msra.mxu0 0
        %2388 = vmatprep.subr.bf16.mxu0 0
        %2389 = vmatpush1.bf16.msra.mxu0 0
        %2390 = vmatprep.subr.bf16.mxu0 0
        %2391 = vmatpush1.bf16.msra.mxu0 0
        %2392 = vmatprep.mubr.bf16.mxu0 %v2030
        %2393 = vmatmul.mubr.bf16.gmra.mrb[0].mxu0 %v2010
        %v2394 = vpop.f32.mrb[0].mxu0
        %v2395 = vadd.f32 %v2354, %v2394
        %v2396 = vpop.f32.mrb[0].mxu0
        %v2397 = vpop.f32.mrb[0].mxu0
        %v2398 = vadd.f32 %v2357, %v2397
        %v2399 = vpop.f32.mrb[0].mxu0
        %2400 = vdwg.mxu0
        %v2401 = vmax.f32 %v1915, %v2395
        %v2402 = vmax.f32 %v1918, %v2398
        %s2403 = scalar_lea.vmem %s308, 288 [#allocation2]
        %v2404 = vld [vmem:[%s2403] sm:$0xff]
        %v2405 = vld [vmem:[%s2403 + $0x8] sm:$0xff]
        %v2406 = vld [vmem:[%s2403 + $0x10] sm:$0xff]
        %v2407 = vld [vmem:[%s2403 + $0x18] sm:$0xff]
        %v2408 = vld [vmem:[%s2403 + $0x20] sm:$0xff]
        %v2409 = vld [vmem:[%s2403 + $0x28] sm:$0xff]
        %v2410 = vld [vmem:[%s2403 + $0x30] sm:$0xff]
        %v2411 = vld [vmem:[%s2403 + $0x38] sm:$0xff]
        %v2412 = vld [vmem:[%s2403 + $0x40] sm:$0xff]
        %v2413 = vld [vmem:[%s2403 + $0x48] sm:$0xff]
        %v2414 = vld [vmem:[%s2403 + $0x50] sm:$0xff]
        %v2415 = vld [vmem:[%s2403 + $0x58] sm:$0xff]
        %v2416 = vld [vmem:[%s2403 + $0x60] sm:$0xff]
        %v2417 = vld [vmem:[%s2403 + $0x68] sm:$0xff]
        %v2418 = vld [vmem:[%s2403 + $0x70] sm:$0xff]
        %v2419 = vld [vmem:[%s2403 + $0x78] sm:$0xff]
        %v2420 = vld [vmem:[%s2403 + $0x80] sm:$0xff]
        %v2421 = vld [vmem:[%s2403 + $0x88] sm:$0xff]
        %v2440 = vunpack.c.l.b16 %v2404
        %v2441 = vunpack.c.h.b16 %v2404
        %v2442 = vunpack.c.l.b16 %v2405
        %v2443 = vunpack.c.h.b16 %v2405
        %v2444 = vunpack.c.l.b16 %v2406
        %v2445 = vunpack.c.h.b16 %v2406
        %v2446 = vunpack.c.l.b16 %v2407
        %v2447 = vunpack.c.h.b16 %v2407
        %v2448 = vunpack.c.l.b16 %v2408
        %v2449 = vunpack.c.h.b16 %v2408
        %v2450 = vunpack.c.l.b16 %v2409
        %v2451 = vunpack.c.h.b16 %v2409
        %v2452 = vunpack.c.l.b16 %v2410
        %v2453 = vunpack.c.h.b16 %v2410
        %v2454 = vunpack.c.l.b16 %v2411
        %v2455 = vunpack.c.h.b16 %v2411
        %v2456 = vunpack.c.l.b16 %v2412
        %v2457 = vunpack.c.h.b16 %v2412
        %v2458 = vunpack.c.l.b16 %v2413
        %v2459 = vunpack.c.h.b16 %v2413
        %v2460 = vunpack.c.l.b16 %v2414
        %v2461 = vunpack.c.h.b16 %v2414
        %v2462 = vunpack.c.l.b16 %v2415
        %v2463 = vunpack.c.h.b16 %v2415
        %v2464 = vunpack.c.l.b16 %v2416
        %v2465 = vunpack.c.h.b16 %v2416
        %v2466 = vunpack.c.l.b16 %v2417
        %v2467 = vunpack.c.h.b16 %v2417
        %v2468 = vunpack.c.l.b16 %v2418
        %v2469 = vunpack.c.h.b16 %v2418
        %v2470 = vunpack.c.l.b16 %v2419
        %v2471 = vunpack.c.h.b16 %v2419
        %v2472 = vunpack.c.l.b16 %v2420
        %v2473 = vunpack.c.h.b16 %v2420
        %v2474 = vunpack.c.l.b16 %v2421
        %v2475 = vunpack.c.h.b16 %v2421
        %v2476 = vpack.c.b16 %v2458, %v2440
        %v2477 = vpack.c.b16 %v2459, %v2441
        %v2478 = vpack.c.b16 %v2460, %v2442
        %v2479 = vpack.c.b16 %v2461, %v2443
        %v2480 = vpack.c.b16 %v2462, %v2444
        %v2481 = vpack.c.b16 %v2463, %v2445
        %v2482 = vpack.c.b16 %v2464, %v2446
        %v2483 = vpack.c.b16 %v2465, %v2447
        %v2484 = vpack.c.b16 %v2466, %v2448
        %v2485 = vpack.c.b16 %v2467, %v2449
        %v2486 = vpack.c.b16 %v2468, %v2450
        %v2487 = vpack.c.b16 %v2469, %v2451
        %v2488 = vpack.c.b16 %v2470, %v2452
        %v2489 = vpack.c.b16 %v2471, %v2453
        %v2490 = vpack.c.b16 %v2472, %v2454
        %v2491 = vpack.c.b16 %v2473, %v2455
        %v2492 = vpack.c.b16 %v2474, %v2456
        %v2493 = vpack.c.b16 %v2475, %v2457
        %v2512 = vsel %vm1544, %v2493, 0
        %2514 = vmatprep.subr.bf16.mxu0 0
        %2515 = vmatpush1.bf16.msra.mxu0 %v1269
        %2516 = vmatprep.subr.bf16.mxu0 0
        %2517 = vmatpush1.bf16.msra.mxu0 %v1270
        %2518 = vmatprep.subr.bf16.mxu0 0
        %2519 = vmatpush1.bf16.msra.mxu0 %v1271
        %2520 = vmatprep.subr.bf16.mxu0 0
        %2521 = vmatpush1.bf16.msra.mxu0 %v1272
        %2522 = vmatprep.subr.bf16.mxu0 0
        %2523 = vmatpush1.bf16.msra.mxu0 %v1273
        %2524 = vmatprep.subr.bf16.mxu0 0
        %2525 = vmatpush1.bf16.msra.mxu0 %v1274
        %2526 = vmatprep.subr.bf16.mxu0 0
        %2527 = vmatpush1.bf16.msra.mxu0 %v1275
        %2528 = vmatprep.subr.bf16.mxu0 0
        %2529 = vmatpush1.bf16.msra.mxu0 %v1276
        %2530 = vmatprep.subr.bf16.mxu0 0
        %2531 = vmatpush1.bf16.msra.mxu0 %v1277
        %2532 = vmatprep.subr.bf16.mxu0 0
        %2533 = vmatpush1.bf16.msra.mxu0 %v1278
        %2534 = vmatprep.subr.bf16.mxu0 0
        %2535 = vmatpush1.bf16.msra.mxu0 %v1279
        %2536 = vmatprep.subr.bf16.mxu0 0
        %2537 = vmatpush1.bf16.msra.mxu0 %v1280
        %2538 = vmatprep.subr.bf16.mxu0 0
        %2539 = vmatpush1.bf16.msra.mxu0 %v1281
        %2540 = vmatprep.subr.bf16.mxu0 0
        %2541 = vmatpush1.bf16.msra.mxu0 %v1282
        %2542 = vmatprep.subr.bf16.mxu0 0
        %2543 = vmatpush1.bf16.msra.mxu0 %v1283
        %2544 = vmatprep.subr.bf16.mxu0 0
        %2545 = vmatpush1.bf16.msra.mxu0 %v1284
        %2546 = vmatprep.mubr.bf16.mxu0 %v2477
        %2547 = vmatmul.mubr.bf16.gmra.mrb[0].mxu0 %v2476
        %v2548 = vpop.f32.mrb[0].mxu0
        %v2549 = vadd.f32 0.0, %v2548
        %v2550 = vpop.f32.mrb[0].mxu0
        %v2551 = vpop.f32.mrb[0].mxu0
        %v2552 = vadd.f32 0.0, %v2551
        %v2553 = vpop.f32.mrb[0].mxu0
        %2554 = vdwg.mxu0
        %2555 = vmatprep.subr.bf16.mxu0 0
        %2556 = vmatpush1.bf16.msra.mxu0 %v1285
        %2557 = vmatprep.subr.bf16.mxu0 0
        %2558 = vmatpush1.bf16.msra.mxu0 %v1286
        %2559 = vmatprep.subr.bf16.mxu0 0
        %2560 = vmatpush1.bf16.msra.mxu0 %v1287
        %2561 = vmatprep.subr.bf16.mxu0 0
        %2562 = vmatpush1.bf16.msra.mxu0 %v1288
        %2563 = vmatprep.subr.bf16.mxu0 0
        %2564 = vmatpush1.bf16.msra.mxu0 %v1289
        %2565 = vmatprep.subr.bf16.mxu0 0
        %2566 = vmatpush1.bf16.msra.mxu0 %v1290
        %2567 = vmatprep.subr.bf16.mxu0 0
        %2568 = vmatpush1.bf16.msra.mxu0 %v1291
        %2569 = vmatprep.subr.bf16.mxu0 0
        %2570 = vmatpush1.bf16.msra.mxu0 %v1292
        %2571 = vmatprep.subr.bf16.mxu0 0
        %2572 = vmatpush1.bf16.msra.mxu0 %v1293
        %2573 = vmatprep.subr.bf16.mxu0 0
        %2574 = vmatpush1.bf16.msra.mxu0 %v1294
        %2575 = vmatprep.subr.bf16.mxu0 0
        %2576 = vmatpush1.bf16.msra.mxu0 %v1295
        %2577 = vmatprep.subr.bf16.mxu0 0
        %2578 = vmatpush1.bf16.msra.mxu0 %v1296
        %2579 = vmatprep.subr.bf16.mxu0 0
        %2580 = vmatpush1.bf16.msra.mxu0 %v1297
        %2581 = vmatprep.subr.bf16.mxu0 0
        %2582 = vmatpush1.bf16.msra.mxu0 %v1298
        %2583 = vmatprep.subr.bf16.mxu0 0
        %2584 = vmatpush1.bf16.msra.mxu0 %v1299
        %2585 = vmatprep.subr.bf16.mxu0 0
        %2586 = vmatpush1.bf16.msra.mxu0 %v1300
        %2587 = vmatprep.mubr.bf16.mxu0 %v2479
        %2588 = vmatmul.mubr.bf16.gmra.mrb[0].mxu0 %v2478
        %v2589 = vpop.f32.mrb[0].mxu0
        %v2590 = vadd.f32 %v2549, %v2589
        %v2591 = vpop.f32.mrb[0].mxu0
        %v2592 = vpop.f32.mrb[0].mxu0
        %v2593 = vadd.f32 %v2552, %v2592
        %v2594 = vpop.f32.mrb[0].mxu0
        %2595 = vdwg.mxu0
        %2596 = vmatprep.subr.bf16.mxu0 0
        %2597 = vmatpush1.bf16.msra.mxu0 %v1301
        %2598 = vmatprep.subr.bf16.mxu0 0
        %2599 = vmatpush1.bf16.msra.mxu0 %v1302
        %2600 = vmatprep.subr.bf16.mxu0 0
        %2601 = vmatpush1.bf16.msra.mxu0 %v1303
        %2602 = vmatprep.subr.bf16.mxu0 0
        %2603 = vmatpush1.bf16.msra.mxu0 %v1304
        %2604 = vmatprep.subr.bf16.mxu0 0
        %2605 = vmatpush1.bf16.msra.mxu0 %v1305
        %2606 = vmatprep.subr.bf16.mxu0 0
        %2607 = vmatpush1.bf16.msra.mxu0 %v1306
        %2608 = vmatprep.subr.bf16.mxu0 0
        %2609 = vmatpush1.bf16.msra.mxu0 %v1307
        %2610 = vmatprep.subr.bf16.mxu0 0
        %2611 = vmatpush1.bf16.msra.mxu0 %v1308
        %2612 = vmatprep.subr.bf16.mxu0 0
        %2613 = vmatpush1.bf16.msra.mxu0 %v1309
        %2614 = vmatprep.subr.bf16.mxu0 0
        %2615 = vmatpush1.bf16.msra.mxu0 %v1310
        %2616 = vmatprep.subr.bf16.mxu0 0
        %2617 = vmatpush1.bf16.msra.mxu0 %v1311
        %2618 = vmatprep.subr.bf16.mxu0 0
        %2619 = vmatpush1.bf16.msra.mxu0 %v1312
        %2620 = vmatprep.subr.bf16.mxu0 0
        %2621 = vmatpush1.bf16.msra.mxu0 %v1313
        %2622 = vmatprep.subr.bf16.mxu0 0
        %2623 = vmatpush1.bf16.msra.mxu0 %v1314
        %2624 = vmatprep.subr.bf16.mxu0 0
        %2625 = vmatpush1.bf16.msra.mxu0 %v1315
        %2626 = vmatprep.subr.bf16.mxu0 0
        %2627 = vmatpush1.bf16.msra.mxu0 %v1316
        %2628 = vmatprep.mubr.bf16.mxu0 %v2481
        %2629 = vmatmul.mubr.bf16.gmra.mrb[0].mxu0 %v2480
        %v2630 = vpop.f32.mrb[0].mxu0
        %v2631 = vadd.f32 %v2590, %v2630
        %v2632 = vpop.f32.mrb[0].mxu0
        %v2633 = vpop.f32.mrb[0].mxu0
        %v2634 = vadd.f32 %v2593, %v2633
        %v2635 = vpop.f32.mrb[0].mxu0
        %2636 = vdwg.mxu0
        %2637 = vmatprep.subr.bf16.mxu0 0
        %2638 = vmatpush1.bf16.msra.mxu0 %v1317
        %2639 = vmatprep.subr.bf16.mxu0 0
        %2640 = vmatpush1.bf16.msra.mxu0 %v1318
        %2641 = vmatprep.subr.bf16.mxu0 0
        %2642 = vmatpush1.bf16.msra.mxu0 %v1319
        %2643 = vmatprep.subr.bf16.mxu0 0
        %2644 = vmatpush1.bf16.msra.mxu0 %v1320
        %2645 = vmatprep.subr.bf16.mxu0 0
        %2646 = vmatpush1.bf16.msra.mxu0 %v1321
        %2647 = vmatprep.subr.bf16.mxu0 0
        %2648 = vmatpush1.bf16.msra.mxu0 %v1322
        %2649 = vmatprep.subr.bf16.mxu0 0
        %2650 = vmatpush1.bf16.msra.mxu0 %v1323
        %2651 = vmatprep.subr.bf16.mxu0 0
        %2652 = vmatpush1.bf16.msra.mxu0 %v1324
        %2653 = vmatprep.subr.bf16.mxu0 0
        %2654 = vmatpush1.bf16.msra.mxu0 %v1325
        %2655 = vmatprep.subr.bf16.mxu0 0
        %2656 = vmatpush1.bf16.msra.mxu0 %v1326
        %2657 = vmatprep.subr.bf16.mxu0 0
        %2658 = vmatpush1.bf16.msra.mxu0 %v1327
        %2659 = vmatprep.subr.bf16.mxu0 0
        %2660 = vmatpush1.bf16.msra.mxu0 %v1328
        %2661 = vmatprep.subr.bf16.mxu0 0
        %2662 = vmatpush1.bf16.msra.mxu0 %v1329
        %2663 = vmatprep.subr.bf16.mxu0 0
        %2664 = vmatpush1.bf16.msra.mxu0 %v1330
        %2665 = vmatprep.subr.bf16.mxu0 0
        %2666 = vmatpush1.bf16.msra.mxu0 %v1331
        %2667 = vmatprep.subr.bf16.mxu0 0
        %2668 = vmatpush1.bf16.msra.mxu0 %v1332
        %2669 = vmatprep.mubr.bf16.mxu0 %v2483
        %2670 = vmatmul.mubr.bf16.gmra.mrb[0].mxu0 %v2482
        %v2671 = vpop.f32.mrb[0].mxu0
        %v2672 = vadd.f32 %v2631, %v2671
        %v2673 = vpop.f32.mrb[0].mxu0
        %v2674 = vpop.f32.mrb[0].mxu0
        %v2675 = vadd.f32 %v2634, %v2674
        %v2676 = vpop.f32.mrb[0].mxu0
        %2677 = vdwg.mxu0
        %2678 = vmatprep.subr.bf16.mxu0 0
        %2679 = vmatpush1.bf16.msra.mxu0 %v1333
        %2680 = vmatprep.subr.bf16.mxu0 0
        %2681 = vmatpush1.bf16.msra.mxu0 %v1334
        %2682 = vmatprep.subr.bf16.mxu0 0
        %2683 = vmatpush1.bf16.msra.mxu0 %v1335
        %2684 = vmatprep.subr.bf16.mxu0 0
        %2685 = vmatpush1.bf16.msra.mxu0 %v1336
        %2686 = vmatprep.subr.bf16.mxu0 0
        %2687 = vmatpush1.bf16.msra.mxu0 %v1337
        %2688 = vmatprep.subr.bf16.mxu0 0
        %2689 = vmatpush1.bf16.msra.mxu0 %v1338
        %2690 = vmatprep.subr.bf16.mxu0 0
        %2691 = vmatpush1.bf16.msra.mxu0 %v1339
        %2692 = vmatprep.subr.bf16.mxu0 0
        %2693 = vmatpush1.bf16.msra.mxu0 %v1340
        %2694 = vmatprep.subr.bf16.mxu0 0
        %2695 = vmatpush1.bf16.msra.mxu0 %v1341
        %2696 = vmatprep.subr.bf16.mxu0 0
        %2697 = vmatpush1.bf16.msra.mxu0 %v1342
        %2698 = vmatprep.subr.bf16.mxu0 0
        %2699 = vmatpush1.bf16.msra.mxu0 %v1343
        %2700 = vmatprep.subr.bf16.mxu0 0
        %2701 = vmatpush1.bf16.msra.mxu0 %v1344
        %2702 = vmatprep.subr.bf16.mxu0 0
        %2703 = vmatpush1.bf16.msra.mxu0 %v1345
        %2704 = vmatprep.subr.bf16.mxu0 0
        %2705 = vmatpush1.bf16.msra.mxu0 %v1346
        %2706 = vmatprep.subr.bf16.mxu0 0
        %2707 = vmatpush1.bf16.msra.mxu0 %v1347
        %2708 = vmatprep.subr.bf16.mxu0 0
        %2709 = vmatpush1.bf16.msra.mxu0 %v1348
        %2710 = vmatprep.mubr.bf16.mxu0 %v2485
        %2711 = vmatmul.mubr.bf16.gmra.mrb[0].mxu0 %v2484
        %v2712 = vpop.f32.mrb[0].mxu0
        %v2713 = vadd.f32 %v2672, %v2712
        %v2714 = vpop.f32.mrb[0].mxu0
        %v2715 = vpop.f32.mrb[0].mxu0
        %v2716 = vadd.f32 %v2675, %v2715
        %v2717 = vpop.f32.mrb[0].mxu0
        %2718 = vdwg.mxu0
        %2719 = vmatprep.subr.bf16.mxu0 0
        %2720 = vmatpush1.bf16.msra.mxu0 %v1349
        %2721 = vmatprep.subr.bf16.mxu0 0
        %2722 = vmatpush1.bf16.msra.mxu0 %v1350
        %2723 = vmatprep.subr.bf16.mxu0 0
        %2724 = vmatpush1.bf16.msra.mxu0 %v1351
        %2725 = vmatprep.subr.bf16.mxu0 0
        %2726 = vmatpush1.bf16.msra.mxu0 %v1352
        %2727 = vmatprep.subr.bf16.mxu0 0
        %2728 = vmatpush1.bf16.msra.mxu0 %v1353
        %2729 = vmatprep.subr.bf16.mxu0 0
        %2730 = vmatpush1.bf16.msra.mxu0 %v1354
        %2731 = vmatprep.subr.bf16.mxu0 0
        %2732 = vmatpush1.bf16.msra.mxu0 %v1355
        %2733 = vmatprep.subr.bf16.mxu0 0
        %2734 = vmatpush1.bf16.msra.mxu0 %v1356
        %2735 = vmatprep.subr.bf16.mxu0 0
        %2736 = vmatpush1.bf16.msra.mxu0 %v1357
        %2737 = vmatprep.subr.bf16.mxu0 0
        %2738 = vmatpush1.bf16.msra.mxu0 %v1358
        %2739 = vmatprep.subr.bf16.mxu0 0
        %2740 = vmatpush1.bf16.msra.mxu0 %v1359
        %2741 = vmatprep.subr.bf16.mxu0 0
        %2742 = vmatpush1.bf16.msra.mxu0 %v1360
        %2743 = vmatprep.subr.bf16.mxu0 0
        %2744 = vmatpush1.bf16.msra.mxu0 %v1361
        %2745 = vmatprep.subr.bf16.mxu0 0
        %2746 = vmatpush1.bf16.msra.mxu0 %v1362
        %2747 = vmatprep.subr.bf16.mxu0 0
        %2748 = vmatpush1.bf16.msra.mxu0 %v1363
        %2749 = vmatprep.subr.bf16.mxu0 0
        %2750 = vmatpush1.bf16.msra.mxu0 %v1364
        %2751 = vmatprep.mubr.bf16.mxu0 %v2487
        %2752 = vmatmul.mubr.bf16.gmra.mrb[0].mxu0 %v2486
        %v2753 = vpop.f32.mrb[0].mxu0
        %v2754 = vadd.f32 %v2713, %v2753
        %v2755 = vpop.f32.mrb[0].mxu0
        %v2756 = vpop.f32.mrb[0].mxu0
        %v2757 = vadd.f32 %v2716, %v2756
        %v2758 = vpop.f32.mrb[0].mxu0
        %2759 = vdwg.mxu0
        %2760 = vmatprep.subr.bf16.mxu0 0
        %2761 = vmatpush1.bf16.msra.mxu0 %v1365
        %2762 = vmatprep.subr.bf16.mxu0 0
        %2763 = vmatpush1.bf16.msra.mxu0 %v1366
        %2764 = vmatprep.subr.bf16.mxu0 0
        %2765 = vmatpush1.bf16.msra.mxu0 %v1367
        %2766 = vmatprep.subr.bf16.mxu0 0
        %2767 = vmatpush1.bf16.msra.mxu0 %v1368
        %2768 = vmatprep.subr.bf16.mxu0 0
        %2769 = vmatpush1.bf16.msra.mxu0 %v1369
        %2770 = vmatprep.subr.bf16.mxu0 0
        %2771 = vmatpush1.bf16.msra.mxu0 %v1370
        %2772 = vmatprep.subr.bf16.mxu0 0
        %2773 = vmatpush1.bf16.msra.mxu0 %v1371
        %2774 = vmatprep.subr.bf16.mxu0 0
        %2775 = vmatpush1.bf16.msra.mxu0 %v1372
        %2776 = vmatprep.subr.bf16.mxu0 0
        %2777 = vmatpush1.bf16.msra.mxu0 %v1373
        %2778 = vmatprep.subr.bf16.mxu0 0
        %2779 = vmatpush1.bf16.msra.mxu0 %v1374
        %2780 = vmatprep.subr.bf16.mxu0 0
        %2781 = vmatpush1.bf16.msra.mxu0 %v1375
        %2782 = vmatprep.subr.bf16.mxu0 0
        %2783 = vmatpush1.bf16.msra.mxu0 %v1376
        %2784 = vmatprep.subr.bf16.mxu0 0
        %2785 = vmatpush1.bf16.msra.mxu0 %v1377
        %2786 = vmatprep.subr.bf16.mxu0 0
        %2787 = vmatpush1.bf16.msra.mxu0 %v1378
        %2788 = vmatprep.subr.bf16.mxu0 0
        %2789 = vmatpush1.bf16.msra.mxu0 %v1379
        %2790 = vmatprep.subr.bf16.mxu0 0
        %2791 = vmatpush1.bf16.msra.mxu0 %v1380
        %2792 = vmatprep.mubr.bf16.mxu0 %v2489
        %2793 = vmatmul.mubr.bf16.gmra.mrb[0].mxu0 %v2488
        %v2794 = vpop.f32.mrb[0].mxu0
        %v2795 = vadd.f32 %v2754, %v2794
        %v2796 = vpop.f32.mrb[0].mxu0
        %v2797 = vpop.f32.mrb[0].mxu0
        %v2798 = vadd.f32 %v2757, %v2797
        %v2799 = vpop.f32.mrb[0].mxu0
        %2800 = vdwg.mxu0
        %2801 = vmatprep.subr.bf16.mxu0 0
        %2802 = vmatpush1.bf16.msra.mxu0 %v1381
        %2803 = vmatprep.subr.bf16.mxu0 0
        %2804 = vmatpush1.bf16.msra.mxu0 %v1382
        %2805 = vmatprep.subr.bf16.mxu0 0
        %2806 = vmatpush1.bf16.msra.mxu0 %v1383
        %2807 = vmatprep.subr.bf16.mxu0 0
        %2808 = vmatpush1.bf16.msra.mxu0 %v1384
        %2809 = vmatprep.subr.bf16.mxu0 0
        %2810 = vmatpush1.bf16.msra.mxu0 %v1385
        %2811 = vmatprep.subr.bf16.mxu0 0
        %2812 = vmatpush1.bf16.msra.mxu0 %v1386
        %2813 = vmatprep.subr.bf16.mxu0 0
        %2814 = vmatpush1.bf16.msra.mxu0 %v1387
        %2815 = vmatprep.subr.bf16.mxu0 0
        %2816 = vmatpush1.bf16.msra.mxu0 %v1388
        %2817 = vmatprep.subr.bf16.mxu0 0
        %2818 = vmatpush1.bf16.msra.mxu0 %v1389
        %2819 = vmatprep.subr.bf16.mxu0 0
        %2820 = vmatpush1.bf16.msra.mxu0 %v1390
        %2821 = vmatprep.subr.bf16.mxu0 0
        %2822 = vmatpush1.bf16.msra.mxu0 %v1391
        %2823 = vmatprep.subr.bf16.mxu0 0
        %2824 = vmatpush1.bf16.msra.mxu0 %v1392
        %2825 = vmatprep.subr.bf16.mxu0 0
        %2826 = vmatpush1.bf16.msra.mxu0 %v1393
        %2827 = vmatprep.subr.bf16.mxu0 0
        %2828 = vmatpush1.bf16.msra.mxu0 %v1394
        %2829 = vmatprep.subr.bf16.mxu0 0
        %2830 = vmatpush1.bf16.msra.mxu0 %v1395
        %2831 = vmatprep.subr.bf16.mxu0 0
        %2832 = vmatpush1.bf16.msra.mxu0 %v1396
        %2833 = vmatprep.mubr.bf16.mxu0 %v2491
        %2834 = vmatmul.mubr.bf16.gmra.mrb[0].mxu0 %v2490
        %v2835 = vpop.f32.mrb[0].mxu0
        %v2836 = vadd.f32 %v2795, %v2835
        %v2837 = vpop.f32.mrb[0].mxu0
        %v2838 = vpop.f32.mrb[0].mxu0
        %v2839 = vadd.f32 %v2798, %v2838
        %v2840 = vpop.f32.mrb[0].mxu0
        %2841 = vdwg.mxu0
        %2842 = vmatprep.subr.bf16.mxu0 0
        %2843 = vmatpush1.bf16.msra.mxu0 %v1397
        %2844 = vmatprep.subr.bf16.mxu0 0
        %2845 = vmatpush1.bf16.msra.mxu0 %v1398
        %2846 = vmatprep.subr.bf16.mxu0 0
        %2847 = vmatpush1.bf16.msra.mxu0 %v1399
        %2848 = vmatprep.subr.bf16.mxu0 0
        %2849 = vmatpush1.bf16.msra.mxu0 %v1400
        %2850 = vmatprep.subr.bf16.mxu0 0
        %2851 = vmatpush1.bf16.msra.mxu0 %v1401
        %2852 = vmatprep.subr.bf16.mxu0 0
        %2853 = vmatpush1.bf16.msra.mxu0 %v1402
        %2854 = vmatprep.subr.bf16.mxu0 0
        %2855 = vmatpush1.bf16.msra.mxu0 %v1403
        %2856 = vmatprep.subr.bf16.mxu0 0
        %2857 = vmatpush1.bf16.msra.mxu0 %v1404
        %2858 = vmatprep.subr.bf16.mxu0 0
        %2859 = vmatpush1.bf16.msra.mxu0 %v1405
        %2860 = vmatprep.subr.bf16.mxu0 0
        %2861 = vmatpush1.bf16.msra.mxu0 %v1550
        %2862 = vmatprep.subr.bf16.mxu0 0
        %2863 = vmatpush1.bf16.msra.mxu0 0
        %2864 = vmatprep.subr.bf16.mxu0 0
        %2865 = vmatpush1.bf16.msra.mxu0 0
        %2866 = vmatprep.subr.bf16.mxu0 0
        %2867 = vmatpush1.bf16.msra.mxu0 0
        %2868 = vmatprep.subr.bf16.mxu0 0
        %2869 = vmatpush1.bf16.msra.mxu0 0
        %2870 = vmatprep.subr.bf16.mxu0 0
        %2871 = vmatpush1.bf16.msra.mxu0 0
        %2872 = vmatprep.subr.bf16.mxu0 0
        %2873 = vmatpush1.bf16.msra.mxu0 0
        %2874 = vmatprep.mubr.bf16.mxu0 %v2512
        %2875 = vmatmul.mubr.bf16.gmra.mrb[0].mxu0 %v2492
        %v2876 = vpop.f32.mrb[0].mxu0
        %v2877 = vadd.f32 %v2836, %v2876
        %v2878 = vpop.f32.mrb[0].mxu0
        %v2879 = vpop.f32.mrb[0].mxu0
        %v2880 = vadd.f32 %v2839, %v2879
        %v2881 = vpop.f32.mrb[0].mxu0
        %2882 = vdwg.mxu0
        %v2883 = vmax.f32 %v2401, %v2877
        %v2884 = vmax.f32 %v2402, %v2880
        %s2885 = scalar_lea.vmem %s308, 432 [#allocation2]
        %v2886 = vld [vmem:[%s2885] sm:$0xff]
        %v2887 = vld [vmem:[%s2885 + $0x8] sm:$0xff]
        %v2888 = vld [vmem:[%s2885 + $0x10] sm:$0xff]
        %v2889 = vld [vmem:[%s2885 + $0x18] sm:$0xff]
        %v2890 = vld [vmem:[%s2885 + $0x20] sm:$0xff]
        %v2891 = vld [vmem:[%s2885 + $0x28] sm:$0xff]
        %v2892 = vld [vmem:[%s2885 + $0x30] sm:$0xff]
        %v2893 = vld [vmem:[%s2885 + $0x38] sm:$0xff]
        %v2894 = vld [vmem:[%s2885 + $0x40] sm:$0xff]
        %v2895 = vld [vmem:[%s2885 + $0x48] sm:$0xff]
        %v2896 = vld [vmem:[%s2885 + $0x50] sm:$0xff]
        %v2897 = vld [vmem:[%s2885 + $0x58] sm:$0xff]
        %v2898 = vld [vmem:[%s2885 + $0x60] sm:$0xff]
        %v2899 = vld [vmem:[%s2885 + $0x68] sm:$0xff]
        %v2900 = vld [vmem:[%s2885 + $0x70] sm:$0xff]
        %v2901 = vld [vmem:[%s2885 + $0x78] sm:$0xff]
        %v2902 = vld [vmem:[%s2885 + $0x80] sm:$0xff]
        %v2903 = vld [vmem:[%s2885 + $0x88] sm:$0xff]
        %v2922 = vunpack.c.l.b16 %v2886
        %v2923 = vunpack.c.h.b16 %v2886
        %v2924 = vunpack.c.l.b16 %v2887
        %v2925 = vunpack.c.h.b16 %v2887
        %v2926 = vunpack.c.l.b16 %v2888
        %v2927 = vunpack.c.h.b16 %v2888
        %v2928 = vunpack.c.l.b16 %v2889
        %v2929 = vunpack.c.h.b16 %v2889
        %v2930 = vunpack.c.l.b16 %v2890
        %v2931 = vunpack.c.h.b16 %v2890
        %v2932 = vunpack.c.l.b16 %v2891
        %v2933 = vunpack.c.h.b16 %v2891
        %v2934 = vunpack.c.l.b16 %v2892
        %v2935 = vunpack.c.h.b16 %v2892
        %v2936 = vunpack.c.l.b16 %v2893
        %v2937 = vunpack.c.h.b16 %v2893
        %v2938 = vunpack.c.l.b16 %v2894
        %v2939 = vunpack.c.h.b16 %v2894
        %v2940 = vunpack.c.l.b16 %v2895
        %v2941 = vunpack.c.h.b16 %v2895
        %v2942 = vunpack.c.l.b16 %v2896
        %v2943 = vunpack.c.h.b16 %v2896
        %v2944 = vunpack.c.l.b16 %v2897
        %v2945 = vunpack.c.h.b16 %v2897
        %v2946 = vunpack.c.l.b16 %v2898
        %v2947 = vunpack.c.h.b16 %v2898
        %v2948 = vunpack.c.l.b16 %v2899
        %v2949 = vunpack.c.h.b16 %v2899
        %v2950 = vunpack.c.l.b16 %v2900
        %v2951 = vunpack.c.h.b16 %v2900
        %v2952 = vunpack.c.l.b16 %v2901
        %v2953 = vunpack.c.h.b16 %v2901
        %v2954 = vunpack.c.l.b16 %v2902
        %v2955 = vunpack.c.h.b16 %v2902
        %v2956 = vunpack.c.l.b16 %v2903
        %v2957 = vunpack.c.h.b16 %v2903
        %v2958 = vpack.c.b16 %v2940, %v2922
        %v2959 = vpack.c.b16 %v2941, %v2923
        %v2960 = vpack.c.b16 %v2942, %v2924
        %v2961 = vpack.c.b16 %v2943, %v2925
        %v2962 = vpack.c.b16 %v2944, %v2926
        %v2963 = vpack.c.b16 %v2945, %v2927
        %v2964 = vpack.c.b16 %v2946, %v2928
        %v2965 = vpack.c.b16 %v2947, %v2929
        %v2966 = vpack.c.b16 %v2948, %v2930
        %v2967 = vpack.c.b16 %v2949, %v2931
        %v2968 = vpack.c.b16 %v2950, %v2932
        %v2969 = vpack.c.b16 %v2951, %v2933
        %v2970 = vpack.c.b16 %v2952, %v2934
        %v2971 = vpack.c.b16 %v2953, %v2935
        %v2972 = vpack.c.b16 %v2954, %v2936
        %v2973 = vpack.c.b16 %v2955, %v2937
        %v2974 = vpack.c.b16 %v2956, %v2938
        %v2975 = vpack.c.b16 %v2957, %v2939
        %v2994 = vsel %vm1544, %v2975, 0
        %2996 = vmatprep.subr.bf16.mxu0 0
        %2997 = vmatpush1.bf16.msra.mxu0 %v1269
        %2998 = vmatprep.subr.bf16.mxu0 0
        %2999 = vmatpush1.bf16.msra.mxu0 %v1270
        %3000 = vmatprep.subr.bf16.mxu0 0
        %3001 = vmatpush1.bf16.msra.mxu0 %v1271
        %3002 = vmatprep.subr.bf16.mxu0 0
        %3003 = vmatpush1.bf16.msra.mxu0 %v1272
        %3004 = vmatprep.subr.bf16.mxu0 0
        %3005 = vmatpush1.bf16.msra.mxu0 %v1273
        %3006 = vmatprep.subr.bf16.mxu0 0
        %3007 = vmatpush1.bf16.msra.mxu0 %v1274
        %3008 = vmatprep.subr.bf16.mxu0 0
        %3009 = vmatpush1.bf16.msra.mxu0 %v1275
        %3010 = vmatprep.subr.bf16.mxu0 0
        %3011 = vmatpush1.bf16.msra.mxu0 %v1276
        %3012 = vmatprep.subr.bf16.mxu0 0
        %3013 = vmatpush1.bf16.msra.mxu0 %v1277
        %3014 = vmatprep.subr.bf16.mxu0 0
        %3015 = vmatpush1.bf16.msra.mxu0 %v1278
        %3016 = vmatprep.subr.bf16.mxu0 0
        %3017 = vmatpush1.bf16.msra.mxu0 %v1279
        %3018 = vmatprep.subr.bf16.mxu0 0
        %3019 = vmatpush1.bf16.msra.mxu0 %v1280
        %3020 = vmatprep.subr.bf16.mxu0 0
        %3021 = vmatpush1.bf16.msra.mxu0 %v1281
        %3022 = vmatprep.subr.bf16.mxu0 0
        %3023 = vmatpush1.bf16.msra.mxu0 %v1282
        %3024 = vmatprep.subr.bf16.mxu0 0
        %3025 = vmatpush1.bf16.msra.mxu0 %v1283
        %3026 = vmatprep.subr.bf16.mxu0 0
        %3027 = vmatpush1.bf16.msra.mxu0 %v1284
        %3028 = vmatprep.mubr.bf16.mxu0 %v2959
        %3029 = vmatmul.mubr.bf16.gmra.mrb[0].mxu0 %v2958
        %v3030 = vpop.f32.mrb[0].mxu0
        %v3031 = vadd.f32 0.0, %v3030
        %v3032 = vpop.f32.mrb[0].mxu0
        %v3033 = vpop.f32.mrb[0].mxu0
        %v3034 = vadd.f32 0.0, %v3033
        %v3035 = vpop.f32.mrb[0].mxu0
        %3036 = vdwg.mxu0
        %3037 = vmatprep.subr.bf16.mxu0 0
        %3038 = vmatpush1.bf16.msra.mxu0 %v1285
        %3039 = vmatprep.subr.bf16.mxu0 0
        %3040 = vmatpush1.bf16.msra.mxu0 %v1286
        %3041 = vmatprep.subr.bf16.mxu0 0
        %3042 = vmatpush1.bf16.msra.mxu0 %v1287
        %3043 = vmatprep.subr.bf16.mxu0 0
        %3044 = vmatpush1.bf16.msra.mxu0 %v1288
        %3045 = vmatprep.subr.bf16.mxu0 0
        %3046 = vmatpush1.bf16.msra.mxu0 %v1289
        %3047 = vmatprep.subr.bf16.mxu0 0
        %3048 = vmatpush1.bf16.msra.mxu0 %v1290
        %3049 = vmatprep.subr.bf16.mxu0 0
        %3050 = vmatpush1.bf16.msra.mxu0 %v1291
        %3051 = vmatprep.subr.bf16.mxu0 0
        %3052 = vmatpush1.bf16.msra.mxu0 %v1292
        %3053 = vmatprep.subr.bf16.mxu0 0
        %3054 = vmatpush1.bf16.msra.mxu0 %v1293
        %3055 = vmatprep.subr.bf16.mxu0 0
        %3056 = vmatpush1.bf16.msra.mxu0 %v1294
        %3057 = vmatprep.subr.bf16.mxu0 0
        %3058 = vmatpush1.bf16.msra.mxu0 %v1295
        %3059 = vmatprep.subr.bf16.mxu0 0
        %3060 = vmatpush1.bf16.msra.mxu0 %v1296
        %3061 = vmatprep.subr.bf16.mxu0 0
        %3062 = vmatpush1.bf16.msra.mxu0 %v1297
        %3063 = vmatprep.subr.bf16.mxu0 0
        %3064 = vmatpush1.bf16.msra.mxu0 %v1298
        %3065 = vmatprep.subr.bf16.mxu0 0
        %3066 = vmatpush1.bf16.msra.mxu0 %v1299
        %3067 = vmatprep.subr.bf16.mxu0 0
        %3068 = vmatpush1.bf16.msra.mxu0 %v1300
        %3069 = vmatprep.mubr.bf16.mxu0 %v2961
        %3070 = vmatmul.mubr.bf16.gmra.mrb[0].mxu0 %v2960
        %v3071 = vpop.f32.mrb[0].mxu0
        %v3072 = vadd.f32 %v3031, %v3071
        %v3073 = vpop.f32.mrb[0].mxu0
        %v3074 = vpop.f32.mrb[0].mxu0
        %v3075 = vadd.f32 %v3034, %v3074
        %v3076 = vpop.f32.mrb[0].mxu0
        %3077 = vdwg.mxu0
        %3078 = vmatprep.subr.bf16.mxu0 0
        %3079 = vmatpush1.bf16.msra.mxu0 %v1301
        %3080 = vmatprep.subr.bf16.mxu0 0
        %3081 = vmatpush1.bf16.msra.mxu0 %v1302
        %3082 = vmatprep.subr.bf16.mxu0 0
        %3083 = vmatpush1.bf16.msra.mxu0 %v1303
        %3084 = vmatprep.subr.bf16.mxu0 0
        %3085 = vmatpush1.bf16.msra.mxu0 %v1304
        %3086 = vmatprep.subr.bf16.mxu0 0
        %3087 = vmatpush1.bf16.msra.mxu0 %v1305
        %3088 = vmatprep.subr.bf16.mxu0 0
        %3089 = vmatpush1.bf16.msra.mxu0 %v1306
        %3090 = vmatprep.subr.bf16.mxu0 0
        %3091 = vmatpush1.bf16.msra.mxu0 %v1307
        %3092 = vmatprep.subr.bf16.mxu0 0
        %3093 = vmatpush1.bf16.msra.mxu0 %v1308
        %3094 = vmatprep.subr.bf16.mxu0 0
        %3095 = vmatpush1.bf16.msra.mxu0 %v1309
        %3096 = vmatprep.subr.bf16.mxu0 0
        %3097 = vmatpush1.bf16.msra.mxu0 %v1310
        %3098 = vmatprep.subr.bf16.mxu0 0
        %3099 = vmatpush1.bf16.msra.mxu0 %v1311
        %3100 = vmatprep.subr.bf16.mxu0 0
        %3101 = vmatpush1.bf16.msra.mxu0 %v1312
        %3102 = vmatprep.subr.bf16.mxu0 0
        %3103 = vmatpush1.bf16.msra.mxu0 %v1313
        %3104 = vmatprep.subr.bf16.mxu0 0
        %3105 = vmatpush1.bf16.msra.mxu0 %v1314
        %3106 = vmatprep.subr.bf16.mxu0 0
        %3107 = vmatpush1.bf16.msra.mxu0 %v1315
        %3108 = vmatprep.subr.bf16.mxu0 0
        %3109 = vmatpush1.bf16.msra.mxu0 %v1316
        %3110 = vmatprep.mubr.bf16.mxu0 %v2963
        %3111 = vmatmul.mubr.bf16.gmra.mrb[0].mxu0 %v2962
        %v3112 = vpop.f32.mrb[0].mxu0
        %v3113 = vadd.f32 %v3072, %v3112
        %v3114 = vpop.f32.mrb[0].mxu0
        %v3115 = vpop.f32.mrb[0].mxu0
        %v3116 = vadd.f32 %v3075, %v3115
        %v3117 = vpop.f32.mrb[0].mxu0
        %3118 = vdwg.mxu0
        %3119 = vmatprep.subr.bf16.mxu0 0
        %3120 = vmatpush1.bf16.msra.mxu0 %v1317
        %3121 = vmatprep.subr.bf16.mxu0 0
        %3122 = vmatpush1.bf16.msra.mxu0 %v1318
        %3123 = vmatprep.subr.bf16.mxu0 0
        %3124 = vmatpush1.bf16.msra.mxu0 %v1319
        %3125 = vmatprep.subr.bf16.mxu0 0
        %3126 = vmatpush1.bf16.msra.mxu0 %v1320
        %3127 = vmatprep.subr.bf16.mxu0 0
        %3128 = vmatpush1.bf16.msra.mxu0 %v1321
        %3129 = vmatprep.subr.bf16.mxu0 0
        %3130 = vmatpush1.bf16.msra.mxu0 %v1322
        %3131 = vmatprep.subr.bf16.mxu0 0
        %3132 = vmatpush1.bf16.msra.mxu0 %v1323
        %3133 = vmatprep.subr.bf16.mxu0 0
        %3134 = vmatpush1.bf16.msra.mxu0 %v1324
        %3135 = vmatprep.subr.bf16.mxu0 0
        %3136 = vmatpush1.bf16.msra.mxu0 %v1325
        %3137 = vmatprep.subr.bf16.mxu0 0
        %3138 = vmatpush1.bf16.msra.mxu0 %v1326
        %3139 = vmatprep.subr.bf16.mxu0 0
        %3140 = vmatpush1.bf16.msra.mxu0 %v1327
        %3141 = vmatprep.subr.bf16.mxu0 0
        %3142 = vmatpush1.bf16.msra.mxu0 %v1328
        %3143 = vmatprep.subr.bf16.mxu0 0
        %3144 = vmatpush1.bf16.msra.mxu0 %v1329
        %3145 = vmatprep.subr.bf16.mxu0 0
        %3146 = vmatpush1.bf16.msra.mxu0 %v1330
        %3147 = vmatprep.subr.bf16.mxu0 0
        %3148 = vmatpush1.bf16.msra.mxu0 %v1331
        %3149 = vmatprep.subr.bf16.mxu0 0
        %3150 = vmatpush1.bf16.msra.mxu0 %v1332
        %3151 = vmatprep.mubr.bf16.mxu0 %v2965
        %3152 = vmatmul.mubr.bf16.gmra.mrb[0].mxu0 %v2964
        %v3153 = vpop.f32.mrb[0].mxu0
        %v3154 = vadd.f32 %v3113, %v3153
        %v3155 = vpop.f32.mrb[0].mxu0
        %v3156 = vpop.f32.mrb[0].mxu0
        %v3157 = vadd.f32 %v3116, %v3156
        %v3158 = vpop.f32.mrb[0].mxu0
        %3159 = vdwg.mxu0
        %3160 = vmatprep.subr.bf16.mxu0 0
        %3161 = vmatpush1.bf16.msra.mxu0 %v1333
        %3162 = vmatprep.subr.bf16.mxu0 0
        %3163 = vmatpush1.bf16.msra.mxu0 %v1334
        %3164 = vmatprep.subr.bf16.mxu0 0
        %3165 = vmatpush1.bf16.msra.mxu0 %v1335
        %3166 = vmatprep.subr.bf16.mxu0 0
        %3167 = vmatpush1.bf16.msra.mxu0 %v1336
        %3168 = vmatprep.subr.bf16.mxu0 0
        %3169 = vmatpush1.bf16.msra.mxu0 %v1337
        %3170 = vmatprep.subr.bf16.mxu0 0
        %3171 = vmatpush1.bf16.msra.mxu0 %v1338
        %3172 = vmatprep.subr.bf16.mxu0 0
        %3173 = vmatpush1.bf16.msra.mxu0 %v1339
        %3174 = vmatprep.subr.bf16.mxu0 0
        %3175 = vmatpush1.bf16.msra.mxu0 %v1340
        %3176 = vmatprep.subr.bf16.mxu0 0
        %3177 = vmatpush1.bf16.msra.mxu0 %v1341
        %3178 = vmatprep.subr.bf16.mxu0 0
        %3179 = vmatpush1.bf16.msra.mxu0 %v1342
        %3180 = vmatprep.subr.bf16.mxu0 0
        %3181 = vmatpush1.bf16.msra.mxu0 %v1343
        %3182 = vmatprep.subr.bf16.mxu0 0
        %3183 = vmatpush1.bf16.msra.mxu0 %v1344
        %3184 = vmatprep.subr.bf16.mxu0 0
        %3185 = vmatpush1.bf16.msra.mxu0 %v1345
        %3186 = vmatprep.subr.bf16.mxu0 0
        %3187 = vmatpush1.bf16.msra.mxu0 %v1346
        %3188 = vmatprep.subr.bf16.mxu0 0
        %3189 = vmatpush1.bf16.msra.mxu0 %v1347
        %3190 = vmatprep.subr.bf16.mxu0 0
        %3191 = vmatpush1.bf16.msra.mxu0 %v1348
        %3192 = vmatprep.mubr.bf16.mxu0 %v2967
        %3193 = vmatmul.mubr.bf16.gmra.mrb[0].mxu0 %v2966
        %v3194 = vpop.f32.mrb[0].mxu0
        %v3195 = vadd.f32 %v3154, %v3194
        %v3196 = vpop.f32.mrb[0].mxu0
        %v3197 = vpop.f32.mrb[0].mxu0
        %v3198 = vadd.f32 %v3157, %v3197
        %v3199 = vpop.f32.mrb[0].mxu0
        %3200 = vdwg.mxu0
        %3201 = vmatprep.subr.bf16.mxu0 0
        %3202 = vmatpush1.bf16.msra.mxu0 %v1349
        %3203 = vmatprep.subr.bf16.mxu0 0
        %3204 = vmatpush1.bf16.msra.mxu0 %v1350
        %3205 = vmatprep.subr.bf16.mxu0 0
        %3206 = vmatpush1.bf16.msra.mxu0 %v1351
        %3207 = vmatprep.subr.bf16.mxu0 0
        %3208 = vmatpush1.bf16.msra.mxu0 %v1352
        %3209 = vmatprep.subr.bf16.mxu0 0
        %3210 = vmatpush1.bf16.msra.mxu0 %v1353
        %3211 = vmatprep.subr.bf16.mxu0 0
        %3212 = vmatpush1.bf16.msra.mxu0 %v1354
        %3213 = vmatprep.subr.bf16.mxu0 0
        %3214 = vmatpush1.bf16.msra.mxu0 %v1355
        %3215 = vmatprep.subr.bf16.mxu0 0
        %3216 = vmatpush1.bf16.msra.mxu0 %v1356
        %3217 = vmatprep.subr.bf16.mxu0 0
        %3218 = vmatpush1.bf16.msra.mxu0 %v1357
        %3219 = vmatprep.subr.bf16.mxu0 0
        %3220 = vmatpush1.bf16.msra.mxu0 %v1358
        %3221 = vmatprep.subr.bf16.mxu0 0
        %3222 = vmatpush1.bf16.msra.mxu0 %v1359
        %3223 = vmatprep.subr.bf16.mxu0 0
        %3224 = vmatpush1.bf16.msra.mxu0 %v1360
        %3225 = vmatprep.subr.bf16.mxu0 0
        %3226 = vmatpush1.bf16.msra.mxu0 %v1361
        %3227 = vmatprep.subr.bf16.mxu0 0
        %3228 = vmatpush1.bf16.msra.mxu0 %v1362
        %3229 = vmatprep.subr.bf16.mxu0 0
        %3230 = vmatpush1.bf16.msra.mxu0 %v1363
        %3231 = vmatprep.subr.bf16.mxu0 0
        %3232 = vmatpush1.bf16.msra.mxu0 %v1364
        %3233 = vmatprep.mubr.bf16.mxu0 %v2969
        %3234 = vmatmul.mubr.bf16.gmra.mrb[0].mxu0 %v2968
        %v3235 = vpop.f32.mrb[0].mxu0
        %v3236 = vadd.f32 %v3195, %v3235
        %v3237 = vpop.f32.mrb[0].mxu0
        %v3238 = vpop.f32.mrb[0].mxu0
        %v3239 = vadd.f32 %v3198, %v3238
        %v3240 = vpop.f32.mrb[0].mxu0
        %3241 = vdwg.mxu0
        %3242 = vmatprep.subr.bf16.mxu0 0
        %3243 = vmatpush1.bf16.msra.mxu0 %v1365
        %3244 = vmatprep.subr.bf16.mxu0 0
        %3245 = vmatpush1.bf16.msra.mxu0 %v1366
        %3246 = vmatprep.subr.bf16.mxu0 0
        %3247 = vmatpush1.bf16.msra.mxu0 %v1367
        %3248 = vmatprep.subr.bf16.mxu0 0
        %3249 = vmatpush1.bf16.msra.mxu0 %v1368
        %3250 = vmatprep.subr.bf16.mxu0 0
        %3251 = vmatpush1.bf16.msra.mxu0 %v1369
        %3252 = vmatprep.subr.bf16.mxu0 0
        %3253 = vmatpush1.bf16.msra.mxu0 %v1370
        %3254 = vmatprep.subr.bf16.mxu0 0
        %3255 = vmatpush1.bf16.msra.mxu0 %v1371
        %3256 = vmatprep.subr.bf16.mxu0 0
        %3257 = vmatpush1.bf16.msra.mxu0 %v1372
        %3258 = vmatprep.subr.bf16.mxu0 0
        %3259 = vmatpush1.bf16.msra.mxu0 %v1373
        %3260 = vmatprep.subr.bf16.mxu0 0
        %3261 = vmatpush1.bf16.msra.mxu0 %v1374
        %3262 = vmatprep.subr.bf16.mxu0 0
        %3263 = vmatpush1.bf16.msra.mxu0 %v1375
        %3264 = vmatprep.subr.bf16.mxu0 0
        %3265 = vmatpush1.bf16.msra.mxu0 %v1376
        %3266 = vmatprep.subr.bf16.mxu0 0
        %3267 = vmatpush1.bf16.msra.mxu0 %v1377
        %3268 = vmatprep.subr.bf16.mxu0 0
        %3269 = vmatpush1.bf16.msra.mxu0 %v1378
        %3270 = vmatprep.subr.bf16.mxu0 0
        %3271 = vmatpush1.bf16.msra.mxu0 %v1379
        %3272 = vmatprep.subr.bf16.mxu0 0
        %3273 = vmatpush1.bf16.msra.mxu0 %v1380
        %3274 = vmatprep.mubr.bf16.mxu0 %v2971
        %3275 = vmatmul.mubr.bf16.gmra.mrb[0].mxu0 %v2970
        %v3276 = vpop.f32.mrb[0].mxu0
        %v3277 = vadd.f32 %v3236, %v3276
        %v3278 = vpop.f32.mrb[0].mxu0
        %v3279 = vpop.f32.mrb[0].mxu0
        %v3280 = vadd.f32 %v3239, %v3279
        %v3281 = vpop.f32.mrb[0].mxu0
        %3282 = vdwg.mxu0
        %3283 = vmatprep.subr.bf16.mxu0 0
        %3284 = vmatpush1.bf16.msra.mxu0 %v1381
        %3285 = vmatprep.subr.bf16.mxu0 0
        %3286 = vmatpush1.bf16.msra.mxu0 %v1382
        %3287 = vmatprep.subr.bf16.mxu0 0
        %3288 = vmatpush1.bf16.msra.mxu0 %v1383
        %3289 = vmatprep.subr.bf16.mxu0 0
        %3290 = vmatpush1.bf16.msra.mxu0 %v1384
        %3291 = vmatprep.subr.bf16.mxu0 0
        %3292 = vmatpush1.bf16.msra.mxu0 %v1385
        %3293 = vmatprep.subr.bf16.mxu0 0
        %3294 = vmatpush1.bf16.msra.mxu0 %v1386
        %3295 = vmatprep.subr.bf16.mxu0 0
        %3296 = vmatpush1.bf16.msra.mxu0 %v1387
        %3297 = vmatprep.subr.bf16.mxu0 0
        %3298 = vmatpush1.bf16.msra.mxu0 %v1388
        %3299 = vmatprep.subr.bf16.mxu0 0
        %3300 = vmatpush1.bf16.msra.mxu0 %v1389
        %3301 = vmatprep.subr.bf16.mxu0 0
        %3302 = vmatpush1.bf16.msra.mxu0 %v1390
        %3303 = vmatprep.subr.bf16.mxu0 0
        %3304 = vmatpush1.bf16.msra.mxu0 %v1391
        %3305 = vmatprep.subr.bf16.mxu0 0
        %3306 = vmatpush1.bf16.msra.mxu0 %v1392
        %3307 = vmatprep.subr.bf16.mxu0 0
        %3308 = vmatpush1.bf16.msra.mxu0 %v1393
        %3309 = vmatprep.subr.bf16.mxu0 0
        %3310 = vmatpush1.bf16.msra.mxu0 %v1394
        %3311 = vmatprep.subr.bf16.mxu0 0
        %3312 = vmatpush1.bf16.msra.mxu0 %v1395
        %3313 = vmatprep.subr.bf16.mxu0 0
        %3314 = vmatpush1.bf16.msra.mxu0 %v1396
        %3315 = vmatprep.mubr.bf16.mxu0 %v2973
        %3316 = vmatmul.mubr.bf16.gmra.mrb[0].mxu0 %v2972
        %v3317 = vpop.f32.mrb[0].mxu0
        %v3318 = vadd.f32 %v3277, %v3317
        %v3319 = vpop.f32.mrb[0].mxu0
        %v3320 = vpop.f32.mrb[0].mxu0
        %v3321 = vadd.f32 %v3280, %v3320
        %v3322 = vpop.f32.mrb[0].mxu0
        %3323 = vdwg.mxu0
        %3324 = vmatprep.subr.bf16.mxu0 0
        %3325 = vmatpush1.bf16.msra.mxu0 %v1397
        %3326 = vmatprep.subr.bf16.mxu0 0
        %3327 = vmatpush1.bf16.msra.mxu0 %v1398
        %3328 = vmatprep.subr.bf16.mxu0 0
        %3329 = vmatpush1.bf16.msra.mxu0 %v1399
        %3330 = vmatprep.subr.bf16.mxu0 0
        %3331 = vmatpush1.bf16.msra.mxu0 %v1400
        %3332 = vmatprep.subr.bf16.mxu0 0
        %3333 = vmatpush1.bf16.msra.mxu0 %v1401
        %3334 = vmatprep.subr.bf16.mxu0 0
        %3335 = vmatpush1.bf16.msra.mxu0 %v1402
        %3336 = vmatprep.subr.bf16.mxu0 0
        %3337 = vmatpush1.bf16.msra.mxu0 %v1403
        %3338 = vmatprep.subr.bf16.mxu0 0
        %3339 = vmatpush1.bf16.msra.mxu0 %v1404
        %3340 = vmatprep.subr.bf16.mxu0 0
        %3341 = vmatpush1.bf16.msra.mxu0 %v1405
        %3342 = vmatprep.subr.bf16.mxu0 0
        %3343 = vmatpush1.bf16.msra.mxu0 %v1550
        %3344 = vmatprep.subr.bf16.mxu0 0
        %3345 = vmatpush1.bf16.msra.mxu0 0
        %3346 = vmatprep.subr.bf16.mxu0 0
        %3347 = vmatpush1.bf16.msra.mxu0 0
        %3348 = vmatprep.subr.bf16.mxu0 0
        %3349 = vmatpush1.bf16.msra.mxu0 0
        %3350 = vmatprep.subr.bf16.mxu0 0
        %3351 = vmatpush1.bf16.msra.mxu0 0
        %3352 = vmatprep.subr.bf16.mxu0 0
        %3353 = vmatpush1.bf16.msra.mxu0 0
        %3354 = vmatprep.subr.bf16.mxu0 0
        %3355 = vmatpush1.bf16.msra.mxu0 0
        %3356 = vmatprep.mubr.bf16.mxu0 %v2994
        %3357 = vmatmul.mubr.bf16.gmra.mrb[0].mxu0 %v2974
        %v3358 = vpop.f32.mrb[0].mxu0
        %v3359 = vadd.f32 %v3318, %v3358
        %v3360 = vpop.f32.mrb[0].mxu0
        %v3361 = vpop.f32.mrb[0].mxu0
        %v3362 = vadd.f32 %v3321, %v3361
        %v3363 = vpop.f32.mrb[0].mxu0
        %3364 = vdwg.mxu0
        %v3365 = vmax.f32 %v2883, %v3359
        %v3366 = vmax.f32 %v2884, %v3362
        %v3367 = vld [vmem:[%s2] sm:$0x1]
        %v3369 = vlaneseq
        %v3370 = vshrl.u32 %v3369, 7
        %v3371 = vsub.s32 0, %v3370
        %v3372 = vrot.slane %v3367, %v3371
        %v3374 = vadd.f32 %v3365, %v3372
        %v3375 = vadd.f32 %v3366, %v3372
        %v3376 = vmax.f32 %v3374, 0.0
        %v3377 = vmax.f32 %v3375, 0.0
        %v3378 = vpack.c.bf16 %v3377, %v3376
        %v3380 = vunpack.c.l.b16 %v3378
        %v3381 = vunpack.c.h.b16 %v3378
        %v3382 = vpack.c.b16 %v3380, %v3380
        %v3383 = vpack.c.b16 %v3381, %v3381
        %vm3386 = vcmask 158720
        %3387 = vst.msk [vmem:[%s334] sm:$0xf] %vm3386, %v3382
        %3388 = vst.msk [vmem:[%s334 + $0x4] sm:$0xf] %vm3386, %v3383
        %s3389 = smul.u32 2, %s14
        %p3390 = scmp.lt.s32.totalorder %s3389, 3
        %s3391 = scalar_select %p3390, %s3389, 3
        %s3392 = smul.addr %s3391, 4
        %s3393 = scalar_lea.vmem %s3, %s3392
        // Predicated region
        $region56: #{net_forward.13} parent=50 // pred_check
          %p3394 = pneg %p100
        $region57: #{net_forward.13} parent=50 // pred_check_branch
          %3396 = sbr.rel (%p3394) target = $region59
        $region58: #{net_forward.13} parent=50 // pred_region
          %s3397 = smul.u32 2, %s14
        $region59: #{net_forward.13} parent=50 // pred_fallthru
          _
      $region51: #{net_forward.13} parent=5 // pred_fallthru
        _
      %p3398 = scmp.le.s32.totalorder 2, %s9
      // Predicated region
      $region60: #{net_forward.13} parent=5 // pred_check
        %p3399 = pneg %p3398
      $region61: #{net_forward.13} parent=5 // pred_check_branch
        %3401 = sbr.rel (%p3399) target = $region63
      $region62: #{net_forward.13} parent=5 // pred_region
        %s3402 = ssub.s32 %s9, 2
        // Predicated region
        $region64: #{net_forward.13} parent=62 // pred_check
          %p3403 = pneg %p106
        $region65: #{net_forward.13} parent=62 // pred_check_branch
          %3405 = sbr.rel (%p3403) target = $region67
        $region66: #{net_forward.13} parent=62 // pred_region
          %s3406 = smul.u32 2, %s15
          %p3407 = scmp.lt.s32.totalorder %s3406, 3
          %s3408 = scalar_select %p3407, %s3406, 3
          %s3409 = smul.addr %s3408, 4
          %s3410 = scalar_lea.vmem %s3, %s3409
        $region67: #{net_forward.13} parent=62 // pred_fallthru
          _
      $region63: #{net_forward.13} parent=5 // pred_fallthru
        _
    $region6: #{net_forward.13} parent=1 // loop_footer
      %s13 = sadd.s32 1, %s9
    $region7: #{net_forward.13} parent=1 // loop_footer_branch
      %8 = sbr.rel target = $region3
    $region8: #{net_forward.13} parent=1 // loop_exit
      _

// kernel: net_forward.15
$region0: #{net_forward.15}
  #allocation0 [shape = 'u32[]', space=smem, size = 0x4, offset = 0x4, fixed_abs, tag = 'smem constant byte address 0x4 - core index']
  #allocation1 [shape = 'u32[144,128]{1,0:T(1,128)}', space=vmem, size = 0x12000, scoped, tag = 'internal scratch']
  %s0 = inlined_call_operand.vmem [shape: bf16[32,724], index: 0, kind: input, shape index: {}]
  %s1 = inlined_call_operand.vmem [shape: bf16[724,72], index: 1, kind: input, shape index: {}]
  %s2 = inlined_call_operand.vmem [shape: f32[1,72], index: 2, kind: input, shape index: {}]
  %s3 = inlined_call_operand.vmem [shape: bf16[32,72], index: 3, kind: output, shape index: {}]
  %s4 = sld [smem:[#allocation0]]
  $region45: #{net_forward.15} parent=0
    _
  %s6 = ssub.s32 1, %s4
  %s7 = scalar_select 0, %s6, %s4
  loop: start=0, step=1, limit=4
  $region2: #{net_forward.15} parent=0 // loop_pre_header
    _
  $region3: #{net_forward.15} parent=0 // loop_header
    %s9 = sphi 0, %s13
    %p10 = scmp.ge.s32.totalorder %s9, 4
    %s19 = sphi 0, %s21
    %s22 = sphi 0, %s19
    %s23 = sphi 0, %s22
    %s39 = sphi 0, %s23
    %s43 = sphi 0, %s43
    %s45 = sphi 0, %s43
    %s46 = sphi 0, %s45
    %s60 = sphi 0, %s46
    %s64 = sphi 0, %s64
    %s66 = sphi 0, %s64
    %s67 = sphi 0, %s66
    %s81 = sphi 0, %s67
    %s87 = sphi 0, %s89
    %s90 = sphi 0, %s87
    %s91 = sphi 0, %s90
    %s107 = sphi 0, %s91
  $region4: #{net_forward.15} parent=0 // loop_header_branch
    %12 = sbr.rel (%p10) target = $region8
  $region5: #{net_forward.15} parent=0 // loop_body
    %s14 = ssub.s32 %s9, 1
    %s15 = ssub.s32 %s9, 2
    %s16 = sadd.s32 %s9, 1
    %s17 = ssub.s32 %s9, %s16
    %p18 = scmp.eq.s32.totalorder %s17, 0
    %s20 = sadd.s32 %s19, 1
    %s21 = scalar_select %p18, %s19, %s20
    %p24 = pneg %p18
    %p25 = scmp.eq.s32.totalorder %s9, 1
    %p26 = por %p24, %p25
    %p27 = scmp.ne.s32.totalorder %s19, %s22
    %p28 = scmp.eq.s32.totalorder %s9, 0
    %p29 = por %p27, %p28
    %p30 = scmp.ne.s32.totalorder %s19, %s22
    %p31 = scmp.eq.s32.totalorder %s14, 1
    %p32 = por %p30, %p31
    %p33 = scmp.ne.s32.totalorder %s22, %s23
    %p34 = scmp.eq.s32.totalorder %s14, 0
    %p35 = por %p33, %p34
    %p36 = scmp.ne.s32.totalorder %s22, %s23
    %p37 = scmp.eq.s32.totalorder %s15, 1
    %p38 = por %p36, %p37
    %p40 = scmp.ne.s32.totalorder %s23, %s39
    %p41 = scmp.eq.s32.totalorder %s15, 0
    %p42 = por %p40, %p41
    %s44 = sadd.s32 %s43, 1
    %p47 = scmp.eq.s32.totalorder %s9, 1
    %p48 = scmp.ne.s32.totalorder %s43, %s45
    %p49 = scmp.eq.s32.totalorder %s9, 0
    %p50 = por %p48, %p49
    %p51 = scmp.ne.s32.totalorder %s43, %s45
    %p52 = scmp.eq.s32.totalorder %s14, 1
    %p53 = por %p51, %p52
    %p54 = scmp.ne.s32.totalorder %s45, %s46
    %p55 = scmp.eq.s32.totalorder %s14, 0
    %p56 = por %p54, %p55
    %p57 = scmp.ne.s32.totalorder %s45, %s46
    %p58 = scmp.eq.s32.totalorder %s15, 1
    %p59 = por %p57, %p58
    %p61 = scmp.ne.s32.totalorder %s46, %s60
    %p62 = scmp.eq.s32.totalorder %s15, 0
    %p63 = por %p61, %p62
    %s65 = sadd.s32 %s64, 1
    %p68 = scmp.eq.s32.totalorder %s9, 1
    %p69 = scmp.ne.s32.totalorder %s64, %s66
    %p70 = scmp.eq.s32.totalorder %s9, 0
    %p71 = por %p69, %p70
    %p72 = scmp.ne.s32.totalorder %s64, %s66
    %p73 = scmp.eq.s32.totalorder %s14, 1
    %p74 = por %p72, %p73
    %p75 = scmp.ne.s32.totalorder %s66, %s67
    %p76 = scmp.eq.s32.totalorder %s14, 0
    %p77 = por %p75, %p76
    %p78 = scmp.ne.s32.totalorder %s66, %s67
    %p79 = scmp.eq.s32.totalorder %s15, 1
    %p80 = por %p78, %p79
    %p82 = scmp.ne.s32.totalorder %s67, %s81
    %p83 = scmp.eq.s32.totalorder %s15, 0
    %p84 = por %p82, %p83
    %s85 = ssub.s32 %s9, %s16
    %p86 = scmp.eq.s32.totalorder %s85, 0
    %s88 = sadd.s32 %s87, 1
    %s89 = scalar_select %p86, %s87, %s88
    %p92 = pneg %p86
    %p93 = scmp.eq.s32.totalorder %s9, 1
    %p94 = por %p92, %p93
    %p95 = scmp.ne.s32.totalorder %s87, %s90
    %p96 = scmp.eq.s32.totalorder %s9, 0
    %p97 = por %p95, %p96
    %p98 = scmp.ne.s32.totalorder %s87, %s90
    %p99 = scmp.eq.s32.totalorder %s14, 1
    %p100 = por %p98, %p99
    %p101 = scmp.ne.s32.totalorder %s90, %s91
    %p102 = scmp.eq.s32.totalorder %s14, 0
    %p103 = por %p101, %p102
    %p104 = scmp.ne.s32.totalorder %s90, %s91
    %p105 = scmp.eq.s32.totalorder %s15, 1
    %p106 = por %p104, %p105
    %p108 = scmp.ne.s32.totalorder %s91, %s107
    %p109 = scmp.eq.s32.totalorder %s15, 0
    %p110 = por %p108, %p109
    %p111 = scmp.le.s32.totalorder 1, %s9
    %p112 = scmp.lt.s32.totalorder %s9, 3
    %p113 = pnand %p111, %p112
    %p114 = pneg %p113
    // Predicated region
    $region9: #{net_forward.15} parent=5 // pred_check
      _
    $region10: #{net_forward.15} parent=5 // pred_check_branch
      %116 = sbr.rel (%p113) target = $region12
    $region11: #{net_forward.15} parent=5 // pred_region
      %s117 = ssub.s32 %s9, 1
      // Predicated region
      $region13: #{net_forward.15} parent=11 // pred_check
        %p118 = pneg %p56
      $region14: #{net_forward.15} parent=11 // pred_check_branch
        %120 = sbr.rel (%p118) target = $region16
      $region15: #{net_forward.15} parent=11 // pred_region
        _
      $region16: #{net_forward.15} parent=11 // pred_fallthru
        _
      // Predicated region
      $region17: #{net_forward.15} parent=11 // pred_check
        %p121 = pneg %p77
      $region18: #{net_forward.15} parent=11 // pred_check_branch
        %123 = sbr.rel (%p121) target = $region20
      $region19: #{net_forward.15} parent=11 // pred_region
        _
      $region20: #{net_forward.15} parent=11 // pred_fallthru
        _
    $region12: #{net_forward.15} parent=5 // pred_fallthru
      _
    %p124 = scmp.lt.s32.totalorder %s9, 2
    // Predicated region
    $region21: #{net_forward.15} parent=5 // pred_check
      %p125 = pneg %p124
    $region22: #{net_forward.15} parent=5 // pred_check_branch
      %127 = sbr.rel (%p125) target = $region24
    $region23: #{net_forward.15} parent=5 // pred_region
      // Predicated region
      $region25: #{net_forward.15} parent=23 // pred_check
        %p128 = pneg %p29
      $region26: #{net_forward.15} parent=23 // pred_check_branch
        %130 = sbr.rel (%p128) target = $region28
      $region27: #{net_forward.15} parent=23 // pred_region
        %s131 = smul.u32 2, %s9
        %p132 = scmp.lt.s32.totalorder %s131, 3
        %s133 = scalar_select %p132, %s131, 3
        %s134 = smul.addr %s133, 6
        %s135 = smul.addr %s134, 4
        %s136 = scalar_lea.vmem %s0, %s135
        %s137 = smul.u32 2, %s9
      $region28: #{net_forward.15} parent=23 // pred_fallthru
        _
    $region24: #{net_forward.15} parent=5 // pred_fallthru
      _
    %p138 = scmp.le.s32.totalorder 1, %s9
    %p139 = scmp.lt.s32.totalorder %s9, 3
    %p140 = pnand %p138, %p139
    %p141 = pneg %p140
    // Predicated region
    $region29: #{net_forward.15} parent=5 // pred_check
      _
    $region30: #{net_forward.15} parent=5 // pred_check_branch
      %143 = sbr.rel (%p140) target = $region32
    $region31: #{net_forward.15} parent=5 // pred_region
      %s144 = ssub.s32 %s9, 1
      %s145 = smul.u32 2, %s14
      %p146 = scmp.lt.s32.totalorder %s145, 3
      %s147 = scalar_select %p146, %s145, 3
      %s148 = smul.addr %s147, 6
      %s149 = smul.addr %s148, 4
      %s150 = scalar_lea.vmem %s0, %s149
      %p151 = pneg %p35
      %p152 = pneg %p32
      %p153 = pneg %p56
      %p154 = pneg %p53
      %p155 = pneg %p77
      %p156 = pneg %p74
      %p157 = pneg %p103
      %p158 = pneg %p100
      %s159 = smul.u32 2, %s14
      %p160 = scmp.lt.s32.totalorder %s159, 3
      %s161 = scalar_select %p160, %s159, 3
      %s162 = smul.addr %s161, 4
      %s163 = scalar_lea.vmem %s3, %s162
      %s164 = smul.u32 2, %s14
      %p165 = scmp.lt.s32.totalorder %s164, 3
      %s166 = scalar_select %p165, %s164, 3
      %s167 = smul.addr %s166, 6
      %s168 = smul.addr %s167, 4
      %s169 = scalar_lea.vmem %s0, %s168
      %s170 = smul.u32 2, %s14
      %s171 = smul.u32 2, %s14
      %p172 = scmp.lt.s32.totalorder %s171, 3
      %s173 = scalar_select %p172, %s171, 3
      %s174 = smul.addr %s173, 4
      %s175 = scalar_lea.vmem %s3, %s174
      %s176 = smul.u32 2, %s14
      %v178 = vld [vmem:[%s169] sm:$0xff]
      %v179 = vld [vmem:[%s169 + $0x8] sm:$0xff]
      %v180 = vld [vmem:[%s169 + $0x10] sm:$0xff]
      %v181 = vld [vmem:[%s169 + $0x18] sm:$0xff]
      %v182 = vld [vmem:[%s169 + $0x20] sm:$0xff]
      %v183 = vld [vmem:[%s169 + $0x28] sm:$0xff]
      %v184 = vld [vmem:[%s1] sm:$0xf]
      %v185 = vld [vmem:[%s1 + $0x4] sm:$0xf]
      %v186 = vld [vmem:[%s1 + $0x8] sm:$0xf]
      %v187 = vld [vmem:[%s1 + $0xc] sm:$0xf]
      %v188 = vld [vmem:[%s1 + $0x10] sm:$0xf]
      %v189 = vld [vmem:[%s1 + $0x14] sm:$0xf]
      %v190 = vld [vmem:[%s1 + $0x18] sm:$0xf]
      %v191 = vld [vmem:[%s1 + $0x1c] sm:$0xf]
      %v192 = vld [vmem:[%s1 + $0x20] sm:$0xf]
      %v193 = vld [vmem:[%s1 + $0x24] sm:$0xf]
      %v194 = vld [vmem:[%s1 + $0x28] sm:$0xf]
      %v195 = vld [vmem:[%s1 + $0x2c] sm:$0xf]
      %v196 = vld [vmem:[%s1 + $0x30] sm:$0xf]
      %v197 = vld [vmem:[%s1 + $0x34] sm:$0xf]
      %v198 = vld [vmem:[%s1 + $0x38] sm:$0xf]
      %v199 = vld [vmem:[%s1 + $0x3c] sm:$0xf]
      %v200 = vld [vmem:[%s1 + $0x40] sm:$0xf]
      %v201 = vld [vmem:[%s1 + $0x44] sm:$0xf]
      %v202 = vld [vmem:[%s1 + $0x48] sm:$0xf]
      %v203 = vld [vmem:[%s1 + $0x4c] sm:$0xf]
      %v204 = vld [vmem:[%s1 + $0x50] sm:$0xf]
      %v205 = vld [vmem:[%s1 + $0x54] sm:$0xf]
      %v206 = vld [vmem:[%s1 + $0x58] sm:$0xf]
      %v207 = vld [vmem:[%s1 + $0x5c] sm:$0xf]
      %v208 = vld [vmem:[%s1 + $0x60] sm:$0xf]
      %v209 = vld [vmem:[%s1 + $0x64] sm:$0xf]
      %v210 = vld [vmem:[%s1 + $0x68] sm:$0xf]
      %v211 = vld [vmem:[%s1 + $0x6c] sm:$0xf]
      %v212 = vld [vmem:[%s1 + $0x70] sm:$0xf]
      %v213 = vld [vmem:[%s1 + $0x74] sm:$0xf]
      %v214 = vld [vmem:[%s1 + $0x78] sm:$0xf]
      %v215 = vld [vmem:[%s1 + $0x7c] sm:$0xf]
      %v216 = vld [vmem:[%s1 + $0x80] sm:$0xf]
      %v217 = vld [vmem:[%s1 + $0x84] sm:$0xf]
      %v218 = vld [vmem:[%s1 + $0x88] sm:$0xf]
      %v219 = vld [vmem:[%s1 + $0x8c] sm:$0xf]
      %v220 = vld [vmem:[%s1 + $0x90] sm:$0xf]
      %v221 = vld [vmem:[%s1 + $0x94] sm:$0xf]
      %v222 = vld [vmem:[%s1 + $0x98] sm:$0xf]
      %v223 = vld [vmem:[%s1 + $0x9c] sm:$0xf]
      %v224 = vld [vmem:[%s1 + $0xa0] sm:$0xf]
      %v225 = vld [vmem:[%s1 + $0xa4] sm:$0xf]
      %v226 = vld [vmem:[%s1 + $0xa8] sm:$0xf]
      %v227 = vld [vmem:[%s1 + $0xac] sm:$0xf]
      %v228 = vld [vmem:[%s1 + $0xb0] sm:$0xf]
      %v229 = vld [vmem:[%s1 + $0xb4] sm:$0xf]
      %v230 = vld [vmem:[%s1 + $0xb8] sm:$0xf]
      %v231 = vld [vmem:[%s1 + $0xbc] sm:$0xf]
      %v232 = vld [vmem:[%s1 + $0xc0] sm:$0xf]
      %v233 = vld [vmem:[%s1 + $0xc4] sm:$0xf]
      %v234 = vld [vmem:[%s1 + $0xc8] sm:$0xf]
      %v235 = vld [vmem:[%s1 + $0xcc] sm:$0xf]
      %v236 = vld [vmem:[%s1 + $0xd0] sm:$0xf]
      %v237 = vld [vmem:[%s1 + $0xd4] sm:$0xf]
      %v238 = vld [vmem:[%s1 + $0xd8] sm:$0xf]
      %v239 = vld [vmem:[%s1 + $0xdc] sm:$0xf]
      %v240 = vld [vmem:[%s1 + $0xe0] sm:$0xf]
      %v241 = vld [vmem:[%s1 + $0xe4] sm:$0xf]
      %v242 = vld [vmem:[%s1 + $0xe8] sm:$0xf]
      %v243 = vld [vmem:[%s1 + $0xec] sm:$0xf]
      %v244 = vld [vmem:[%s1 + $0xf0] sm:$0xf]
      %v245 = vld [vmem:[%s1 + $0xf4] sm:$0xf]
      %v246 = vld [vmem:[%s1 + $0xf8] sm:$0xf]
      %v247 = vld [vmem:[%s1 + $0xfc] sm:$0xf]
      %v248 = vld [vmem:[%s1 + $0x100] sm:$0xf]
      %v249 = vld [vmem:[%s1 + $0x104] sm:$0xf]
      %v250 = vld [vmem:[%s1 + $0x108] sm:$0xf]
      %v251 = vld [vmem:[%s1 + $0x10c] sm:$0xf]
      %v252 = vld [vmem:[%s1 + $0x110] sm:$0xf]
      %v253 = vld [vmem:[%s1 + $0x114] sm:$0xf]
      %v254 = vld [vmem:[%s1 + $0x118] sm:$0xf]
      %v255 = vld [vmem:[%s1 + $0x11c] sm:$0xf]
      %v256 = vld [vmem:[%s1 + $0x120] sm:$0xf]
      %v257 = vld [vmem:[%s1 + $0x124] sm:$0xf]
      %v258 = vld [vmem:[%s1 + $0x128] sm:$0xf]
      %v259 = vld [vmem:[%s1 + $0x12c] sm:$0xf]
      %v260 = vld [vmem:[%s1 + $0x130] sm:$0xf]
      %v261 = vld [vmem:[%s1 + $0x134] sm:$0xf]
      %v262 = vld [vmem:[%s1 + $0x138] sm:$0xf]
      %v263 = vld [vmem:[%s1 + $0x13c] sm:$0xf]
      %v264 = vld [vmem:[%s1 + $0x140] sm:$0xf]
      %v265 = vld [vmem:[%s1 + $0x144] sm:$0xf]
      %v266 = vld [vmem:[%s1 + $0x148] sm:$0xf]
      %v267 = vld [vmem:[%s1 + $0x14c] sm:$0xf]
      %v268 = vld [vmem:[%s1 + $0x150] sm:$0xf]
      %v269 = vld [vmem:[%s1 + $0x154] sm:$0xf]
      %v270 = vld [vmem:[%s1 + $0x158] sm:$0xf]
      %v271 = vld [vmem:[%s1 + $0x15c] sm:$0xf]
      %v272 = vld [vmem:[%s1 + $0x160] sm:$0xf]
      %v273 = vld [vmem:[%s1 + $0x164] sm:$0xf]
      %v274 = vld [vmem:[%s1 + $0x168] sm:$0x3]
      %v275 = vld [vmem:[%s2] sm:$0x1]
      %v277 = vlaneseq
      %v278 = vshrl.u32 %v277, 7
      %v279 = vsub.s32 0, %v278
      %v280 = vrot.slane %v275, %v279
      %v288 = vunpack.c.l.b16 %v178
      %v289 = vunpack.c.h.b16 %v178
      %v290 = vunpack.c.l.b16 %v179
      %v291 = vunpack.c.h.b16 %v179
      %v292 = vunpack.c.l.b16 %v180
      %v293 = vunpack.c.h.b16 %v180
      %v294 = vunpack.c.l.b16 %v181
      %v295 = vunpack.c.h.b16 %v181
      %v296 = vunpack.c.l.b16 %v182
      %v297 = vunpack.c.h.b16 %v182
      %v298 = vunpack.c.l.b16 %v183
      %v299 = vunpack.c.h.b16 %v183
      %v300 = vpack.c.b16 %v294, %v288
      %v301 = vpack.c.b16 %v295, %v289
      %v302 = vpack.c.b16 %v296, %v290
      %v303 = vpack.c.b16 %v297, %v291
      %v304 = vpack.c.b16 %v298, %v292
      %v305 = vpack.c.b16 %v299, %v293
      %v402 = vunpack.c.l.b16 %v184
      %v403 = vunpack.c.l.b16 %v185
      %v404 = vunpack.c.l.b16 %v186
      %v405 = vunpack.c.l.b16 %v187
      %v406 = vunpack.c.l.b16 %v188
      %v407 = vunpack.c.l.b16 %v189
      %v408 = vunpack.c.l.b16 %v190
      %v409 = vunpack.c.l.b16 %v191
      %v410 = vunpack.c.l.b16 %v192
      %v411 = vunpack.c.l.b16 %v193
      %v412 = vunpack.c.l.b16 %v194
      %v413 = vunpack.c.l.b16 %v195
      %v414 = vunpack.c.l.b16 %v196
      %v415 = vunpack.c.l.b16 %v197
      %v416 = vunpack.c.l.b16 %v198
      %v417 = vunpack.c.l.b16 %v199
      %v418 = vunpack.c.l.b16 %v200
      %v419 = vunpack.c.l.b16 %v201
      %v420 = vunpack.c.l.b16 %v202
      %v421 = vunpack.c.l.b16 %v203
      %v422 = vunpack.c.l.b16 %v204
      %v423 = vunpack.c.l.b16 %v205
      %v424 = vunpack.c.l.b16 %v206
      %v425 = vunpack.c.l.b16 %v207
      %v426 = vunpack.c.l.b16 %v208
      %v427 = vunpack.c.l.b16 %v209
      %v428 = vunpack.c.l.b16 %v210
      %v429 = vunpack.c.l.b16 %v211
      %v430 = vunpack.c.l.b16 %v212
      %v431 = vunpack.c.l.b16 %v213
      %v432 = vunpack.c.l.b16 %v214
      %v433 = vunpack.c.l.b16 %v215
      %v434 = vunpack.c.l.b16 %v216
      %v435 = vunpack.c.l.b16 %v217
      %v436 = vunpack.c.l.b16 %v218
      %v437 = vunpack.c.l.b16 %v219
      %v438 = vunpack.c.l.b16 %v220
      %v439 = vunpack.c.l.b16 %v221
      %v440 = vunpack.c.l.b16 %v222
      %v441 = vunpack.c.l.b16 %v223
      %v442 = vunpack.c.l.b16 %v224
      %v443 = vunpack.c.l.b16 %v225
      %v444 = vunpack.c.l.b16 %v226
      %v445 = vunpack.c.l.b16 %v227
      %v446 = vunpack.c.l.b16 %v228
      %v447 = vunpack.c.l.b16 %v229
      %v448 = vunpack.c.l.b16 %v230
      %v449 = vunpack.c.l.b16 %v231
      %v450 = vunpack.c.l.b16 %v232
      %v451 = vunpack.c.l.b16 %v233
      %v452 = vunpack.c.l.b16 %v234
      %v453 = vunpack.c.l.b16 %v235
      %v454 = vunpack.c.l.b16 %v236
      %v455 = vunpack.c.l.b16 %v237
      %v456 = vunpack.c.l.b16 %v238
      %v457 = vunpack.c.l.b16 %v239
      %v458 = vunpack.c.l.b16 %v240
      %v459 = vunpack.c.l.b16 %v241
      %v460 = vunpack.c.l.b16 %v242
      %v461 = vunpack.c.l.b16 %v243
      %v462 = vunpack.c.l.b16 %v244
      %v463 = vunpack.c.l.b16 %v245
      %v464 = vunpack.c.l.b16 %v246
      %v465 = vunpack.c.l.b16 %v247
      %v466 = vunpack.c.l.b16 %v248
      %v467 = vunpack.c.l.b16 %v249
      %v468 = vunpack.c.l.b16 %v250
      %v469 = vunpack.c.l.b16 %v251
      %v470 = vunpack.c.l.b16 %v252
      %v471 = vunpack.c.l.b16 %v253
      %v472 = vunpack.c.l.b16 %v254
      %v473 = vunpack.c.l.b16 %v255
      %v474 = vunpack.c.l.b16 %v256
      %v475 = vunpack.c.l.b16 %v257
      %v476 = vunpack.c.l.b16 %v258
      %v477 = vunpack.c.l.b16 %v259
      %v478 = vunpack.c.l.b16 %v260
      %v479 = vunpack.c.l.b16 %v261
      %v480 = vunpack.c.l.b16 %v262
      %v481 = vunpack.c.l.b16 %v263
      %v482 = vunpack.c.l.b16 %v264
      %v483 = vunpack.c.l.b16 %v265
      %v484 = vunpack.c.l.b16 %v266
      %v485 = vunpack.c.l.b16 %v267
      %v486 = vunpack.c.l.b16 %v268
      %v487 = vunpack.c.l.b16 %v269
      %v488 = vunpack.c.l.b16 %v270
      %v489 = vunpack.c.l.b16 %v271
      %v490 = vunpack.c.l.b16 %v272
      %v491 = vunpack.c.l.b16 %v273
      %v492 = vunpack.c.l.b16 %v274
      %v493 = vpack.c.b16 %v403, %v402
      %v494 = vpack.c.b16 %v405, %v404
      %v495 = vpack.c.b16 %v407, %v406
      %v496 = vpack.c.b16 %v409, %v408
      %v497 = vpack.c.b16 %v411, %v410
      %v498 = vpack.c.b16 %v413, %v412
      %v499 = vpack.c.b16 %v415, %v414
      %v500 = vpack.c.b16 %v417, %v416
      %v501 = vpack.c.b16 %v419, %v418
      %v502 = vpack.c.b16 %v421, %v420
      %v503 = vpack.c.b16 %v423, %v422
      %v504 = vpack.c.b16 %v425, %v424
      %v505 = vpack.c.b16 %v427, %v426
      %v506 = vpack.c.b16 %v429, %v428
      %v507 = vpack.c.b16 %v431, %v430
      %v508 = vpack.c.b16 %v433, %v432
      %v509 = vpack.c.b16 %v435, %v434
      %v510 = vpack.c.b16 %v437, %v436
      %v511 = vpack.c.b16 %v439, %v438
      %v512 = vpack.c.b16 %v441, %v440
      %v513 = vpack.c.b16 %v443, %v442
      %v514 = vpack.c.b16 %v445, %v444
      %v515 = vpack.c.b16 %v447, %v446
      %v516 = vpack.c.b16 %v449, %v448
      %v517 = vpack.c.b16 %v451, %v450
      %v518 = vpack.c.b16 %v453, %v452
      %v519 = vpack.c.b16 %v455, %v454
      %v520 = vpack.c.b16 %v457, %v456
      %v521 = vpack.c.b16 %v459, %v458
      %v522 = vpack.c.b16 %v461, %v460
      %v523 = vpack.c.b16 %v463, %v462
      %v524 = vpack.c.b16 %v465, %v464
      %v525 = vpack.c.b16 %v467, %v466
      %v526 = vpack.c.b16 %v469, %v468
      %v527 = vpack.c.b16 %v471, %v470
      %v528 = vpack.c.b16 %v473, %v472
      %v529 = vpack.c.b16 %v475, %v474
      %v530 = vpack.c.b16 %v477, %v476
      %v531 = vpack.c.b16 %v479, %v478
      %v532 = vpack.c.b16 %v481, %v480
      %v533 = vpack.c.b16 %v483, %v482
      %v534 = vpack.c.b16 %v485, %v484
      %v535 = vpack.c.b16 %v487, %v486
      %v536 = vpack.c.b16 %v489, %v488
      %v537 = vpack.c.b16 %v491, %v490
      %v538 = vpack.c.b16 %v492, %v492
      %vm584 = vcmask 687104
      %v586 = vsel %vm584, %v305, 0
      %vm588 = vcmask 1041408
      %v590 = vsel %vm588, %v538, 0
      %592 = vmatprep.subr.bf16.mxu0 0
      %593 = vmatpush1.bf16.msra.mxu0 %v493
      %594 = vmatprep.subr.bf16.mxu0 0
      %595 = vmatpush1.bf16.msra.mxu0 %v494
      %596 = vmatprep.subr.bf16.mxu0 0
      %597 = vmatpush1.bf16.msra.mxu0 %v495
      %598 = vmatprep.subr.bf16.mxu0 0
      %599 = vmatpush1.bf16.msra.mxu0 %v496
      %600 = vmatprep.subr.bf16.mxu0 0
      %601 = vmatpush1.bf16.msra.mxu0 %v497
      %602 = vmatprep.subr.bf16.mxu0 0
      %603 = vmatpush1.bf16.msra.mxu0 %v498
      %604 = vmatprep.subr.bf16.mxu0 0
      %605 = vmatpush1.bf16.msra.mxu0 %v499
      %606 = vmatprep.subr.bf16.mxu0 0
      %607 = vmatpush1.bf16.msra.mxu0 %v500
      %608 = vmatprep.subr.bf16.mxu0 0
      %609 = vmatpush1.bf16.msra.mxu0 %v501
      %610 = vmatprep.subr.bf16.mxu0 0
      %611 = vmatpush1.bf16.msra.mxu0 %v502
      %612 = vmatprep.subr.bf16.mxu0 0
      %613 = vmatpush1.bf16.msra.mxu0 %v503
      %614 = vmatprep.subr.bf16.mxu0 0
      %615 = vmatpush1.bf16.msra.mxu0 %v504
      %616 = vmatprep.subr.bf16.mxu0 0
      %617 = vmatpush1.bf16.msra.mxu0 %v505
      %618 = vmatprep.subr.bf16.mxu0 0
      %619 = vmatpush1.bf16.msra.mxu0 %v506
      %620 = vmatprep.subr.bf16.mxu0 0
      %621 = vmatpush1.bf16.msra.mxu0 %v507
      %622 = vmatprep.subr.bf16.mxu0 0
      %623 = vmatpush1.bf16.msra.mxu0 %v508
      %624 = vmatprep.mubr.bf16.mxu0 %v301
      %625 = vmatmul.mubr.bf16.gmra.mrb[0].mxu0 %v300
      %v626 = vpop.f32.mrb[0].mxu0
      %v627 = vadd.f32 %v280, %v626
      %v628 = vpop.f32.mrb[0].mxu0
      %v629 = vpop.f32.mrb[0].mxu0
      %v630 = vadd.f32 %v280, %v629
      %v631 = vpop.f32.mrb[0].mxu0
      %632 = vdwg.mxu0
      %633 = vmatprep.subr.bf16.mxu0 0
      %634 = vmatpush1.bf16.msra.mxu0 %v509
      %635 = vmatprep.subr.bf16.mxu0 0
      %636 = vmatpush1.bf16.msra.mxu0 %v510
      %637 = vmatprep.subr.bf16.mxu0 0
      %638 = vmatpush1.bf16.msra.mxu0 %v511
      %639 = vmatprep.subr.bf16.mxu0 0
      %640 = vmatpush1.bf16.msra.mxu0 %v512
      %641 = vmatprep.subr.bf16.mxu0 0
      %642 = vmatpush1.bf16.msra.mxu0 %v513
      %643 = vmatprep.subr.bf16.mxu0 0
      %644 = vmatpush1.bf16.msra.mxu0 %v514
      %645 = vmatprep.subr.bf16.mxu0 0
      %646 = vmatpush1.bf16.msra.mxu0 %v515
      %647 = vmatprep.subr.bf16.mxu0 0
      %648 = vmatpush1.bf16.msra.mxu0 %v516
      %649 = vmatprep.subr.bf16.mxu0 0
      %650 = vmatpush1.bf16.msra.mxu0 %v517
      %651 = vmatprep.subr.bf16.mxu0 0
      %652 = vmatpush1.bf16.msra.mxu0 %v518
      %653 = vmatprep.subr.bf16.mxu0 0
      %654 = vmatpush1.bf16.msra.mxu0 %v519
      %655 = vmatprep.subr.bf16.mxu0 0
      %656 = vmatpush1.bf16.msra.mxu0 %v520
      %657 = vmatprep.subr.bf16.mxu0 0
      %658 = vmatpush1.bf16.msra.mxu0 %v521
      %659 = vmatprep.subr.bf16.mxu0 0
      %660 = vmatpush1.bf16.msra.mxu0 %v522
      %661 = vmatprep.subr.bf16.mxu0 0
      %662 = vmatpush1.bf16.msra.mxu0 %v523
      %663 = vmatprep.subr.bf16.mxu0 0
      %664 = vmatpush1.bf16.msra.mxu0 %v524
      %665 = vmatprep.mubr.bf16.mxu0 %v303
      %666 = vmatmul.mubr.bf16.gmra.mrb[0].mxu0 %v302
      %v667 = vpop.f32.mrb[0].mxu0
      %v668 = vadd.f32 %v627, %v667
      %v669 = vpop.f32.mrb[0].mxu0
      %v670 = vpop.f32.mrb[0].mxu0
      %v671 = vadd.f32 %v630, %v670
      %v672 = vpop.f32.mrb[0].mxu0
      %673 = vdwg.mxu0
      %674 = vmatprep.subr.bf16.mxu0 0
      %675 = vmatpush1.bf16.msra.mxu0 %v525
      %676 = vmatprep.subr.bf16.mxu0 0
      %677 = vmatpush1.bf16.msra.mxu0 %v526
      %678 = vmatprep.subr.bf16.mxu0 0
      %679 = vmatpush1.bf16.msra.mxu0 %v527
      %680 = vmatprep.subr.bf16.mxu0 0
      %681 = vmatpush1.bf16.msra.mxu0 %v528
      %682 = vmatprep.subr.bf16.mxu0 0
      %683 = vmatpush1.bf16.msra.mxu0 %v529
      %684 = vmatprep.subr.bf16.mxu0 0
      %685 = vmatpush1.bf16.msra.mxu0 %v530
      %686 = vmatprep.subr.bf16.mxu0 0
      %687 = vmatpush1.bf16.msra.mxu0 %v531
      %688 = vmatprep.subr.bf16.mxu0 0
      %689 = vmatpush1.bf16.msra.mxu0 %v532
      %690 = vmatprep.subr.bf16.mxu0 0
      %691 = vmatpush1.bf16.msra.mxu0 %v533
      %692 = vmatprep.subr.bf16.mxu0 0
      %693 = vmatpush1.bf16.msra.mxu0 %v534
      %694 = vmatprep.subr.bf16.mxu0 0
      %695 = vmatpush1.bf16.msra.mxu0 %v535
      %696 = vmatprep.subr.bf16.mxu0 0
      %697 = vmatpush1.bf16.msra.mxu0 %v536
      %698 = vmatprep.subr.bf16.mxu0 0
      %699 = vmatpush1.bf16.msra.mxu0 %v537
      %700 = vmatprep.subr.bf16.mxu0 0
      %701 = vmatpush1.bf16.msra.mxu0 %v590
      %702 = vmatprep.subr.bf16.mxu0 0
      %703 = vmatpush1.bf16.msra.mxu0 0
      %704 = vmatprep.subr.bf16.mxu0 0
      %705 = vmatpush1.bf16.msra.mxu0 0
      %706 = vmatprep.mubr.bf16.mxu0 %v586
      %707 = vmatmul.mubr.bf16.gmra.mrb[0].mxu0 %v304
      %v708 = vpop.f32.mrb[0].mxu0
      %v709 = vadd.f32 %v668, %v708
      %v710 = vpop.f32.mrb[0].mxu0
      %v711 = vpop.f32.mrb[0].mxu0
      %v712 = vadd.f32 %v671, %v711
      %v713 = vpop.f32.mrb[0].mxu0
      %714 = vdwg.mxu0
      %v715 = vpack.c.bf16 %v712, %v709
      %v717 = vunpack.c.l.b16 %v715
      %v718 = vunpack.c.h.b16 %v715
      %v719 = vpack.c.b16 %v717, %v717
      %v720 = vpack.c.b16 %v718, %v718
      %vm723 = vcmask 584704
      %724 = vst.msk [vmem:[%s175] sm:$0xf] %vm723, %v719
      %725 = vst.msk [vmem:[%s175 + $0x4] sm:$0xf] %vm723, %v720
      %s726 = smul.u32 2, %s14
      %p727 = scmp.lt.s32.totalorder %s726, 3
      %s728 = scalar_select %p727, %s726, 3
      %s729 = smul.addr %s728, 4
      %s730 = scalar_lea.vmem %s3, %s729
      // Predicated region
      $region33: #{net_forward.15} parent=31 // pred_check
        %p731 = pneg %p100
      $region34: #{net_forward.15} parent=31 // pred_check_branch
        %733 = sbr.rel (%p731) target = $region36
      $region35: #{net_forward.15} parent=31 // pred_region
        %s734 = smul.u32 2, %s14
      $region36: #{net_forward.15} parent=31 // pred_fallthru
        _
    $region32: #{net_forward.15} parent=5 // pred_fallthru
      _
    %p735 = scmp.le.s32.totalorder 2, %s9
    // Predicated region
    $region37: #{net_forward.15} parent=5 // pred_check
      %p736 = pneg %p735
    $region38: #{net_forward.15} parent=5 // pred_check_branch
      %738 = sbr.rel (%p736) target = $region40
    $region39: #{net_forward.15} parent=5 // pred_region
      %s739 = ssub.s32 %s9, 2
      // Predicated region
      $region41: #{net_forward.15} parent=39 // pred_check
        %p740 = pneg %p106
      $region42: #{net_forward.15} parent=39 // pred_check_branch
        %742 = sbr.rel (%p740) target = $region44
      $region43: #{net_forward.15} parent=39 // pred_region
        %s743 = smul.u32 2, %s15
        %p744 = scmp.lt.s32.totalorder %s743, 3
        %s745 = scalar_select %p744, %s743, 3
        %s746 = smul.addr %s745, 4
        %s747 = scalar_lea.vmem %s3, %s746
      $region44: #{net_forward.15} parent=39 // pred_fallthru
        _
    $region40: #{net_forward.15} parent=5 // pred_fallthru
      _
  $region6: #{net_forward.15} parent=0 // loop_footer
    %s13 = sadd.s32 1, %s9
  $region7: #{net_forward.15} parent=0 // loop_footer_branch
    %8 = sbr.rel target = $region3
  $region8: #{net_forward.15} parent=0 // loop_exit
    _

// kernel: net_forward.16
$region0: #{net_forward.16}
  #allocation0 [shape = 'u32[]', space=smem, size = 0x4, offset = 0x4, fixed_abs, tag = 'smem constant byte address 0x4 - core index']
  #allocation1 [shape = 'u32[144,128]{1,0:T(1,128)}', space=vmem, size = 0x12000, scoped, tag = 'internal scratch']
  %s0 = inlined_call_operand.vmem [shape: bf16[32,216], index: 0, kind: input, shape index: {}]
  %s1 = inlined_call_operand.vmem [shape: bf16[216,24], index: 1, kind: input, shape index: {}]
  %s2 = inlined_call_operand.vmem [shape: f32[1,24], index: 2, kind: input, shape index: {}]
  %s3 = inlined_call_operand.vmem [shape: bf16[32,24], index: 3, kind: output, shape index: {}]
  %s4 = sld [smem:[#allocation0]]
  $region45: #{net_forward.16} parent=0
    _
  %s6 = ssub.s32 1, %s4
  %s7 = scalar_select 0, %s6, %s4
  loop: start=0, step=1, limit=4
  $region2: #{net_forward.16} parent=0 // loop_pre_header
    _
  $region3: #{net_forward.16} parent=0 // loop_header
    %s9 = sphi 0, %s13
    %p10 = scmp.ge.s32.totalorder %s9, 4
    %s19 = sphi 0, %s21
    %s22 = sphi 0, %s19
    %s23 = sphi 0, %s22
    %s39 = sphi 0, %s23
    %s43 = sphi 0, %s43
    %s45 = sphi 0, %s43
    %s46 = sphi 0, %s45
    %s60 = sphi 0, %s46
    %s64 = sphi 0, %s64
    %s66 = sphi 0, %s64
    %s67 = sphi 0, %s66
    %s81 = sphi 0, %s67
    %s87 = sphi 0, %s89
    %s90 = sphi 0, %s87
    %s91 = sphi 0, %s90
    %s107 = sphi 0, %s91
  $region4: #{net_forward.16} parent=0 // loop_header_branch
    %12 = sbr.rel (%p10) target = $region8
  $region5: #{net_forward.16} parent=0 // loop_body
    %s14 = ssub.s32 %s9, 1
    %s15 = ssub.s32 %s9, 2
    %s16 = sadd.s32 %s9, 1
    %s17 = ssub.s32 %s9, %s16
    %p18 = scmp.eq.s32.totalorder %s17, 0
    %s20 = sadd.s32 %s19, 1
    %s21 = scalar_select %p18, %s19, %s20
    %p24 = pneg %p18
    %p25 = scmp.eq.s32.totalorder %s9, 1
    %p26 = por %p24, %p25
    %p27 = scmp.ne.s32.totalorder %s19, %s22
    %p28 = scmp.eq.s32.totalorder %s9, 0
    %p29 = por %p27, %p28
    %p30 = scmp.ne.s32.totalorder %s19, %s22
    %p31 = scmp.eq.s32.totalorder %s14, 1
    %p32 = por %p30, %p31
    %p33 = scmp.ne.s32.totalorder %s22, %s23
    %p34 = scmp.eq.s32.totalorder %s14, 0
    %p35 = por %p33, %p34
    %p36 = scmp.ne.s32.totalorder %s22, %s23
    %p37 = scmp.eq.s32.totalorder %s15, 1
    %p38 = por %p36, %p37
    %p40 = scmp.ne.s32.totalorder %s23, %s39
    %p41 = scmp.eq.s32.totalorder %s15, 0
    %p42 = por %p40, %p41
    %s44 = sadd.s32 %s43, 1
    %p47 = scmp.eq.s32.totalorder %s9, 1
    %p48 = scmp.ne.s32.totalorder %s43, %s45
    %p49 = scmp.eq.s32.totalorder %s9, 0
    %p50 = por %p48, %p49
    %p51 = scmp.ne.s32.totalorder %s43, %s45
    %p52 = scmp.eq.s32.totalorder %s14, 1
    %p53 = por %p51, %p52
    %p54 = scmp.ne.s32.totalorder %s45, %s46
    %p55 = scmp.eq.s32.totalorder %s14, 0
    %p56 = por %p54, %p55
    %p57 = scmp.ne.s32.totalorder %s45, %s46
    %p58 = scmp.eq.s32.totalorder %s15, 1
    %p59 = por %p57, %p58
    %p61 = scmp.ne.s32.totalorder %s46, %s60
    %p62 = scmp.eq.s32.totalorder %s15, 0
    %p63 = por %p61, %p62
    %s65 = sadd.s32 %s64, 1
    %p68 = scmp.eq.s32.totalorder %s9, 1
    %p69 = scmp.ne.s32.totalorder %s64, %s66
    %p70 = scmp.eq.s32.totalorder %s9, 0
    %p71 = por %p69, %p70
    %p72 = scmp.ne.s32.totalorder %s64, %s66
    %p73 = scmp.eq.s32.totalorder %s14, 1
    %p74 = por %p72, %p73
    %p75 = scmp.ne.s32.totalorder %s66, %s67
    %p76 = scmp.eq.s32.totalorder %s14, 0
    %p77 = por %p75, %p76
    %p78 = scmp.ne.s32.totalorder %s66, %s67
    %p79 = scmp.eq.s32.totalorder %s15, 1
    %p80 = por %p78, %p79
    %p82 = scmp.ne.s32.totalorder %s67, %s81
    %p83 = scmp.eq.s32.totalorder %s15, 0
    %p84 = por %p82, %p83
    %s85 = ssub.s32 %s9, %s16
    %p86 = scmp.eq.s32.totalorder %s85, 0
    %s88 = sadd.s32 %s87, 1
    %s89 = scalar_select %p86, %s87, %s88
    %p92 = pneg %p86
    %p93 = scmp.eq.s32.totalorder %s9, 1
    %p94 = por %p92, %p93
    %p95 = scmp.ne.s32.totalorder %s87, %s90
    %p96 = scmp.eq.s32.totalorder %s9, 0
    %p97 = por %p95, %p96
    %p98 = scmp.ne.s32.totalorder %s87, %s90
    %p99 = scmp.eq.s32.totalorder %s14, 1
    %p100 = por %p98, %p99
    %p101 = scmp.ne.s32.totalorder %s90, %s91
    %p102 = scmp.eq.s32.totalorder %s14, 0
    %p103 = por %p101, %p102
    %p104 = scmp.ne.s32.totalorder %s90, %s91
    %p105 = scmp.eq.s32.totalorder %s15, 1
    %p106 = por %p104, %p105
    %p108 = scmp.ne.s32.totalorder %s91, %s107
    %p109 = scmp.eq.s32.totalorder %s15, 0
    %p110 = por %p108, %p109
    %p111 = scmp.le.s32.totalorder 1, %s9
    %p112 = scmp.lt.s32.totalorder %s9, 3
    %p113 = pnand %p111, %p112
    %p114 = pneg %p113
    // Predicated region
    $region9: #{net_forward.16} parent=5 // pred_check
      _
    $region10: #{net_forward.16} parent=5 // pred_check_branch
      %116 = sbr.rel (%p113) target = $region12
    $region11: #{net_forward.16} parent=5 // pred_region
      %s117 = ssub.s32 %s9, 1
      // Predicated region
      $region13: #{net_forward.16} parent=11 // pred_check
        %p118 = pneg %p56
      $region14: #{net_forward.16} parent=11 // pred_check_branch
        %120 = sbr.rel (%p118) target = $region16
      $region15: #{net_forward.16} parent=11 // pred_region
        _
      $region16: #{net_forward.16} parent=11 // pred_fallthru
        _
      // Predicated region
      $region17: #{net_forward.16} parent=11 // pred_check
        %p121 = pneg %p77
      $region18: #{net_forward.16} parent=11 // pred_check_branch
        %123 = sbr.rel (%p121) target = $region20
      $region19: #{net_forward.16} parent=11 // pred_region
        _
      $region20: #{net_forward.16} parent=11 // pred_fallthru
        _
    $region12: #{net_forward.16} parent=5 // pred_fallthru
      _
    %p124 = scmp.lt.s32.totalorder %s9, 2
    // Predicated region
    $region21: #{net_forward.16} parent=5 // pred_check
      %p125 = pneg %p124
    $region22: #{net_forward.16} parent=5 // pred_check_branch
      %127 = sbr.rel (%p125) target = $region24
    $region23: #{net_forward.16} parent=5 // pred_region
      // Predicated region
      $region25: #{net_forward.16} parent=23 // pred_check
        %p128 = pneg %p29
      $region26: #{net_forward.16} parent=23 // pred_check_branch
        %130 = sbr.rel (%p128) target = $region28
      $region27: #{net_forward.16} parent=23 // pred_region
        %s131 = smul.u32 2, %s9
        %p132 = scmp.lt.s32.totalorder %s131, 3
        %s133 = scalar_select %p132, %s131, 3
        %s134 = smul.addr %s133, 2
        %s135 = smul.addr %s134, 4
        %s136 = scalar_lea.vmem %s0, %s135
        %s137 = smul.u32 2, %s9
      $region28: #{net_forward.16} parent=23 // pred_fallthru
        _
    $region24: #{net_forward.16} parent=5 // pred_fallthru
      _
    %p138 = scmp.le.s32.totalorder 1, %s9
    %p139 = scmp.lt.s32.totalorder %s9, 3
    %p140 = pnand %p138, %p139
    %p141 = pneg %p140
    // Predicated region
    $region29: #{net_forward.16} parent=5 // pred_check
      _
    $region30: #{net_forward.16} parent=5 // pred_check_branch
      %143 = sbr.rel (%p140) target = $region32
    $region31: #{net_forward.16} parent=5 // pred_region
      %s144 = ssub.s32 %s9, 1
      %s145 = smul.u32 2, %s14
      %p146 = scmp.lt.s32.totalorder %s145, 3
      %s147 = scalar_select %p146, %s145, 3
      %s148 = smul.addr %s147, 2
      %s149 = smul.addr %s148, 4
      %s150 = scalar_lea.vmem %s0, %s149
      %p151 = pneg %p35
      %p152 = pneg %p32
      %p153 = pneg %p56
      %p154 = pneg %p53
      %p155 = pneg %p77
      %p156 = pneg %p74
      %p157 = pneg %p103
      %p158 = pneg %p100
      %s159 = smul.u32 2, %s14
      %p160 = scmp.lt.s32.totalorder %s159, 3
      %s161 = scalar_select %p160, %s159, 3
      %s162 = smul.addr %s161, 4
      %s163 = scalar_lea.vmem %s3, %s162
      %s164 = smul.u32 2, %s14
      %p165 = scmp.lt.s32.totalorder %s164, 3
      %s166 = scalar_select %p165, %s164, 3
      %s167 = smul.addr %s166, 2
      %s168 = smul.addr %s167, 4
      %s169 = scalar_lea.vmem %s0, %s168
      %s170 = smul.u32 2, %s14
      %s171 = smul.u32 2, %s14
      %p172 = scmp.lt.s32.totalorder %s171, 3
      %s173 = scalar_select %p172, %s171, 3
      %s174 = smul.addr %s173, 4
      %s175 = scalar_lea.vmem %s3, %s174
      %s176 = smul.u32 2, %s14
      %v178 = vld [vmem:[%s169] sm:$0xff]
      %v179 = vld [vmem:[%s169 + $0x8] sm:$0xff]
      %v180 = vld [vmem:[%s1] sm:$0xf]
      %v181 = vld [vmem:[%s1 + $0x4] sm:$0xf]
      %v182 = vld [vmem:[%s1 + $0x8] sm:$0xf]
      %v183 = vld [vmem:[%s1 + $0xc] sm:$0xf]
      %v184 = vld [vmem:[%s1 + $0x10] sm:$0xf]
      %v185 = vld [vmem:[%s1 + $0x14] sm:$0xf]
      %v186 = vld [vmem:[%s1 + $0x18] sm:$0xf]
      %v187 = vld [vmem:[%s1 + $0x1c] sm:$0xf]
      %v188 = vld [vmem:[%s1 + $0x20] sm:$0xf]
      %v189 = vld [vmem:[%s1 + $0x24] sm:$0xf]
      %v190 = vld [vmem:[%s1 + $0x28] sm:$0xf]
      %v191 = vld [vmem:[%s1 + $0x2c] sm:$0xf]
      %v192 = vld [vmem:[%s1 + $0x30] sm:$0xf]
      %v193 = vld [vmem:[%s1 + $0x34] sm:$0xf]
      %v194 = vld [vmem:[%s1 + $0x38] sm:$0xf]
      %v195 = vld [vmem:[%s1 + $0x3c] sm:$0xf]
      %v196 = vld [vmem:[%s1 + $0x40] sm:$0xf]
      %v197 = vld [vmem:[%s1 + $0x44] sm:$0xf]
      %v198 = vld [vmem:[%s1 + $0x48] sm:$0xf]
      %v199 = vld [vmem:[%s1 + $0x4c] sm:$0xf]
      %v200 = vld [vmem:[%s1 + $0x50] sm:$0xf]
      %v201 = vld [vmem:[%s1 + $0x54] sm:$0xf]
      %v202 = vld [vmem:[%s1 + $0x58] sm:$0xf]
      %v203 = vld [vmem:[%s1 + $0x5c] sm:$0xf]
      %v204 = vld [vmem:[%s1 + $0x60] sm:$0xf]
      %v205 = vld [vmem:[%s1 + $0x64] sm:$0xf]
      %v206 = vld [vmem:[%s1 + $0x68] sm:$0xf]
      %v207 = vld [vmem:[%s2] sm:$0x1]
      %v209 = vlaneseq
      %v210 = vshrl.u32 %v209, 7
      %v211 = vsub.s32 0, %v210
      %v212 = vrot.slane %v207, %v211
      %v216 = vunpack.c.l.b16 %v178
      %v217 = vunpack.c.h.b16 %v178
      %v218 = vunpack.c.l.b16 %v179
      %v219 = vunpack.c.h.b16 %v179
      %v220 = vpack.c.b16 %v218, %v216
      %v221 = vpack.c.b16 %v219, %v217
      %v250 = vunpack.c.l.b16 %v180
      %v251 = vunpack.c.l.b16 %v181
      %v252 = vunpack.c.l.b16 %v182
      %v253 = vunpack.c.l.b16 %v183
      %v254 = vunpack.c.l.b16 %v184
      %v255 = vunpack.c.l.b16 %v185
      %v256 = vunpack.c.l.b16 %v186
      %v257 = vunpack.c.l.b16 %v187
      %v258 = vunpack.c.l.b16 %v188
      %v259 = vunpack.c.l.b16 %v189
      %v260 = vunpack.c.l.b16 %v190
      %v261 = vunpack.c.l.b16 %v191
      %v262 = vunpack.c.l.b16 %v192
      %v263 = vunpack.c.l.b16 %v193
      %v264 = vunpack.c.l.b16 %v194
      %v265 = vunpack.c.l.b16 %v195
      %v266 = vunpack.c.l.b16 %v196
      %v267 = vunpack.c.l.b16 %v197
      %v268 = vunpack.c.l.b16 %v198
      %v269 = vunpack.c.l.b16 %v199
      %v270 = vunpack.c.l.b16 %v200
      %v271 = vunpack.c.l.b16 %v201
      %v272 = vunpack.c.l.b16 %v202
      %v273 = vunpack.c.l.b16 %v203
      %v274 = vunpack.c.l.b16 %v204
      %v275 = vunpack.c.l.b16 %v205
      %v276 = vunpack.c.l.b16 %v206
      %v277 = vpack.c.b16 %v251, %v250
      %v278 = vpack.c.b16 %v253, %v252
      %v279 = vpack.c.b16 %v255, %v254
      %v280 = vpack.c.b16 %v257, %v256
      %v281 = vpack.c.b16 %v259, %v258
      %v282 = vpack.c.b16 %v261, %v260
      %v283 = vpack.c.b16 %v263, %v262
      %v284 = vpack.c.b16 %v265, %v264
      %v285 = vpack.c.b16 %v267, %v266
      %v286 = vpack.c.b16 %v269, %v268
      %v287 = vpack.c.b16 %v271, %v270
      %v288 = vpack.c.b16 %v273, %v272
      %v289 = vpack.c.b16 %v275, %v274
      %v290 = vpack.c.b16 %v276, %v276
      %vm304 = vcmask 719872
      %v306 = vsel %vm304, %v221, 0
      %vm308 = vcmask 1043456
      %v310 = vsel %vm308, %v290, 0
      %312 = vmatprep.subr.bf16.mxu0 0
      %313 = vmatpush1.bf16.msra.mxu0 %v277
      %314 = vmatprep.subr.bf16.mxu0 0
      %315 = vmatpush1.bf16.msra.mxu0 %v278
      %316 = vmatprep.subr.bf16.mxu0 0
      %317 = vmatpush1.bf16.msra.mxu0 %v279
      %318 = vmatprep.subr.bf16.mxu0 0
      %319 = vmatpush1.bf16.msra.mxu0 %v280
      %320 = vmatprep.subr.bf16.mxu0 0
      %321 = vmatpush1.bf16.msra.mxu0 %v281
      %322 = vmatprep.subr.bf16.mxu0 0
      %323 = vmatpush1.bf16.msra.mxu0 %v282
      %324 = vmatprep.subr.bf16.mxu0 0
      %325 = vmatpush1.bf16.msra.mxu0 %v283
      %326 = vmatprep.subr.bf16.mxu0 0
      %327 = vmatpush1.bf16.msra.mxu0 %v284
      %328 = vmatprep.subr.bf16.mxu0 0
      %329 = vmatpush1.bf16.msra.mxu0 %v285
      %330 = vmatprep.subr.bf16.mxu0 0
      %331 = vmatpush1.bf16.msra.mxu0 %v286
      %332 = vmatprep.subr.bf16.mxu0 0
      %333 = vmatpush1.bf16.msra.mxu0 %v287
      %334 = vmatprep.subr.bf16.mxu0 0
      %335 = vmatpush1.bf16.msra.mxu0 %v288
      %336 = vmatprep.subr.bf16.mxu0 0
      %337 = vmatpush1.bf16.msra.mxu0 %v289
      %338 = vmatprep.subr.bf16.mxu0 0
      %339 = vmatpush1.bf16.msra.mxu0 %v310
      %340 = vmatprep.subr.bf16.mxu0 0
      %341 = vmatpush1.bf16.msra.mxu0 0
      %342 = vmatprep.subr.bf16.mxu0 0
      %343 = vmatpush1.bf16.msra.mxu0 0
      %344 = vmatprep.mubr.bf16.mxu0 %v306
      %345 = vmatmul.mubr.bf16.gmra.mrb[0].mxu0 %v220
      %v346 = vpop.f32.mrb[0].mxu0
      %v347 = vadd.f32 %v212, %v346
      %v348 = vpop.f32.mrb[0].mxu0
      %v349 = vpop.f32.mrb[0].mxu0
      %v350 = vadd.f32 %v212, %v349
      %v351 = vpop.f32.mrb[0].mxu0
      %352 = vdwg.mxu0
      %v353 = vpack.c.bf16 %v350, %v347
      %v355 = vunpack.c.l.b16 %v353
      %v356 = vunpack.c.h.b16 %v353
      %v357 = vpack.c.b16 %v355, %v355
      %v358 = vpack.c.b16 %v356, %v356
      %vm361 = vcmask 191488
      %362 = vst.msk [vmem:[%s175] sm:$0xf] %vm361, %v357
      %363 = vst.msk [vmem:[%s175 + $0x4] sm:$0xf] %vm361, %v358
      %s364 = smul.u32 2, %s14
      %p365 = scmp.lt.s32.totalorder %s364, 3
      %s366 = scalar_select %p365, %s364, 3
      %s367 = smul.addr %s366, 4
      %s368 = scalar_lea.vmem %s3, %s367
      // Predicated region
      $region33: #{net_forward.16} parent=31 // pred_check
        %p369 = pneg %p100
      $region34: #{net_forward.16} parent=31 // pred_check_branch
        %371 = sbr.rel (%p369) target = $region36
      $region35: #{net_forward.16} parent=31 // pred_region
        %s372 = smul.u32 2, %s14
      $region36: #{net_forward.16} parent=31 // pred_fallthru
        _
    $region32: #{net_forward.16} parent=5 // pred_fallthru
      _
    %p373 = scmp.le.s32.totalorder 2, %s9
    // Predicated region
    $region37: #{net_forward.16} parent=5 // pred_check
      %p374 = pneg %p373
    $region38: #{net_forward.16} parent=5 // pred_check_branch
      %376 = sbr.rel (%p374) target = $region40
    $region39: #{net_forward.16} parent=5 // pred_region
      %s377 = ssub.s32 %s9, 2
      // Predicated region
      $region41: #{net_forward.16} parent=39 // pred_check
        %p378 = pneg %p106
      $region42: #{net_forward.16} parent=39 // pred_check_branch
        %380 = sbr.rel (%p378) target = $region44
      $region43: #{net_forward.16} parent=39 // pred_region
        %s381 = smul.u32 2, %s15
        %p382 = scmp.lt.s32.totalorder %s381, 3
        %s383 = scalar_select %p382, %s381, 3
        %s384 = smul.addr %s383, 4
        %s385 = scalar_lea.vmem %s3, %s384
      $region44: #{net_forward.16} parent=39 // pred_fallthru
        _
    $region40: #{net_forward.16} parent=5 // pred_fallthru
      _
  $region6: #{net_forward.16} parent=0 // loop_footer
    %s13 = sadd.s32 1, %s9
  $region7: #{net_forward.16} parent=0 // loop_footer_branch
    %8 = sbr.rel target = $region3
  $region8: #{net_forward.16} parent=0 // loop_exit
    _

// kernel: net_forward.17
$region0: #{net_forward.17}
  #allocation0 [shape = 'u32[]', space=smem, size = 0x4, offset = 0x4, fixed_abs, tag = 'smem constant byte address 0x4 - core index']
  #allocation1 [shape = 'u32[144,128]{1,0:T(1,128)}', space=vmem, size = 0x12000, scoped, tag = 'internal scratch']
  %s0 = inlined_call_operand.vmem [shape: bf16[2,1408], index: 0, kind: input, shape index: {}]
  %s1 = inlined_call_operand.vmem [shape: bf16[1408,10], index: 1, kind: input, shape index: {}]
  %s2 = inlined_call_operand.vmem [shape: f32[1,10], index: 2, kind: input, shape index: {}]
  %s3 = inlined_call_operand.hbm [shape: f32[2,10], index: 3, kind: output, shape index: {}]
  %s4 = sld [smem:[#allocation0]]
  $region22: #{net_forward.17} parent=0
    _
  %s6 = ssub.s32 1, %s4
  %s7 = scalar_select 0, %s6, %s4
  $region1: #{net_forward.17} parent=0
    #allocation2 [shape = 'u8[1024]{0}', space=vmem, size = 0x400, scoped, tag = 'output window, operand 0, single buffered']
    #allocation3 [shape = 's32[1]{0}', space=sflag, size = 0x4, scoped, tag = 'scoped memory for net_forward.17']
    %8 = vsyncpa [#allocation3], 0
    // Predicated region
    $region2: #{net_forward.17} parent=1 // pred_check
      _
    $region3: #{net_forward.17} parent=1 // pred_check_branch
      %10 = sbr.rel (0) target = $region5
    $region4: #{net_forward.17} parent=1 // pred_region
      _
    $region5: #{net_forward.17} parent=1 // pred_fallthru
      _
    // Predicated region
    $region6: #{net_forward.17} parent=1 // pred_check
      _
    $region7: #{net_forward.17} parent=1 // pred_check_branch
      %12 = sbr.rel (0) target = $region9
    $region8: #{net_forward.17} parent=1 // pred_region
      _
    $region9: #{net_forward.17} parent=1 // pred_fallthru
      _
    // Predicated region
    $region10: #{net_forward.17} parent=1 // pred_check
      _
    $region11: #{net_forward.17} parent=1 // pred_check_branch
      %14 = sbr.rel (0) target = $region13
    $region12: #{net_forward.17} parent=1 // pred_region
      _
    $region13: #{net_forward.17} parent=1 // pred_fallthru
      _
    %v16 = vld [vmem:[%s0] sm:$0xff]
    %v17 = vld [vmem:[%s0 + $0x8] sm:$0x7]
    %v18 = vld [vmem:[%s1] sm:$0xf]
    %v19 = vld [vmem:[%s1 + $0x4] sm:$0xf]
    %v20 = vld [vmem:[%s1 + $0x8] sm:$0xf]
    %v21 = vld [vmem:[%s1 + $0xc] sm:$0xf]
    %v22 = vld [vmem:[%s1 + $0x10] sm:$0xf]
    %v23 = vld [vmem:[%s1 + $0x14] sm:$0xf]
    %v24 = vld [vmem:[%s1 + $0x18] sm:$0xf]
    %v25 = vld [vmem:[%s1 + $0x1c] sm:$0xf]
    %v26 = vld [vmem:[%s1 + $0x20] sm:$0xf]
    %v27 = vld [vmem:[%s1 + $0x24] sm:$0xf]
    %v28 = vld [vmem:[%s1 + $0x28] sm:$0xf]
    %v29 = vld [vmem:[%s1 + $0x2c] sm:$0xf]
    %v30 = vld [vmem:[%s1 + $0x30] sm:$0xf]
    %v31 = vld [vmem:[%s1 + $0x34] sm:$0xf]
    %v32 = vld [vmem:[%s1 + $0x38] sm:$0xf]
    %v33 = vld [vmem:[%s1 + $0x3c] sm:$0xf]
    %v34 = vld [vmem:[%s1 + $0x40] sm:$0xf]
    %v35 = vld [vmem:[%s1 + $0x44] sm:$0xf]
    %v36 = vld [vmem:[%s1 + $0x48] sm:$0xf]
    %v37 = vld [vmem:[%s1 + $0x4c] sm:$0xf]
    %v38 = vld [vmem:[%s1 + $0x50] sm:$0xf]
    %v39 = vld [vmem:[%s1 + $0x54] sm:$0xf]
    %v40 = vld [vmem:[%s1 + $0x58] sm:$0xf]
    %v41 = vld [vmem:[%s1 + $0x5c] sm:$0xf]
    %v42 = vld [vmem:[%s1 + $0x60] sm:$0xf]
    %v43 = vld [vmem:[%s1 + $0x64] sm:$0xf]
    %v44 = vld [vmem:[%s1 + $0x68] sm:$0xf]
    %v45 = vld [vmem:[%s1 + $0x6c] sm:$0xf]
    %v46 = vld [vmem:[%s1 + $0x70] sm:$0xf]
    %v47 = vld [vmem:[%s1 + $0x74] sm:$0xf]
    %v48 = vld [vmem:[%s1 + $0x78] sm:$0xf]
    %v49 = vld [vmem:[%s1 + $0x7c] sm:$0xf]
    %v50 = vld [vmem:[%s1 + $0x80] sm:$0xf]
    %v51 = vld [vmem:[%s1 + $0x84] sm:$0xf]
    %v52 = vld [vmem:[%s1 + $0x88] sm:$0xf]
    %v53 = vld [vmem:[%s1 + $0x8c] sm:$0xf]
    %v54 = vld [vmem:[%s1 + $0x90] sm:$0xf]
    %v55 = vld [vmem:[%s1 + $0x94] sm:$0xf]
    %v56 = vld [vmem:[%s1 + $0x98] sm:$0xf]
    %v57 = vld [vmem:[%s1 + $0x9c] sm:$0xf]
    %v58 = vld [vmem:[%s1 + $0xa0] sm:$0xf]
    %v59 = vld [vmem:[%s1 + $0xa4] sm:$0xf]
    %v60 = vld [vmem:[%s1 + $0xa8] sm:$0xf]
    %v61 = vld [vmem:[%s1 + $0xac] sm:$0xf]
    %v62 = vld [vmem:[%s1 + $0xb0] sm:$0xf]
    %v63 = vld [vmem:[%s1 + $0xb4] sm:$0xf]
    %v64 = vld [vmem:[%s1 + $0xb8] sm:$0xf]
    %v65 = vld [vmem:[%s1 + $0xbc] sm:$0xf]
    %v66 = vld [vmem:[%s1 + $0xc0] sm:$0xf]
    %v67 = vld [vmem:[%s1 + $0xc4] sm:$0xf]
    %v68 = vld [vmem:[%s1 + $0xc8] sm:$0xf]
    %v69 = vld [vmem:[%s1 + $0xcc] sm:$0xf]
    %v70 = vld [vmem:[%s1 + $0xd0] sm:$0xf]
    %v71 = vld [vmem:[%s1 + $0xd4] sm:$0xf]
    %v72 = vld [vmem:[%s1 + $0xd8] sm:$0xf]
    %v73 = vld [vmem:[%s1 + $0xdc] sm:$0xf]
    %v74 = vld [vmem:[%s1 + $0xe0] sm:$0xf]
    %v75 = vld [vmem:[%s1 + $0xe4] sm:$0xf]
    %v76 = vld [vmem:[%s1 + $0xe8] sm:$0xf]
    %v77 = vld [vmem:[%s1 + $0xec] sm:$0xf]
    %v78 = vld [vmem:[%s1 + $0xf0] sm:$0xf]
    %v79 = vld [vmem:[%s1 + $0xf4] sm:$0xf]
    %v80 = vld [vmem:[%s1 + $0xf8] sm:$0xf]
    %v81 = vld [vmem:[%s1 + $0xfc] sm:$0xf]
    %v82 = vld [vmem:[%s1 + $0x100] sm:$0xf]
    %v83 = vld [vmem:[%s1 + $0x104] sm:$0xf]
    %v84 = vld [vmem:[%s1 + $0x108] sm:$0xf]
    %v85 = vld [vmem:[%s1 + $0x10c] sm:$0xf]
    %v86 = vld [vmem:[%s1 + $0x110] sm:$0xf]
    %v87 = vld [vmem:[%s1 + $0x114] sm:$0xf]
    %v88 = vld [vmem:[%s1 + $0x118] sm:$0xf]
    %v89 = vld [vmem:[%s1 + $0x11c] sm:$0xf]
    %v90 = vld [vmem:[%s1 + $0x120] sm:$0xf]
    %v91 = vld [vmem:[%s1 + $0x124] sm:$0xf]
    %v92 = vld [vmem:[%s1 + $0x128] sm:$0xf]
    %v93 = vld [vmem:[%s1 + $0x12c] sm:$0xf]
    %v94 = vld [vmem:[%s1 + $0x130] sm:$0xf]
    %v95 = vld [vmem:[%s1 + $0x134] sm:$0xf]
    %v96 = vld [vmem:[%s1 + $0x138] sm:$0xf]
    %v97 = vld [vmem:[%s1 + $0x13c] sm:$0xf]
    %v98 = vld [vmem:[%s1 + $0x140] sm:$0xf]
    %v99 = vld [vmem:[%s1 + $0x144] sm:$0xf]
    %v100 = vld [vmem:[%s1 + $0x148] sm:$0xf]
    %v101 = vld [vmem:[%s1 + $0x14c] sm:$0xf]
    %v102 = vld [vmem:[%s1 + $0x150] sm:$0xf]
    %v103 = vld [vmem:[%s1 + $0x154] sm:$0xf]
    %v104 = vld [vmem:[%s1 + $0x158] sm:$0xf]
    %v105 = vld [vmem:[%s1 + $0x15c] sm:$0xf]
    %v106 = vld [vmem:[%s1 + $0x160] sm:$0xf]
    %v107 = vld [vmem:[%s1 + $0x164] sm:$0xf]
    %v108 = vld [vmem:[%s1 + $0x168] sm:$0xf]
    %v109 = vld [vmem:[%s1 + $0x16c] sm:$0xf]
    %v110 = vld [vmem:[%s1 + $0x170] sm:$0xf]
    %v111 = vld [vmem:[%s1 + $0x174] sm:$0xf]
    %v112 = vld [vmem:[%s1 + $0x178] sm:$0xf]
    %v113 = vld [vmem:[%s1 + $0x17c] sm:$0xf]
    %v114 = vld [vmem:[%s1 + $0x180] sm:$0xf]
    %v115 = vld [vmem:[%s1 + $0x184] sm:$0xf]
    %v116 = vld [vmem:[%s1 + $0x188] sm:$0xf]
    %v117 = vld [vmem:[%s1 + $0x18c] sm:$0xf]
    %v118 = vld [vmem:[%s1 + $0x190] sm:$0xf]
    %v119 = vld [vmem:[%s1 + $0x194] sm:$0xf]
    %v120 = vld [vmem:[%s1 + $0x198] sm:$0xf]
    %v121 = vld [vmem:[%s1 + $0x19c] sm:$0xf]
    %v122 = vld [vmem:[%s1 + $0x1a0] sm:$0xf]
    %v123 = vld [vmem:[%s1 + $0x1a4] sm:$0xf]
    %v124 = vld [vmem:[%s1 + $0x1a8] sm:$0xf]
    %v125 = vld [vmem:[%s1 + $0x1ac] sm:$0xf]
    %v126 = vld [vmem:[%s1 + $0x1b0] sm:$0xf]
    %v127 = vld [vmem:[%s1 + $0x1b4] sm:$0xf]
    %v128 = vld [vmem:[%s1 + $0x1b8] sm:$0xf]
    %v129 = vld [vmem:[%s1 + $0x1bc] sm:$0xf]
    %v130 = vld [vmem:[%s1 + $0x1c0] sm:$0xf]
    %v131 = vld [vmem:[%s1 + $0x1c4] sm:$0xf]
    %v132 = vld [vmem:[%s1 + $0x1c8] sm:$0xf]
    %v133 = vld [vmem:[%s1 + $0x1cc] sm:$0xf]
    %v134 = vld [vmem:[%s1 + $0x1d0] sm:$0xf]
    %v135 = vld [vmem:[%s1 + $0x1d4] sm:$0xf]
    %v136 = vld [vmem:[%s1 + $0x1d8] sm:$0xf]
    %v137 = vld [vmem:[%s1 + $0x1dc] sm:$0xf]
    %v138 = vld [vmem:[%s1 + $0x1e0] sm:$0xf]
    %v139 = vld [vmem:[%s1 + $0x1e4] sm:$0xf]
    %v140 = vld [vmem:[%s1 + $0x1e8] sm:$0xf]
    %v141 = vld [vmem:[%s1 + $0x1ec] sm:$0xf]
    %v142 = vld [vmem:[%s1 + $0x1f0] sm:$0xf]
    %v143 = vld [vmem:[%s1 + $0x1f4] sm:$0xf]
    %v144 = vld [vmem:[%s1 + $0x1f8] sm:$0xf]
    %v145 = vld [vmem:[%s1 + $0x1fc] sm:$0xf]
    %v146 = vld [vmem:[%s1 + $0x200] sm:$0xf]
    %v147 = vld [vmem:[%s1 + $0x204] sm:$0xf]
    %v148 = vld [vmem:[%s1 + $0x208] sm:$0xf]
    %v149 = vld [vmem:[%s1 + $0x20c] sm:$0xf]
    %v150 = vld [vmem:[%s1 + $0x210] sm:$0xf]
    %v151 = vld [vmem:[%s1 + $0x214] sm:$0xf]
    %v152 = vld [vmem:[%s1 + $0x218] sm:$0xf]
    %v153 = vld [vmem:[%s1 + $0x21c] sm:$0xf]
    %v154 = vld [vmem:[%s1 + $0x220] sm:$0xf]
    %v155 = vld [vmem:[%s1 + $0x224] sm:$0xf]
    %v156 = vld [vmem:[%s1 + $0x228] sm:$0xf]
    %v157 = vld [vmem:[%s1 + $0x22c] sm:$0xf]
    %v158 = vld [vmem:[%s1 + $0x230] sm:$0xf]
    %v159 = vld [vmem:[%s1 + $0x234] sm:$0xf]
    %v160 = vld [vmem:[%s1 + $0x238] sm:$0xf]
    %v161 = vld [vmem:[%s1 + $0x23c] sm:$0xf]
    %v162 = vld [vmem:[%s1 + $0x240] sm:$0xf]
    %v163 = vld [vmem:[%s1 + $0x244] sm:$0xf]
    %v164 = vld [vmem:[%s1 + $0x248] sm:$0xf]
    %v165 = vld [vmem:[%s1 + $0x24c] sm:$0xf]
    %v166 = vld [vmem:[%s1 + $0x250] sm:$0xf]
    %v167 = vld [vmem:[%s1 + $0x254] sm:$0xf]
    %v168 = vld [vmem:[%s1 + $0x258] sm:$0xf]
    %v169 = vld [vmem:[%s1 + $0x25c] sm:$0xf]
    %v170 = vld [vmem:[%s1 + $0x260] sm:$0xf]
    %v171 = vld [vmem:[%s1 + $0x264] sm:$0xf]
    %v172 = vld [vmem:[%s1 + $0x268] sm:$0xf]
    %v173 = vld [vmem:[%s1 + $0x26c] sm:$0xf]
    %v174 = vld [vmem:[%s1 + $0x270] sm:$0xf]
    %v175 = vld [vmem:[%s1 + $0x274] sm:$0xf]
    %v176 = vld [vmem:[%s1 + $0x278] sm:$0xf]
    %v177 = vld [vmem:[%s1 + $0x27c] sm:$0xf]
    %v178 = vld [vmem:[%s1 + $0x280] sm:$0xf]
    %v179 = vld [vmem:[%s1 + $0x284] sm:$0xf]
    %v180 = vld [vmem:[%s1 + $0x288] sm:$0xf]
    %v181 = vld [vmem:[%s1 + $0x28c] sm:$0xf]
    %v182 = vld [vmem:[%s1 + $0x290] sm:$0xf]
    %v183 = vld [vmem:[%s1 + $0x294] sm:$0xf]
    %v184 = vld [vmem:[%s1 + $0x298] sm:$0xf]
    %v185 = vld [vmem:[%s1 + $0x29c] sm:$0xf]
    %v186 = vld [vmem:[%s1 + $0x2a0] sm:$0xf]
    %v187 = vld [vmem:[%s1 + $0x2a4] sm:$0xf]
    %v188 = vld [vmem:[%s1 + $0x2a8] sm:$0xf]
    %v189 = vld [vmem:[%s1 + $0x2ac] sm:$0xf]
    %v190 = vld [vmem:[%s1 + $0x2b0] sm:$0xf]
    %v191 = vld [vmem:[%s1 + $0x2b4] sm:$0xf]
    %v192 = vld [vmem:[%s1 + $0x2b8] sm:$0xf]
    %v193 = vld [vmem:[%s1 + $0x2bc] sm:$0xf]
    %v194 = vld [vmem:[%s2] sm:$0x1]
    %v196 = vlaneseq
    %v197 = vshrl.u32 %v196, 7
    %v198 = vsub.s32 0, %v197
    %v199 = vrot.slane %v194, %v198
    %v203 = vcombine.high %v16, %v16
    %v205 = vunpack.c.l.s4 1966171168
    %v206 = vunpack.c.0.s8 %v205
    %v207 = vlaneseq
    %v208 = vshrl.u32 %v207, 7
    %v209 = vsub.s32 %v206, %v208
    %v210 = vrot.slane %v16, %v209
    %v212 = vunpack.c.l.s4 1966171168
    %v213 = vunpack.c.0.s8 %v212
    %v214 = vlaneseq
    %v215 = vshrl.u32 %v214, 7
    %v216 = vsub.s32 %v213, %v215
    %v217 = vrot.slane %v203, %v216
    %v218 = vcombine.high %v210, %v210
    %v219 = vcombine.high %v217, %v217
    %v221 = vunpack.c.l.s4 1966171168
    %v222 = vunpack.c.0.s8 %v221
    %v223 = vlaneseq
    %v224 = vshrl.u32 %v223, 7
    %v225 = vsub.s32 %v222, %v224
    %v226 = vrot.slane %v210, %v225
    %v228 = vunpack.c.l.s4 1966171168
    %v229 = vunpack.c.0.s8 %v228
    %v230 = vlaneseq
    %v231 = vshrl.u32 %v230, 7
    %v232 = vsub.s32 %v229, %v231
    %v233 = vrot.slane %v217, %v232
    %v235 = vunpack.c.l.s4 1966171168
    %v236 = vunpack.c.0.s8 %v235
    %v237 = vlaneseq
    %v238 = vshrl.u32 %v237, 7
    %v239 = vsub.s32 %v236, %v238
    %v240 = vrot.slane %v218, %v239
    %v242 = vunpack.c.l.s4 1966171168
    %v243 = vunpack.c.0.s8 %v242
    %v244 = vlaneseq
    %v245 = vshrl.u32 %v244, 7
    %v246 = vsub.s32 %v243, %v245
    %v247 = vrot.slane %v219, %v246
    %v248 = vcombine.high %v226, %v226
    %v249 = vcombine.high %v233, %v233
    %v250 = vcombine.high %v240, %v240
    %v251 = vcombine.high %v247, %v247
    %v253 = vunpack.c.l.s4 1966171168
    %v254 = vunpack.c.0.s8 %v253
    %v255 = vlaneseq
    %v256 = vshrl.u32 %v255, 7
    %v257 = vsub.s32 %v254, %v256
    %v258 = vrot.slane %v17, %v257
    %v259 = vcombine.high %v258, %v258
    %v261 = vunpack.c.l.s4 1966171168
    %v262 = vunpack.c.0.s8 %v261
    %v263 = vlaneseq
    %v264 = vshrl.u32 %v263, 7
    %v265 = vsub.s32 %v262, %v264
    %v266 = vrot.slane %v258, %v265
    %v268 = vunpack.c.l.s4 1966171168
    %v269 = vunpack.c.0.s8 %v268
    %v270 = vlaneseq
    %v271 = vshrl.u32 %v270, 7
    %v272 = vsub.s32 %v269, %v271
    %v273 = vrot.slane %v259, %v272
    %v274 = vcombine.high %v266, %v266
    %v462 = vunpack.c.l.b16 %v18
    %v463 = vunpack.c.l.b16 %v19
    %v464 = vunpack.c.l.b16 %v20
    %v465 = vunpack.c.l.b16 %v21
    %v466 = vunpack.c.l.b16 %v22
    %v467 = vunpack.c.l.b16 %v23
    %v468 = vunpack.c.l.b16 %v24
    %v469 = vunpack.c.l.b16 %v25
    %v470 = vunpack.c.l.b16 %v26
    %v471 = vunpack.c.l.b16 %v27
    %v472 = vunpack.c.l.b16 %v28
    %v473 = vunpack.c.l.b16 %v29
    %v474 = vunpack.c.l.b16 %v30
    %v475 = vunpack.c.l.b16 %v31
    %v476 = vunpack.c.l.b16 %v32
    %v477 = vunpack.c.l.b16 %v33
    %v478 = vunpack.c.l.b16 %v34
    %v479 = vunpack.c.l.b16 %v35
    %v480 = vunpack.c.l.b16 %v36
    %v481 = vunpack.c.l.b16 %v37
    %v482 = vunpack.c.l.b16 %v38
    %v483 = vunpack.c.l.b16 %v39
    %v484 = vunpack.c.l.b16 %v40
    %v485 = vunpack.c.l.b16 %v41
    %v486 = vunpack.c.l.b16 %v42
    %v487 = vunpack.c.l.b16 %v43
    %v488 = vunpack.c.l.b16 %v44
    %v489 = vunpack.c.l.b16 %v45
    %v490 = vunpack.c.l.b16 %v46
    %v491 = vunpack.c.l.b16 %v47
    %v492 = vunpack.c.l.b16 %v48
    %v493 = vunpack.c.l.b16 %v49
    %v494 = vunpack.c.l.b16 %v50
    %v495 = vunpack.c.l.b16 %v51
    %v496 = vunpack.c.l.b16 %v52
    %v497 = vunpack.c.l.b16 %v53
    %v498 = vunpack.c.l.b16 %v54
    %v499 = vunpack.c.l.b16 %v55
    %v500 = vunpack.c.l.b16 %v56
    %v501 = vunpack.c.l.b16 %v57
    %v502 = vunpack.c.l.b16 %v58
    %v503 = vunpack.c.l.b16 %v59
    %v504 = vunpack.c.l.b16 %v60
    %v505 = vunpack.c.l.b16 %v61
    %v506 = vunpack.c.l.b16 %v62
    %v507 = vunpack.c.l.b16 %v63
    %v508 = vunpack.c.l.b16 %v64
    %v509 = vunpack.c.l.b16 %v65
    %v510 = vunpack.c.l.b16 %v66
    %v511 = vunpack.c.l.b16 %v67
    %v512 = vunpack.c.l.b16 %v68
    %v513 = vunpack.c.l.b16 %v69
    %v514 = vunpack.c.l.b16 %v70
    %v515 = vunpack.c.l.b16 %v71
    %v516 = vunpack.c.l.b16 %v72
    %v517 = vunpack.c.l.b16 %v73
    %v518 = vunpack.c.l.b16 %v74
    %v519 = vunpack.c.l.b16 %v75
    %v520 = vunpack.c.l.b16 %v76
    %v521 = vunpack.c.l.b16 %v77
    %v522 = vunpack.c.l.b16 %v78
    %v523 = vunpack.c.l.b16 %v79
    %v524 = vunpack.c.l.b16 %v80
    %v525 = vunpack.c.l.b16 %v81
    %v526 = vunpack.c.l.b16 %v82
    %v527 = vunpack.c.l.b16 %v83
    %v528 = vunpack.c.l.b16 %v84
    %v529 = vunpack.c.l.b16 %v85
    %v530 = vunpack.c.l.b16 %v86
    %v531 = vunpack.c.l.b16 %v87
    %v532 = vunpack.c.l.b16 %v88
    %v533 = vunpack.c.l.b16 %v89
    %v534 = vunpack.c.l.b16 %v90
    %v535 = vunpack.c.l.b16 %v91
    %v536 = vunpack.c.l.b16 %v92
    %v537 = vunpack.c.l.b16 %v93
    %v538 = vunpack.c.l.b16 %v94
    %v539 = vunpack.c.l.b16 %v95
    %v540 = vunpack.c.l.b16 %v96
    %v541 = vunpack.c.l.b16 %v97
    %v542 = vunpack.c.l.b16 %v98
    %v543 = vunpack.c.l.b16 %v99
    %v544 = vunpack.c.l.b16 %v100
    %v545 = vunpack.c.l.b16 %v101
    %v546 = vunpack.c.l.b16 %v102
    %v547 = vunpack.c.l.b16 %v103
    %v548 = vunpack.c.l.b16 %v104
    %v549 = vunpack.c.l.b16 %v105
    %v550 = vunpack.c.l.b16 %v106
    %v551 = vunpack.c.l.b16 %v107
    %v552 = vunpack.c.l.b16 %v108
    %v553 = vunpack.c.l.b16 %v109
    %v554 = vunpack.c.l.b16 %v110
    %v555 = vunpack.c.l.b16 %v111
    %v556 = vunpack.c.l.b16 %v112
    %v557 = vunpack.c.l.b16 %v113
    %v558 = vunpack.c.l.b16 %v114
    %v559 = vunpack.c.l.b16 %v115
    %v560 = vunpack.c.l.b16 %v116
    %v561 = vunpack.c.l.b16 %v117
    %v562 = vunpack.c.l.b16 %v118
    %v563 = vunpack.c.l.b16 %v119
    %v564 = vunpack.c.l.b16 %v120
    %v565 = vunpack.c.l.b16 %v121
    %v566 = vunpack.c.l.b16 %v122
    %v567 = vunpack.c.l.b16 %v123
    %v568 = vunpack.c.l.b16 %v124
    %v569 = vunpack.c.l.b16 %v125
    %v570 = vunpack.c.l.b16 %v126
    %v571 = vunpack.c.l.b16 %v127
    %v572 = vunpack.c.l.b16 %v128
    %v573 = vunpack.c.l.b16 %v129
    %v574 = vunpack.c.l.b16 %v130
    %v575 = vunpack.c.l.b16 %v131
    %v576 = vunpack.c.l.b16 %v132
    %v577 = vunpack.c.l.b16 %v133
    %v578 = vunpack.c.l.b16 %v134
    %v579 = vunpack.c.l.b16 %v135
    %v580 = vunpack.c.l.b16 %v136
    %v581 = vunpack.c.l.b16 %v137
    %v582 = vunpack.c.l.b16 %v138
    %v583 = vunpack.c.l.b16 %v139
    %v584 = vunpack.c.l.b16 %v140
    %v585 = vunpack.c.l.b16 %v141
    %v586 = vunpack.c.l.b16 %v142
    %v587 = vunpack.c.l.b16 %v143
    %v588 = vunpack.c.l.b16 %v144
    %v589 = vunpack.c.l.b16 %v145
    %v590 = vunpack.c.l.b16 %v146
    %v591 = vunpack.c.l.b16 %v147
    %v592 = vunpack.c.l.b16 %v148
    %v593 = vunpack.c.l.b16 %v149
    %v594 = vunpack.c.l.b16 %v150
    %v595 = vunpack.c.l.b16 %v151
    %v596 = vunpack.c.l.b16 %v152
    %v597 = vunpack.c.l.b16 %v153
    %v598 = vunpack.c.l.b16 %v154
    %v599 = vunpack.c.l.b16 %v155
    %v600 = vunpack.c.l.b16 %v156
    %v601 = vunpack.c.l.b16 %v157
    %v602 = vunpack.c.l.b16 %v158
    %v603 = vunpack.c.l.b16 %v159
    %v604 = vunpack.c.l.b16 %v160
    %v605 = vunpack.c.l.b16 %v161
    %v606 = vunpack.c.l.b16 %v162
    %v607 = vunpack.c.l.b16 %v163
    %v608 = vunpack.c.l.b16 %v164
    %v609 = vunpack.c.l.b16 %v165
    %v610 = vunpack.c.l.b16 %v166
    %v611 = vunpack.c.l.b16 %v167
    %v612 = vunpack.c.l.b16 %v168
    %v613 = vunpack.c.l.b16 %v169
    %v614 = vunpack.c.l.b16 %v170
    %v615 = vunpack.c.l.b16 %v171
    %v616 = vunpack.c.l.b16 %v172
    %v617 = vunpack.c.l.b16 %v173
    %v618 = vunpack.c.l.b16 %v174
    %v619 = vunpack.c.l.b16 %v175
    %v620 = vunpack.c.l.b16 %v176
    %v621 = vunpack.c.l.b16 %v177
    %v622 = vunpack.c.l.b16 %v178
    %v623 = vunpack.c.l.b16 %v179
    %v624 = vunpack.c.l.b16 %v180
    %v625 = vunpack.c.l.b16 %v181
    %v626 = vunpack.c.l.b16 %v182
    %v627 = vunpack.c.l.b16 %v183
    %v628 = vunpack.c.l.b16 %v184
    %v629 = vunpack.c.l.b16 %v185
    %v630 = vunpack.c.l.b16 %v186
    %v631 = vunpack.c.l.b16 %v187
    %v632 = vunpack.c.l.b16 %v188
    %v633 = vunpack.c.l.b16 %v189
    %v634 = vunpack.c.l.b16 %v190
    %v635 = vunpack.c.l.b16 %v191
    %v636 = vunpack.c.l.b16 %v192
    %v637 = vunpack.c.l.b16 %v193
    %v638 = vpack.c.b16 %v463, %v462
    %v639 = vpack.c.b16 %v465, %v464
    %v640 = vpack.c.b16 %v467, %v466
    %v641 = vpack.c.b16 %v469, %v468
    %v642 = vpack.c.b16 %v471, %v470
    %v643 = vpack.c.b16 %v473, %v472
    %v644 = vpack.c.b16 %v475, %v474
    %v645 = vpack.c.b16 %v477, %v476
    %v646 = vpack.c.b16 %v479, %v478
    %v647 = vpack.c.b16 %v481, %v480
    %v648 = vpack.c.b16 %v483, %v482
    %v649 = vpack.c.b16 %v485, %v484
    %v650 = vpack.c.b16 %v487, %v486
    %v651 = vpack.c.b16 %v489, %v488
    %v652 = vpack.c.b16 %v491, %v490
    %v653 = vpack.c.b16 %v493, %v492
    %v654 = vpack.c.b16 %v495, %v494
    %v655 = vpack.c.b16 %v497, %v496
    %v656 = vpack.c.b16 %v499, %v498
    %v657 = vpack.c.b16 %v501, %v500
    %v658 = vpack.c.b16 %v503, %v502
    %v659 = vpack.c.b16 %v505, %v504
    %v660 = vpack.c.b16 %v507, %v506
    %v661 = vpack.c.b16 %v509, %v508
    %v662 = vpack.c.b16 %v511, %v510
    %v663 = vpack.c.b16 %v513, %v512
    %v664 = vpack.c.b16 %v515, %v514
    %v665 = vpack.c.b16 %v517, %v516
    %v666 = vpack.c.b16 %v519, %v518
    %v667 = vpack.c.b16 %v521, %v520
    %v668 = vpack.c.b16 %v523, %v522
    %v669 = vpack.c.b16 %v525, %v524
    %v670 = vpack.c.b16 %v527, %v526
    %v671 = vpack.c.b16 %v529, %v528
    %v672 = vpack.c.b16 %v531, %v530
    %v673 = vpack.c.b16 %v533, %v532
    %v674 = vpack.c.b16 %v535, %v534
    %v675 = vpack.c.b16 %v537, %v536
    %v676 = vpack.c.b16 %v539, %v538
    %v677 = vpack.c.b16 %v541, %v540
    %v678 = vpack.c.b16 %v543, %v542
    %v679 = vpack.c.b16 %v545, %v544
    %v680 = vpack.c.b16 %v547, %v546
    %v681 = vpack.c.b16 %v549, %v548
    %v682 = vpack.c.b16 %v551, %v550
    %v683 = vpack.c.b16 %v553, %v552
    %v684 = vpack.c.b16 %v555, %v554
    %v685 = vpack.c.b16 %v557, %v556
    %v686 = vpack.c.b16 %v559, %v558
    %v687 = vpack.c.b16 %v561, %v560
    %v688 = vpack.c.b16 %v563, %v562
    %v689 = vpack.c.b16 %v565, %v564
    %v690 = vpack.c.b16 %v567, %v566
    %v691 = vpack.c.b16 %v569, %v568
    %v692 = vpack.c.b16 %v571, %v570
    %v693 = vpack.c.b16 %v573, %v572
    %v694 = vpack.c.b16 %v575, %v574
    %v695 = vpack.c.b16 %v577, %v576
    %v696 = vpack.c.b16 %v579, %v578
    %v697 = vpack.c.b16 %v581, %v580
    %v698 = vpack.c.b16 %v583, %v582
    %v699 = vpack.c.b16 %v585, %v584
    %v700 = vpack.c.b16 %v587, %v586
    %v701 = vpack.c.b16 %v589, %v588
    %v702 = vpack.c.b16 %v591, %v590
    %v703 = vpack.c.b16 %v593, %v592
    %v704 = vpack.c.b16 %v595, %v594
    %v705 = vpack.c.b16 %v597, %v596
    %v706 = vpack.c.b16 %v599, %v598
    %v707 = vpack.c.b16 %v601, %v600
    %v708 = vpack.c.b16 %v603, %v602
    %v709 = vpack.c.b16 %v605, %v604
    %v710 = vpack.c.b16 %v607, %v606
    %v711 = vpack.c.b16 %v609, %v608
    %v712 = vpack.c.b16 %v611, %v610
    %v713 = vpack.c.b16 %v613, %v612
    %v714 = vpack.c.b16 %v615, %v614
    %v715 = vpack.c.b16 %v617, %v616
    %v716 = vpack.c.b16 %v619, %v618
    %v717 = vpack.c.b16 %v621, %v620
    %v718 = vpack.c.b16 %v623, %v622
    %v719 = vpack.c.b16 %v625, %v624
    %v720 = vpack.c.b16 %v627, %v626
    %v721 = vpack.c.b16 %v629, %v628
    %v722 = vpack.c.b16 %v631, %v630
    %v723 = vpack.c.b16 %v633, %v632
    %v724 = vpack.c.b16 %v635, %v634
    %v725 = vpack.c.b16 %v637, %v636
    %814 = vmatprep.subr.bf16.mxu0 0
    %815 = vmatpush1.bf16.msra.mxu0 %v638
    %816 = vmatprep.subr.bf16.mxu0 0
    %817 = vmatpush1.bf16.msra.mxu0 %v639
    %818 = vmatprep.subr.bf16.mxu0 0
    %819 = vmatpush1.bf16.msra.mxu0 %v640
    %820 = vmatprep.subr.bf16.mxu0 0
    %821 = vmatpush1.bf16.msra.mxu0 %v641
    %822 = vmatprep.subr.bf16.mxu0 0
    %823 = vmatpush1.bf16.msra.mxu0 %v642
    %824 = vmatprep.subr.bf16.mxu0 0
    %825 = vmatpush1.bf16.msra.mxu0 %v643
    %826 = vmatprep.subr.bf16.mxu0 0
    %827 = vmatpush1.bf16.msra.mxu0 %v644
    %828 = vmatprep.subr.bf16.mxu0 0
    %829 = vmatpush1.bf16.msra.mxu0 %v645
    %830 = vmatprep.subr.bf16.mxu0 0
    %831 = vmatpush1.bf16.msra.mxu0 %v646
    %832 = vmatprep.subr.bf16.mxu0 0
    %833 = vmatpush1.bf16.msra.mxu0 %v647
    %834 = vmatprep.subr.bf16.mxu0 0
    %835 = vmatpush1.bf16.msra.mxu0 %v648
    %836 = vmatprep.subr.bf16.mxu0 0
    %837 = vmatpush1.bf16.msra.mxu0 %v649
    %838 = vmatprep.subr.bf16.mxu0 0
    %839 = vmatpush1.bf16.msra.mxu0 %v650
    %840 = vmatprep.subr.bf16.mxu0 0
    %841 = vmatpush1.bf16.msra.mxu0 %v651
    %842 = vmatprep.subr.bf16.mxu0 0
    %843 = vmatpush1.bf16.msra.mxu0 %v652
    %844 = vmatprep.subr.bf16.mxu0 0
    %845 = vmatpush1.bf16.msra.mxu0 %v653
    %846 = vmatprep.mubr.bf16.mxu0 %v240
    %847 = vmatmul.mubr.bf16.gmra.mrb[0].mxu0 %v226
    %v848 = vpop.f32.mrb[0].mxu0
    %v849 = vadd.f32 %v199, %v848
    %v850 = vpop.f32.mrb[0].mxu0
    %v851 = vpop.f32.mrb[0].mxu0
    %v852 = vpop.f32.mrb[0].mxu0
    %853 = vdwg.mxu0
    %854 = vmatprep.subr.bf16.mxu0 0
    %855 = vmatpush1.bf16.msra.mxu0 %v654
    %856 = vmatprep.subr.bf16.mxu0 0
    %857 = vmatpush1.bf16.msra.mxu0 %v655
    %858 = vmatprep.subr.bf16.mxu0 0
    %859 = vmatpush1.bf16.msra.mxu0 %v656
    %860 = vmatprep.subr.bf16.mxu0 0
    %861 = vmatpush1.bf16.msra.mxu0 %v657
    %862 = vmatprep.subr.bf16.mxu0 0
    %863 = vmatpush1.bf16.msra.mxu0 %v658
    %864 = vmatprep.subr.bf16.mxu0 0
    %865 = vmatpush1.bf16.msra.mxu0 %v659
    %866 = vmatprep.subr.bf16.mxu0 0
    %867 = vmatpush1.bf16.msra.mxu0 %v660
    %868 = vmatprep.subr.bf16.mxu0 0
    %869 = vmatpush1.bf16.msra.mxu0 %v661
    %870 = vmatprep.subr.bf16.mxu0 0
    %871 = vmatpush1.bf16.msra.mxu0 %v662
    %872 = vmatprep.subr.bf16.mxu0 0
    %873 = vmatpush1.bf16.msra.mxu0 %v663
    %874 = vmatprep.subr.bf16.mxu0 0
    %875 = vmatpush1.bf16.msra.mxu0 %v664
    %876 = vmatprep.subr.bf16.mxu0 0
    %877 = vmatpush1.bf16.msra.mxu0 %v665
    %878 = vmatprep.subr.bf16.mxu0 0
    %879 = vmatpush1.bf16.msra.mxu0 %v666
    %880 = vmatprep.subr.bf16.mxu0 0
    %881 = vmatpush1.bf16.msra.mxu0 %v667
    %882 = vmatprep.subr.bf16.mxu0 0
    %883 = vmatpush1.bf16.msra.mxu0 %v668
    %884 = vmatprep.subr.bf16.mxu0 0
    %885 = vmatpush1.bf16.msra.mxu0 %v669
    %886 = vmatprep.mubr.bf16.mxu0 %v250
    %887 = vmatmul.mubr.bf16.gmra.mrb[0].mxu0 %v248
    %v888 = vpop.f32.mrb[0].mxu0
    %v889 = vadd.f32 %v849, %v888
    %v890 = vpop.f32.mrb[0].mxu0
    %v891 = vpop.f32.mrb[0].mxu0
    %v892 = vpop.f32.mrb[0].mxu0
    %893 = vdwg.mxu0
    %894 = vmatprep.subr.bf16.mxu0 0
    %895 = vmatpush1.bf16.msra.mxu0 %v670
    %896 = vmatprep.subr.bf16.mxu0 0
    %897 = vmatpush1.bf16.msra.mxu0 %v671
    %898 = vmatprep.subr.bf16.mxu0 0
    %899 = vmatpush1.bf16.msra.mxu0 %v672
    %900 = vmatprep.subr.bf16.mxu0 0
    %901 = vmatpush1.bf16.msra.mxu0 %v673
    %902 = vmatprep.subr.bf16.mxu0 0
    %903 = vmatpush1.bf16.msra.mxu0 %v674
    %904 = vmatprep.subr.bf16.mxu0 0
    %905 = vmatpush1.bf16.msra.mxu0 %v675
    %906 = vmatprep.subr.bf16.mxu0 0
    %907 = vmatpush1.bf16.msra.mxu0 %v676
    %908 = vmatprep.subr.bf16.mxu0 0
    %909 = vmatpush1.bf16.msra.mxu0 %v677
    %910 = vmatprep.subr.bf16.mxu0 0
    %911 = vmatpush1.bf16.msra.mxu0 %v678
    %912 = vmatprep.subr.bf16.mxu0 0
    %913 = vmatpush1.bf16.msra.mxu0 %v679
    %914 = vmatprep.subr.bf16.mxu0 0
    %915 = vmatpush1.bf16.msra.mxu0 %v680
    %916 = vmatprep.subr.bf16.mxu0 0
    %917 = vmatpush1.bf16.msra.mxu0 %v681
    %918 = vmatprep.subr.bf16.mxu0 0
    %919 = vmatpush1.bf16.msra.mxu0 %v682
    %920 = vmatprep.subr.bf16.mxu0 0
    %921 = vmatpush1.bf16.msra.mxu0 %v683
    %922 = vmatprep.subr.bf16.mxu0 0
    %923 = vmatpush1.bf16.msra.mxu0 %v684
    %924 = vmatprep.subr.bf16.mxu0 0
    %925 = vmatpush1.bf16.msra.mxu0 %v685
    %926 = vmatprep.mubr.bf16.mxu0 %v247
    %927 = vmatmul.mubr.bf16.gmra.mrb[0].mxu0 %v233
    %v928 = vpop.f32.mrb[0].mxu0
    %v929 = vadd.f32 %v889, %v928
    %v930 = vpop.f32.mrb[0].mxu0
    %v931 = vpop.f32.mrb[0].mxu0
    %v932 = vpop.f32.mrb[0].mxu0
    %933 = vdwg.mxu0
    %934 = vmatprep.subr.bf16.mxu0 0
    %935 = vmatpush1.bf16.msra.mxu0 %v686
    %936 = vmatprep.subr.bf16.mxu0 0
    %937 = vmatpush1.bf16.msra.mxu0 %v687
    %938 = vmatprep.subr.bf16.mxu0 0
    %939 = vmatpush1.bf16.msra.mxu0 %v688
    %940 = vmatprep.subr.bf16.mxu0 0
    %941 = vmatpush1.bf16.msra.mxu0 %v689
    %942 = vmatprep.subr.bf16.mxu0 0
    %943 = vmatpush1.bf16.msra.mxu0 %v690
    %944 = vmatprep.subr.bf16.mxu0 0
    %945 = vmatpush1.bf16.msra.mxu0 %v691
    %946 = vmatprep.subr.bf16.mxu0 0
    %947 = vmatpush1.bf16.msra.mxu0 %v692
    %948 = vmatprep.subr.bf16.mxu0 0
    %949 = vmatpush1.bf16.msra.mxu0 %v693
    %950 = vmatprep.subr.bf16.mxu0 0
    %951 = vmatpush1.bf16.msra.mxu0 %v694
    %952 = vmatprep.subr.bf16.mxu0 0
    %953 = vmatpush1.bf16.msra.mxu0 %v695
    %954 = vmatprep.subr.bf16.mxu0 0
    %955 = vmatpush1.bf16.msra.mxu0 %v696
    %956 = vmatprep.subr.bf16.mxu0 0
    %957 = vmatpush1.bf16.msra.mxu0 %v697
    %958 = vmatprep.subr.bf16.mxu0 0
    %959 = vmatpush1.bf16.msra.mxu0 %v698
    %960 = vmatprep.subr.bf16.mxu0 0
    %961 = vmatpush1.bf16.msra.mxu0 %v699
    %962 = vmatprep.subr.bf16.mxu0 0
    %963 = vmatpush1.bf16.msra.mxu0 %v700
    %964 = vmatprep.subr.bf16.mxu0 0
    %965 = vmatpush1.bf16.msra.mxu0 %v701
    %966 = vmatprep.mubr.bf16.mxu0 %v251
    %967 = vmatmul.mubr.bf16.gmra.mrb[0].mxu0 %v249
    %v968 = vpop.f32.mrb[0].mxu0
    %v969 = vadd.f32 %v929, %v968
    %v970 = vpop.f32.mrb[0].mxu0
    %v971 = vpop.f32.mrb[0].mxu0
    %v972 = vpop.f32.mrb[0].mxu0
    %973 = vdwg.mxu0
    %974 = vmatprep.subr.bf16.mxu0 0
    %975 = vmatpush1.bf16.msra.mxu0 %v702
    %976 = vmatprep.subr.bf16.mxu0 0
    %977 = vmatpush1.bf16.msra.mxu0 %v703
    %978 = vmatprep.subr.bf16.mxu0 0
    %979 = vmatpush1.bf16.msra.mxu0 %v704
    %980 = vmatprep.subr.bf16.mxu0 0
    %981 = vmatpush1.bf16.msra.mxu0 %v705
    %982 = vmatprep.subr.bf16.mxu0 0
    %983 = vmatpush1.bf16.msra.mxu0 %v706
    %984 = vmatprep.subr.bf16.mxu0 0
    %985 = vmatpush1.bf16.msra.mxu0 %v707
    %986 = vmatprep.subr.bf16.mxu0 0
    %987 = vmatpush1.bf16.msra.mxu0 %v708
    %988 = vmatprep.subr.bf16.mxu0 0
    %989 = vmatpush1.bf16.msra.mxu0 %v709
    %990 = vmatprep.subr.bf16.mxu0 0
    %991 = vmatpush1.bf16.msra.mxu0 %v710
    %992 = vmatprep.subr.bf16.mxu0 0
    %993 = vmatpush1.bf16.msra.mxu0 %v711
    %994 = vmatprep.subr.bf16.mxu0 0
    %995 = vmatpush1.bf16.msra.mxu0 %v712
    %996 = vmatprep.subr.bf16.mxu0 0
    %997 = vmatpush1.bf16.msra.mxu0 %v713
    %998 = vmatprep.subr.bf16.mxu0 0
    %999 = vmatpush1.bf16.msra.mxu0 %v714
    %1000 = vmatprep.subr.bf16.mxu0 0
    %1001 = vmatpush1.bf16.msra.mxu0 %v715
    %1002 = vmatprep.subr.bf16.mxu0 0
    %1003 = vmatpush1.bf16.msra.mxu0 %v716
    %1004 = vmatprep.subr.bf16.mxu0 0
    %1005 = vmatpush1.bf16.msra.mxu0 %v717
    %1006 = vmatprep.mubr.bf16.mxu0 %v273
    %1007 = vmatmul.mubr.bf16.gmra.mrb[0].mxu0 %v266
    %v1008 = vpop.f32.mrb[0].mxu0
    %v1009 = vadd.f32 %v969, %v1008
    %v1010 = vpop.f32.mrb[0].mxu0
    %v1011 = vpop.f32.mrb[0].mxu0
    %v1012 = vpop.f32.mrb[0].mxu0
    %1013 = vdwg.mxu0
    %1014 = vmatprep.subr.bf16.mxu0 0
    %1015 = vmatpush1.bf16.msra.mxu0 %v718
    %1016 = vmatprep.subr.bf16.mxu0 0
    %1017 = vmatpush1.bf16.msra.mxu0 %v719
    %1018 = vmatprep.subr.bf16.mxu0 0
    %1019 = vmatpush1.bf16.msra.mxu0 %v720
    %1020 = vmatprep.subr.bf16.mxu0 0
    %1021 = vmatpush1.bf16.msra.mxu0 %v721
    %1022 = vmatprep.subr.bf16.mxu0 0
    %1023 = vmatpush1.bf16.msra.mxu0 %v722
    %1024 = vmatprep.subr.bf16.mxu0 0
    %1025 = vmatpush1.bf16.msra.mxu0 %v723
    %1026 = vmatprep.subr.bf16.mxu0 0
    %1027 = vmatpush1.bf16.msra.mxu0 %v724
    %1028 = vmatprep.subr.bf16.mxu0 0
    %1029 = vmatpush1.bf16.msra.mxu0 %v725
    %1030 = vmatprep.subr.bf16.mxu0 0
    %1031 = vmatpush1.bf16.msra.mxu0 0
    %1032 = vmatprep.subr.bf16.mxu0 0
    %1033 = vmatpush1.bf16.msra.mxu0 0
    %1034 = vmatprep.subr.bf16.mxu0 0
    %1035 = vmatpush1.bf16.msra.mxu0 0
    %1036 = vmatprep.subr.bf16.mxu0 0
    %1037 = vmatpush1.bf16.msra.mxu0 0
    %1038 = vmatprep.subr.bf16.mxu0 0
    %1039 = vmatpush1.bf16.msra.mxu0 0
    %1040 = vmatprep.subr.bf16.mxu0 0
    %1041 = vmatpush1.bf16.msra.mxu0 0
    %1042 = vmatprep.subr.bf16.mxu0 0
    %1043 = vmatpush1.bf16.msra.mxu0 0
    %1044 = vmatprep.subr.bf16.mxu0 0
    %1045 = vmatpush1.bf16.msra.mxu0 0
    %1046 = vmatprep.mubr.bf16.mxu0 0
    %1047 = vmatmul.mubr.bf16.gmra.mrb[0].mxu0 %v274
    %v1048 = vpop.f32.mrb[0].mxu0
    %v1049 = vadd.f32 %v1009, %v1048
    %v1050 = vpop.f32.mrb[0].mxu0
    %v1051 = vpop.f32.mrb[0].mxu0
    %v1052 = vpop.f32.mrb[0].mxu0
    %1053 = vdwg.mxu0
    %vm1054 = vcmask 74752
    %1055 = vst.msk [vmem:[#allocation2] sm:$0x3] %vm1054, %v1049
    // Predicated region
    $region14: #{net_forward.17} parent=1 // pred_check
      _
    $region15: #{net_forward.17} parent=1 // pred_check_branch
      %1057 = sbr.rel (0) target = $region17
    $region16: #{net_forward.17} parent=1 // pred_region
      %s1059 = ssub.s32 32, 32
      %1060 = vsyncadd [#allocation3], %s1059
      %s1062 = sshll.u32 [#allocation2], 4
      %s1063 = int_to_ptr.vmem [resolvable:$true] %s1062
      %1065 = dma.vmem_to_hbm [thread:$0]  %s1063, 32, %s3, [#allocation3]
    $region17: #{net_forward.17} parent=1 // pred_fallthru
      _
    // Predicated region
    $region18: #{net_forward.17} parent=1 // pred_check
      _
    $region19: #{net_forward.17} parent=1 // pred_check_branch
      %1067 = sbr.rel (0) target = $region21
    $region20: #{net_forward.17} parent=1 // pred_region
      %1068 = dma.done [#allocation3], 32
    $region21: #{net_forward.17} parent=1 // pred_fallthru
      _
    %1069 = vsyncpa [#allocation3], 1

</llo_original>
